<compile_context>
chip_gen: v6e
topology: v6e:2x2x1
jax: 0.10.0
libtpu: 0.0.40
codegen_flags: <defaults>
</compile_context>

<pallas_src>
import functools
import math

import jax
import jax.numpy as jnp
from jax import lax
from jax.experimental import pallas as pl
from jax.experimental.pallas import tpu as pltpu

EPS = 1e-6
# Explicit VMEM budget: above the 32 MiB default scoped limit (v6e/v7x), but
# safely under v7x's 64 MiB physical VMEM.
VMEM_LIMIT_BYTES = 48 * 1024 * 1024


# ---------------------------------------------------------------------------
# In-kernel helpers
# ---------------------------------------------------------------------------
def _layernorm(x, a, b, eps):
    """Custom LayerNorm: unbiased std (D-1 divisor), eps added to the std.

    Exact divide (VPU) per the correctness review; statistics stay in f32.
    """
    d = x.shape[-1]
    mean = jnp.mean(x, axis=-1, keepdims=True)
    diff = x - mean
    var = jnp.sum(diff * diff, axis=-1, keepdims=True) / (d - 1)
    return a * diff / (jnp.sqrt(var) + eps) + b


# ---------------------------------------------------------------------------
# Fully fused encoder-layer kernel:
#   out = x + FFN(LN1(x + Attn(LN0(x))))     [+ final LayerNorm on last layer]
# Grid = (batch, q-row-tile).  K/V for the whole sequence are computed once
# per batch element (q-tile 0) into a persistent VMEM scratch.
# ---------------------------------------------------------------------------
def _encoder_layer_kernel(x_ref, mask_ref, ln0_a_ref, ln0_b_ref,
                          wq_ref, bq_ref, wkv_ref, bkv_ref, wo_ref, bo_ref,
                          ln1_a_ref, ln1_b_ref, w1_ref, b1_ref, w2_ref, b2_ref,
                          nf_a_ref, nf_b_ref,
                          o_ref,
                          kv_scratch, ctx_scratch, *,
                          num_heads, tile_q, eps, apply_final_norm):
    d_model = x_ref.shape[-1]
    d_k = d_model // num_heads
    cd = wq_ref.dtype                      # compute dtype (set host-side)
    i = pl.program_id(1)

    # --- K/V projection for the whole sequence, once per batch element -----
    @pl.when(i == 0)
    def _():
        y_full = _layernorm(x_ref[0], ln0_a_ref[...], ln0_b_ref[...], eps)
        kv = jnp.dot(y_full.astype(cd), wkv_ref[...],
                     preferred_element_type=jnp.float32) + bkv_ref[...]
        kv_scratch[...] = kv.astype(kv_scratch.dtype)

    # --- Q projection for this q-row tile -----------------------------------
    q_start = pl.multiple_of(i * tile_q, tile_q)
    x_q = x_ref[0, pl.ds(q_start, tile_q), :]            # (tile_q, D) f32
    y_q = _layernorm(x_q, ln0_a_ref[...], ln0_b_ref[...], eps)
    # 1/sqrt(d_k) is folded into wq / bq at fuse_params() time.
    q_all = (jnp.dot(y_q.astype(cd), wq_ref[...],
                     preferred_element_type=jnp.float32)
             + bq_ref[...]).astype(cd)                    # (tile_q, D)

    kv = kv_scratch[...]                                  # (S, 2D), cd
    mask_zero = mask_ref[0] == 0.0                        # (1, S), hoisted

    # Heads are contiguous d_k-wide column slices; each head's context is
    # written into its column slice of ctx_scratch so a single full-depth
    # (tile_q, D) @ (D, D) out-projection runs after the loop.
    # TODO(synk): convert to lax.fori_loop(..., unroll=2) with pl.ds head
    # slicing if the bundle dump shows vreg spills at production H (8-16).
    for h in range(num_heads):
        q_h = q_all[:, h * d_k:(h + 1) * d_k]
        k_h = kv[:, h * d_k:(h + 1) * d_k]
        v_h = kv[:, d_model + h * d_k:d_model + (h + 1) * d_k]

        # Contract the last dims of q and k directly (no k.T materialisation).
        scores = lax.dot_general(q_h, k_h, (((1,), (1,)), ((), ())),
                                 preferred_element_type=jnp.float32)
        scores = jnp.where(mask_zero, -1e9, scores)       # masked_fill(mask==0)
        scores = scores - jnp.max(scores, axis=-1, keepdims=True)
        p = jnp.exp(scores)                               # f32 softmax
        p = p * pl.reciprocal(jnp.sum(p, axis=-1, keepdims=True), approx=True)

        ctx_h = jnp.dot(p.astype(cd), v_h,
                        preferred_element_type=jnp.float32)   # (tile_q, d_k)
        ctx_scratch[:, h * d_k:(h + 1) * d_k] = ctx_h.astype(ctx_scratch.dtype)

    attn = jnp.dot(ctx_scratch[...], wo_ref[...],
                   preferred_element_type=jnp.float32) + bo_ref[...]
    h1 = x_q + attn                                       # residual 1 (f32)

    # --- FFN sublayer --------------------------------------------------------
    y1 = _layernorm(h1, ln1_a_ref[...], ln1_b_ref[...], eps)
    hid = jnp.dot(y1.astype(cd), w1_ref[...],
                  preferred_element_type=jnp.float32) + b1_ref[...]
    hid = jnp.maximum(hid, 0.0)                           # ReLU
    ffn = jnp.dot(hid.astype(cd), w2_ref[...],
                  preferred_element_type=jnp.float32) + b2_ref[...]
    out = h1 + ffn                                        # residual 2 (f32)

    if apply_final_norm:                                  # Encoder.norm (fused)
        out = _layernorm(out, nf_a_ref[...], nf_b_ref[...], eps)

    o_ref[0] = out.astype(o_ref.dtype)


# ---------------------------------------------------------------------------
# pallas_call wrapper (one call per encoder layer)
# ---------------------------------------------------------------------------
def _row_tile(s, max_tile=256):
    """Largest q-row tile: whole S if small, else a multiple of 8 dividing S."""
    if s <= max_tile:
        return s
    t = max_tile - (max_tile % 8)
    while t >= 8:
        if s % t == 0:
            return t
        t -= 8
    return s


def encoder_layer(x, mask, lp, norm_a, norm_b, *, num_heads,
                  apply_final_norm, single_buffer_weights=True):
    B, S, D = x.shape
    Dff = lp["w1"].shape[1]
    cd = lp["wq"].dtype
    tile_q = _row_tile(S)
    n_q = S // tile_q

    kernel = functools.partial(_encoder_layer_kernel, num_heads=num_heads,
                               tile_q=tile_q, eps=EPS,
                               apply_final_norm=apply_final_norm)

    def const_spec(shape):
        # Grid-invariant block: fetched once; single buffer saves VMEM (v7x).
        idx = lambda b, i, _n=len(shape): (0,) * _n
        if single_buffer_weights:
            return pl.BlockSpec(shape, idx, pipeline_mode=pl.Buffered(1))
        return pl.BlockSpec(shape, idx)

    in_specs = [
        pl.BlockSpec((1, S, D), lambda b, i: (b, 0, 0)),   # x (full S per batch)
        pl.BlockSpec((1, 1, S), lambda b, i: (b, 0, 0)),   # mask (B,1,S)
        const_spec((1, D)), const_spec((1, D)),            # LN0 gamma/beta
        const_spec((D, D)), const_spec((1, D)),            # Wq (scaled), bq
        const_spec((D, 2 * D)), const_spec((1, 2 * D)),    # fused Wkv, bkv
        const_spec((D, D)), const_spec((1, D)),            # Wo, bo
        const_spec((1, D)), const_spec((1, D)),            # LN1 gamma/beta
        const_spec((D, Dff)), const_spec((1, Dff)),        # W1, b1
        const_spec((Dff, D)), const_spec((1, D)),          # W2, b2
        const_spec((1, D)), const_spec((1, D)),            # final-norm gamma/beta
    ]

    return pl.pallas_call(
        kernel,
        out_shape=jax.ShapeDtypeStruct((B, S, D), x.dtype),
        grid=(B, n_q),
        in_specs=in_specs,
        out_specs=pl.BlockSpec((1, tile_q, D), lambda b, i: (b, i, 0)),
        scratch_shapes=[
            pltpu.VMEM((S, 2 * D), cd),       # K/V cache (persists over q-tiles)
            pltpu.VMEM((tile_q, D), cd),      # per-head context columns
        ],
        compiler_params=pltpu.CompilerParams(
            dimension_semantics=("parallel", "arbitrary"),
            vmem_limit_bytes=VMEM_LIMIT_BYTES),
    )(x, mask, lp["ln0_a"], lp["ln0_b"], lp["wq"], lp["bq"],
      lp["wkv"], lp["bkv"], lp["wo"], lp["bo"],
      lp["ln1_a"], lp["ln1_b"], lp["w1"], lp["b1"], lp["w2"], lp["b2"],
      norm_a, norm_b)


# ---------------------------------------------------------------------------
# Encoder forward: one pallas_call per layer; final LN fused into last layer.
# ---------------------------------------------------------------------------
@functools.partial(jax.jit, static_argnames=("num_heads",
                                             "single_buffer_weights"))
def encoder_forward(x, mask, fused_params, num_heads,
                    single_buffer_weights=True):
    layers = fused_params["layers"]
    n = len(layers)
    for idx, lp in enumerate(layers):
        x = encoder_layer(x, mask, lp,
                          fused_params["norm_a"], fused_params["norm_b"],
                          num_heads=num_heads,
                          apply_final_norm=(idx == n - 1),
                          single_buffer_weights=single_buffer_weights)
    return x


# ---------------------------------------------------------------------------
# Parameter init (synthetic, matches the torch layer shapes) + fusion prep
# ---------------------------------------------------------------------------
def init_params(key, n_layers, d_model, d_ff):
    layers = []
    for _ in range(n_layers):
        key, *ks = jax.random.split(key, 7)
        layers.append(dict(
            wq=0.05 * jax.random.normal(ks[0], (d_model, d_model), jnp.float32),
            bq=jnp.zeros((d_model,), jnp.float32),
            wk=0.05 * jax.random.normal(ks[1], (d_model, d_model), jnp.float32),
            bk=jnp.zeros((d_model,), jnp.float32),
            wv=0.05 * jax.random.normal(ks[2], (d_model, d_model), jnp.float32),
            bv=jnp.zeros((d_model,), jnp.float32),
            wo=0.05 * jax.random.normal(ks[3], (d_model, d_model), jnp.float32),
            bo=jnp.zeros((d_model,), jnp.float32),
            w1=0.05 * jax.random.normal(ks[4], (d_model, d_ff), jnp.float32),
            b1=jnp.zeros((d_ff,), jnp.float32),
            w2=0.05 * jax.random.normal(ks[5], (d_ff, d_model), jnp.float32),
            b2=jnp.zeros((d_model,), jnp.float32),
            ln0_a=jnp.ones((d_model,), jnp.float32),
            ln0_b=jnp.zeros((d_model,), jnp.float32),
            ln1_a=jnp.ones((d_model,), jnp.float32),
            ln1_b=jnp.zeros((d_model,), jnp.float32),
        ))
    return dict(layers=layers,
                norm_a=jnp.ones((d_model,), jnp.float32),
                norm_b=jnp.zeros((d_model,), jnp.float32))


def fuse_params(params, num_heads, compute_dtype=jnp.float32):
    """Kernel-facing layout: host-side dtype cast, fused Wkv, 1/sqrt(dk) fold.

    Weights are stored in `compute_dtype` (MXU operand dtype); biases and LN
    params stay f32 (they feed f32 accumulations / statistics).
    """
    layers = []
    for p in params["layers"]:
        d_model = p["wq"].shape[0]
        scale = 1.0 / math.sqrt(d_model // num_heads)
        layers.append(dict(
            ln0_a=p["ln0_a"].reshape(1, -1), ln0_b=p["ln0_b"].reshape(1, -1),
            ln1_a=p["ln1_a"].reshape(1, -1), ln1_b=p["ln1_b"].reshape(1, -1),
            wq=(p["wq"] * scale).astype(compute_dtype),
            bq=(p["bq"] * scale).reshape(1, -1),
            wkv=jnp.concatenate([p["wk"], p["wv"]], axis=1).astype(compute_dtype),
            bkv=jnp.concatenate([p["bk"], p["bv"]]).reshape(1, -1),
            wo=p["wo"].astype(compute_dtype), bo=p["bo"].reshape(1, -1),
            w1=p["w1"].astype(compute_dtype), b1=p["b1"].reshape(1, -1),
            w2=p["w2"].astype(compute_dtype), b2=p["b2"].reshape(1, -1),
        ))
    return dict(layers=layers,
                norm_a=params["norm_a"].reshape(1, -1),
                norm_b=params["norm_b"].reshape(1, -1))


# ---------------------------------------------------------------------------
# Pure-JAX reference (correctness check)
# ---------------------------------------------------------------------------
def _ref_layernorm(x, a, b, eps=EPS):
    mean = x.mean(-1, keepdims=True)
    std = jnp.sqrt(jnp.sum((x - mean) ** 2, -1, keepdims=True) / (x.shape[-1] - 1))
    return a * (x - mean) / (std + eps) + b


def _ref_encoder(x, mask, params, H):
    B, S, D = x.shape
    dk = D // H
    for p in params["layers"]:
        y = _ref_layernorm(x, p["ln0_a"], p["ln0_b"])
        q = (y @ p["wq"] + p["bq"]).reshape(B, S, H, dk).transpose(0, 2, 1, 3)
        k = (y @ p["wk"] + p["bk"]).reshape(B, S, H, dk).transpose(0, 2, 1, 3)
        v = (y @ p["wv"] + p["bv"]).reshape(B, S, H, dk).transpose(0, 2, 1, 3)
        s = jnp.einsum("bhqd,bhkd->bhqk", q, k) / math.sqrt(dk)
        s = jnp.where(mask[:, None, :, :] == 0.0, -1e9, s)
        a = jax.nn.softmax(s, axis=-1)
        ctx = jnp.einsum("bhqk,bhkd->bhqd", a, v).transpose(0, 2, 1, 3).reshape(B, S, D)
        x = x + (ctx @ p["wo"] + p["bo"])
        y = _ref_layernorm(x, p["ln1_a"], p["ln1_b"])
        x = x + (jnp.maximum(y @ p["w1"] + p["b1"], 0.0) @ p["w2"] + p["b2"])
    return _ref_layernorm(x, params["norm_a"], params["norm_b"])


# ---------------------------------------------------------------------------
if __name__ == "__main__":
    B, S, D, H, Dff, N = 2, 8, 32, 4, 64, 2

    key = jax.random.PRNGKey(0)
    kx, kp = jax.random.split(key)
    x = jax.random.normal(kx, (B, S, D), jnp.float32)
    # padding mask (B, 1, S): batch 1 has its last two positions masked out
    mask = jnp.ones((B, 1, S), jnp.float32).at[1, 0, 6:].set(0.0)
    params = init_params(kp, N, D, Dff)

    ref = _ref_encoder(x, mask, params, H)

    def run(compute_dtype, single_buffer):
        fused = fuse_params(params, num_heads=H, compute_dtype=compute_dtype)
        out = encoder_forward(x, mask, fused, num_heads=H,
                              single_buffer_weights=single_buffer)
        return jax.block_until_ready(out)

    # Prefer single-buffered grid-invariant weight blocks (v7x VMEM headroom);
    # fall back to default double buffering if this Pallas build does not
    # accept pipeline_mode on pallas_call BlockSpecs.
    try:
        out = run(jnp.float32, True)
        single_buffer = True
    except Exception:
        out = run(jnp.float32, False)
        single_buffer = False

    # f32 MXU path: tight-ish check (only remaining approximation is the EUP
    # approx reciprocal in the softmax normalisation).
    assert out.shape == (B, S, D)
    assert jnp.allclose(out, ref, atol=1e-2, rtol=1e-2), "f32 mismatch vs reference"

    # bf16 MXU-operand path (production setting on v6e/v7x): weights stored
    # bf16 host-side, activations/softmax probs cast to bf16 at MXU inputs,
    # f32 accumulation and f32 LN/softmax statistics kept -> loose check.
    out_bf16 = run(jnp.bfloat16, single_buffer)
    assert jnp.all(jnp.isfinite(out_bf16))
    assert jnp.allclose(out_bf16, ref, atol=1e-1, rtol=1e-1), "bf16 mismatch vs reference"

    print("KERNEL_OK")
</pallas_src>

<mosaic_0001>
module attributes {stable_mosaic.version = 11 : i64} {
  func.func @_encoder_layer_kernel(%arg0: i32, %arg1: i32, %arg2: memref<1x8x32xf32, #tpu.memory_space<vmem>>, %arg3: memref<1x1x8xf32, #tpu.memory_space<vmem>>, %arg4: memref<1x32xf32, #tpu.memory_space<vmem>>, %arg5: memref<1x32xf32, #tpu.memory_space<vmem>>, %arg6: memref<32x32xf32, #tpu.memory_space<vmem>>, %arg7: memref<1x32xf32, #tpu.memory_space<vmem>>, %arg8: memref<32x64xf32, #tpu.memory_space<vmem>>, %arg9: memref<1x64xf32, #tpu.memory_space<vmem>>, %arg10: memref<32x32xf32, #tpu.memory_space<vmem>>, %arg11: memref<1x32xf32, #tpu.memory_space<vmem>>, %arg12: memref<1x32xf32, #tpu.memory_space<vmem>>, %arg13: memref<1x32xf32, #tpu.memory_space<vmem>>, %arg14: memref<32x64xf32, #tpu.memory_space<vmem>>, %arg15: memref<1x64xf32, #tpu.memory_space<vmem>>, %arg16: memref<64x32xf32, #tpu.memory_space<vmem>>, %arg17: memref<1x32xf32, #tpu.memory_space<vmem>>, %arg18: memref<1x32xf32, #tpu.memory_space<vmem>>, %arg19: memref<1x32xf32, #tpu.memory_space<vmem>>, %arg20: memref<1x8x32xf32, #tpu.memory_space<vmem>>, %arg21: memref<8x64xf32, #tpu.memory_space<vmem>>, %arg22: memref<8x32xf32, #tpu.memory_space<vmem>>) attributes {dimension_semantics = [#tpu.dimension_semantics<parallel>, #tpu.dimension_semantics<arbitrary>], iteration_bounds = array<i64: 2, 1>, scalar_prefetch = 0 : i64, scratch_operands = 2 : i64, tpu.core_type = #tpu.core_type<tc>, window_params = [{transform_indices = @transform_0, window_bounds = array<i64: 1, 8, 32>}, {transform_indices = @transform_1, window_bounds = array<i64: 1, 1, 8>}, {pipeline_mode = #tpu.pipeline_mode<synchronous>, transform_indices = @transform_2, window_bounds = array<i64: 1, 32>}, {pipeline_mode = #tpu.pipeline_mode<synchronous>, transform_indices = @transform_3, window_bounds = array<i64: 1, 32>}, {pipeline_mode = #tpu.pipeline_mode<synchronous>, transform_indices = @transform_4, window_bounds = array<i64: 32, 32>}, {pipeline_mode = #tpu.pipeline_mode<synchronous>, transform_indices = @transform_5, window_bounds = array<i64: 1, 32>}, {pipeline_mode = #tpu.pipeline_mode<synchronous>, transform_indices = @transform_6, window_bounds = array<i64: 32, 64>}, {pipeline_mode = #tpu.pipeline_mode<synchronous>, transform_indices = @transform_7, window_bounds = array<i64: 1, 64>}, {pipeline_mode = #tpu.pipeline_mode<synchronous>, transform_indices = @transform_8, window_bounds = array<i64: 32, 32>}, {pipeline_mode = #tpu.pipeline_mode<synchronous>, transform_indices = @transform_9, window_bounds = array<i64: 1, 32>}, {pipeline_mode = #tpu.pipeline_mode<synchronous>, transform_indices = @transform_10, window_bounds = array<i64: 1, 32>}, {pipeline_mode = #tpu.pipeline_mode<synchronous>, transform_indices = @transform_11, window_bounds = array<i64: 1, 32>}, {pipeline_mode = #tpu.pipeline_mode<synchronous>, transform_indices = @transform_12, window_bounds = array<i64: 32, 64>}, {pipeline_mode = #tpu.pipeline_mode<synchronous>, transform_indices = @transform_13, window_bounds = array<i64: 1, 64>}, {pipeline_mode = #tpu.pipeline_mode<synchronous>, transform_indices = @transform_14, window_bounds = array<i64: 64, 32>}, {pipeline_mode = #tpu.pipeline_mode<synchronous>, transform_indices = @transform_15, window_bounds = array<i64: 1, 32>}, {pipeline_mode = #tpu.pipeline_mode<synchronous>, transform_indices = @transform_16, window_bounds = array<i64: 1, 32>}, {pipeline_mode = #tpu.pipeline_mode<synchronous>, transform_indices = @transform_17, window_bounds = array<i64: 1, 32>}, {transform_indices = @transform_18, window_bounds = array<i64: 1, 8, 32>}]} {
    %c0_i32 = arith.constant 0 : i32
    %0 = arith.cmpi eq, %arg1, %c0_i32 : i32
    %1 = arith.extui %0 : i1 to i32
    %c0_i32_0 = arith.constant 0 : i32
    %2 = arith.cmpi ne, %1, %c0_i32_0 : i32
    scf.if %2 {
      %c0_76 = arith.constant 0 : index
      %c0_77 = arith.constant 0 : index
      %c0_78 = arith.constant 0 : index
      %165 = vector.load %arg2[%c0_76, %c0_77, %c0_78] : memref<1x8x32xf32, #tpu.memory_space<vmem>>, vector<1x8x32xf32>
      %166 = vector.shape_cast %165 : vector<1x8x32xf32> to vector<8x32xf32>
      %c0_79 = arith.constant 0 : index
      %c0_80 = arith.constant 0 : index
      %167 = vector.load %arg4[%c0_79, %c0_80] : memref<1x32xf32, #tpu.memory_space<vmem>>, vector<1x32xf32>
      %c0_81 = arith.constant 0 : index
      %c0_82 = arith.constant 0 : index
      %168 = vector.load %arg5[%c0_81, %c0_82] : memref<1x32xf32, #tpu.memory_space<vmem>>, vector<1x32xf32>
      %cst_83 = arith.constant dense<0.000000e+00> : vector<8xf32>
      %169 = vector.multi_reduction <add>, %166, %cst_83 [1] : vector<8x32xf32> to vector<8xf32>
      %170 = vector.shape_cast %169 : vector<8xf32> to vector<8x1xf32>
      %cst_84 = arith.constant 3.200000e+01 : f32
      %171 = vector.broadcast %cst_84 : f32 to vector<8x1xf32>
      %172 = arith.divf %170, %171 : vector<8x1xf32>
      %173 = vector.broadcast %172 : vector<8x1xf32> to vector<8x32xf32>
      %174 = arith.subf %166, %173 : vector<8x32xf32>
      %175 = arith.mulf %174, %174 : vector<8x32xf32>
      %cst_85 = arith.constant dense<0.000000e+00> : vector<8xf32>
      %176 = vector.multi_reduction <add>, %175, %cst_85 [1] : vector<8x32xf32> to vector<8xf32>
      %177 = vector.shape_cast %176 : vector<8xf32> to vector<8x1xf32>
      %cst_86 = arith.constant 3.100000e+01 : f32
      %178 = vector.broadcast %cst_86 : f32 to vector<8x1xf32>
      %179 = arith.divf %177, %178 : vector<8x1xf32>
      %180 = vector.broadcast %167 : vector<1x32xf32> to vector<8x32xf32>
      %181 = arith.mulf %180, %174 : vector<8x32xf32>
      %182 = math.sqrt %179 : vector<8x1xf32>
      %cst_87 = arith.constant 9.99999997E-7 : f32
      %183 = vector.broadcast %cst_87 : f32 to vector<8x1xf32>
      %184 = arith.addf %182, %183 : vector<8x1xf32>
      %185 = vector.broadcast %184 : vector<8x1xf32> to vector<8x32xf32>
      %186 = arith.divf %181, %185 : vector<8x32xf32>
      %187 = vector.broadcast %168 : vector<1x32xf32> to vector<8x32xf32>
      %188 = arith.addf %186, %187 : vector<8x32xf32>
      %c0_88 = arith.constant 0 : index
      %c0_89 = arith.constant 0 : index
      %189 = vector.load %arg8[%c0_88, %c0_89] : memref<32x64xf32, #tpu.memory_space<vmem>>, vector<32x64xf32>
      %cst_90 = arith.constant dense<0.000000e+00> : vector<8x64xf32>
      %190 = tpu.matmul %188, %189, %cst_90 {dimension_numbers = #tpu.dot_dimension_numbers<[1], [0], [0], [1], [0, 0, 1, 1], [], []>} : vector<8x32xf32>, vector<32x64xf32>, vector<8x64xf32> -> vector<8x64xf32>
      %c0_91 = arith.constant 0 : index
      %c0_92 = arith.constant 0 : index
      %191 = vector.load %arg9[%c0_91, %c0_92] : memref<1x64xf32, #tpu.memory_space<vmem>>, vector<1x64xf32>
      %192 = vector.broadcast %191 : vector<1x64xf32> to vector<8x64xf32>
      %193 = arith.addf %190, %192 : vector<8x64xf32>
      %c0_93 = arith.constant 0 : index
      %c0_94 = arith.constant 0 : index
      %194 = vector.load %arg21[%c0_93, %c0_94] : memref<8x64xf32, #tpu.memory_space<vmem>>, vector<8x64xf32>
      tpu.vector_store %arg21[%c0_93, %c0_94], %193 {strides = array<i32>} : memref<8x64xf32, #tpu.memory_space<vmem>>, vector<8x64xf32>,
    } else {
    }
    %c8_i32 = arith.constant 8 : i32
    %3 = arith.muli %arg1, %c8_i32 : i32
    %4 = tpu.assume_multiple %3, 8 : i32
    %c0 = arith.constant 0 : index
    %5 = arith.index_cast %4 : i32 to index
    %c0_1 = arith.constant 0 : index
    %6 = vector.load %arg2[%c0, %5, %c0_1] : memref<1x8x32xf32, #tpu.memory_space<vmem>>, vector<1x8x32xf32>
    %7 = vector.shape_cast %6 : vector<1x8x32xf32> to vector<8x32xf32>
    %c0_2 = arith.constant 0 : index
    %c0_3 = arith.constant 0 : index
    %8 = vector.load %arg4[%c0_2, %c0_3] : memref<1x32xf32, #tpu.memory_space<vmem>>, vector<1x32xf32>
    %c0_4 = arith.constant 0 : index
    %c0_5 = arith.constant 0 : index
    %9 = vector.load %arg5[%c0_4, %c0_5] : memref<1x32xf32, #tpu.memory_space<vmem>>, vector<1x32xf32>
    %cst = arith.constant dense<0.000000e+00> : vector<8xf32>
    %10 = vector.multi_reduction <add>, %7, %cst [1] : vector<8x32xf32> to vector<8xf32>
    %11 = vector.shape_cast %10 : vector<8xf32> to vector<8x1xf32>
    %cst_6 = arith.constant 3.200000e+01 : f32
    %12 = vector.broadcast %cst_6 : f32 to vector<8x1xf32>
    %13 = arith.divf %11, %12 : vector<8x1xf32>
    %14 = vector.broadcast %13 : vector<8x1xf32> to vector<8x32xf32>
    %15 = arith.subf %7, %14 : vector<8x32xf32>
    %16 = arith.mulf %15, %15 : vector<8x32xf32>
    %cst_7 = arith.constant dense<0.000000e+00> : vector<8xf32>
    %17 = vector.multi_reduction <add>, %16, %cst_7 [1] : vector<8x32xf32> to vector<8xf32>
    %18 = vector.shape_cast %17 : vector<8xf32> to vector<8x1xf32>
    %cst_8 = arith.constant 3.100000e+01 : f32
    %19 = vector.broadcast %cst_8 : f32 to vector<8x1xf32>
    %20 = arith.divf %18, %19 : vector<8x1xf32>
    %21 = vector.broadcast %8 : vector<1x32xf32> to vector<8x32xf32>
    %22 = arith.mulf %21, %15 : vector<8x32xf32>
    %23 = math.sqrt %20 : vector<8x1xf32>
    %cst_9 = arith.constant 9.99999997E-7 : f32
    %24 = vector.broadcast %cst_9 : f32 to vector<8x1xf32>
    %25 = arith.addf %23, %24 : vector<8x1xf32>
    %26 = vector.broadcast %25 : vector<8x1xf32> to vector<8x32xf32>
    %27 = arith.divf %22, %26 : vector<8x32xf32>
    %28 = vector.broadcast %9 : vector<1x32xf32> to vector<8x32xf32>
    %29 = arith.addf %27, %28 : vector<8x32xf32>
    %c0_10 = arith.constant 0 : index
    %c0_11 = arith.constant 0 : index
    %30 = vector.load %arg6[%c0_10, %c0_11] : memref<32x32xf32, #tpu.memory_space<vmem>>, vector<32x32xf32>
    %cst_12 = arith.constant dense<0.000000e+00> : vector<8x32xf32>
    %31 = tpu.matmul %29, %30, %cst_12 {dimension_numbers = #tpu.dot_dimension_numbers<[1], [0], [0], [1], [0, 0, 1, 1], [], []>} : vector<8x32xf32>, vector<32x32xf32>, vector<8x32xf32> -> vector<8x32xf32>
    %c0_13 = arith.constant 0 : index
    %c0_14 = arith.constant 0 : index
    %32 = vector.load %arg7[%c0_13, %c0_14] : memref<1x32xf32, #tpu.memory_space<vmem>>, vector<1x32xf32>
    %33 = vector.broadcast %32 : vector<1x32xf32> to vector<8x32xf32>
    %34 = arith.addf %31, %33 : vector<8x32xf32>
    %c0_15 = arith.constant 0 : index
    %c0_16 = arith.constant 0 : index
    %35 = vector.load %arg21[%c0_15, %c0_16] : memref<8x64xf32, #tpu.memory_space<vmem>>, vector<8x64xf32>
    %c0_17 = arith.constant 0 : index
    %c0_18 = arith.constant 0 : index
    %c0_19 = arith.constant 0 : index
    %36 = vector.load %arg3[%c0_17, %c0_18, %c0_19] : memref<1x1x8xf32, #tpu.memory_space<vmem>>, vector<1x1x8xf32>
    %37 = vector.shape_cast %36 : vector<1x1x8xf32> to vector<1x8xf32>
    %cst_20 = arith.constant 0.000000e+00 : f32
    %38 = vector.broadcast %cst_20 : f32 to vector<1x8xf32>
    %39 = arith.cmpf oeq, %37, %38 : vector<1x8xf32>
    %40 = vector.extract_strided_slice %34 {offsets = [0, 0], sizes = [8, 8], strides = [1, 1]} : vector<8x32xf32> to vector<8x8xf32>
    %41 = vector.extract_strided_slice %35 {offsets = [0, 0], sizes = [8, 8], strides = [1, 1]} : vector<8x64xf32> to vector<8x8xf32>
    %42 = vector.extract_strided_slice %35 {offsets = [0, 32], sizes = [8, 8], strides = [1, 1]} : vector<8x64xf32> to vector<8x8xf32>
    %cst_21 = arith.constant dense<0.000000e+00> : vector<8x8xf32>
    %43 = tpu.matmul %40, %41, %cst_21 {dimension_numbers = #tpu.dot_dimension_numbers<[1], [1], [0], [0], [0, 0, 1, 0], [], []>} : vector<8x8xf32>, vector<8x8xf32>, vector<8x8xf32> -> vector<8x8xf32>
    %cst_22 = arith.constant -1.000000e+09 : f32
    %44 = vector.shape_cast %39 : vector<1x8xi1> to vector<1x8xi1>
    %45 = vector.broadcast %44 : vector<1x8xi1> to vector<8x8xi1>
    %46 = vector.broadcast %cst_22 : f32 to vector<8x8xf32>
    %47 = arith.select %45, %46, %43 : vector<8x8xi1>, vector<8x8xf32>
    %cst_23 = arith.constant dense<0xFF800000> : vector<8xf32>
    %48 = vector.multi_reduction <maximumf>, %47, %cst_23 [1] : vector<8x8xf32> to vector<8xf32>
    %49 = vector.shape_cast %48 : vector<8xf32> to vector<8x1xf32>
    %50 = vector.broadcast %49 : vector<8x1xf32> to vector<8x8xf32>
    %51 = arith.subf %47, %50 : vector<8x8xf32>
    %52 = math.exp %51 : vector<8x8xf32>
    %cst_24 = arith.constant dense<0.000000e+00> : vector<8xf32>
    %53 = vector.multi_reduction <add>, %52, %cst_24 [1] : vector<8x8xf32> to vector<8xf32>
    %54 = vector.shape_cast %53 : vector<8xf32> to vector<8x1xf32>
    %55 = tpu.reciprocal %54 {approx = true} : vector<8x1xf32> -> vector<8x1xf32>
    %56 = vector.broadcast %55 : vector<8x1xf32> to vector<8x8xf32>
    %57 = arith.mulf %52, %56 : vector<8x8xf32>
    %cst_25 = arith.constant dense<0.000000e+00> : vector<8x8xf32>
    %58 = tpu.matmul %57, %42, %cst_25 {dimension_numbers = #tpu.dot_dimension_numbers<[1], [0], [0], [1], [0, 0, 1, 1], [], []>} : vector<8x8xf32>, vector<8x8xf32>, vector<8x8xf32> -> vector<8x8xf32>
    %c0_26 = arith.constant 0 : index
    %c0_27 = arith.constant 0 : index
    %59 = vector.load %arg22[%c0_26, %c0_27] : memref<8x32xf32, #tpu.memory_space<vmem>>, vector<8x8xf32>
    tpu.vector_store %arg22[%c0_26, %c0_27], %58 {strides = array<i32>} : memref<8x32xf32, #tpu.memory_space<vmem>>, vector<8x8xf32>,
    %60 = vector.extract_strided_slice %34 {offsets = [0, 8], sizes = [8, 8], strides = [1, 1]} : vector<8x32xf32> to vector<8x8xf32>
    %61 = vector.extract_strided_slice %35 {offsets = [0, 8], sizes = [8, 8], strides = [1, 1]} : vector<8x64xf32> to vector<8x8xf32>
    %62 = vector.extract_strided_slice %35 {offsets = [0, 40], sizes = [8, 8], strides = [1, 1]} : vector<8x64xf32> to vector<8x8xf32>
    %cst_28 = arith.constant dense<0.000000e+00> : vector<8x8xf32>
    %63 = tpu.matmul %60, %61, %cst_28 {dimension_numbers = #tpu.dot_dimension_numbers<[1], [1], [0], [0], [0, 0, 1, 0], [], []>} : vector<8x8xf32>, vector<8x8xf32>, vector<8x8xf32> -> vector<8x8xf32>
    %cst_29 = arith.constant -1.000000e+09 : f32
    %64 = vector.shape_cast %39 : vector<1x8xi1> to vector<1x8xi1>
    %65 = vector.broadcast %64 : vector<1x8xi1> to vector<8x8xi1>
    %66 = vector.broadcast %cst_29 : f32 to vector<8x8xf32>
    %67 = arith.select %65, %66, %63 : vector<8x8xi1>, vector<8x8xf32>
    %cst_30 = arith.constant dense<0xFF800000> : vector<8xf32>
    %68 = vector.multi_reduction <maximumf>, %67, %cst_30 [1] : vector<8x8xf32> to vector<8xf32>
    %69 = vector.shape_cast %68 : vector<8xf32> to vector<8x1xf32>
    %70 = vector.broadcast %69 : vector<8x1xf32> to vector<8x8xf32>
    %71 = arith.subf %67, %70 : vector<8x8xf32>
    %72 = math.exp %71 : vector<8x8xf32>
    %cst_31 = arith.constant dense<0.000000e+00> : vector<8xf32>
    %73 = vector.multi_reduction <add>, %72, %cst_31 [1] : vector<8x8xf32> to vector<8xf32>
    %74 = vector.shape_cast %73 : vector<8xf32> to vector<8x1xf32>
    %75 = tpu.reciprocal %74 {approx = true} : vector<8x1xf32> -> vector<8x1xf32>
    %76 = vector.broadcast %75 : vector<8x1xf32> to vector<8x8xf32>
    %77 = arith.mulf %72, %76 : vector<8x8xf32>
    %cst_32 = arith.constant dense<0.000000e+00> : vector<8x8xf32>
    %78 = tpu.matmul %77, %62, %cst_32 {dimension_numbers = #tpu.dot_dimension_numbers<[1], [0], [0], [1], [0, 0, 1, 1], [], []>} : vector<8x8xf32>, vector<8x8xf32>, vector<8x8xf32> -> vector<8x8xf32>
    %c0_33 = arith.constant 0 : index
    %c8 = arith.constant 8 : index
    %79 = vector.load %arg22[%c0_33, %c8] : memref<8x32xf32, #tpu.memory_space<vmem>>, vector<8x8xf32>
    tpu.vector_store %arg22[%c0_33, %c8], %78 {strides = array<i32>} : memref<8x32xf32, #tpu.memory_space<vmem>>, vector<8x8xf32>,
    %80 = vector.extract_strided_slice %34 {offsets = [0, 16], sizes = [8, 8], strides = [1, 1]} : vector<8x32xf32> to vector<8x8xf32>
    %81 = vector.extract_strided_slice %35 {offsets = [0, 16], sizes = [8, 8], strides = [1, 1]} : vector<8x64xf32> to vector<8x8xf32>
    %82 = vector.extract_strided_slice %35 {offsets = [0, 48], sizes = [8, 8], strides = [1, 1]} : vector<8x64xf32> to vector<8x8xf32>
    %cst_34 = arith.constant dense<0.000000e+00> : vector<8x8xf32>
    %83 = tpu.matmul %80, %81, %cst_34 {dimension_numbers = #tpu.dot_dimension_numbers<[1], [1], [0], [0], [0, 0, 1, 0], [], []>} : vector<8x8xf32>, vector<8x8xf32>, vector<8x8xf32> -> vector<8x8xf32>
    %cst_35 = arith.constant -1.000000e+09 : f32
    %84 = vector.shape_cast %39 : vector<1x8xi1> to vector<1x8xi1>
    %85 = vector.broadcast %84 : vector<1x8xi1> to vector<8x8xi1>
    %86 = vector.broadcast %cst_35 : f32 to vector<8x8xf32>
    %87 = arith.select %85, %86, %83 : vector<8x8xi1>, vector<8x8xf32>
    %cst_36 = arith.constant dense<0xFF800000> : vector<8xf32>
    %88 = vector.multi_reduction <maximumf>, %87, %cst_36 [1] : vector<8x8xf32> to vector<8xf32>
    %89 = vector.shape_cast %88 : vector<8xf32> to vector<8x1xf32>
    %90 = vector.broadcast %89 : vector<8x1xf32> to vector<8x8xf32>
    %91 = arith.subf %87, %90 : vector<8x8xf32>
    %92 = math.exp %91 : vector<8x8xf32>
    %cst_37 = arith.constant dense<0.000000e+00> : vector<8xf32>
    %93 = vector.multi_reduction <add>, %92, %cst_37 [1] : vector<8x8xf32> to vector<8xf32>
    %94 = vector.shape_cast %93 : vector<8xf32> to vector<8x1xf32>
    %95 = tpu.reciprocal %94 {approx = true} : vector<8x1xf32> -> vector<8x1xf32>
    %96 = vector.broadcast %95 : vector<8x1xf32> to vector<8x8xf32>
    %97 = arith.mulf %92, %96 : vector<8x8xf32>
    %cst_38 = arith.constant dense<0.000000e+00> : vector<8x8xf32>
    %98 = tpu.matmul %97, %82, %cst_38 {dimension_numbers = #tpu.dot_dimension_numbers<[1], [0], [0], [1], [0, 0, 1, 1], [], []>} : vector<8x8xf32>, vector<8x8xf32>, vector<8x8xf32> -> vector<8x8xf32>
    %c0_39 = arith.constant 0 : index
    %c16 = arith.constant 16 : index
    %99 = vector.load %arg22[%c0_39, %c16] : memref<8x32xf32, #tpu.memory_space<vmem>>, vector<8x8xf32>
    tpu.vector_store %arg22[%c0_39, %c16], %98 {strides = array<i32>} : memref<8x32xf32, #tpu.memory_space<vmem>>, vector<8x8xf32>,
    %100 = vector.extract_strided_slice %34 {offsets = [0, 24], sizes = [8, 8], strides = [1, 1]} : vector<8x32xf32> to vector<8x8xf32>
    %101 = vector.extract_strided_slice %35 {offsets = [0, 24], sizes = [8, 8], strides = [1, 1]} : vector<8x64xf32> to vector<8x8xf32>
    %102 = vector.extract_strided_slice %35 {offsets = [0, 56], sizes = [8, 8], strides = [1, 1]} : vector<8x64xf32> to vector<8x8xf32>
    %cst_40 = arith.constant dense<0.000000e+00> : vector<8x8xf32>
    %103 = tpu.matmul %100, %101, %cst_40 {dimension_numbers = #tpu.dot_dimension_numbers<[1], [1], [0], [0], [0, 0, 1, 0], [], []>} : vector<8x8xf32>, vector<8x8xf32>, vector<8x8xf32> -> vector<8x8xf32>
    %cst_41 = arith.constant -1.000000e+09 : f32
    %104 = vector.shape_cast %39 : vector<1x8xi1> to vector<1x8xi1>
    %105 = vector.broadcast %104 : vector<1x8xi1> to vector<8x8xi1>
    %106 = vector.broadcast %cst_41 : f32 to vector<8x8xf32>
    %107 = arith.select %105, %106, %103 : vector<8x8xi1>, vector<8x8xf32>
    %cst_42 = arith.constant dense<0xFF800000> : vector<8xf32>
    %108 = vector.multi_reduction <maximumf>, %107, %cst_42 [1] : vector<8x8xf32> to vector<8xf32>
    %109 = vector.shape_cast %108 : vector<8xf32> to vector<8x1xf32>
    %110 = vector.broadcast %109 : vector<8x1xf32> to vector<8x8xf32>
    %111 = arith.subf %107, %110 : vector<8x8xf32>
    %112 = math.exp %111 : vector<8x8xf32>
    %cst_43 = arith.constant dense<0.000000e+00> : vector<8xf32>
    %113 = vector.multi_reduction <add>, %112, %cst_43 [1] : vector<8x8xf32> to vector<8xf32>
    %114 = vector.shape_cast %113 : vector<8xf32> to vector<8x1xf32>
    %115 = tpu.reciprocal %114 {approx = true} : vector<8x1xf32> -> vector<8x1xf32>
    %116 = vector.broadcast %115 : vector<8x1xf32> to vector<8x8xf32>
    %117 = arith.mulf %112, %116 : vector<8x8xf32>
    %cst_44 = arith.constant dense<0.000000e+00> : vector<8x8xf32>
    %118 = tpu.matmul %117, %102, %cst_44 {dimension_numbers = #tpu.dot_dimension_numbers<[1], [0], [0], [1], [0, 0, 1, 1], [], []>} : vector<8x8xf32>, vector<8x8xf32>, vector<8x8xf32> -> vector<8x8xf32>
    %c0_45 = arith.constant 0 : index
    %c24 = arith.constant 24 : index
    %119 = vector.load %arg22[%c0_45, %c24] : memref<8x32xf32, #tpu.memory_space<vmem>>, vector<8x8xf32>
    tpu.vector_store %arg22[%c0_45, %c24], %118 {strides = array<i32>} : memref<8x32xf32, #tpu.memory_space<vmem>>, vector<8x8xf32>,
    %c0_46 = arith.constant 0 : index
    %c0_47 = arith.constant 0 : index
    %120 = vector.load %arg22[%c0_46, %c0_47] : memref<8x32xf32, #tpu.memory_space<vmem>>, vector<8x32xf32>
    %c0_48 = arith.constant 0 : index
    %c0_49 = arith.constant 0 : index
    %121 = vector.load %arg10[%c0_48, %c0_49] : memref<32x32xf32, #tpu.memory_space<vmem>>, vector<32x32xf32>
    %cst_50 = arith.constant dense<0.000000e+00> : vector<8x32xf32>
    %122 = tpu.matmul %120, %121, %cst_50 {dimension_numbers = #tpu.dot_dimension_numbers<[1], [0], [0], [1], [0, 0, 1, 1], [], []>} : vector<8x32xf32>, vector<32x32xf32>, vector<8x32xf32> -> vector<8x32xf32>
    %c0_51 = arith.constant 0 : index
    %c0_52 = arith.constant 0 : index
    %123 = vector.load %arg11[%c0_51, %c0_52] : memref<1x32xf32, #tpu.memory_space<vmem>>, vector<1x32xf32>
    %124 = vector.broadcast %123 : vector<1x32xf32> to vector<8x32xf32>
    %125 = arith.addf %122, %124 : vector<8x32xf32>
    %126 = arith.addf %7, %125 : vector<8x32xf32>
    %c0_53 = arith.constant 0 : index
    %c0_54 = arith.constant 0 : index
    %127 = vector.load %arg12[%c0_53, %c0_54] : memref<1x32xf32, #tpu.memory_space<vmem>>, vector<1x32xf32>
    %c0_55 = arith.constant 0 : index
    %c0_56 = arith.constant 0 : index
    %128 = vector.load %arg13[%c0_55, %c0_56] : memref<1x32xf32, #tpu.memory_space<vmem>>, vector<1x32xf32>
    %cst_57 = arith.constant dense<0.000000e+00> : vector<8xf32>
    %129 = vector.multi_reduction <add>, %126, %cst_57 [1] : vector<8x32xf32> to vector<8xf32>
    %130 = vector.shape_cast %129 : vector<8xf32> to vector<8x1xf32>
    %cst_58 = arith.constant 3.200000e+01 : f32
    %131 = vector.broadcast %cst_58 : f32 to vector<8x1xf32>
    %132 = arith.divf %130, %131 : vector<8x1xf32>
    %133 = vector.broadcast %132 : vector<8x1xf32> to vector<8x32xf32>
    %134 = arith.subf %126, %133 : vector<8x32xf32>
    %135 = arith.mulf %134, %134 : vector<8x32xf32>
    %cst_59 = arith.constant dense<0.000000e+00> : vector<8xf32>
    %136 = vector.multi_reduction <add>, %135, %cst_59 [1] : vector<8x32xf32> to vector<8xf32>
    %137 = vector.shape_cast %136 : vector<8xf32> to vector<8x1xf32>
    %cst_60 = arith.constant 3.100000e+01 : f32
    %138 = vector.broadcast %cst_60 : f32 to vector<8x1xf32>
    %139 = arith.divf %137, %138 : vector<8x1xf32>
    %140 = vector.broadcast %127 : vector<1x32xf32> to vector<8x32xf32>
    %141 = arith.mulf %140, %134 : vector<8x32xf32>
    %142 = math.sqrt %139 : vector<8x1xf32>
    %cst_61 = arith.constant 9.99999997E-7 : f32
    %143 = vector.broadcast %cst_61 : f32 to vector<8x1xf32>
    %144 = arith.addf %142, %143 : vector<8x1xf32>
    %145 = vector.broadcast %144 : vector<8x1xf32> to vector<8x32xf32>
    %146 = arith.divf %141, %145 : vector<8x32xf32>
    %147 = vector.broadcast %128 : vector<1x32xf32> to vector<8x32xf32>
    %148 = arith.addf %146, %147 : vector<8x32xf32>
    %c0_62 = arith.constant 0 : index
    %c0_63 = arith.constant 0 : index
    %149 = vector.load %arg14[%c0_62, %c0_63] : memref<32x64xf32, #tpu.memory_space<vmem>>, vector<32x64xf32>
    %cst_64 = arith.constant dense<0.000000e+00> : vector<8x64xf32>
    %150 = tpu.matmul %148, %149, %cst_64 {dimension_numbers = #tpu.dot_dimension_numbers<[1], [0], [0], [1], [0, 0, 1, 1], [], []>} : vector<8x32xf32>, vector<32x64xf32>, vector<8x64xf32> -> vector<8x64xf32>
    %c0_65 = arith.constant 0 : index
    %c0_66 = arith.constant 0 : index
    %151 = vector.load %arg15[%c0_65, %c0_66] : memref<1x64xf32, #tpu.memory_space<vmem>>, vector<1x64xf32>
    %152 = vector.broadcast %151 : vector<1x64xf32> to vector<8x64xf32>
    %153 = arith.addf %150, %152 : vector<8x64xf32>
    %cst_67 = arith.constant 0.000000e+00 : f32
    %154 = vector.broadcast %cst_67 : f32 to vector<8x64xf32>
    %155 = arith.maximumf %153, %154 : vector<8x64xf32>
    %c0_68 = arith.constant 0 : index
    %c0_69 = arith.constant 0 : index
    %156 = vector.load %arg16[%c0_68, %c0_69] : memref<64x32xf32, #tpu.memory_space<vmem>>, vector<64x32xf32>
    %cst_70 = arith.constant dense<0.000000e+00> : vector<8x32xf32>
    %157 = tpu.matmul %155, %156, %cst_70 {dimension_numbers = #tpu.dot_dimension_numbers<[1], [0], [0], [1], [0, 0, 1, 1], [], []>} : vector<8x64xf32>, vector<64x32xf32>, vector<8x32xf32> -> vector<8x32xf32>
    %c0_71 = arith.constant 0 : index
    %c0_72 = arith.constant 0 : index
    %158 = vector.load %arg17[%c0_71, %c0_72] : memref<1x32xf32, #tpu.memory_space<vmem>>, vector<1x32xf32>
    %159 = vector.broadcast %158 : vector<1x32xf32> to vector<8x32xf32>
    %160 = arith.addf %157, %159 : vector<8x32xf32>
    %161 = arith.addf %126, %160 : vector<8x32xf32>
    %c0_73 = arith.constant 0 : index
    %c0_74 = arith.constant 0 : index
    %c0_75 = arith.constant 0 : index
    %162 = vector.load %arg20[%c0_73, %c0_74, %c0_75] : memref<1x8x32xf32, #tpu.memory_space<vmem>>, vector<1x8x32xf32>
    %163 = vector.shape_cast %162 : vector<1x8x32xf32> to vector<8x32xf32>
    %164 = vector.shape_cast %161 : vector<8x32xf32> to vector<1x8x32xf32>
    tpu.vector_store %arg20[%c0_73, %c0_74, %c0_75], %164 {strides = array<i32>} : memref<1x8x32xf32, #tpu.memory_space<vmem>>, vector<1x8x32xf32>,
    return
  }
  func.func @transform_0(%arg0: i32, %arg1: i32) -> (i32, i32, i32) {
    %c0_i32 = arith.constant 0 : i32
    %c0_i32_0 = arith.constant 0 : i32
    %c0_i32_1 = arith.constant 0 : i32
    return %arg0, %c0_i32, %c0_i32_0 : i32, i32, i32
  }
  func.func @transform_1(%arg0: i32, %arg1: i32) -> (i32, i32, i32) {
    %c0_i32 = arith.constant 0 : i32
    %c0_i32_0 = arith.constant 0 : i32
    %c0_i32_1 = arith.constant 0 : i32
    return %arg0, %c0_i32, %c0_i32_0 : i32, i32, i32
  }
  func.func @transform_2(%arg0: i32, %arg1: i32) -> (i32, i32) {
    %c0_i32 = arith.constant 0 : i32
    %c0_i32_0 = arith.constant 0 : i32
    %c0_i32_1 = arith.constant 0 : i32
    return %c0_i32, %c0_i32_0 : i32, i32
  }
  func.func @transform_3(%arg0: i32, %arg1: i32) -> (i32, i32) {
    %c0_i32 = arith.constant 0 : i32
    %c0_i32_0 = arith.constant 0 : i32
    %c0_i32_1 = arith.constant 0 : i32
    return %c0_i32, %c0_i32_0 : i32, i32
  }
  func.func @transform_4(%arg0: i32, %arg1: i32) -> (i32, i32) {
    %c0_i32 = arith.constant 0 : i32
    %c0_i32_0 = arith.constant 0 : i32
    %c0_i32_1 = arith.constant 0 : i32
    return %c0_i32, %c0_i32_0 : i32, i32
  }
  func.func @transform_5(%arg0: i32, %arg1: i32) -> (i32, i32) {
    %c0_i32 = arith.constant 0 : i32
    %c0_i32_0 = arith.constant 0 : i32
    %c0_i32_1 = arith.constant 0 : i32
    return %c0_i32, %c0_i32_0 : i32, i32
  }
  func.func @transform_6(%arg0: i32, %arg1: i32) -> (i32, i32) {
    %c0_i32 = arith.constant 0 : i32
    %c0_i32_0 = arith.constant 0 : i32
    %c0_i32_1 = arith.constant 0 : i32
    return %c0_i32, %c0_i32_0 : i32, i32
  }
  func.func @transform_7(%arg0: i32, %arg1: i32) -> (i32, i32) {
    %c0_i32 = arith.constant 0 : i32
    %c0_i32_0 = arith.constant 0 : i32
    %c0_i32_1 = arith.constant 0 : i32
    return %c0_i32, %c0_i32_0 : i32, i32
  }
  func.func @transform_8(%arg0: i32, %arg1: i32) -> (i32, i32) {
    %c0_i32 = arith.constant 0 : i32
    %c0_i32_0 = arith.constant 0 : i32
    %c0_i32_1 = arith.constant 0 : i32
    return %c0_i32, %c0_i32_0 : i32, i32
  }
  func.func @transform_9(%arg0: i32, %arg1: i32) -> (i32, i32) {
    %c0_i32 = arith.constant 0 : i32
    %c0_i32_0 = arith.constant 0 : i32
    %c0_i32_1 = arith.constant 0 : i32
    return %c0_i32, %c0_i32_0 : i32, i32
  }
  func.func @transform_10(%arg0: i32, %arg1: i32) -> (i32, i32) {
    %c0_i32 = arith.constant 0 : i32
    %c0_i32_0 = arith.constant 0 : i32
    %c0_i32_1 = arith.constant 0 : i32
    return %c0_i32, %c0_i32_0 : i32, i32
  }
  func.func @transform_11(%arg0: i32, %arg1: i32) -> (i32, i32) {
    %c0_i32 = arith.constant 0 : i32
    %c0_i32_0 = arith.constant 0 : i32
    %c0_i32_1 = arith.constant 0 : i32
    return %c0_i32, %c0_i32_0 : i32, i32
  }
  func.func @transform_12(%arg0: i32, %arg1: i32) -> (i32, i32) {
    %c0_i32 = arith.constant 0 : i32
    %c0_i32_0 = arith.constant 0 : i32
    %c0_i32_1 = arith.constant 0 : i32
    return %c0_i32, %c0_i32_0 : i32, i32
  }
  func.func @transform_13(%arg0: i32, %arg1: i32) -> (i32, i32) {
    %c0_i32 = arith.constant 0 : i32
    %c0_i32_0 = arith.constant 0 : i32
    %c0_i32_1 = arith.constant 0 : i32
    return %c0_i32, %c0_i32_0 : i32, i32
  }
  func.func @transform_14(%arg0: i32, %arg1: i32) -> (i32, i32) {
    %c0_i32 = arith.constant 0 : i32
    %c0_i32_0 = arith.constant 0 : i32
    %c0_i32_1 = arith.constant 0 : i32
    return %c0_i32, %c0_i32_0 : i32, i32
  }
  func.func @transform_15(%arg0: i32, %arg1: i32) -> (i32, i32) {
    %c0_i32 = arith.constant 0 : i32
    %c0_i32_0 = arith.constant 0 : i32
    %c0_i32_1 = arith.constant 0 : i32
    return %c0_i32, %c0_i32_0 : i32, i32
  }
  func.func @transform_16(%arg0: i32, %arg1: i32) -> (i32, i32) {
    %c0_i32 = arith.constant 0 : i32
    %c0_i32_0 = arith.constant 0 : i32
    %c0_i32_1 = arith.constant 0 : i32
    return %c0_i32, %c0_i32_0 : i32, i32
  }
  func.func @transform_17(%arg0: i32, %arg1: i32) -> (i32, i32) {
    %c0_i32 = arith.constant 0 : i32
    %c0_i32_0 = arith.constant 0 : i32
    %c0_i32_1 = arith.constant 0 : i32
    return %c0_i32, %c0_i32_0 : i32, i32
  }
  func.func @transform_18(%arg0: i32, %arg1: i32) -> (i32, i32, i32) {
    %c0_i32 = arith.constant 0 : i32
    %c0_i32_0 = arith.constant 0 : i32
    return %arg0, %arg1, %c0_i32 : i32, i32, i32
  }
}

module attributes {stable_mosaic.version = 11 : i64} {
  func.func @_encoder_layer_kernel(%arg0: i32, %arg1: i32, %arg2: memref<1x8x32xf32, #tpu.memory_space<vmem>>, %arg3: memref<1x1x8xf32, #tpu.memory_space<vmem>>, %arg4: memref<1x32xf32, #tpu.memory_space<vmem>>, %arg5: memref<1x32xf32, #tpu.memory_space<vmem>>, %arg6: memref<32x32xf32, #tpu.memory_space<vmem>>, %arg7: memref<1x32xf32, #tpu.memory_space<vmem>>, %arg8: memref<32x64xf32, #tpu.memory_space<vmem>>, %arg9: memref<1x64xf32, #tpu.memory_space<vmem>>, %arg10: memref<32x32xf32, #tpu.memory_space<vmem>>, %arg11: memref<1x32xf32, #tpu.memory_space<vmem>>, %arg12: memref<1x32xf32, #tpu.memory_space<vmem>>, %arg13: memref<1x32xf32, #tpu.memory_space<vmem>>, %arg14: memref<32x64xf32, #tpu.memory_space<vmem>>, %arg15: memref<1x64xf32, #tpu.memory_space<vmem>>, %arg16: memref<64x32xf32, #tpu.memory_space<vmem>>, %arg17: memref<1x32xf32, #tpu.memory_space<vmem>>, %arg18: memref<1x32xf32, #tpu.memory_space<vmem>>, %arg19: memref<1x32xf32, #tpu.memory_space<vmem>>, %arg20: memref<1x8x32xf32, #tpu.memory_space<vmem>>, %arg21: memref<8x64xf32, #tpu.memory_space<vmem>>, %arg22: memref<8x32xf32, #tpu.memory_space<vmem>>) attributes {dimension_semantics = [#tpu.dimension_semantics<parallel>, #tpu.dimension_semantics<arbitrary>], iteration_bounds = array<i64: 2, 1>, scalar_prefetch = 0 : i64, scratch_operands = 2 : i64, tpu.core_type = #tpu.core_type<tc>, window_params = [{transform_indices = @transform_0, window_bounds = array<i64: 1, 8, 32>}, {transform_indices = @transform_1, window_bounds = array<i64: 1, 1, 8>}, {pipeline_mode = #tpu.pipeline_mode<synchronous>, transform_indices = @transform_2, window_bounds = array<i64: 1, 32>}, {pipeline_mode = #tpu.pipeline_mode<synchronous>, transform_indices = @transform_3, window_bounds = array<i64: 1, 32>}, {pipeline_mode = #tpu.pipeline_mode<synchronous>, transform_indices = @transform_4, window_bounds = array<i64: 32, 32>}, {pipeline_mode = #tpu.pipeline_mode<synchronous>, transform_indices = @transform_5, window_bounds = array<i64: 1, 32>}, {pipeline_mode = #tpu.pipeline_mode<synchronous>, transform_indices = @transform_6, window_bounds = array<i64: 32, 64>}, {pipeline_mode = #tpu.pipeline_mode<synchronous>, transform_indices = @transform_7, window_bounds = array<i64: 1, 64>}, {pipeline_mode = #tpu.pipeline_mode<synchronous>, transform_indices = @transform_8, window_bounds = array<i64: 32, 32>}, {pipeline_mode = #tpu.pipeline_mode<synchronous>, transform_indices = @transform_9, window_bounds = array<i64: 1, 32>}, {pipeline_mode = #tpu.pipeline_mode<synchronous>, transform_indices = @transform_10, window_bounds = array<i64: 1, 32>}, {pipeline_mode = #tpu.pipeline_mode<synchronous>, transform_indices = @transform_11, window_bounds = array<i64: 1, 32>}, {pipeline_mode = #tpu.pipeline_mode<synchronous>, transform_indices = @transform_12, window_bounds = array<i64: 32, 64>}, {pipeline_mode = #tpu.pipeline_mode<synchronous>, transform_indices = @transform_13, window_bounds = array<i64: 1, 64>}, {pipeline_mode = #tpu.pipeline_mode<synchronous>, transform_indices = @transform_14, window_bounds = array<i64: 64, 32>}, {pipeline_mode = #tpu.pipeline_mode<synchronous>, transform_indices = @transform_15, window_bounds = array<i64: 1, 32>}, {pipeline_mode = #tpu.pipeline_mode<synchronous>, transform_indices = @transform_16, window_bounds = array<i64: 1, 32>}, {pipeline_mode = #tpu.pipeline_mode<synchronous>, transform_indices = @transform_17, window_bounds = array<i64: 1, 32>}, {transform_indices = @transform_18, window_bounds = array<i64: 1, 8, 32>}]} {
    %c0_i32 = arith.constant 0 : i32
    %0 = arith.cmpi eq, %arg1, %c0_i32 : i32
    %1 = arith.extui %0 : i1 to i32
    %c0_i32_0 = arith.constant 0 : i32
    %2 = arith.cmpi ne, %1, %c0_i32_0 : i32
    scf.if %2 {
      %c0_85 = arith.constant 0 : index
      %c0_86 = arith.constant 0 : index
      %c0_87 = arith.constant 0 : index
      %187 = vector.load %arg2[%c0_85, %c0_86, %c0_87] : memref<1x8x32xf32, #tpu.memory_space<vmem>>, vector<1x8x32xf32>
      %188 = vector.shape_cast %187 : vector<1x8x32xf32> to vector<8x32xf32>
      %c0_88 = arith.constant 0 : index
      %c0_89 = arith.constant 0 : index
      %189 = vector.load %arg4[%c0_88, %c0_89] : memref<1x32xf32, #tpu.memory_space<vmem>>, vector<1x32xf32>
      %c0_90 = arith.constant 0 : index
      %c0_91 = arith.constant 0 : index
      %190 = vector.load %arg5[%c0_90, %c0_91] : memref<1x32xf32, #tpu.memory_space<vmem>>, vector<1x32xf32>
      %cst_92 = arith.constant dense<0.000000e+00> : vector<8xf32>
      %191 = vector.multi_reduction <add>, %188, %cst_92 [1] : vector<8x32xf32> to vector<8xf32>
      %192 = vector.shape_cast %191 : vector<8xf32> to vector<8x1xf32>
      %cst_93 = arith.constant 3.200000e+01 : f32
      %193 = vector.broadcast %cst_93 : f32 to vector<8x1xf32>
      %194 = arith.divf %192, %193 : vector<8x1xf32>
      %195 = vector.broadcast %194 : vector<8x1xf32> to vector<8x32xf32>
      %196 = arith.subf %188, %195 : vector<8x32xf32>
      %197 = arith.mulf %196, %196 : vector<8x32xf32>
      %cst_94 = arith.constant dense<0.000000e+00> : vector<8xf32>
      %198 = vector.multi_reduction <add>, %197, %cst_94 [1] : vector<8x32xf32> to vector<8xf32>
      %199 = vector.shape_cast %198 : vector<8xf32> to vector<8x1xf32>
      %cst_95 = arith.constant 3.100000e+01 : f32
      %200 = vector.broadcast %cst_95 : f32 to vector<8x1xf32>
      %201 = arith.divf %199, %200 : vector<8x1xf32>
      %202 = vector.broadcast %189 : vector<1x32xf32> to vector<8x32xf32>
      %203 = arith.mulf %202, %196 : vector<8x32xf32>
      %204 = math.sqrt %201 : vector<8x1xf32>
      %cst_96 = arith.constant 9.99999997E-7 : f32
      %205 = vector.broadcast %cst_96 : f32 to vector<8x1xf32>
      %206 = arith.addf %204, %205 : vector<8x1xf32>
      %207 = vector.broadcast %206 : vector<8x1xf32> to vector<8x32xf32>
      %208 = arith.divf %203, %207 : vector<8x32xf32>
      %209 = vector.broadcast %190 : vector<1x32xf32> to vector<8x32xf32>
      %210 = arith.addf %208, %209 : vector<8x32xf32>
      %c0_97 = arith.constant 0 : index
      %c0_98 = arith.constant 0 : index
      %211 = vector.load %arg8[%c0_97, %c0_98] : memref<32x64xf32, #tpu.memory_space<vmem>>, vector<32x64xf32>
      %cst_99 = arith.constant dense<0.000000e+00> : vector<8x64xf32>
      %212 = tpu.matmul %210, %211, %cst_99 {dimension_numbers = #tpu.dot_dimension_numbers<[1], [0], [0], [1], [0, 0, 1, 1], [], []>} : vector<8x32xf32>, vector<32x64xf32>, vector<8x64xf32> -> vector<8x64xf32>
      %c0_100 = arith.constant 0 : index
      %c0_101 = arith.constant 0 : index
      %213 = vector.load %arg9[%c0_100, %c0_101] : memref<1x64xf32, #tpu.memory_space<vmem>>, vector<1x64xf32>
      %214 = vector.broadcast %213 : vector<1x64xf32> to vector<8x64xf32>
      %215 = arith.addf %212, %214 : vector<8x64xf32>
      %c0_102 = arith.constant 0 : index
      %c0_103 = arith.constant 0 : index
      %216 = vector.load %arg21[%c0_102, %c0_103] : memref<8x64xf32, #tpu.memory_space<vmem>>, vector<8x64xf32>
      tpu.vector_store %arg21[%c0_102, %c0_103], %215 {strides = array<i32>} : memref<8x64xf32, #tpu.memory_space<vmem>>, vector<8x64xf32>,
    } else {
    }
    %c8_i32 = arith.constant 8 : i32
    %3 = arith.muli %arg1, %c8_i32 : i32
    %4 = tpu.assume_multiple %3, 8 : i32
    %c0 = arith.constant 0 : index
    %5 = arith.index_cast %4 : i32 to index
    %c0_1 = arith.constant 0 : index
    %6 = vector.load %arg2[%c0, %5, %c0_1] : memref<1x8x32xf32, #tpu.memory_space<vmem>>, vector<1x8x32xf32>
    %7 = vector.shape_cast %6 : vector<1x8x32xf32> to vector<8x32xf32>
    %c0_2 = arith.constant 0 : index
    %c0_3 = arith.constant 0 : index
    %8 = vector.load %arg4[%c0_2, %c0_3] : memref<1x32xf32, #tpu.memory_space<vmem>>, vector<1x32xf32>
    %c0_4 = arith.constant 0 : index
    %c0_5 = arith.constant 0 : index
    %9 = vector.load %arg5[%c0_4, %c0_5] : memref<1x32xf32, #tpu.memory_space<vmem>>, vector<1x32xf32>
    %cst = arith.constant dense<0.000000e+00> : vector<8xf32>
    %10 = vector.multi_reduction <add>, %7, %cst [1] : vector<8x32xf32> to vector<8xf32>
    %11 = vector.shape_cast %10 : vector<8xf32> to vector<8x1xf32>
    %cst_6 = arith.constant 3.200000e+01 : f32
    %12 = vector.broadcast %cst_6 : f32 to vector<8x1xf32>
    %13 = arith.divf %11, %12 : vector<8x1xf32>
    %14 = vector.broadcast %13 : vector<8x1xf32> to vector<8x32xf32>
    %15 = arith.subf %7, %14 : vector<8x32xf32>
    %16 = arith.mulf %15, %15 : vector<8x32xf32>
    %cst_7 = arith.constant dense<0.000000e+00> : vector<8xf32>
    %17 = vector.multi_reduction <add>, %16, %cst_7 [1] : vector<8x32xf32> to vector<8xf32>
    %18 = vector.shape_cast %17 : vector<8xf32> to vector<8x1xf32>
    %cst_8 = arith.constant 3.100000e+01 : f32
    %19 = vector.broadcast %cst_8 : f32 to vector<8x1xf32>
    %20 = arith.divf %18, %19 : vector<8x1xf32>
    %21 = vector.broadcast %8 : vector<1x32xf32> to vector<8x32xf32>
    %22 = arith.mulf %21, %15 : vector<8x32xf32>
    %23 = math.sqrt %20 : vector<8x1xf32>
    %cst_9 = arith.constant 9.99999997E-7 : f32
    %24 = vector.broadcast %cst_9 : f32 to vector<8x1xf32>
    %25 = arith.addf %23, %24 : vector<8x1xf32>
    %26 = vector.broadcast %25 : vector<8x1xf32> to vector<8x32xf32>
    %27 = arith.divf %22, %26 : vector<8x32xf32>
    %28 = vector.broadcast %9 : vector<1x32xf32> to vector<8x32xf32>
    %29 = arith.addf %27, %28 : vector<8x32xf32>
    %c0_10 = arith.constant 0 : index
    %c0_11 = arith.constant 0 : index
    %30 = vector.load %arg6[%c0_10, %c0_11] : memref<32x32xf32, #tpu.memory_space<vmem>>, vector<32x32xf32>
    %cst_12 = arith.constant dense<0.000000e+00> : vector<8x32xf32>
    %31 = tpu.matmul %29, %30, %cst_12 {dimension_numbers = #tpu.dot_dimension_numbers<[1], [0], [0], [1], [0, 0, 1, 1], [], []>} : vector<8x32xf32>, vector<32x32xf32>, vector<8x32xf32> -> vector<8x32xf32>
    %c0_13 = arith.constant 0 : index
    %c0_14 = arith.constant 0 : index
    %32 = vector.load %arg7[%c0_13, %c0_14] : memref<1x32xf32, #tpu.memory_space<vmem>>, vector<1x32xf32>
    %33 = vector.broadcast %32 : vector<1x32xf32> to vector<8x32xf32>
    %34 = arith.addf %31, %33 : vector<8x32xf32>
    %c0_15 = arith.constant 0 : index
    %c0_16 = arith.constant 0 : index
    %35 = vector.load %arg21[%c0_15, %c0_16] : memref<8x64xf32, #tpu.memory_space<vmem>>, vector<8x64xf32>
    %c0_17 = arith.constant 0 : index
    %c0_18 = arith.constant 0 : index
    %c0_19 = arith.constant 0 : index
    %36 = vector.load %arg3[%c0_17, %c0_18, %c0_19] : memref<1x1x8xf32, #tpu.memory_space<vmem>>, vector<1x1x8xf32>
    %37 = vector.shape_cast %36 : vector<1x1x8xf32> to vector<1x8xf32>
    %cst_20 = arith.constant 0.000000e+00 : f32
    %38 = vector.broadcast %cst_20 : f32 to vector<1x8xf32>
    %39 = arith.cmpf oeq, %37, %38 : vector<1x8xf32>
    %40 = vector.extract_strided_slice %34 {offsets = [0, 0], sizes = [8, 8], strides = [1, 1]} : vector<8x32xf32> to vector<8x8xf32>
    %41 = vector.extract_strided_slice %35 {offsets = [0, 0], sizes = [8, 8], strides = [1, 1]} : vector<8x64xf32> to vector<8x8xf32>
    %42 = vector.extract_strided_slice %35 {offsets = [0, 32], sizes = [8, 8], strides = [1, 1]} : vector<8x64xf32> to vector<8x8xf32>
    %cst_21 = arith.constant dense<0.000000e+00> : vector<8x8xf32>
    %43 = tpu.matmul %40, %41, %cst_21 {dimension_numbers = #tpu.dot_dimension_numbers<[1], [1], [0], [0], [0, 0, 1, 0], [], []>} : vector<8x8xf32>, vector<8x8xf32>, vector<8x8xf32> -> vector<8x8xf32>
    %cst_22 = arith.constant -1.000000e+09 : f32
    %44 = vector.shape_cast %39 : vector<1x8xi1> to vector<1x8xi1>
    %45 = vector.broadcast %44 : vector<1x8xi1> to vector<8x8xi1>
    %46 = vector.broadcast %cst_22 : f32 to vector<8x8xf32>
    %47 = arith.select %45, %46, %43 : vector<8x8xi1>, vector<8x8xf32>
    %cst_23 = arith.constant dense<0xFF800000> : vector<8xf32>
    %48 = vector.multi_reduction <maximumf>, %47, %cst_23 [1] : vector<8x8xf32> to vector<8xf32>
    %49 = vector.shape_cast %48 : vector<8xf32> to vector<8x1xf32>
    %50 = vector.broadcast %49 : vector<8x1xf32> to vector<8x8xf32>
    %51 = arith.subf %47, %50 : vector<8x8xf32>
    %52 = math.exp %51 : vector<8x8xf32>
    %cst_24 = arith.constant dense<0.000000e+00> : vector<8xf32>
    %53 = vector.multi_reduction <add>, %52, %cst_24 [1] : vector<8x8xf32> to vector<8xf32>
    %54 = vector.shape_cast %53 : vector<8xf32> to vector<8x1xf32>
    %55 = tpu.reciprocal %54 {approx = true} : vector<8x1xf32> -> vector<8x1xf32>
    %56 = vector.broadcast %55 : vector<8x1xf32> to vector<8x8xf32>
    %57 = arith.mulf %52, %56 : vector<8x8xf32>
    %cst_25 = arith.constant dense<0.000000e+00> : vector<8x8xf32>
    %58 = tpu.matmul %57, %42, %cst_25 {dimension_numbers = #tpu.dot_dimension_numbers<[1], [0], [0], [1], [0, 0, 1, 1], [], []>} : vector<8x8xf32>, vector<8x8xf32>, vector<8x8xf32> -> vector<8x8xf32>
    %c0_26 = arith.constant 0 : index
    %c0_27 = arith.constant 0 : index
    %59 = vector.load %arg22[%c0_26, %c0_27] : memref<8x32xf32, #tpu.memory_space<vmem>>, vector<8x8xf32>
    tpu.vector_store %arg22[%c0_26, %c0_27], %58 {strides = array<i32>} : memref<8x32xf32, #tpu.memory_space<vmem>>, vector<8x8xf32>,
    %60 = vector.extract_strided_slice %34 {offsets = [0, 8], sizes = [8, 8], strides = [1, 1]} : vector<8x32xf32> to vector<8x8xf32>
    %61 = vector.extract_strided_slice %35 {offsets = [0, 8], sizes = [8, 8], strides = [1, 1]} : vector<8x64xf32> to vector<8x8xf32>
    %62 = vector.extract_strided_slice %35 {offsets = [0, 40], sizes = [8, 8], strides = [1, 1]} : vector<8x64xf32> to vector<8x8xf32>
    %cst_28 = arith.constant dense<0.000000e+00> : vector<8x8xf32>
    %63 = tpu.matmul %60, %61, %cst_28 {dimension_numbers = #tpu.dot_dimension_numbers<[1], [1], [0], [0], [0, 0, 1, 0], [], []>} : vector<8x8xf32>, vector<8x8xf32>, vector<8x8xf32> -> vector<8x8xf32>
    %cst_29 = arith.constant -1.000000e+09 : f32
    %64 = vector.shape_cast %39 : vector<1x8xi1> to vector<1x8xi1>
    %65 = vector.broadcast %64 : vector<1x8xi1> to vector<8x8xi1>
    %66 = vector.broadcast %cst_29 : f32 to vector<8x8xf32>
    %67 = arith.select %65, %66, %63 : vector<8x8xi1>, vector<8x8xf32>
    %cst_30 = arith.constant dense<0xFF800000> : vector<8xf32>
    %68 = vector.multi_reduction <maximumf>, %67, %cst_30 [1] : vector<8x8xf32> to vector<8xf32>
    %69 = vector.shape_cast %68 : vector<8xf32> to vector<8x1xf32>
    %70 = vector.broadcast %69 : vector<8x1xf32> to vector<8x8xf32>
    %71 = arith.subf %67, %70 : vector<8x8xf32>
    %72 = math.exp %71 : vector<8x8xf32>
    %cst_31 = arith.constant dense<0.000000e+00> : vector<8xf32>
    %73 = vector.multi_reduction <add>, %72, %cst_31 [1] : vector<8x8xf32> to vector<8xf32>
    %74 = vector.shape_cast %73 : vector<8xf32> to vector<8x1xf32>
    %75 = tpu.reciprocal %74 {approx = true} : vector<8x1xf32> -> vector<8x1xf32>
    %76 = vector.broadcast %75 : vector<8x1xf32> to vector<8x8xf32>
    %77 = arith.mulf %72, %76 : vector<8x8xf32>
    %cst_32 = arith.constant dense<0.000000e+00> : vector<8x8xf32>
    %78 = tpu.matmul %77, %62, %cst_32 {dimension_numbers = #tpu.dot_dimension_numbers<[1], [0], [0], [1], [0, 0, 1, 1], [], []>} : vector<8x8xf32>, vector<8x8xf32>, vector<8x8xf32> -> vector<8x8xf32>
    %c0_33 = arith.constant 0 : index
    %c8 = arith.constant 8 : index
    %79 = vector.load %arg22[%c0_33, %c8] : memref<8x32xf32, #tpu.memory_space<vmem>>, vector<8x8xf32>
    tpu.vector_store %arg22[%c0_33, %c8], %78 {strides = array<i32>} : memref<8x32xf32, #tpu.memory_space<vmem>>, vector<8x8xf32>,
    %80 = vector.extract_strided_slice %34 {offsets = [0, 16], sizes = [8, 8], strides = [1, 1]} : vector<8x32xf32> to vector<8x8xf32>
    %81 = vector.extract_strided_slice %35 {offsets = [0, 16], sizes = [8, 8], strides = [1, 1]} : vector<8x64xf32> to vector<8x8xf32>
    %82 = vector.extract_strided_slice %35 {offsets = [0, 48], sizes = [8, 8], strides = [1, 1]} : vector<8x64xf32> to vector<8x8xf32>
    %cst_34 = arith.constant dense<0.000000e+00> : vector<8x8xf32>
    %83 = tpu.matmul %80, %81, %cst_34 {dimension_numbers = #tpu.dot_dimension_numbers<[1], [1], [0], [0], [0, 0, 1, 0], [], []>} : vector<8x8xf32>, vector<8x8xf32>, vector<8x8xf32> -> vector<8x8xf32>
    %cst_35 = arith.constant -1.000000e+09 : f32
    %84 = vector.shape_cast %39 : vector<1x8xi1> to vector<1x8xi1>
    %85 = vector.broadcast %84 : vector<1x8xi1> to vector<8x8xi1>
    %86 = vector.broadcast %cst_35 : f32 to vector<8x8xf32>
    %87 = arith.select %85, %86, %83 : vector<8x8xi1>, vector<8x8xf32>
    %cst_36 = arith.constant dense<0xFF800000> : vector<8xf32>
    %88 = vector.multi_reduction <maximumf>, %87, %cst_36 [1] : vector<8x8xf32> to vector<8xf32>
    %89 = vector.shape_cast %88 : vector<8xf32> to vector<8x1xf32>
    %90 = vector.broadcast %89 : vector<8x1xf32> to vector<8x8xf32>
    %91 = arith.subf %87, %90 : vector<8x8xf32>
    %92 = math.exp %91 : vector<8x8xf32>
    %cst_37 = arith.constant dense<0.000000e+00> : vector<8xf32>
    %93 = vector.multi_reduction <add>, %92, %cst_37 [1] : vector<8x8xf32> to vector<8xf32>
    %94 = vector.shape_cast %93 : vector<8xf32> to vector<8x1xf32>
    %95 = tpu.reciprocal %94 {approx = true} : vector<8x1xf32> -> vector<8x1xf32>
    %96 = vector.broadcast %95 : vector<8x1xf32> to vector<8x8xf32>
    %97 = arith.mulf %92, %96 : vector<8x8xf32>
    %cst_38 = arith.constant dense<0.000000e+00> : vector<8x8xf32>
    %98 = tpu.matmul %97, %82, %cst_38 {dimension_numbers = #tpu.dot_dimension_numbers<[1], [0], [0], [1], [0, 0, 1, 1], [], []>} : vector<8x8xf32>, vector<8x8xf32>, vector<8x8xf32> -> vector<8x8xf32>
    %c0_39 = arith.constant 0 : index
    %c16 = arith.constant 16 : index
    %99 = vector.load %arg22[%c0_39, %c16] : memref<8x32xf32, #tpu.memory_space<vmem>>, vector<8x8xf32>
    tpu.vector_store %arg22[%c0_39, %c16], %98 {strides = array<i32>} : memref<8x32xf32, #tpu.memory_space<vmem>>, vector<8x8xf32>,
    %100 = vector.extract_strided_slice %34 {offsets = [0, 24], sizes = [8, 8], strides = [1, 1]} : vector<8x32xf32> to vector<8x8xf32>
    %101 = vector.extract_strided_slice %35 {offsets = [0, 24], sizes = [8, 8], strides = [1, 1]} : vector<8x64xf32> to vector<8x8xf32>
    %102 = vector.extract_strided_slice %35 {offsets = [0, 56], sizes = [8, 8], strides = [1, 1]} : vector<8x64xf32> to vector<8x8xf32>
    %cst_40 = arith.constant dense<0.000000e+00> : vector<8x8xf32>
    %103 = tpu.matmul %100, %101, %cst_40 {dimension_numbers = #tpu.dot_dimension_numbers<[1], [1], [0], [0], [0, 0, 1, 0], [], []>} : vector<8x8xf32>, vector<8x8xf32>, vector<8x8xf32> -> vector<8x8xf32>
    %cst_41 = arith.constant -1.000000e+09 : f32
    %104 = vector.shape_cast %39 : vector<1x8xi1> to vector<1x8xi1>
    %105 = vector.broadcast %104 : vector<1x8xi1> to vector<8x8xi1>
    %106 = vector.broadcast %cst_41 : f32 to vector<8x8xf32>
    %107 = arith.select %105, %106, %103 : vector<8x8xi1>, vector<8x8xf32>
    %cst_42 = arith.constant dense<0xFF800000> : vector<8xf32>
    %108 = vector.multi_reduction <maximumf>, %107, %cst_42 [1] : vector<8x8xf32> to vector<8xf32>
    %109 = vector.shape_cast %108 : vector<8xf32> to vector<8x1xf32>
    %110 = vector.broadcast %109 : vector<8x1xf32> to vector<8x8xf32>
    %111 = arith.subf %107, %110 : vector<8x8xf32>
    %112 = math.exp %111 : vector<8x8xf32>
    %cst_43 = arith.constant dense<0.000000e+00> : vector<8xf32>
    %113 = vector.multi_reduction <add>, %112, %cst_43 [1] : vector<8x8xf32> to vector<8xf32>
    %114 = vector.shape_cast %113 : vector<8xf32> to vector<8x1xf32>
    %115 = tpu.reciprocal %114 {approx = true} : vector<8x1xf32> -> vector<8x1xf32>
    %116 = vector.broadcast %115 : vector<8x1xf32> to vector<8x8xf32>
    %117 = arith.mulf %112, %116 : vector<8x8xf32>
    %cst_44 = arith.constant dense<0.000000e+00> : vector<8x8xf32>
    %118 = tpu.matmul %117, %102, %cst_44 {dimension_numbers = #tpu.dot_dimension_numbers<[1], [0], [0], [1], [0, 0, 1, 1], [], []>} : vector<8x8xf32>, vector<8x8xf32>, vector<8x8xf32> -> vector<8x8xf32>
    %c0_45 = arith.constant 0 : index
    %c24 = arith.constant 24 : index
    %119 = vector.load %arg22[%c0_45, %c24] : memref<8x32xf32, #tpu.memory_space<vmem>>, vector<8x8xf32>
    tpu.vector_store %arg22[%c0_45, %c24], %118 {strides = array<i32>} : memref<8x32xf32, #tpu.memory_space<vmem>>, vector<8x8xf32>,
    %c0_46 = arith.constant 0 : index
    %c0_47 = arith.constant 0 : index
    %120 = vector.load %arg22[%c0_46, %c0_47] : memref<8x32xf32, #tpu.memory_space<vmem>>, vector<8x32xf32>
    %c0_48 = arith.constant 0 : index
    %c0_49 = arith.constant 0 : index
    %121 = vector.load %arg10[%c0_48, %c0_49] : memref<32x32xf32, #tpu.memory_space<vmem>>, vector<32x32xf32>
    %cst_50 = arith.constant dense<0.000000e+00> : vector<8x32xf32>
    %122 = tpu.matmul %120, %121, %cst_50 {dimension_numbers = #tpu.dot_dimension_numbers<[1], [0], [0], [1], [0, 0, 1, 1], [], []>} : vector<8x32xf32>, vector<32x32xf32>, vector<8x32xf32> -> vector<8x32xf32>
    %c0_51 = arith.constant 0 : index
    %c0_52 = arith.constant 0 : index
    %123 = vector.load %arg11[%c0_51, %c0_52] : memref<1x32xf32, #tpu.memory_space<vmem>>, vector<1x32xf32>
    %124 = vector.broadcast %123 : vector<1x32xf32> to vector<8x32xf32>
    %125 = arith.addf %122, %124 : vector<8x32xf32>
    %126 = arith.addf %7, %125 : vector<8x32xf32>
    %c0_53 = arith.constant 0 : index
    %c0_54 = arith.constant 0 : index
    %127 = vector.load %arg12[%c0_53, %c0_54] : memref<1x32xf32, #tpu.memory_space<vmem>>, vector<1x32xf32>
    %c0_55 = arith.constant 0 : index
    %c0_56 = arith.constant 0 : index
    %128 = vector.load %arg13[%c0_55, %c0_56] : memref<1x32xf32, #tpu.memory_space<vmem>>, vector<1x32xf32>
    %cst_57 = arith.constant dense<0.000000e+00> : vector<8xf32>
    %129 = vector.multi_reduction <add>, %126, %cst_57 [1] : vector<8x32xf32> to vector<8xf32>
    %130 = vector.shape_cast %129 : vector<8xf32> to vector<8x1xf32>
    %cst_58 = arith.constant 3.200000e+01 : f32
    %131 = vector.broadcast %cst_58 : f32 to vector<8x1xf32>
    %132 = arith.divf %130, %131 : vector<8x1xf32>
    %133 = vector.broadcast %132 : vector<8x1xf32> to vector<8x32xf32>
    %134 = arith.subf %126, %133 : vector<8x32xf32>
    %135 = arith.mulf %134, %134 : vector<8x32xf32>
    %cst_59 = arith.constant dense<0.000000e+00> : vector<8xf32>
    %136 = vector.multi_reduction <add>, %135, %cst_59 [1] : vector<8x32xf32> to vector<8xf32>
    %137 = vector.shape_cast %136 : vector<8xf32> to vector<8x1xf32>
    %cst_60 = arith.constant 3.100000e+01 : f32
    %138 = vector.broadcast %cst_60 : f32 to vector<8x1xf32>
    %139 = arith.divf %137, %138 : vector<8x1xf32>
    %140 = vector.broadcast %127 : vector<1x32xf32> to vector<8x32xf32>
    %141 = arith.mulf %140, %134 : vector<8x32xf32>
    %142 = math.sqrt %139 : vector<8x1xf32>
    %cst_61 = arith.constant 9.99999997E-7 : f32
    %143 = vector.broadcast %cst_61 : f32 to vector<8x1xf32>
    %144 = arith.addf %142, %143 : vector<8x1xf32>
    %145 = vector.broadcast %144 : vector<8x1xf32> to vector<8x32xf32>
    %146 = arith.divf %141, %145 : vector<8x32xf32>
    %147 = vector.broadcast %128 : vector<1x32xf32> to vector<8x32xf32>
    %148 = arith.addf %146, %147 : vector<8x32xf32>
    %c0_62 = arith.constant 0 : index
    %c0_63 = arith.constant 0 : index
    %149 = vector.load %arg14[%c0_62, %c0_63] : memref<32x64xf32, #tpu.memory_space<vmem>>, vector<32x64xf32>
    %cst_64 = arith.constant dense<0.000000e+00> : vector<8x64xf32>
    %150 = tpu.matmul %148, %149, %cst_64 {dimension_numbers = #tpu.dot_dimension_numbers<[1], [0], [0], [1], [0, 0, 1, 1], [], []>} : vector<8x32xf32>, vector<32x64xf32>, vector<8x64xf32> -> vector<8x64xf32>
    %c0_65 = arith.constant 0 : index
    %c0_66 = arith.constant 0 : index
    %151 = vector.load %arg15[%c0_65, %c0_66] : memref<1x64xf32, #tpu.memory_space<vmem>>, vector<1x64xf32>
    %152 = vector.broadcast %151 : vector<1x64xf32> to vector<8x64xf32>
    %153 = arith.addf %150, %152 : vector<8x64xf32>
    %cst_67 = arith.constant 0.000000e+00 : f32
    %154 = vector.broadcast %cst_67 : f32 to vector<8x64xf32>
    %155 = arith.maximumf %153, %154 : vector<8x64xf32>
    %c0_68 = arith.constant 0 : index
    %c0_69 = arith.constant 0 : index
    %156 = vector.load %arg16[%c0_68, %c0_69] : memref<64x32xf32, #tpu.memory_space<vmem>>, vector<64x32xf32>
    %cst_70 = arith.constant dense<0.000000e+00> : vector<8x32xf32>
    %157 = tpu.matmul %155, %156, %cst_70 {dimension_numbers = #tpu.dot_dimension_numbers<[1], [0], [0], [1], [0, 0, 1, 1], [], []>} : vector<8x64xf32>, vector<64x32xf32>, vector<8x32xf32> -> vector<8x32xf32>
    %c0_71 = arith.constant 0 : index
    %c0_72 = arith.constant 0 : index
    %158 = vector.load %arg17[%c0_71, %c0_72] : memref<1x32xf32, #tpu.memory_space<vmem>>, vector<1x32xf32>
    %159 = vector.broadcast %158 : vector<1x32xf32> to vector<8x32xf32>
    %160 = arith.addf %157, %159 : vector<8x32xf32>
    %161 = arith.addf %126, %160 : vector<8x32xf32>
    %c0_73 = arith.constant 0 : index
    %c0_74 = arith.constant 0 : index
    %162 = vector.load %arg18[%c0_73, %c0_74] : memref<1x32xf32, #tpu.memory_space<vmem>>, vector<1x32xf32>
    %c0_75 = arith.constant 0 : index
    %c0_76 = arith.constant 0 : index
    %163 = vector.load %arg19[%c0_75, %c0_76] : memref<1x32xf32, #tpu.memory_space<vmem>>, vector<1x32xf32>
    %cst_77 = arith.constant dense<0.000000e+00> : vector<8xf32>
    %164 = vector.multi_reduction <add>, %161, %cst_77 [1] : vector<8x32xf32> to vector<8xf32>
    %165 = vector.shape_cast %164 : vector<8xf32> to vector<8x1xf32>
    %cst_78 = arith.constant 3.200000e+01 : f32
    %166 = vector.broadcast %cst_78 : f32 to vector<8x1xf32>
    %167 = arith.divf %165, %166 : vector<8x1xf32>
    %168 = vector.broadcast %167 : vector<8x1xf32> to vector<8x32xf32>
    %169 = arith.subf %161, %168 : vector<8x32xf32>
    %170 = arith.mulf %169, %169 : vector<8x32xf32>
    %cst_79 = arith.constant dense<0.000000e+00> : vector<8xf32>
    %171 = vector.multi_reduction <add>, %170, %cst_79 [1] : vector<8x32xf32> to vector<8xf32>
    %172 = vector.shape_cast %171 : vector<8xf32> to vector<8x1xf32>
    %cst_80 = arith.constant 3.100000e+01 : f32
    %173 = vector.broadcast %cst_80 : f32 to vector<8x1xf32>
    %174 = arith.divf %172, %173 : vector<8x1xf32>
    %175 = vector.broadcast %162 : vector<1x32xf32> to vector<8x32xf32>
    %176 = arith.mulf %175, %169 : vector<8x32xf32>
    %177 = math.sqrt %174 : vector<8x1xf32>
    %cst_81 = arith.constant 9.99999997E-7 : f32
    %178 = vector.broadcast %cst_81 : f32 to vector<8x1xf32>
    %179 = arith.addf %177, %178 : vector<8x1xf32>
    %180 = vector.broadcast %179 : vector<8x1xf32> to vector<8x32xf32>
    %181 = arith.divf %176, %180 : vector<8x32xf32>
    %182 = vector.broadcast %163 : vector<1x32xf32> to vector<8x32xf32>
    %183 = arith.addf %181, %182 : vector<8x32xf32>
    %c0_82 = arith.constant 0 : index
    %c0_83 = arith.constant 0 : index
    %c0_84 = arith.constant 0 : index
    %184 = vector.load %arg20[%c0_82, %c0_83, %c0_84] : memref<1x8x32xf32, #tpu.memory_space<vmem>>, vector<1x8x32xf32>
    %185 = vector.shape_cast %184 : vector<1x8x32xf32> to vector<8x32xf32>
    %186 = vector.shape_cast %183 : vector<8x32xf32> to vector<1x8x32xf32>
    tpu.vector_store %arg20[%c0_82, %c0_83, %c0_84], %186 {strides = array<i32>} : memref<1x8x32xf32, #tpu.memory_space<vmem>>, vector<1x8x32xf32>,
    return
  }
  func.func @transform_0(%arg0: i32, %arg1: i32) -> (i32, i32, i32) {
    %c0_i32 = arith.constant 0 : i32
    %c0_i32_0 = arith.constant 0 : i32
    %c0_i32_1 = arith.constant 0 : i32
    return %arg0, %c0_i32, %c0_i32_0 : i32, i32, i32
  }
  func.func @transform_1(%arg0: i32, %arg1: i32) -> (i32, i32, i32) {
    %c0_i32 = arith.constant 0 : i32
    %c0_i32_0 = arith.constant 0 : i32
    %c0_i32_1 = arith.constant 0 : i32
    return %arg0, %c0_i32, %c0_i32_0 : i32, i32, i32
  }
  func.func @transform_2(%arg0: i32, %arg1: i32) -> (i32, i32) {
    %c0_i32 = arith.constant 0 : i32
    %c0_i32_0 = arith.constant 0 : i32
    %c0_i32_1 = arith.constant 0 : i32
    return %c0_i32, %c0_i32_0 : i32, i32
  }
  func.func @transform_3(%arg0: i32, %arg1: i32) -> (i32, i32) {
    %c0_i32 = arith.constant 0 : i32
    %c0_i32_0 = arith.constant 0 : i32
    %c0_i32_1 = arith.constant 0 : i32
    return %c0_i32, %c0_i32_0 : i32, i32
  }
  func.func @transform_4(%arg0: i32, %arg1: i32) -> (i32, i32) {
    %c0_i32 = arith.constant 0 : i32
    %c0_i32_0 = arith.constant 0 : i32
    %c0_i32_1 = arith.constant 0 : i32
    return %c0_i32, %c0_i32_0 : i32, i32
  }
  func.func @transform_5(%arg0: i32, %arg1: i32) -> (i32, i32) {
    %c0_i32 = arith.constant 0 : i32
    %c0_i32_0 = arith.constant 0 : i32
    %c0_i32_1 = arith.constant 0 : i32
    return %c0_i32, %c0_i32_0 : i32, i32
  }
  func.func @transform_6(%arg0: i32, %arg1: i32) -> (i32, i32) {
    %c0_i32 = arith.constant 0 : i32
    %c0_i32_0 = arith.constant 0 : i32
    %c0_i32_1 = arith.constant 0 : i32
    return %c0_i32, %c0_i32_0 : i32, i32
  }
  func.func @transform_7(%arg0: i32, %arg1: i32) -> (i32, i32) {
    %c0_i32 = arith.constant 0 : i32
    %c0_i32_0 = arith.constant 0 : i32
    %c0_i32_1 = arith.constant 0 : i32
    return %c0_i32, %c0_i32_0 : i32, i32
  }
  func.func @transform_8(%arg0: i32, %arg1: i32) -> (i32, i32) {
    %c0_i32 = arith.constant 0 : i32
    %c0_i32_0 = arith.constant 0 : i32
    %c0_i32_1 = arith.constant 0 : i32
    return %c0_i32, %c0_i32_0 : i32, i32
  }
  func.func @transform_9(%arg0: i32, %arg1: i32) -> (i32, i32) {
    %c0_i32 = arith.constant 0 : i32
    %c0_i32_0 = arith.constant 0 : i32
    %c0_i32_1 = arith.constant 0 : i32
    return %c0_i32, %c0_i32_0 : i32, i32
  }
  func.func @transform_10(%arg0: i32, %arg1: i32) -> (i32, i32) {
    %c0_i32 = arith.constant 0 : i32
    %c0_i32_0 = arith.constant 0 : i32
    %c0_i32_1 = arith.constant 0 : i32
    return %c0_i32, %c0_i32_0 : i32, i32
  }
  func.func @transform_11(%arg0: i32, %arg1: i32) -> (i32, i32) {
    %c0_i32 = arith.constant 0 : i32
    %c0_i32_0 = arith.constant 0 : i32
    %c0_i32_1 = arith.constant 0 : i32
    return %c0_i32, %c0_i32_0 : i32, i32
  }
  func.func @transform_12(%arg0: i32, %arg1: i32) -> (i32, i32) {
    %c0_i32 = arith.constant 0 : i32
    %c0_i32_0 = arith.constant 0 : i32
    %c0_i32_1 = arith.constant 0 : i32
    return %c0_i32, %c0_i32_0 : i32, i32
  }
  func.func @transform_13(%arg0: i32, %arg1: i32) -> (i32, i32) {
    %c0_i32 = arith.constant 0 : i32
    %c0_i32_0 = arith.constant 0 : i32
    %c0_i32_1 = arith.constant 0 : i32
    return %c0_i32, %c0_i32_0 : i32, i32
  }
  func.func @transform_14(%arg0: i32, %arg1: i32) -> (i32, i32) {
    %c0_i32 = arith.constant 0 : i32
    %c0_i32_0 = arith.constant 0 : i32
    %c0_i32_1 = arith.constant 0 : i32
    return %c0_i32, %c0_i32_0 : i32, i32
  }
  func.func @transform_15(%arg0: i32, %arg1: i32) -> (i32, i32) {
    %c0_i32 = arith.constant 0 : i32
    %c0_i32_0 = arith.constant 0 : i32
    %c0_i32_1 = arith.constant 0 : i32
    return %c0_i32, %c0_i32_0 : i32, i32
  }
  func.func @transform_16(%arg0: i32, %arg1: i32) -> (i32, i32) {
    %c0_i32 = arith.constant 0 : i32
    %c0_i32_0 = arith.constant 0 : i32
    %c0_i32_1 = arith.constant 0 : i32
    return %c0_i32, %c0_i32_0 : i32, i32
  }
  func.func @transform_17(%arg0: i32, %arg1: i32) -> (i32, i32) {
    %c0_i32 = arith.constant 0 : i32
    %c0_i32_0 = arith.constant 0 : i32
    %c0_i32_1 = arith.constant 0 : i32
    return %c0_i32, %c0_i32_0 : i32, i32
  }
  func.func @transform_18(%arg0: i32, %arg1: i32) -> (i32, i32, i32) {
    %c0_i32 = arith.constant 0 : i32
    %c0_i32_0 = arith.constant 0 : i32
    return %arg0, %arg1, %c0_i32 : i32, i32, i32
  }
}

module attributes {stable_mosaic.version = 11 : i64} {
  func.func @_encoder_layer_kernel(%arg0: i32, %arg1: i32, %arg2: memref<1x8x32xf32, #tpu.memory_space<vmem>>, %arg3: memref<1x1x8xf32, #tpu.memory_space<vmem>>, %arg4: memref<1x32xf32, #tpu.memory_space<vmem>>, %arg5: memref<1x32xf32, #tpu.memory_space<vmem>>, %arg6: memref<32x32xf32, #tpu.memory_space<vmem>>, %arg7: memref<1x32xf32, #tpu.memory_space<vmem>>, %arg8: memref<32x64xf32, #tpu.memory_space<vmem>>, %arg9: memref<1x64xf32, #tpu.memory_space<vmem>>, %arg10: memref<32x32xf32, #tpu.memory_space<vmem>>, %arg11: memref<1x32xf32, #tpu.memory_space<vmem>>, %arg12: memref<1x32xf32, #tpu.memory_space<vmem>>, %arg13: memref<1x32xf32, #tpu.memory_space<vmem>>, %arg14: memref<32x64xf32, #tpu.memory_space<vmem>>, %arg15: memref<1x64xf32, #tpu.memory_space<vmem>>, %arg16: memref<64x32xf32, #tpu.memory_space<vmem>>, %arg17: memref<1x32xf32, #tpu.memory_space<vmem>>, %arg18: memref<1x32xf32, #tpu.memory_space<vmem>>, %arg19: memref<1x32xf32, #tpu.memory_space<vmem>>, %arg20: memref<1x8x32xf32, #tpu.memory_space<vmem>>, %arg21: memref<8x64xf32, #tpu.memory_space<vmem>>, %arg22: memref<8x32xf32, #tpu.memory_space<vmem>>) attributes {dimension_semantics = [#tpu.dimension_semantics<parallel>, #tpu.dimension_semantics<arbitrary>], iteration_bounds = array<i64: 2, 1>, scalar_prefetch = 0 : i64, scratch_operands = 2 : i64, tpu.core_type = #tpu.core_type<tc>, window_params = [{transform_indices = @transform_0, window_bounds = array<i64: 1, 8, 32>}, {transform_indices = @transform_1, window_bounds = array<i64: 1, 1, 8>}, {pipeline_mode = #tpu.pipeline_mode<synchronous>, transform_indices = @transform_2, window_bounds = array<i64: 1, 32>}, {pipeline_mode = #tpu.pipeline_mode<synchronous>, transform_indices = @transform_3, window_bounds = array<i64: 1, 32>}, {pipeline_mode = #tpu.pipeline_mode<synchronous>, transform_indices = @transform_4, window_bounds = array<i64: 32, 32>}, {pipeline_mode = #tpu.pipeline_mode<synchronous>, transform_indices = @transform_5, window_bounds = array<i64: 1, 32>}, {pipeline_mode = #tpu.pipeline_mode<synchronous>, transform_indices = @transform_6, window_bounds = array<i64: 32, 64>}, {pipeline_mode = #tpu.pipeline_mode<synchronous>, transform_indices = @transform_7, window_bounds = array<i64: 1, 64>}, {pipeline_mode = #tpu.pipeline_mode<synchronous>, transform_indices = @transform_8, window_bounds = array<i64: 32, 32>}, {pipeline_mode = #tpu.pipeline_mode<synchronous>, transform_indices = @transform_9, window_bounds = array<i64: 1, 32>}, {pipeline_mode = #tpu.pipeline_mode<synchronous>, transform_indices = @transform_10, window_bounds = array<i64: 1, 32>}, {pipeline_mode = #tpu.pipeline_mode<synchronous>, transform_indices = @transform_11, window_bounds = array<i64: 1, 32>}, {pipeline_mode = #tpu.pipeline_mode<synchronous>, transform_indices = @transform_12, window_bounds = array<i64: 32, 64>}, {pipeline_mode = #tpu.pipeline_mode<synchronous>, transform_indices = @transform_13, window_bounds = array<i64: 1, 64>}, {pipeline_mode = #tpu.pipeline_mode<synchronous>, transform_indices = @transform_14, window_bounds = array<i64: 64, 32>}, {pipeline_mode = #tpu.pipeline_mode<synchronous>, transform_indices = @transform_15, window_bounds = array<i64: 1, 32>}, {pipeline_mode = #tpu.pipeline_mode<synchronous>, transform_indices = @transform_16, window_bounds = array<i64: 1, 32>}, {pipeline_mode = #tpu.pipeline_mode<synchronous>, transform_indices = @transform_17, window_bounds = array<i64: 1, 32>}, {transform_indices = @transform_18, window_bounds = array<i64: 1, 8, 32>}]} {
    %c0_i32 = arith.constant 0 : i32
    %0 = arith.cmpi eq, %arg1, %c0_i32 : i32
    %1 = arith.extui %0 : i1 to i32
    %c0_i32_0 = arith.constant 0 : i32
    %2 = arith.cmpi ne, %1, %c0_i32_0 : i32
    scf.if %2 {
      %c0_76 = arith.constant 0 : index
      %c0_77 = arith.constant 0 : index
      %c0_78 = arith.constant 0 : index
      %165 = vector.load %arg2[%c0_76, %c0_77, %c0_78] : memref<1x8x32xf32, #tpu.memory_space<vmem>>, vector<1x8x32xf32>
      %166 = vector.shape_cast %165 : vector<1x8x32xf32> to vector<8x32xf32>
      %c0_79 = arith.constant 0 : index
      %c0_80 = arith.constant 0 : index
      %167 = vector.load %arg4[%c0_79, %c0_80] : memref<1x32xf32, #tpu.memory_space<vmem>>, vector<1x32xf32>
      %c0_81 = arith.constant 0 : index
      %c0_82 = arith.constant 0 : index
      %168 = vector.load %arg5[%c0_81, %c0_82] : memref<1x32xf32, #tpu.memory_space<vmem>>, vector<1x32xf32>
      %cst_83 = arith.constant dense<0.000000e+00> : vector<8xf32>
      %169 = vector.multi_reduction <add>, %166, %cst_83 [1] : vector<8x32xf32> to vector<8xf32>
      %170 = vector.shape_cast %169 : vector<8xf32> to vector<8x1xf32>
      %cst_84 = arith.constant 3.200000e+01 : f32
      %171 = vector.broadcast %cst_84 : f32 to vector<8x1xf32>
      %172 = arith.divf %170, %171 : vector<8x1xf32>
      %173 = vector.broadcast %172 : vector<8x1xf32> to vector<8x32xf32>
      %174 = arith.subf %166, %173 : vector<8x32xf32>
      %175 = arith.mulf %174, %174 : vector<8x32xf32>
      %cst_85 = arith.constant dense<0.000000e+00> : vector<8xf32>
      %176 = vector.multi_reduction <add>, %175, %cst_85 [1] : vector<8x32xf32> to vector<8xf32>
      %177 = vector.shape_cast %176 : vector<8xf32> to vector<8x1xf32>
      %cst_86 = arith.constant 3.100000e+01 : f32
      %178 = vector.broadcast %cst_86 : f32 to vector<8x1xf32>
      %179 = arith.divf %177, %178 : vector<8x1xf32>
      %180 = vector.broadcast %167 : vector<1x32xf32> to vector<8x32xf32>
      %181 = arith.mulf %180, %174 : vector<8x32xf32>
      %182 = math.sqrt %179 : vector<8x1xf32>
      %cst_87 = arith.constant 9.99999997E-7 : f32
      %183 = vector.broadcast %cst_87 : f32 to vector<8x1xf32>
      %184 = arith.addf %182, %183 : vector<8x1xf32>
      %185 = vector.broadcast %184 : vector<8x1xf32> to vector<8x32xf32>
      %186 = arith.divf %181, %185 : vector<8x32xf32>
      %187 = vector.broadcast %168 : vector<1x32xf32> to vector<8x32xf32>
      %188 = arith.addf %186, %187 : vector<8x32xf32>
      %c0_88 = arith.constant 0 : index
      %c0_89 = arith.constant 0 : index
      %189 = vector.load %arg8[%c0_88, %c0_89] : memref<32x64xf32, #tpu.memory_space<vmem>>, vector<32x64xf32>
      %cst_90 = arith.constant dense<0.000000e+00> : vector<8x64xf32>
      %190 = tpu.matmul %188, %189, %cst_90 {dimension_numbers = #tpu.dot_dimension_numbers<[1], [0], [0], [1], [0, 0, 1, 1], [], []>} : vector<8x32xf32>, vector<32x64xf32>, vector<8x64xf32> -> vector<8x64xf32>
      %c0_91 = arith.constant 0 : index
      %c0_92 = arith.constant 0 : index
      %191 = vector.load %arg9[%c0_91, %c0_92] : memref<1x64xf32, #tpu.memory_space<vmem>>, vector<1x64xf32>
      %192 = vector.broadcast %191 : vector<1x64xf32> to vector<8x64xf32>
      %193 = arith.addf %190, %192 : vector<8x64xf32>
      %c0_93 = arith.constant 0 : index
      %c0_94 = arith.constant 0 : index
      %194 = vector.load %arg21[%c0_93, %c0_94] : memref<8x64xf32, #tpu.memory_space<vmem>>, vector<8x64xf32>
      tpu.vector_store %arg21[%c0_93, %c0_94], %193 {strides = array<i32>} : memref<8x64xf32, #tpu.memory_space<vmem>>, vector<8x64xf32>,
    } else {
    }
    %c8_i32 = arith.constant 8 : i32
    %3 = arith.muli %arg1, %c8_i32 : i32
    %4 = tpu.assume_multiple %3, 8 : i32
    %c0 = arith.constant 0 : index
    %5 = arith.index_cast %4 : i32 to index
    %c0_1 = arith.constant 0 : index
    %6 = vector.load %arg2[%c0, %5, %c0_1] : memref<1x8x32xf32, #tpu.memory_space<vmem>>, vector<1x8x32xf32>
    %7 = vector.shape_cast %6 : vector<1x8x32xf32> to vector<8x32xf32>
    %c0_2 = arith.constant 0 : index
    %c0_3 = arith.constant 0 : index
    %8 = vector.load %arg4[%c0_2, %c0_3] : memref<1x32xf32, #tpu.memory_space<vmem>>, vector<1x32xf32>
    %c0_4 = arith.constant 0 : index
    %c0_5 = arith.constant 0 : index
    %9 = vector.load %arg5[%c0_4, %c0_5] : memref<1x32xf32, #tpu.memory_space<vmem>>, vector<1x32xf32>
    %cst = arith.constant dense<0.000000e+00> : vector<8xf32>
    %10 = vector.multi_reduction <add>, %7, %cst [1] : vector<8x32xf32> to vector<8xf32>
    %11 = vector.shape_cast %10 : vector<8xf32> to vector<8x1xf32>
    %cst_6 = arith.constant 3.200000e+01 : f32
    %12 = vector.broadcast %cst_6 : f32 to vector<8x1xf32>
    %13 = arith.divf %11, %12 : vector<8x1xf32>
    %14 = vector.broadcast %13 : vector<8x1xf32> to vector<8x32xf32>
    %15 = arith.subf %7, %14 : vector<8x32xf32>
    %16 = arith.mulf %15, %15 : vector<8x32xf32>
    %cst_7 = arith.constant dense<0.000000e+00> : vector<8xf32>
    %17 = vector.multi_reduction <add>, %16, %cst_7 [1] : vector<8x32xf32> to vector<8xf32>
    %18 = vector.shape_cast %17 : vector<8xf32> to vector<8x1xf32>
    %cst_8 = arith.constant 3.100000e+01 : f32
    %19 = vector.broadcast %cst_8 : f32 to vector<8x1xf32>
    %20 = arith.divf %18, %19 : vector<8x1xf32>
    %21 = vector.broadcast %8 : vector<1x32xf32> to vector<8x32xf32>
    %22 = arith.mulf %21, %15 : vector<8x32xf32>
    %23 = math.sqrt %20 : vector<8x1xf32>
    %cst_9 = arith.constant 9.99999997E-7 : f32
    %24 = vector.broadcast %cst_9 : f32 to vector<8x1xf32>
    %25 = arith.addf %23, %24 : vector<8x1xf32>
    %26 = vector.broadcast %25 : vector<8x1xf32> to vector<8x32xf32>
    %27 = arith.divf %22, %26 : vector<8x32xf32>
    %28 = vector.broadcast %9 : vector<1x32xf32> to vector<8x32xf32>
    %29 = arith.addf %27, %28 : vector<8x32xf32>
    %c0_10 = arith.constant 0 : index
    %c0_11 = arith.constant 0 : index
    %30 = vector.load %arg6[%c0_10, %c0_11] : memref<32x32xf32, #tpu.memory_space<vmem>>, vector<32x32xf32>
    %cst_12 = arith.constant dense<0.000000e+00> : vector<8x32xf32>
    %31 = tpu.matmul %29, %30, %cst_12 {dimension_numbers = #tpu.dot_dimension_numbers<[1], [0], [0], [1], [0, 0, 1, 1], [], []>} : vector<8x32xf32>, vector<32x32xf32>, vector<8x32xf32> -> vector<8x32xf32>
    %c0_13 = arith.constant 0 : index
    %c0_14 = arith.constant 0 : index
    %32 = vector.load %arg7[%c0_13, %c0_14] : memref<1x32xf32, #tpu.memory_space<vmem>>, vector<1x32xf32>
    %33 = vector.broadcast %32 : vector<1x32xf32> to vector<8x32xf32>
    %34 = arith.addf %31, %33 : vector<8x32xf32>
    %c0_15 = arith.constant 0 : index
    %c0_16 = arith.constant 0 : index
    %35 = vector.load %arg21[%c0_15, %c0_16] : memref<8x64xf32, #tpu.memory_space<vmem>>, vector<8x64xf32>
    %c0_17 = arith.constant 0 : index
    %c0_18 = arith.constant 0 : index
    %c0_19 = arith.constant 0 : index
    %36 = vector.load %arg3[%c0_17, %c0_18, %c0_19] : memref<1x1x8xf32, #tpu.memory_space<vmem>>, vector<1x1x8xf32>
    %37 = vector.shape_cast %36 : vector<1x1x8xf32> to vector<1x8xf32>
    %cst_20 = arith.constant 0.000000e+00 : f32
    %38 = vector.broadcast %cst_20 : f32 to vector<1x8xf32>
    %39 = arith.cmpf oeq, %37, %38 : vector<1x8xf32>
    %40 = vector.extract_strided_slice %34 {offsets = [0, 0], sizes = [8, 8], strides = [1, 1]} : vector<8x32xf32> to vector<8x8xf32>
    %41 = vector.extract_strided_slice %35 {offsets = [0, 0], sizes = [8, 8], strides = [1, 1]} : vector<8x64xf32> to vector<8x8xf32>
    %42 = vector.extract_strided_slice %35 {offsets = [0, 32], sizes = [8, 8], strides = [1, 1]} : vector<8x64xf32> to vector<8x8xf32>
    %cst_21 = arith.constant dense<0.000000e+00> : vector<8x8xf32>
    %43 = tpu.matmul %40, %41, %cst_21 {dimension_numbers = #tpu.dot_dimension_numbers<[1], [1], [0], [0], [0, 0, 1, 0], [], []>} : vector<8x8xf32>, vector<8x8xf32>, vector<8x8xf32> -> vector<8x8xf32>
    %cst_22 = arith.constant -1.000000e+09 : f32
    %44 = vector.shape_cast %39 : vector<1x8xi1> to vector<1x8xi1>
    %45 = vector.broadcast %44 : vector<1x8xi1> to vector<8x8xi1>
    %46 = vector.broadcast %cst_22 : f32 to vector<8x8xf32>
    %47 = arith.select %45, %46, %43 : vector<8x8xi1>, vector<8x8xf32>
    %cst_23 = arith.constant dense<0xFF800000> : vector<8xf32>
    %48 = vector.multi_reduction <maximumf>, %47, %cst_23 [1] : vector<8x8xf32> to vector<8xf32>
    %49 = vector.shape_cast %48 : vector<8xf32> to vector<8x1xf32>
    %50 = vector.broadcast %49 : vector<8x1xf32> to vector<8x8xf32>
    %51 = arith.subf %47, %50 : vector<8x8xf32>
    %52 = math.exp %51 : vector<8x8xf32>
    %cst_24 = arith.constant dense<0.000000e+00> : vector<8xf32>
    %53 = vector.multi_reduction <add>, %52, %cst_24 [1] : vector<8x8xf32> to vector<8xf32>
    %54 = vector.shape_cast %53 : vector<8xf32> to vector<8x1xf32>
    %55 = tpu.reciprocal %54 {approx = true} : vector<8x1xf32> -> vector<8x1xf32>
    %56 = vector.broadcast %55 : vector<8x1xf32> to vector<8x8xf32>
    %57 = arith.mulf %52, %56 : vector<8x8xf32>
    %cst_25 = arith.constant dense<0.000000e+00> : vector<8x8xf32>
    %58 = tpu.matmul %57, %42, %cst_25 {dimension_numbers = #tpu.dot_dimension_numbers<[1], [0], [0], [1], [0, 0, 1, 1], [], []>} : vector<8x8xf32>, vector<8x8xf32>, vector<8x8xf32> -> vector<8x8xf32>
    %c0_26 = arith.constant 0 : index
    %c0_27 = arith.constant 0 : index
    %59 = vector.load %arg22[%c0_26, %c0_27] : memref<8x32xf32, #tpu.memory_space<vmem>>, vector<8x8xf32>
    tpu.vector_store %arg22[%c0_26, %c0_27], %58 {strides = array<i32>} : memref<8x32xf32, #tpu.memory_space<vmem>>, vector<8x8xf32>,
    %60 = vector.extract_strided_slice %34 {offsets = [0, 8], sizes = [8, 8], strides = [1, 1]} : vector<8x32xf32> to vector<8x8xf32>
    %61 = vector.extract_strided_slice %35 {offsets = [0, 8], sizes = [8, 8], strides = [1, 1]} : vector<8x64xf32> to vector<8x8xf32>
    %62 = vector.extract_strided_slice %35 {offsets = [0, 40], sizes = [8, 8], strides = [1, 1]} : vector<8x64xf32> to vector<8x8xf32>
    %cst_28 = arith.constant dense<0.000000e+00> : vector<8x8xf32>
    %63 = tpu.matmul %60, %61, %cst_28 {dimension_numbers = #tpu.dot_dimension_numbers<[1], [1], [0], [0], [0, 0, 1, 0], [], []>} : vector<8x8xf32>, vector<8x8xf32>, vector<8x8xf32> -> vector<8x8xf32>
    %cst_29 = arith.constant -1.000000e+09 : f32
    %64 = vector.shape_cast %39 : vector<1x8xi1> to vector<1x8xi1>
    %65 = vector.broadcast %64 : vector<1x8xi1> to vector<8x8xi1>
    %66 = vector.broadcast %cst_29 : f32 to vector<8x8xf32>
    %67 = arith.select %65, %66, %63 : vector<8x8xi1>, vector<8x8xf32>
    %cst_30 = arith.constant dense<0xFF800000> : vector<8xf32>
    %68 = vector.multi_reduction <maximumf>, %67, %cst_30 [1] : vector<8x8xf32> to vector<8xf32>
    %69 = vector.shape_cast %68 : vector<8xf32> to vector<8x1xf32>
    %70 = vector.broadcast %69 : vector<8x1xf32> to vector<8x8xf32>
    %71 = arith.subf %67, %70 : vector<8x8xf32>
    %72 = math.exp %71 : vector<8x8xf32>
    %cst_31 = arith.constant dense<0.000000e+00> : vector<8xf32>
    %73 = vector.multi_reduction <add>, %72, %cst_31 [1] : vector<8x8xf32> to vector<8xf32>
    %74 = vector.shape_cast %73 : vector<8xf32> to vector<8x1xf32>
    %75 = tpu.reciprocal %74 {approx = true} : vector<8x1xf32> -> vector<8x1xf32>
    %76 = vector.broadcast %75 : vector<8x1xf32> to vector<8x8xf32>
    %77 = arith.mulf %72, %76 : vector<8x8xf32>
    %cst_32 = arith.constant dense<0.000000e+00> : vector<8x8xf32>
    %78 = tpu.matmul %77, %62, %cst_32 {dimension_numbers = #tpu.dot_dimension_numbers<[1], [0], [0], [1], [0, 0, 1, 1], [], []>} : vector<8x8xf32>, vector<8x8xf32>, vector<8x8xf32> -> vector<8x8xf32>
    %c0_33 = arith.constant 0 : index
    %c8 = arith.constant 8 : index
    %79 = vector.load %arg22[%c0_33, %c8] : memref<8x32xf32, #tpu.memory_space<vmem>>, vector<8x8xf32>
    tpu.vector_store %arg22[%c0_33, %c8], %78 {strides = array<i32>} : memref<8x32xf32, #tpu.memory_space<vmem>>, vector<8x8xf32>,
    %80 = vector.extract_strided_slice %34 {offsets = [0, 16], sizes = [8, 8], strides = [1, 1]} : vector<8x32xf32> to vector<8x8xf32>
    %81 = vector.extract_strided_slice %35 {offsets = [0, 16], sizes = [8, 8], strides = [1, 1]} : vector<8x64xf32> to vector<8x8xf32>
    %82 = vector.extract_strided_slice %35 {offsets = [0, 48], sizes = [8, 8], strides = [1, 1]} : vector<8x64xf32> to vector<8x8xf32>
    %cst_34 = arith.constant dense<0.000000e+00> : vector<8x8xf32>
    %83 = tpu.matmul %80, %81, %cst_34 {dimension_numbers = #tpu.dot_dimension_numbers<[1], [1], [0], [0], [0, 0, 1, 0], [], []>} : vector<8x8xf32>, vector<8x8xf32>, vector<8x8xf32> -> vector<8x8xf32>
    %cst_35 = arith.constant -1.000000e+09 : f32
    %84 = vector.shape_cast %39 : vector<1x8xi1> to vector<1x8xi1>
    %85 = vector.broadcast %84 : vector<1x8xi1> to vector<8x8xi1>
    %86 = vector.broadcast %cst_35 : f32 to vector<8x8xf32>
    %87 = arith.select %85, %86, %83 : vector<8x8xi1>, vector<8x8xf32>
    %cst_36 = arith.constant dense<0xFF800000> : vector<8xf32>
    %88 = vector.multi_reduction <maximumf>, %87, %cst_36 [1] : vector<8x8xf32> to vector<8xf32>
    %89 = vector.shape_cast %88 : vector<8xf32> to vector<8x1xf32>
    %90 = vector.broadcast %89 : vector<8x1xf32> to vector<8x8xf32>
    %91 = arith.subf %87, %90 : vector<8x8xf32>
    %92 = math.exp %91 : vector<8x8xf32>
    %cst_37 = arith.constant dense<0.000000e+00> : vector<8xf32>
    %93 = vector.multi_reduction <add>, %92, %cst_37 [1] : vector<8x8xf32> to vector<8xf32>
    %94 = vector.shape_cast %93 : vector<8xf32> to vector<8x1xf32>
    %95 = tpu.reciprocal %94 {approx = true} : vector<8x1xf32> -> vector<8x1xf32>
    %96 = vector.broadcast %95 : vector<8x1xf32> to vector<8x8xf32>
    %97 = arith.mulf %92, %96 : vector<8x8xf32>
    %cst_38 = arith.constant dense<0.000000e+00> : vector<8x8xf32>
    %98 = tpu.matmul %97, %82, %cst_38 {dimension_numbers = #tpu.dot_dimension_numbers<[1], [0], [0], [1], [0, 0, 1, 1], [], []>} : vector<8x8xf32>, vector<8x8xf32>, vector<8x8xf32> -> vector<8x8xf32>
    %c0_39 = arith.constant 0 : index
    %c16 = arith.constant 16 : index
    %99 = vector.load %arg22[%c0_39, %c16] : memref<8x32xf32, #tpu.memory_space<vmem>>, vector<8x8xf32>
    tpu.vector_store %arg22[%c0_39, %c16], %98 {strides = array<i32>} : memref<8x32xf32, #tpu.memory_space<vmem>>, vector<8x8xf32>,
    %100 = vector.extract_strided_slice %34 {offsets = [0, 24], sizes = [8, 8], strides = [1, 1]} : vector<8x32xf32> to vector<8x8xf32>
    %101 = vector.extract_strided_slice %35 {offsets = [0, 24], sizes = [8, 8], strides = [1, 1]} : vector<8x64xf32> to vector<8x8xf32>
    %102 = vector.extract_strided_slice %35 {offsets = [0, 56], sizes = [8, 8], strides = [1, 1]} : vector<8x64xf32> to vector<8x8xf32>
    %cst_40 = arith.constant dense<0.000000e+00> : vector<8x8xf32>
    %103 = tpu.matmul %100, %101, %cst_40 {dimension_numbers = #tpu.dot_dimension_numbers<[1], [1], [0], [0], [0, 0, 1, 0], [], []>} : vector<8x8xf32>, vector<8x8xf32>, vector<8x8xf32> -> vector<8x8xf32>
    %cst_41 = arith.constant -1.000000e+09 : f32
    %104 = vector.shape_cast %39 : vector<1x8xi1> to vector<1x8xi1>
    %105 = vector.broadcast %104 : vector<1x8xi1> to vector<8x8xi1>
    %106 = vector.broadcast %cst_41 : f32 to vector<8x8xf32>
    %107 = arith.select %105, %106, %103 : vector<8x8xi1>, vector<8x8xf32>
    %cst_42 = arith.constant dense<0xFF800000> : vector<8xf32>
    %108 = vector.multi_reduction <maximumf>, %107, %cst_42 [1] : vector<8x8xf32> to vector<8xf32>
    %109 = vector.shape_cast %108 : vector<8xf32> to vector<8x1xf32>
    %110 = vector.broadcast %109 : vector<8x1xf32> to vector<8x8xf32>
    %111 = arith.subf %107, %110 : vector<8x8xf32>
    %112 = math.exp %111 : vector<8x8xf32>
    %cst_43 = arith.constant dense<0.000000e+00> : vector<8xf32>
    %113 = vector.multi_reduction <add>, %112, %cst_43 [1] : vector<8x8xf32> to vector<8xf32>
    %114 = vector.shape_cast %113 : vector<8xf32> to vector<8x1xf32>
    %115 = tpu.reciprocal %114 {approx = true} : vector<8x1xf32> -> vector<8x1xf32>
    %116 = vector.broadcast %115 : vector<8x1xf32> to vector<8x8xf32>
    %117 = arith.mulf %112, %116 : vector<8x8xf32>
    %cst_44 = arith.constant dense<0.000000e+00> : vector<8x8xf32>
    %118 = tpu.matmul %117, %102, %cst_44 {dimension_numbers = #tpu.dot_dimension_numbers<[1], [0], [0], [1], [0, 0, 1, 1], [], []>} : vector<8x8xf32>, vector<8x8xf32>, vector<8x8xf32> -> vector<8x8xf32>
    %c0_45 = arith.constant 0 : index
    %c24 = arith.constant 24 : index
    %119 = vector.load %arg22[%c0_45, %c24] : memref<8x32xf32, #tpu.memory_space<vmem>>, vector<8x8xf32>
    tpu.vector_store %arg22[%c0_45, %c24], %118 {strides = array<i32>} : memref<8x32xf32, #tpu.memory_space<vmem>>, vector<8x8xf32>,
    %c0_46 = arith.constant 0 : index
    %c0_47 = arith.constant 0 : index
    %120 = vector.load %arg22[%c0_46, %c0_47] : memref<8x32xf32, #tpu.memory_space<vmem>>, vector<8x32xf32>
    %c0_48 = arith.constant 0 : index
    %c0_49 = arith.constant 0 : index
    %121 = vector.load %arg10[%c0_48, %c0_49] : memref<32x32xf32, #tpu.memory_space<vmem>>, vector<32x32xf32>
    %cst_50 = arith.constant dense<0.000000e+00> : vector<8x32xf32>
    %122 = tpu.matmul %120, %121, %cst_50 {dimension_numbers = #tpu.dot_dimension_numbers<[1], [0], [0], [1], [0, 0, 1, 1], [], []>} : vector<8x32xf32>, vector<32x32xf32>, vector<8x32xf32> -> vector<8x32xf32>
    %c0_51 = arith.constant 0 : index
    %c0_52 = arith.constant 0 : index
    %123 = vector.load %arg11[%c0_51, %c0_52] : memref<1x32xf32, #tpu.memory_space<vmem>>, vector<1x32xf32>
    %124 = vector.broadcast %123 : vector<1x32xf32> to vector<8x32xf32>
    %125 = arith.addf %122, %124 : vector<8x32xf32>
    %126 = arith.addf %7, %125 : vector<8x32xf32>
    %c0_53 = arith.constant 0 : index
    %c0_54 = arith.constant 0 : index
    %127 = vector.load %arg12[%c0_53, %c0_54] : memref<1x32xf32, #tpu.memory_space<vmem>>, vector<1x32xf32>
    %c0_55 = arith.constant 0 : index
    %c0_56 = arith.constant 0 : index
    %128 = vector.load %arg13[%c0_55, %c0_56] : memref<1x32xf32, #tpu.memory_space<vmem>>, vector<1x32xf32>
    %cst_57 = arith.constant dense<0.000000e+00> : vector<8xf32>
    %129 = vector.multi_reduction <add>, %126, %cst_57 [1] : vector<8x32xf32> to vector<8xf32>
    %130 = vector.shape_cast %129 : vector<8xf32> to vector<8x1xf32>
    %cst_58 = arith.constant 3.200000e+01 : f32
    %131 = vector.broadcast %cst_58 : f32 to vector<8x1xf32>
    %132 = arith.divf %130, %131 : vector<8x1xf32>
    %133 = vector.broadcast %132 : vector<8x1xf32> to vector<8x32xf32>
    %134 = arith.subf %126, %133 : vector<8x32xf32>
    %135 = arith.mulf %134, %134 : vector<8x32xf32>
    %cst_59 = arith.constant dense<0.000000e+00> : vector<8xf32>
    %136 = vector.multi_reduction <add>, %135, %cst_59 [1] : vector<8x32xf32> to vector<8xf32>
    %137 = vector.shape_cast %136 : vector<8xf32> to vector<8x1xf32>
    %cst_60 = arith.constant 3.100000e+01 : f32
    %138 = vector.broadcast %cst_60 : f32 to vector<8x1xf32>
    %139 = arith.divf %137, %138 : vector<8x1xf32>
    %140 = vector.broadcast %127 : vector<1x32xf32> to vector<8x32xf32>
    %141 = arith.mulf %140, %134 : vector<8x32xf32>
    %142 = math.sqrt %139 : vector<8x1xf32>
    %cst_61 = arith.constant 9.99999997E-7 : f32
    %143 = vector.broadcast %cst_61 : f32 to vector<8x1xf32>
    %144 = arith.addf %142, %143 : vector<8x1xf32>
    %145 = vector.broadcast %144 : vector<8x1xf32> to vector<8x32xf32>
    %146 = arith.divf %141, %145 : vector<8x32xf32>
    %147 = vector.broadcast %128 : vector<1x32xf32> to vector<8x32xf32>
    %148 = arith.addf %146, %147 : vector<8x32xf32>
    %c0_62 = arith.constant 0 : index
    %c0_63 = arith.constant 0 : index
    %149 = vector.load %arg14[%c0_62, %c0_63] : memref<32x64xf32, #tpu.memory_space<vmem>>, vector<32x64xf32>
    %cst_64 = arith.constant dense<0.000000e+00> : vector<8x64xf32>
    %150 = tpu.matmul %148, %149, %cst_64 {dimension_numbers = #tpu.dot_dimension_numbers<[1], [0], [0], [1], [0, 0, 1, 1], [], []>} : vector<8x32xf32>, vector<32x64xf32>, vector<8x64xf32> -> vector<8x64xf32>
    %c0_65 = arith.constant 0 : index
    %c0_66 = arith.constant 0 : index
    %151 = vector.load %arg15[%c0_65, %c0_66] : memref<1x64xf32, #tpu.memory_space<vmem>>, vector<1x64xf32>
    %152 = vector.broadcast %151 : vector<1x64xf32> to vector<8x64xf32>
    %153 = arith.addf %150, %152 : vector<8x64xf32>
    %cst_67 = arith.constant 0.000000e+00 : f32
    %154 = vector.broadcast %cst_67 : f32 to vector<8x64xf32>
    %155 = arith.maximumf %153, %154 : vector<8x64xf32>
    %c0_68 = arith.constant 0 : index
    %c0_69 = arith.constant 0 : index
    %156 = vector.load %arg16[%c0_68, %c0_69] : memref<64x32xf32, #tpu.memory_space<vmem>>, vector<64x32xf32>
    %cst_70 = arith.constant dense<0.000000e+00> : vector<8x32xf32>
    %157 = tpu.matmul %155, %156, %cst_70 {dimension_numbers = #tpu.dot_dimension_numbers<[1], [0], [0], [1], [0, 0, 1, 1], [], []>} : vector<8x64xf32>, vector<64x32xf32>, vector<8x32xf32> -> vector<8x32xf32>
    %c0_71 = arith.constant 0 : index
    %c0_72 = arith.constant 0 : index
    %158 = vector.load %arg17[%c0_71, %c0_72] : memref<1x32xf32, #tpu.memory_space<vmem>>, vector<1x32xf32>
    %159 = vector.broadcast %158 : vector<1x32xf32> to vector<8x32xf32>
    %160 = arith.addf %157, %159 : vector<8x32xf32>
    %161 = arith.addf %126, %160 : vector<8x32xf32>
    %c0_73 = arith.constant 0 : index
    %c0_74 = arith.constant 0 : index
    %c0_75 = arith.constant 0 : index
    %162 = vector.load %arg20[%c0_73, %c0_74, %c0_75] : memref<1x8x32xf32, #tpu.memory_space<vmem>>, vector<1x8x32xf32>
    %163 = vector.shape_cast %162 : vector<1x8x32xf32> to vector<8x32xf32>
    %164 = vector.shape_cast %161 : vector<8x32xf32> to vector<1x8x32xf32>
    tpu.vector_store %arg20[%c0_73, %c0_74, %c0_75], %164 {strides = array<i32>} : memref<1x8x32xf32, #tpu.memory_space<vmem>>, vector<1x8x32xf32>,
    return
  }
  func.func @transform_0(%arg0: i32, %arg1: i32) -> (i32, i32, i32) {
    %c0_i32 = arith.constant 0 : i32
    %c0_i32_0 = arith.constant 0 : i32
    %c0_i32_1 = arith.constant 0 : i32
    return %arg0, %c0_i32, %c0_i32_0 : i32, i32, i32
  }
  func.func @transform_1(%arg0: i32, %arg1: i32) -> (i32, i32, i32) {
    %c0_i32 = arith.constant 0 : i32
    %c0_i32_0 = arith.constant 0 : i32
    %c0_i32_1 = arith.constant 0 : i32
    return %arg0, %c0_i32, %c0_i32_0 : i32, i32, i32
  }
  func.func @transform_2(%arg0: i32, %arg1: i32) -> (i32, i32) {
    %c0_i32 = arith.constant 0 : i32
    %c0_i32_0 = arith.constant 0 : i32
    %c0_i32_1 = arith.constant 0 : i32
    return %c0_i32, %c0_i32_0 : i32, i32
  }
  func.func @transform_3(%arg0: i32, %arg1: i32) -> (i32, i32) {
    %c0_i32 = arith.constant 0 : i32
    %c0_i32_0 = arith.constant 0 : i32
    %c0_i32_1 = arith.constant 0 : i32
    return %c0_i32, %c0_i32_0 : i32, i32
  }
  func.func @transform_4(%arg0: i32, %arg1: i32) -> (i32, i32) {
    %c0_i32 = arith.constant 0 : i32
    %c0_i32_0 = arith.constant 0 : i32
    %c0_i32_1 = arith.constant 0 : i32
    return %c0_i32, %c0_i32_0 : i32, i32
  }
  func.func @transform_5(%arg0: i32, %arg1: i32) -> (i32, i32) {
    %c0_i32 = arith.constant 0 : i32
    %c0_i32_0 = arith.constant 0 : i32
    %c0_i32_1 = arith.constant 0 : i32
    return %c0_i32, %c0_i32_0 : i32, i32
  }
  func.func @transform_6(%arg0: i32, %arg1: i32) -> (i32, i32) {
    %c0_i32 = arith.constant 0 : i32
    %c0_i32_0 = arith.constant 0 : i32
    %c0_i32_1 = arith.constant 0 : i32
    return %c0_i32, %c0_i32_0 : i32, i32
  }
  func.func @transform_7(%arg0: i32, %arg1: i32) -> (i32, i32) {
    %c0_i32 = arith.constant 0 : i32
    %c0_i32_0 = arith.constant 0 : i32
    %c0_i32_1 = arith.constant 0 : i32
    return %c0_i32, %c0_i32_0 : i32, i32
  }
  func.func @transform_8(%arg0: i32, %arg1: i32) -> (i32, i32) {
    %c0_i32 = arith.constant 0 : i32
    %c0_i32_0 = arith.constant 0 : i32
    %c0_i32_1 = arith.constant 0 : i32
    return %c0_i32, %c0_i32_0 : i32, i32
  }
  func.func @transform_9(%arg0: i32, %arg1: i32) -> (i32, i32) {
    %c0_i32 = arith.constant 0 : i32
    %c0_i32_0 = arith.constant 0 : i32
    %c0_i32_1 = arith.constant 0 : i32
    return %c0_i32, %c0_i32_0 : i32, i32
  }
  func.func @transform_10(%arg0: i32, %arg1: i32) -> (i32, i32) {
    %c0_i32 = arith.constant 0 : i32
    %c0_i32_0 = arith.constant 0 : i32
    %c0_i32_1 = arith.constant 0 : i32
    return %c0_i32, %c0_i32_0 : i32, i32
  }
  func.func @transform_11(%arg0: i32, %arg1: i32) -> (i32, i32) {
    %c0_i32 = arith.constant 0 : i32
    %c0_i32_0 = arith.constant 0 : i32
    %c0_i32_1 = arith.constant 0 : i32
    return %c0_i32, %c0_i32_0 : i32, i32
  }
  func.func @transform_12(%arg0: i32, %arg1: i32) -> (i32, i32) {
    %c0_i32 = arith.constant 0 : i32
    %c0_i32_0 = arith.constant 0 : i32
    %c0_i32_1 = arith.constant 0 : i32
    return %c0_i32, %c0_i32_0 : i32, i32
  }
  func.func @transform_13(%arg0: i32, %arg1: i32) -> (i32, i32) {
    %c0_i32 = arith.constant 0 : i32
    %c0_i32_0 = arith.constant 0 : i32
    %c0_i32_1 = arith.constant 0 : i32
    return %c0_i32, %c0_i32_0 : i32, i32
  }
  func.func @transform_14(%arg0: i32, %arg1: i32) -> (i32, i32) {
    %c0_i32 = arith.constant 0 : i32
    %c0_i32_0 = arith.constant 0 : i32
    %c0_i32_1 = arith.constant 0 : i32
    return %c0_i32, %c0_i32_0 : i32, i32
  }
  func.func @transform_15(%arg0: i32, %arg1: i32) -> (i32, i32) {
    %c0_i32 = arith.constant 0 : i32
    %c0_i32_0 = arith.constant 0 : i32
    %c0_i32_1 = arith.constant 0 : i32
    return %c0_i32, %c0_i32_0 : i32, i32
  }
  func.func @transform_16(%arg0: i32, %arg1: i32) -> (i32, i32) {
    %c0_i32 = arith.constant 0 : i32
    %c0_i32_0 = arith.constant 0 : i32
    %c0_i32_1 = arith.constant 0 : i32
    return %c0_i32, %c0_i32_0 : i32, i32
  }
  func.func @transform_17(%arg0: i32, %arg1: i32) -> (i32, i32) {
    %c0_i32 = arith.constant 0 : i32
    %c0_i32_0 = arith.constant 0 : i32
    %c0_i32_1 = arith.constant 0 : i32
    return %c0_i32, %c0_i32_0 : i32, i32
  }
  func.func @transform_18(%arg0: i32, %arg1: i32) -> (i32, i32, i32) {
    %c0_i32 = arith.constant 0 : i32
    %c0_i32_0 = arith.constant 0 : i32
    return %arg0, %arg1, %c0_i32 : i32, i32, i32
  }
}

module attributes {stable_mosaic.version = 11 : i64} {
  func.func @_encoder_layer_kernel(%arg0: i32, %arg1: i32, %arg2: memref<1x8x32xf32, #tpu.memory_space<vmem>>, %arg3: memref<1x1x8xf32, #tpu.memory_space<vmem>>, %arg4: memref<1x32xf32, #tpu.memory_space<vmem>>, %arg5: memref<1x32xf32, #tpu.memory_space<vmem>>, %arg6: memref<32x32xf32, #tpu.memory_space<vmem>>, %arg7: memref<1x32xf32, #tpu.memory_space<vmem>>, %arg8: memref<32x64xf32, #tpu.memory_space<vmem>>, %arg9: memref<1x64xf32, #tpu.memory_space<vmem>>, %arg10: memref<32x32xf32, #tpu.memory_space<vmem>>, %arg11: memref<1x32xf32, #tpu.memory_space<vmem>>, %arg12: memref<1x32xf32, #tpu.memory_space<vmem>>, %arg13: memref<1x32xf32, #tpu.memory_space<vmem>>, %arg14: memref<32x64xf32, #tpu.memory_space<vmem>>, %arg15: memref<1x64xf32, #tpu.memory_space<vmem>>, %arg16: memref<64x32xf32, #tpu.memory_space<vmem>>, %arg17: memref<1x32xf32, #tpu.memory_space<vmem>>, %arg18: memref<1x32xf32, #tpu.memory_space<vmem>>, %arg19: memref<1x32xf32, #tpu.memory_space<vmem>>, %arg20: memref<1x8x32xf32, #tpu.memory_space<vmem>>, %arg21: memref<8x64xf32, #tpu.memory_space<vmem>>, %arg22: memref<8x32xf32, #tpu.memory_space<vmem>>) attributes {dimension_semantics = [#tpu.dimension_semantics<parallel>, #tpu.dimension_semantics<arbitrary>], iteration_bounds = array<i64: 2, 1>, scalar_prefetch = 0 : i64, scratch_operands = 2 : i64, tpu.core_type = #tpu.core_type<tc>, window_params = [{transform_indices = @transform_0, window_bounds = array<i64: 1, 8, 32>}, {transform_indices = @transform_1, window_bounds = array<i64: 1, 1, 8>}, {pipeline_mode = #tpu.pipeline_mode<synchronous>, transform_indices = @transform_2, window_bounds = array<i64: 1, 32>}, {pipeline_mode = #tpu.pipeline_mode<synchronous>, transform_indices = @transform_3, window_bounds = array<i64: 1, 32>}, {pipeline_mode = #tpu.pipeline_mode<synchronous>, transform_indices = @transform_4, window_bounds = array<i64: 32, 32>}, {pipeline_mode = #tpu.pipeline_mode<synchronous>, transform_indices = @transform_5, window_bounds = array<i64: 1, 32>}, {pipeline_mode = #tpu.pipeline_mode<synchronous>, transform_indices = @transform_6, window_bounds = array<i64: 32, 64>}, {pipeline_mode = #tpu.pipeline_mode<synchronous>, transform_indices = @transform_7, window_bounds = array<i64: 1, 64>}, {pipeline_mode = #tpu.pipeline_mode<synchronous>, transform_indices = @transform_8, window_bounds = array<i64: 32, 32>}, {pipeline_mode = #tpu.pipeline_mode<synchronous>, transform_indices = @transform_9, window_bounds = array<i64: 1, 32>}, {pipeline_mode = #tpu.pipeline_mode<synchronous>, transform_indices = @transform_10, window_bounds = array<i64: 1, 32>}, {pipeline_mode = #tpu.pipeline_mode<synchronous>, transform_indices = @transform_11, window_bounds = array<i64: 1, 32>}, {pipeline_mode = #tpu.pipeline_mode<synchronous>, transform_indices = @transform_12, window_bounds = array<i64: 32, 64>}, {pipeline_mode = #tpu.pipeline_mode<synchronous>, transform_indices = @transform_13, window_bounds = array<i64: 1, 64>}, {pipeline_mode = #tpu.pipeline_mode<synchronous>, transform_indices = @transform_14, window_bounds = array<i64: 64, 32>}, {pipeline_mode = #tpu.pipeline_mode<synchronous>, transform_indices = @transform_15, window_bounds = array<i64: 1, 32>}, {pipeline_mode = #tpu.pipeline_mode<synchronous>, transform_indices = @transform_16, window_bounds = array<i64: 1, 32>}, {pipeline_mode = #tpu.pipeline_mode<synchronous>, transform_indices = @transform_17, window_bounds = array<i64: 1, 32>}, {transform_indices = @transform_18, window_bounds = array<i64: 1, 8, 32>}]} {
    %c0_i32 = arith.constant 0 : i32
    %0 = arith.cmpi eq, %arg1, %c0_i32 : i32
    %1 = arith.extui %0 : i1 to i32
    %c0_i32_0 = arith.constant 0 : i32
    %2 = arith.cmpi ne, %1, %c0_i32_0 : i32
    scf.if %2 {
      %c0_85 = arith.constant 0 : index
      %c0_86 = arith.constant 0 : index
      %c0_87 = arith.constant 0 : index
      %187 = vector.load %arg2[%c0_85, %c0_86, %c0_87] : memref<1x8x32xf32, #tpu.memory_space<vmem>>, vector<1x8x32xf32>
      %188 = vector.shape_cast %187 : vector<1x8x32xf32> to vector<8x32xf32>
      %c0_88 = arith.constant 0 : index
      %c0_89 = arith.constant 0 : index
      %189 = vector.load %arg4[%c0_88, %c0_89] : memref<1x32xf32, #tpu.memory_space<vmem>>, vector<1x32xf32>
      %c0_90 = arith.constant 0 : index
      %c0_91 = arith.constant 0 : index
      %190 = vector.load %arg5[%c0_90, %c0_91] : memref<1x32xf32, #tpu.memory_space<vmem>>, vector<1x32xf32>
      %cst_92 = arith.constant dense<0.000000e+00> : vector<8xf32>
      %191 = vector.multi_reduction <add>, %188, %cst_92 [1] : vector<8x32xf32> to vector<8xf32>
      %192 = vector.shape_cast %191 : vector<8xf32> to vector<8x1xf32>
      %cst_93 = arith.constant 3.200000e+01 : f32
      %193 = vector.broadcast %cst_93 : f32 to vector<8x1xf32>
      %194 = arith.divf %192, %193 : vector<8x1xf32>
      %195 = vector.broadcast %194 : vector<8x1xf32> to vector<8x32xf32>
      %196 = arith.subf %188, %195 : vector<8x32xf32>
      %197 = arith.mulf %196, %196 : vector<8x32xf32>
      %cst_94 = arith.constant dense<0.000000e+00> : vector<8xf32>
      %198 = vector.multi_reduction <add>, %197, %cst_94 [1] : vector<8x32xf32> to vector<8xf32>
      %199 = vector.shape_cast %198 : vector<8xf32> to vector<8x1xf32>
      %cst_95 = arith.constant 3.100000e+01 : f32
      %200 = vector.broadcast %cst_95 : f32 to vector<8x1xf32>
      %201 = arith.divf %199, %200 : vector<8x1xf32>
      %202 = vector.broadcast %189 : vector<1x32xf32> to vector<8x32xf32>
      %203 = arith.mulf %202, %196 : vector<8x32xf32>
      %204 = math.sqrt %201 : vector<8x1xf32>
      %cst_96 = arith.constant 9.99999997E-7 : f32
      %205 = vector.broadcast %cst_96 : f32 to vector<8x1xf32>
      %206 = arith.addf %204, %205 : vector<8x1xf32>
      %207 = vector.broadcast %206 : vector<8x1xf32> to vector<8x32xf32>
      %208 = arith.divf %203, %207 : vector<8x32xf32>
      %209 = vector.broadcast %190 : vector<1x32xf32> to vector<8x32xf32>
      %210 = arith.addf %208, %209 : vector<8x32xf32>
      %c0_97 = arith.constant 0 : index
      %c0_98 = arith.constant 0 : index
      %211 = vector.load %arg8[%c0_97, %c0_98] : memref<32x64xf32, #tpu.memory_space<vmem>>, vector<32x64xf32>
      %cst_99 = arith.constant dense<0.000000e+00> : vector<8x64xf32>
      %212 = tpu.matmul %210, %211, %cst_99 {dimension_numbers = #tpu.dot_dimension_numbers<[1], [0], [0], [1], [0, 0, 1, 1], [], []>} : vector<8x32xf32>, vector<32x64xf32>, vector<8x64xf32> -> vector<8x64xf32>
      %c0_100 = arith.constant 0 : index
      %c0_101 = arith.constant 0 : index
      %213 = vector.load %arg9[%c0_100, %c0_101] : memref<1x64xf32, #tpu.memory_space<vmem>>, vector<1x64xf32>
      %214 = vector.broadcast %213 : vector<1x64xf32> to vector<8x64xf32>
      %215 = arith.addf %212, %214 : vector<8x64xf32>
      %c0_102 = arith.constant 0 : index
      %c0_103 = arith.constant 0 : index
      %216 = vector.load %arg21[%c0_102, %c0_103] : memref<8x64xf32, #tpu.memory_space<vmem>>, vector<8x64xf32>
      tpu.vector_store %arg21[%c0_102, %c0_103], %215 {strides = array<i32>} : memref<8x64xf32, #tpu.memory_space<vmem>>, vector<8x64xf32>,
    } else {
    }
    %c8_i32 = arith.constant 8 : i32
    %3 = arith.muli %arg1, %c8_i32 : i32
    %4 = tpu.assume_multiple %3, 8 : i32
    %c0 = arith.constant 0 : index
    %5 = arith.index_cast %4 : i32 to index
    %c0_1 = arith.constant 0 : index
    %6 = vector.load %arg2[%c0, %5, %c0_1] : memref<1x8x32xf32, #tpu.memory_space<vmem>>, vector<1x8x32xf32>
    %7 = vector.shape_cast %6 : vector<1x8x32xf32> to vector<8x32xf32>
    %c0_2 = arith.constant 0 : index
    %c0_3 = arith.constant 0 : index
    %8 = vector.load %arg4[%c0_2, %c0_3] : memref<1x32xf32, #tpu.memory_space<vmem>>, vector<1x32xf32>
    %c0_4 = arith.constant 0 : index
    %c0_5 = arith.constant 0 : index
    %9 = vector.load %arg5[%c0_4, %c0_5] : memref<1x32xf32, #tpu.memory_space<vmem>>, vector<1x32xf32>
    %cst = arith.constant dense<0.000000e+00> : vector<8xf32>
    %10 = vector.multi_reduction <add>, %7, %cst [1] : vector<8x32xf32> to vector<8xf32>
    %11 = vector.shape_cast %10 : vector<8xf32> to vector<8x1xf32>
    %cst_6 = arith.constant 3.200000e+01 : f32
    %12 = vector.broadcast %cst_6 : f32 to vector<8x1xf32>
    %13 = arith.divf %11, %12 : vector<8x1xf32>
    %14 = vector.broadcast %13 : vector<8x1xf32> to vector<8x32xf32>
    %15 = arith.subf %7, %14 : vector<8x32xf32>
    %16 = arith.mulf %15, %15 : vector<8x32xf32>
    %cst_7 = arith.constant dense<0.000000e+00> : vector<8xf32>
    %17 = vector.multi_reduction <add>, %16, %cst_7 [1] : vector<8x32xf32> to vector<8xf32>
    %18 = vector.shape_cast %17 : vector<8xf32> to vector<8x1xf32>
    %cst_8 = arith.constant 3.100000e+01 : f32
    %19 = vector.broadcast %cst_8 : f32 to vector<8x1xf32>
    %20 = arith.divf %18, %19 : vector<8x1xf32>
    %21 = vector.broadcast %8 : vector<1x32xf32> to vector<8x32xf32>
    %22 = arith.mulf %21, %15 : vector<8x32xf32>
    %23 = math.sqrt %20 : vector<8x1xf32>
    %cst_9 = arith.constant 9.99999997E-7 : f32
    %24 = vector.broadcast %cst_9 : f32 to vector<8x1xf32>
    %25 = arith.addf %23, %24 : vector<8x1xf32>
    %26 = vector.broadcast %25 : vector<8x1xf32> to vector<8x32xf32>
    %27 = arith.divf %22, %26 : vector<8x32xf32>
    %28 = vector.broadcast %9 : vector<1x32xf32> to vector<8x32xf32>
    %29 = arith.addf %27, %28 : vector<8x32xf32>
    %c0_10 = arith.constant 0 : index
    %c0_11 = arith.constant 0 : index
    %30 = vector.load %arg6[%c0_10, %c0_11] : memref<32x32xf32, #tpu.memory_space<vmem>>, vector<32x32xf32>
    %cst_12 = arith.constant dense<0.000000e+00> : vector<8x32xf32>
    %31 = tpu.matmul %29, %30, %cst_12 {dimension_numbers = #tpu.dot_dimension_numbers<[1], [0], [0], [1], [0, 0, 1, 1], [], []>} : vector<8x32xf32>, vector<32x32xf32>, vector<8x32xf32> -> vector<8x32xf32>
    %c0_13 = arith.constant 0 : index
    %c0_14 = arith.constant 0 : index
    %32 = vector.load %arg7[%c0_13, %c0_14] : memref<1x32xf32, #tpu.memory_space<vmem>>, vector<1x32xf32>
    %33 = vector.broadcast %32 : vector<1x32xf32> to vector<8x32xf32>
    %34 = arith.addf %31, %33 : vector<8x32xf32>
    %c0_15 = arith.constant 0 : index
    %c0_16 = arith.constant 0 : index
    %35 = vector.load %arg21[%c0_15, %c0_16] : memref<8x64xf32, #tpu.memory_space<vmem>>, vector<8x64xf32>
    %c0_17 = arith.constant 0 : index
    %c0_18 = arith.constant 0 : index
    %c0_19 = arith.constant 0 : index
    %36 = vector.load %arg3[%c0_17, %c0_18, %c0_19] : memref<1x1x8xf32, #tpu.memory_space<vmem>>, vector<1x1x8xf32>
    %37 = vector.shape_cast %36 : vector<1x1x8xf32> to vector<1x8xf32>
    %cst_20 = arith.constant 0.000000e+00 : f32
    %38 = vector.broadcast %cst_20 : f32 to vector<1x8xf32>
    %39 = arith.cmpf oeq, %37, %38 : vector<1x8xf32>
    %40 = vector.extract_strided_slice %34 {offsets = [0, 0], sizes = [8, 8], strides = [1, 1]} : vector<8x32xf32> to vector<8x8xf32>
    %41 = vector.extract_strided_slice %35 {offsets = [0, 0], sizes = [8, 8], strides = [1, 1]} : vector<8x64xf32> to vector<8x8xf32>
    %42 = vector.extract_strided_slice %35 {offsets = [0, 32], sizes = [8, 8], strides = [1, 1]} : vector<8x64xf32> to vector<8x8xf32>
    %cst_21 = arith.constant dense<0.000000e+00> : vector<8x8xf32>
    %43 = tpu.matmul %40, %41, %cst_21 {dimension_numbers = #tpu.dot_dimension_numbers<[1], [1], [0], [0], [0, 0, 1, 0], [], []>} : vector<8x8xf32>, vector<8x8xf32>, vector<8x8xf32> -> vector<8x8xf32>
    %cst_22 = arith.constant -1.000000e+09 : f32
    %44 = vector.shape_cast %39 : vector<1x8xi1> to vector<1x8xi1>
    %45 = vector.broadcast %44 : vector<1x8xi1> to vector<8x8xi1>
    %46 = vector.broadcast %cst_22 : f32 to vector<8x8xf32>
    %47 = arith.select %45, %46, %43 : vector<8x8xi1>, vector<8x8xf32>
    %cst_23 = arith.constant dense<0xFF800000> : vector<8xf32>
    %48 = vector.multi_reduction <maximumf>, %47, %cst_23 [1] : vector<8x8xf32> to vector<8xf32>
    %49 = vector.shape_cast %48 : vector<8xf32> to vector<8x1xf32>
    %50 = vector.broadcast %49 : vector<8x1xf32> to vector<8x8xf32>
    %51 = arith.subf %47, %50 : vector<8x8xf32>
    %52 = math.exp %51 : vector<8x8xf32>
    %cst_24 = arith.constant dense<0.000000e+00> : vector<8xf32>
    %53 = vector.multi_reduction <add>, %52, %cst_24 [1] : vector<8x8xf32> to vector<8xf32>
    %54 = vector.shape_cast %53 : vector<8xf32> to vector<8x1xf32>
    %55 = tpu.reciprocal %54 {approx = true} : vector<8x1xf32> -> vector<8x1xf32>
    %56 = vector.broadcast %55 : vector<8x1xf32> to vector<8x8xf32>
    %57 = arith.mulf %52, %56 : vector<8x8xf32>
    %cst_25 = arith.constant dense<0.000000e+00> : vector<8x8xf32>
    %58 = tpu.matmul %57, %42, %cst_25 {dimension_numbers = #tpu.dot_dimension_numbers<[1], [0], [0], [1], [0, 0, 1, 1], [], []>} : vector<8x8xf32>, vector<8x8xf32>, vector<8x8xf32> -> vector<8x8xf32>
    %c0_26 = arith.constant 0 : index
    %c0_27 = arith.constant 0 : index
    %59 = vector.load %arg22[%c0_26, %c0_27] : memref<8x32xf32, #tpu.memory_space<vmem>>, vector<8x8xf32>
    tpu.vector_store %arg22[%c0_26, %c0_27], %58 {strides = array<i32>} : memref<8x32xf32, #tpu.memory_space<vmem>>, vector<8x8xf32>,
    %60 = vector.extract_strided_slice %34 {offsets = [0, 8], sizes = [8, 8], strides = [1, 1]} : vector<8x32xf32> to vector<8x8xf32>
    %61 = vector.extract_strided_slice %35 {offsets = [0, 8], sizes = [8, 8], strides = [1, 1]} : vector<8x64xf32> to vector<8x8xf32>
    %62 = vector.extract_strided_slice %35 {offsets = [0, 40], sizes = [8, 8], strides = [1, 1]} : vector<8x64xf32> to vector<8x8xf32>
    %cst_28 = arith.constant dense<0.000000e+00> : vector<8x8xf32>
    %63 = tpu.matmul %60, %61, %cst_28 {dimension_numbers = #tpu.dot_dimension_numbers<[1], [1], [0], [0], [0, 0, 1, 0], [], []>} : vector<8x8xf32>, vector<8x8xf32>, vector<8x8xf32> -> vector<8x8xf32>
    %cst_29 = arith.constant -1.000000e+09 : f32
    %64 = vector.shape_cast %39 : vector<1x8xi1> to vector<1x8xi1>
    %65 = vector.broadcast %64 : vector<1x8xi1> to vector<8x8xi1>
    %66 = vector.broadcast %cst_29 : f32 to vector<8x8xf32>
    %67 = arith.select %65, %66, %63 : vector<8x8xi1>, vector<8x8xf32>
    %cst_30 = arith.constant dense<0xFF800000> : vector<8xf32>
    %68 = vector.multi_reduction <maximumf>, %67, %cst_30 [1] : vector<8x8xf32> to vector<8xf32>
    %69 = vector.shape_cast %68 : vector<8xf32> to vector<8x1xf32>
    %70 = vector.broadcast %69 : vector<8x1xf32> to vector<8x8xf32>
    %71 = arith.subf %67, %70 : vector<8x8xf32>
    %72 = math.exp %71 : vector<8x8xf32>
    %cst_31 = arith.constant dense<0.000000e+00> : vector<8xf32>
    %73 = vector.multi_reduction <add>, %72, %cst_31 [1] : vector<8x8xf32> to vector<8xf32>
    %74 = vector.shape_cast %73 : vector<8xf32> to vector<8x1xf32>
    %75 = tpu.reciprocal %74 {approx = true} : vector<8x1xf32> -> vector<8x1xf32>
    %76 = vector.broadcast %75 : vector<8x1xf32> to vector<8x8xf32>
    %77 = arith.mulf %72, %76 : vector<8x8xf32>
    %cst_32 = arith.constant dense<0.000000e+00> : vector<8x8xf32>
    %78 = tpu.matmul %77, %62, %cst_32 {dimension_numbers = #tpu.dot_dimension_numbers<[1], [0], [0], [1], [0, 0, 1, 1], [], []>} : vector<8x8xf32>, vector<8x8xf32>, vector<8x8xf32> -> vector<8x8xf32>
    %c0_33 = arith.constant 0 : index
    %c8 = arith.constant 8 : index
    %79 = vector.load %arg22[%c0_33, %c8] : memref<8x32xf32, #tpu.memory_space<vmem>>, vector<8x8xf32>
    tpu.vector_store %arg22[%c0_33, %c8], %78 {strides = array<i32>} : memref<8x32xf32, #tpu.memory_space<vmem>>, vector<8x8xf32>,
    %80 = vector.extract_strided_slice %34 {offsets = [0, 16], sizes = [8, 8], strides = [1, 1]} : vector<8x32xf32> to vector<8x8xf32>
    %81 = vector.extract_strided_slice %35 {offsets = [0, 16], sizes = [8, 8], strides = [1, 1]} : vector<8x64xf32> to vector<8x8xf32>
    %82 = vector.extract_strided_slice %35 {offsets = [0, 48], sizes = [8, 8], strides = [1, 1]} : vector<8x64xf32> to vector<8x8xf32>
    %cst_34 = arith.constant dense<0.000000e+00> : vector<8x8xf32>
    %83 = tpu.matmul %80, %81, %cst_34 {dimension_numbers = #tpu.dot_dimension_numbers<[1], [1], [0], [0], [0, 0, 1, 0], [], []>} : vector<8x8xf32>, vector<8x8xf32>, vector<8x8xf32> -> vector<8x8xf32>
    %cst_35 = arith.constant -1.000000e+09 : f32
    %84 = vector.shape_cast %39 : vector<1x8xi1> to vector<1x8xi1>
    %85 = vector.broadcast %84 : vector<1x8xi1> to vector<8x8xi1>
    %86 = vector.broadcast %cst_35 : f32 to vector<8x8xf32>
    %87 = arith.select %85, %86, %83 : vector<8x8xi1>, vector<8x8xf32>
    %cst_36 = arith.constant dense<0xFF800000> : vector<8xf32>
    %88 = vector.multi_reduction <maximumf>, %87, %cst_36 [1] : vector<8x8xf32> to vector<8xf32>
    %89 = vector.shape_cast %88 : vector<8xf32> to vector<8x1xf32>
    %90 = vector.broadcast %89 : vector<8x1xf32> to vector<8x8xf32>
    %91 = arith.subf %87, %90 : vector<8x8xf32>
    %92 = math.exp %91 : vector<8x8xf32>
    %cst_37 = arith.constant dense<0.000000e+00> : vector<8xf32>
    %93 = vector.multi_reduction <add>, %92, %cst_37 [1] : vector<8x8xf32> to vector<8xf32>
    %94 = vector.shape_cast %93 : vector<8xf32> to vector<8x1xf32>
    %95 = tpu.reciprocal %94 {approx = true} : vector<8x1xf32> -> vector<8x1xf32>
    %96 = vector.broadcast %95 : vector<8x1xf32> to vector<8x8xf32>
    %97 = arith.mulf %92, %96 : vector<8x8xf32>
    %cst_38 = arith.constant dense<0.000000e+00> : vector<8x8xf32>
    %98 = tpu.matmul %97, %82, %cst_38 {dimension_numbers = #tpu.dot_dimension_numbers<[1], [0], [0], [1], [0, 0, 1, 1], [], []>} : vector<8x8xf32>, vector<8x8xf32>, vector<8x8xf32> -> vector<8x8xf32>
    %c0_39 = arith.constant 0 : index
    %c16 = arith.constant 16 : index
    %99 = vector.load %arg22[%c0_39, %c16] : memref<8x32xf32, #tpu.memory_space<vmem>>, vector<8x8xf32>
    tpu.vector_store %arg22[%c0_39, %c16], %98 {strides = array<i32>} : memref<8x32xf32, #tpu.memory_space<vmem>>, vector<8x8xf32>,
    %100 = vector.extract_strided_slice %34 {offsets = [0, 24], sizes = [8, 8], strides = [1, 1]} : vector<8x32xf32> to vector<8x8xf32>
    %101 = vector.extract_strided_slice %35 {offsets = [0, 24], sizes = [8, 8], strides = [1, 1]} : vector<8x64xf32> to vector<8x8xf32>
    %102 = vector.extract_strided_slice %35 {offsets = [0, 56], sizes = [8, 8], strides = [1, 1]} : vector<8x64xf32> to vector<8x8xf32>
    %cst_40 = arith.constant dense<0.000000e+00> : vector<8x8xf32>
    %103 = tpu.matmul %100, %101, %cst_40 {dimension_numbers = #tpu.dot_dimension_numbers<[1], [1], [0], [0], [0, 0, 1, 0], [], []>} : vector<8x8xf32>, vector<8x8xf32>, vector<8x8xf32> -> vector<8x8xf32>
    %cst_41 = arith.constant -1.000000e+09 : f32
    %104 = vector.shape_cast %39 : vector<1x8xi1> to vector<1x8xi1>
    %105 = vector.broadcast %104 : vector<1x8xi1> to vector<8x8xi1>
    %106 = vector.broadcast %cst_41 : f32 to vector<8x8xf32>
    %107 = arith.select %105, %106, %103 : vector<8x8xi1>, vector<8x8xf32>
    %cst_42 = arith.constant dense<0xFF800000> : vector<8xf32>
    %108 = vector.multi_reduction <maximumf>, %107, %cst_42 [1] : vector<8x8xf32> to vector<8xf32>
    %109 = vector.shape_cast %108 : vector<8xf32> to vector<8x1xf32>
    %110 = vector.broadcast %109 : vector<8x1xf32> to vector<8x8xf32>
    %111 = arith.subf %107, %110 : vector<8x8xf32>
    %112 = math.exp %111 : vector<8x8xf32>
    %cst_43 = arith.constant dense<0.000000e+00> : vector<8xf32>
    %113 = vector.multi_reduction <add>, %112, %cst_43 [1] : vector<8x8xf32> to vector<8xf32>
    %114 = vector.shape_cast %113 : vector<8xf32> to vector<8x1xf32>
    %115 = tpu.reciprocal %114 {approx = true} : vector<8x1xf32> -> vector<8x1xf32>
    %116 = vector.broadcast %115 : vector<8x1xf32> to vector<8x8xf32>
    %117 = arith.mulf %112, %116 : vector<8x8xf32>
    %cst_44 = arith.constant dense<0.000000e+00> : vector<8x8xf32>
    %118 = tpu.matmul %117, %102, %cst_44 {dimension_numbers = #tpu.dot_dimension_numbers<[1], [0], [0], [1], [0, 0, 1, 1], [], []>} : vector<8x8xf32>, vector<8x8xf32>, vector<8x8xf32> -> vector<8x8xf32>
    %c0_45 = arith.constant 0 : index
    %c24 = arith.constant 24 : index
    %119 = vector.load %arg22[%c0_45, %c24] : memref<8x32xf32, #tpu.memory_space<vmem>>, vector<8x8xf32>
    tpu.vector_store %arg22[%c0_45, %c24], %118 {strides = array<i32>} : memref<8x32xf32, #tpu.memory_space<vmem>>, vector<8x8xf32>,
    %c0_46 = arith.constant 0 : index
    %c0_47 = arith.constant 0 : index
    %120 = vector.load %arg22[%c0_46, %c0_47] : memref<8x32xf32, #tpu.memory_space<vmem>>, vector<8x32xf32>
    %c0_48 = arith.constant 0 : index
    %c0_49 = arith.constant 0 : index
    %121 = vector.load %arg10[%c0_48, %c0_49] : memref<32x32xf32, #tpu.memory_space<vmem>>, vector<32x32xf32>
    %cst_50 = arith.constant dense<0.000000e+00> : vector<8x32xf32>
    %122 = tpu.matmul %120, %121, %cst_50 {dimension_numbers = #tpu.dot_dimension_numbers<[1], [0], [0], [1], [0, 0, 1, 1], [], []>} : vector<8x32xf32>, vector<32x32xf32>, vector<8x32xf32> -> vector<8x32xf32>
    %c0_51 = arith.constant 0 : index
    %c0_52 = arith.constant 0 : index
    %123 = vector.load %arg11[%c0_51, %c0_52] : memref<1x32xf32, #tpu.memory_space<vmem>>, vector<1x32xf32>
    %124 = vector.broadcast %123 : vector<1x32xf32> to vector<8x32xf32>
    %125 = arith.addf %122, %124 : vector<8x32xf32>
    %126 = arith.addf %7, %125 : vector<8x32xf32>
    %c0_53 = arith.constant 0 : index
    %c0_54 = arith.constant 0 : index
    %127 = vector.load %arg12[%c0_53, %c0_54] : memref<1x32xf32, #tpu.memory_space<vmem>>, vector<1x32xf32>
    %c0_55 = arith.constant 0 : index
    %c0_56 = arith.constant 0 : index
    %128 = vector.load %arg13[%c0_55, %c0_56] : memref<1x32xf32, #tpu.memory_space<vmem>>, vector<1x32xf32>
    %cst_57 = arith.constant dense<0.000000e+00> : vector<8xf32>
    %129 = vector.multi_reduction <add>, %126, %cst_57 [1] : vector<8x32xf32> to vector<8xf32>
    %130 = vector.shape_cast %129 : vector<8xf32> to vector<8x1xf32>
    %cst_58 = arith.constant 3.200000e+01 : f32
    %131 = vector.broadcast %cst_58 : f32 to vector<8x1xf32>
    %132 = arith.divf %130, %131 : vector<8x1xf32>
    %133 = vector.broadcast %132 : vector<8x1xf32> to vector<8x32xf32>
    %134 = arith.subf %126, %133 : vector<8x32xf32>
    %135 = arith.mulf %134, %134 : vector<8x32xf32>
    %cst_59 = arith.constant dense<0.000000e+00> : vector<8xf32>
    %136 = vector.multi_reduction <add>, %135, %cst_59 [1] : vector<8x32xf32> to vector<8xf32>
    %137 = vector.shape_cast %136 : vector<8xf32> to vector<8x1xf32>
    %cst_60 = arith.constant 3.100000e+01 : f32
    %138 = vector.broadcast %cst_60 : f32 to vector<8x1xf32>
    %139 = arith.divf %137, %138 : vector<8x1xf32>
    %140 = vector.broadcast %127 : vector<1x32xf32> to vector<8x32xf32>
    %141 = arith.mulf %140, %134 : vector<8x32xf32>
    %142 = math.sqrt %139 : vector<8x1xf32>
    %cst_61 = arith.constant 9.99999997E-7 : f32
    %143 = vector.broadcast %cst_61 : f32 to vector<8x1xf32>
    %144 = arith.addf %142, %143 : vector<8x1xf32>
    %145 = vector.broadcast %144 : vector<8x1xf32> to vector<8x32xf32>
    %146 = arith.divf %141, %145 : vector<8x32xf32>
    %147 = vector.broadcast %128 : vector<1x32xf32> to vector<8x32xf32>
    %148 = arith.addf %146, %147 : vector<8x32xf32>
    %c0_62 = arith.constant 0 : index
    %c0_63 = arith.constant 0 : index
    %149 = vector.load %arg14[%c0_62, %c0_63] : memref<32x64xf32, #tpu.memory_space<vmem>>, vector<32x64xf32>
    %cst_64 = arith.constant dense<0.000000e+00> : vector<8x64xf32>
    %150 = tpu.matmul %148, %149, %cst_64 {dimension_numbers = #tpu.dot_dimension_numbers<[1], [0], [0], [1], [0, 0, 1, 1], [], []>} : vector<8x32xf32>, vector<32x64xf32>, vector<8x64xf32> -> vector<8x64xf32>
    %c0_65 = arith.constant 0 : index
    %c0_66 = arith.constant 0 : index
    %151 = vector.load %arg15[%c0_65, %c0_66] : memref<1x64xf32, #tpu.memory_space<vmem>>, vector<1x64xf32>
    %152 = vector.broadcast %151 : vector<1x64xf32> to vector<8x64xf32>
    %153 = arith.addf %150, %152 : vector<8x64xf32>
    %cst_67 = arith.constant 0.000000e+00 : f32
    %154 = vector.broadcast %cst_67 : f32 to vector<8x64xf32>
    %155 = arith.maximumf %153, %154 : vector<8x64xf32>
    %c0_68 = arith.constant 0 : index
    %c0_69 = arith.constant 0 : index
    %156 = vector.load %arg16[%c0_68, %c0_69] : memref<64x32xf32, #tpu.memory_space<vmem>>, vector<64x32xf32>
    %cst_70 = arith.constant dense<0.000000e+00> : vector<8x32xf32>
    %157 = tpu.matmul %155, %156, %cst_70 {dimension_numbers = #tpu.dot_dimension_numbers<[1], [0], [0], [1], [0, 0, 1, 1], [], []>} : vector<8x64xf32>, vector<64x32xf32>, vector<8x32xf32> -> vector<8x32xf32>
    %c0_71 = arith.constant 0 : index
    %c0_72 = arith.constant 0 : index
    %158 = vector.load %arg17[%c0_71, %c0_72] : memref<1x32xf32, #tpu.memory_space<vmem>>, vector<1x32xf32>
    %159 = vector.broadcast %158 : vector<1x32xf32> to vector<8x32xf32>
    %160 = arith.addf %157, %159 : vector<8x32xf32>
    %161 = arith.addf %126, %160 : vector<8x32xf32>
    %c0_73 = arith.constant 0 : index
    %c0_74 = arith.constant 0 : index
    %162 = vector.load %arg18[%c0_73, %c0_74] : memref<1x32xf32, #tpu.memory_space<vmem>>, vector<1x32xf32>
    %c0_75 = arith.constant 0 : index
    %c0_76 = arith.constant 0 : index
    %163 = vector.load %arg19[%c0_75, %c0_76] : memref<1x32xf32, #tpu.memory_space<vmem>>, vector<1x32xf32>
    %cst_77 = arith.constant dense<0.000000e+00> : vector<8xf32>
    %164 = vector.multi_reduction <add>, %161, %cst_77 [1] : vector<8x32xf32> to vector<8xf32>
    %165 = vector.shape_cast %164 : vector<8xf32> to vector<8x1xf32>
    %cst_78 = arith.constant 3.200000e+01 : f32
    %166 = vector.broadcast %cst_78 : f32 to vector<8x1xf32>
    %167 = arith.divf %165, %166 : vector<8x1xf32>
    %168 = vector.broadcast %167 : vector<8x1xf32> to vector<8x32xf32>
    %169 = arith.subf %161, %168 : vector<8x32xf32>
    %170 = arith.mulf %169, %169 : vector<8x32xf32>
    %cst_79 = arith.constant dense<0.000000e+00> : vector<8xf32>
    %171 = vector.multi_reduction <add>, %170, %cst_79 [1] : vector<8x32xf32> to vector<8xf32>
    %172 = vector.shape_cast %171 : vector<8xf32> to vector<8x1xf32>
    %cst_80 = arith.constant 3.100000e+01 : f32
    %173 = vector.broadcast %cst_80 : f32 to vector<8x1xf32>
    %174 = arith.divf %172, %173 : vector<8x1xf32>
    %175 = vector.broadcast %162 : vector<1x32xf32> to vector<8x32xf32>
    %176 = arith.mulf %175, %169 : vector<8x32xf32>
    %177 = math.sqrt %174 : vector<8x1xf32>
    %cst_81 = arith.constant 9.99999997E-7 : f32
    %178 = vector.broadcast %cst_81 : f32 to vector<8x1xf32>
    %179 = arith.addf %177, %178 : vector<8x1xf32>
    %180 = vector.broadcast %179 : vector<8x1xf32> to vector<8x32xf32>
    %181 = arith.divf %176, %180 : vector<8x32xf32>
    %182 = vector.broadcast %163 : vector<1x32xf32> to vector<8x32xf32>
    %183 = arith.addf %181, %182 : vector<8x32xf32>
    %c0_82 = arith.constant 0 : index
    %c0_83 = arith.constant 0 : index
    %c0_84 = arith.constant 0 : index
    %184 = vector.load %arg20[%c0_82, %c0_83, %c0_84] : memref<1x8x32xf32, #tpu.memory_space<vmem>>, vector<1x8x32xf32>
    %185 = vector.shape_cast %184 : vector<1x8x32xf32> to vector<8x32xf32>
    %186 = vector.shape_cast %183 : vector<8x32xf32> to vector<1x8x32xf32>
    tpu.vector_store %arg20[%c0_82, %c0_83, %c0_84], %186 {strides = array<i32>} : memref<1x8x32xf32, #tpu.memory_space<vmem>>, vector<1x8x32xf32>,
    return
  }
  func.func @transform_0(%arg0: i32, %arg1: i32) -> (i32, i32, i32) {
    %c0_i32 = arith.constant 0 : i32
    %c0_i32_0 = arith.constant 0 : i32
    %c0_i32_1 = arith.constant 0 : i32
    return %arg0, %c0_i32, %c0_i32_0 : i32, i32, i32
  }
  func.func @transform_1(%arg0: i32, %arg1: i32) -> (i32, i32, i32) {
    %c0_i32 = arith.constant 0 : i32
    %c0_i32_0 = arith.constant 0 : i32
    %c0_i32_1 = arith.constant 0 : i32
    return %arg0, %c0_i32, %c0_i32_0 : i32, i32, i32
  }
  func.func @transform_2(%arg0: i32, %arg1: i32) -> (i32, i32) {
    %c0_i32 = arith.constant 0 : i32
    %c0_i32_0 = arith.constant 0 : i32
    %c0_i32_1 = arith.constant 0 : i32
    return %c0_i32, %c0_i32_0 : i32, i32
  }
  func.func @transform_3(%arg0: i32, %arg1: i32) -> (i32, i32) {
    %c0_i32 = arith.constant 0 : i32
    %c0_i32_0 = arith.constant 0 : i32
    %c0_i32_1 = arith.constant 0 : i32
    return %c0_i32, %c0_i32_0 : i32, i32
  }
  func.func @transform_4(%arg0: i32, %arg1: i32) -> (i32, i32) {
    %c0_i32 = arith.constant 0 : i32
    %c0_i32_0 = arith.constant 0 : i32
    %c0_i32_1 = arith.constant 0 : i32
    return %c0_i32, %c0_i32_0 : i32, i32
  }
  func.func @transform_5(%arg0: i32, %arg1: i32) -> (i32, i32) {
    %c0_i32 = arith.constant 0 : i32
    %c0_i32_0 = arith.constant 0 : i32
    %c0_i32_1 = arith.constant 0 : i32
    return %c0_i32, %c0_i32_0 : i32, i32
  }
  func.func @transform_6(%arg0: i32, %arg1: i32) -> (i32, i32) {
    %c0_i32 = arith.constant 0 : i32
    %c0_i32_0 = arith.constant 0 : i32
    %c0_i32_1 = arith.constant 0 : i32
    return %c0_i32, %c0_i32_0 : i32, i32
  }
  func.func @transform_7(%arg0: i32, %arg1: i32) -> (i32, i32) {
    %c0_i32 = arith.constant 0 : i32
    %c0_i32_0 = arith.constant 0 : i32
    %c0_i32_1 = arith.constant 0 : i32
    return %c0_i32, %c0_i32_0 : i32, i32
  }
  func.func @transform_8(%arg0: i32, %arg1: i32) -> (i32, i32) {
    %c0_i32 = arith.constant 0 : i32
    %c0_i32_0 = arith.constant 0 : i32
    %c0_i32_1 = arith.constant 0 : i32
    return %c0_i32, %c0_i32_0 : i32, i32
  }
  func.func @transform_9(%arg0: i32, %arg1: i32) -> (i32, i32) {
    %c0_i32 = arith.constant 0 : i32
    %c0_i32_0 = arith.constant 0 : i32
    %c0_i32_1 = arith.constant 0 : i32
    return %c0_i32, %c0_i32_0 : i32, i32
  }
  func.func @transform_10(%arg0: i32, %arg1: i32) -> (i32, i32) {
    %c0_i32 = arith.constant 0 : i32
    %c0_i32_0 = arith.constant 0 : i32
    %c0_i32_1 = arith.constant 0 : i32
    return %c0_i32, %c0_i32_0 : i32, i32
  }
  func.func @transform_11(%arg0: i32, %arg1: i32) -> (i32, i32) {
    %c0_i32 = arith.constant 0 : i32
    %c0_i32_0 = arith.constant 0 : i32
    %c0_i32_1 = arith.constant 0 : i32
    return %c0_i32, %c0_i32_0 : i32, i32
  }
  func.func @transform_12(%arg0: i32, %arg1: i32) -> (i32, i32) {
    %c0_i32 = arith.constant 0 : i32
    %c0_i32_0 = arith.constant 0 : i32
    %c0_i32_1 = arith.constant 0 : i32
    return %c0_i32, %c0_i32_0 : i32, i32
  }
  func.func @transform_13(%arg0: i32, %arg1: i32) -> (i32, i32) {
    %c0_i32 = arith.constant 0 : i32
    %c0_i32_0 = arith.constant 0 : i32
    %c0_i32_1 = arith.constant 0 : i32
    return %c0_i32, %c0_i32_0 : i32, i32
  }
  func.func @transform_14(%arg0: i32, %arg1: i32) -> (i32, i32) {
    %c0_i32 = arith.constant 0 : i32
    %c0_i32_0 = arith.constant 0 : i32
    %c0_i32_1 = arith.constant 0 : i32
    return %c0_i32, %c0_i32_0 : i32, i32
  }
  func.func @transform_15(%arg0: i32, %arg1: i32) -> (i32, i32) {
    %c0_i32 = arith.constant 0 : i32
    %c0_i32_0 = arith.constant 0 : i32
    %c0_i32_1 = arith.constant 0 : i32
    return %c0_i32, %c0_i32_0 : i32, i32
  }
  func.func @transform_16(%arg0: i32, %arg1: i32) -> (i32, i32) {
    %c0_i32 = arith.constant 0 : i32
    %c0_i32_0 = arith.constant 0 : i32
    %c0_i32_1 = arith.constant 0 : i32
    return %c0_i32, %c0_i32_0 : i32, i32
  }
  func.func @transform_17(%arg0: i32, %arg1: i32) -> (i32, i32) {
    %c0_i32 = arith.constant 0 : i32
    %c0_i32_0 = arith.constant 0 : i32
    %c0_i32_1 = arith.constant 0 : i32
    return %c0_i32, %c0_i32_0 : i32, i32
  }
  func.func @transform_18(%arg0: i32, %arg1: i32) -> (i32, i32, i32) {
    %c0_i32 = arith.constant 0 : i32
    %c0_i32_0 = arith.constant 0 : i32
    return %arg0, %arg1, %c0_i32 : i32, i32, i32
  }
}

</mosaic_0001>

<llo_original>
// kernel: encoder_forward.3
$region0: #{encoder_forward.3}
  #allocation0 [shape = 'u32[]', space=smem, size = 0x4, offset = 0x4, fixed_abs, tag = 'smem constant byte address 0x4 - core index']
  #allocation1 [shape = 'u32[144,128]{1,0:T(1,128)}', space=vmem, size = 0x12000, scoped, tag = 'internal scratch']
  #allocation2 [shape = 'f32[8,64]{1,0:T(8,128)}', space=vmem, size = 0x1000, scoped, tag = 'scratch operand']
  #allocation3 [shape = 'f32[8,32]{1,0:T(8,128)}', space=vmem, size = 0x1000, scoped, tag = 'scratch operand']
  %s0 = inlined_call_operand.vmem [shape: f32[2,8,32], index: 0, kind: input, shape index: {}]
  %s1 = inlined_call_operand.vmem [shape: f32[2,1,8], index: 1, kind: input, shape index: {}]
  %s2 = inlined_call_operand.vmem [shape: f32[1,32], index: 2, kind: input, shape index: {}]
  %s3 = inlined_call_operand.vmem [shape: f32[1,32], index: 3, kind: input, shape index: {}]
  %s4 = inlined_call_operand.vmem [shape: f32[32,32], index: 4, kind: input, shape index: {}]
  %s5 = inlined_call_operand.vmem [shape: f32[1,32], index: 5, kind: input, shape index: {}]
  %s6 = inlined_call_operand.vmem [shape: f32[32,64], index: 6, kind: input, shape index: {}]
  %s7 = inlined_call_operand.vmem [shape: f32[1,64], index: 7, kind: input, shape index: {}]
  %s8 = inlined_call_operand.vmem [shape: f32[32,32], index: 8, kind: input, shape index: {}]
  %s9 = inlined_call_operand.vmem [shape: f32[1,32], index: 9, kind: input, shape index: {}]
  %s10 = inlined_call_operand.vmem [shape: f32[1,32], index: 10, kind: input, shape index: {}]
  %s11 = inlined_call_operand.vmem [shape: f32[1,32], index: 11, kind: input, shape index: {}]
  %s12 = inlined_call_operand.vmem [shape: f32[32,64], index: 12, kind: input, shape index: {}]
  %s13 = inlined_call_operand.vmem [shape: f32[1,64], index: 13, kind: input, shape index: {}]
  %s14 = inlined_call_operand.vmem [shape: f32[64,32], index: 14, kind: input, shape index: {}]
  %s15 = inlined_call_operand.vmem [shape: f32[1,32], index: 15, kind: input, shape index: {}]
  %s16 = inlined_call_operand.vmem [shape: f32[1,32], index: 16, kind: input, shape index: {}]
  %s17 = inlined_call_operand.vmem [shape: f32[1,32], index: 17, kind: input, shape index: {}]
  %s18 = inlined_call_operand.hbm [shape: f32[2,8,32], index: 18, kind: output, shape index: {}]
  %s19 = sld [smem:[#allocation0]]
  $region109: #{encoder_forward.3} parent=0
    _
  %s21 = ssub.s32 1, %s19
  %s22 = scalar_select 0, %s21, %s19
  $region1: #{encoder_forward.3} parent=0
    #allocation4 [shape = 'u8[8192]{0}', space=vmem, size = 0x2000, scoped, tag = 'output window, operand 0']
    #allocation5 [shape = 's32[2]{0}', space=sflag, size = 0x8, scoped, tag = 'scoped memory for encoder_forward.3']
    %23 = vsyncpa [#allocation5], 0
    %s24 = scalar_lea.sflag [#allocation5], 1
    %25 = vsyncpa %s24, 0
    loop: start=0, step=1, limit=4
    $region2: #{encoder_forward.3} parent=1 // loop_pre_header
      _
    $region3: #{encoder_forward.3} parent=1 // loop_header
      %s27 = sphi 0, %s31
      %p28 = scmp.ge.s32.totalorder %s27, 4
      %s34 = sphi 0, %s46
      %s35 = sphi 0, %s42
      %s36 = sphi 0, %s34
      %s37 = sphi 0, %s35
      %s38 = sphi 0, %s36
      %s39 = sphi 0, %s37
      %s49 = sphi 0, %s51
      %s52 = sphi 0, %s49
      %s53 = sphi 0, %s52
      %s69 = sphi 0, %s53
      %s75 = sphi 0, %s77
      %s78 = sphi 0, %s75
      %s79 = sphi 0, %s78
      %s95 = sphi 0, %s79
      %s99 = sphi 0, %s99
      %s101 = sphi 0, %s99
      %s102 = sphi 0, %s101
      %s116 = sphi 0, %s102
      %s120 = sphi 0, %s120
      %s122 = sphi 0, %s120
      %s123 = sphi 0, %s122
      %s137 = sphi 0, %s123
      %s141 = sphi 0, %s141
      %s143 = sphi 0, %s141
      %s144 = sphi 0, %s143
      %s158 = sphi 0, %s144
      %s162 = sphi 0, %s162
      %s164 = sphi 0, %s162
      %s165 = sphi 0, %s164
      %s179 = sphi 0, %s165
      %s183 = sphi 0, %s183
      %s185 = sphi 0, %s183
      %s186 = sphi 0, %s185
      %s200 = sphi 0, %s186
      %s204 = sphi 0, %s204
      %s206 = sphi 0, %s204
      %s207 = sphi 0, %s206
      %s221 = sphi 0, %s207
      %s225 = sphi 0, %s225
      %s227 = sphi 0, %s225
      %s228 = sphi 0, %s227
      %s242 = sphi 0, %s228
      %s246 = sphi 0, %s246
      %s248 = sphi 0, %s246
      %s249 = sphi 0, %s248
      %s263 = sphi 0, %s249
      %s267 = sphi 0, %s267
      %s269 = sphi 0, %s267
      %s270 = sphi 0, %s269
      %s284 = sphi 0, %s270
      %s288 = sphi 0, %s288
      %s290 = sphi 0, %s288
      %s291 = sphi 0, %s290
      %s305 = sphi 0, %s291
      %s309 = sphi 0, %s309
      %s311 = sphi 0, %s309
      %s312 = sphi 0, %s311
      %s326 = sphi 0, %s312
      %s330 = sphi 0, %s330
      %s332 = sphi 0, %s330
      %s333 = sphi 0, %s332
      %s347 = sphi 0, %s333
      %s351 = sphi 0, %s351
      %s353 = sphi 0, %s351
      %s354 = sphi 0, %s353
      %s368 = sphi 0, %s354
      %s372 = sphi 0, %s372
      %s374 = sphi 0, %s372
      %s375 = sphi 0, %s374
      %s389 = sphi 0, %s375
      %s393 = sphi 0, %s393
      %s395 = sphi 0, %s393
      %s396 = sphi 0, %s395
      %s410 = sphi 0, %s396
      %s414 = sphi 0, %s414
      %s416 = sphi 0, %s414
      %s417 = sphi 0, %s416
      %s431 = sphi 0, %s417
      %s439 = sphi 0, %s441
      %s442 = sphi 0, %s439
      %s443 = sphi 0, %s442
      %s459 = sphi 0, %s443
    $region4: #{encoder_forward.3} parent=1 // loop_header_branch
      %30 = sbr.rel (%p28) target = $region8
    $region5: #{encoder_forward.3} parent=1 // loop_body
      %s32 = ssub.s32 %s27, 1
      %s33 = ssub.s32 %s27, 2
      %s40 = sadd.s32 1, %s35
      %p41 = scmp.ge.s32.totalorder %s40, 1
      %s42 = scalar_select %p41, 0, %s40
      %s43 = sadd.s32 1, %s34
      %s44 = scalar_select %p41, %s43, %s34
      %p45 = scmp.ge.s32.totalorder %s44, 2
      %s46 = scalar_select %p45, 0, %s44
      %s47 = ssub.s32 %s34, %s46
      %p48 = scmp.eq.s32.totalorder %s47, 0
      %s50 = sadd.s32 %s49, 1
      %s51 = scalar_select %p48, %s49, %s50
      %p54 = pneg %p48
      %p55 = scmp.eq.s32.totalorder %s27, 1
      %p56 = por %p54, %p55
      %p57 = scmp.ne.s32.totalorder %s49, %s52
      %p58 = scmp.eq.s32.totalorder %s27, 0
      %p59 = por %p57, %p58
      %p60 = scmp.ne.s32.totalorder %s49, %s52
      %p61 = scmp.eq.s32.totalorder %s32, 1
      %p62 = por %p60, %p61
      %p63 = scmp.ne.s32.totalorder %s52, %s53
      %p64 = scmp.eq.s32.totalorder %s32, 0
      %p65 = por %p63, %p64
      %p66 = scmp.ne.s32.totalorder %s52, %s53
      %p67 = scmp.eq.s32.totalorder %s33, 1
      %p68 = por %p66, %p67
      %p70 = scmp.ne.s32.totalorder %s53, %s69
      %p71 = scmp.eq.s32.totalorder %s33, 0
      %p72 = por %p70, %p71
      %s73 = ssub.s32 %s34, %s46
      %p74 = scmp.eq.s32.totalorder %s73, 0
      %s76 = sadd.s32 %s75, 1
      %s77 = scalar_select %p74, %s75, %s76
      %p80 = pneg %p74
      %p81 = scmp.eq.s32.totalorder %s27, 1
      %p82 = por %p80, %p81
      %p83 = scmp.ne.s32.totalorder %s75, %s78
      %p84 = scmp.eq.s32.totalorder %s27, 0
      %p85 = por %p83, %p84
      %p86 = scmp.ne.s32.totalorder %s75, %s78
      %p87 = scmp.eq.s32.totalorder %s32, 1
      %p88 = por %p86, %p87
      %p89 = scmp.ne.s32.totalorder %s78, %s79
      %p90 = scmp.eq.s32.totalorder %s32, 0
      %p91 = por %p89, %p90
      %p92 = scmp.ne.s32.totalorder %s78, %s79
      %p93 = scmp.eq.s32.totalorder %s33, 1
      %p94 = por %p92, %p93
      %p96 = scmp.ne.s32.totalorder %s79, %s95
      %p97 = scmp.eq.s32.totalorder %s33, 0
      %p98 = por %p96, %p97
      %s100 = sadd.s32 %s99, 1
      %p103 = scmp.eq.s32.totalorder %s27, 1
      %p104 = scmp.ne.s32.totalorder %s99, %s101
      %p105 = scmp.eq.s32.totalorder %s27, 0
      %p106 = por %p104, %p105
      %p107 = scmp.ne.s32.totalorder %s99, %s101
      %p108 = scmp.eq.s32.totalorder %s32, 1
      %p109 = por %p107, %p108
      %p110 = scmp.ne.s32.totalorder %s101, %s102
      %p111 = scmp.eq.s32.totalorder %s32, 0
      %p112 = por %p110, %p111
      %p113 = scmp.ne.s32.totalorder %s101, %s102
      %p114 = scmp.eq.s32.totalorder %s33, 1
      %p115 = por %p113, %p114
      %p117 = scmp.ne.s32.totalorder %s102, %s116
      %p118 = scmp.eq.s32.totalorder %s33, 0
      %p119 = por %p117, %p118
      %s121 = sadd.s32 %s120, 1
      %p124 = scmp.eq.s32.totalorder %s27, 1
      %p125 = scmp.ne.s32.totalorder %s120, %s122
      %p126 = scmp.eq.s32.totalorder %s27, 0
      %p127 = por %p125, %p126
      %p128 = scmp.ne.s32.totalorder %s120, %s122
      %p129 = scmp.eq.s32.totalorder %s32, 1
      %p130 = por %p128, %p129
      %p131 = scmp.ne.s32.totalorder %s122, %s123
      %p132 = scmp.eq.s32.totalorder %s32, 0
      %p133 = por %p131, %p132
      %p134 = scmp.ne.s32.totalorder %s122, %s123
      %p135 = scmp.eq.s32.totalorder %s33, 1
      %p136 = por %p134, %p135
      %p138 = scmp.ne.s32.totalorder %s123, %s137
      %p139 = scmp.eq.s32.totalorder %s33, 0
      %p140 = por %p138, %p139
      %s142 = sadd.s32 %s141, 1
      %p145 = scmp.eq.s32.totalorder %s27, 1
      %p146 = scmp.ne.s32.totalorder %s141, %s143
      %p147 = scmp.eq.s32.totalorder %s27, 0
      %p148 = por %p146, %p147
      %p149 = scmp.ne.s32.totalorder %s141, %s143
      %p150 = scmp.eq.s32.totalorder %s32, 1
      %p151 = por %p149, %p150
      %p152 = scmp.ne.s32.totalorder %s143, %s144
      %p153 = scmp.eq.s32.totalorder %s32, 0
      %p154 = por %p152, %p153
      %p155 = scmp.ne.s32.totalorder %s143, %s144
      %p156 = scmp.eq.s32.totalorder %s33, 1
      %p157 = por %p155, %p156
      %p159 = scmp.ne.s32.totalorder %s144, %s158
      %p160 = scmp.eq.s32.totalorder %s33, 0
      %p161 = por %p159, %p160
      %s163 = sadd.s32 %s162, 1
      %p166 = scmp.eq.s32.totalorder %s27, 1
      %p167 = scmp.ne.s32.totalorder %s162, %s164
      %p168 = scmp.eq.s32.totalorder %s27, 0
      %p169 = por %p167, %p168
      %p170 = scmp.ne.s32.totalorder %s162, %s164
      %p171 = scmp.eq.s32.totalorder %s32, 1
      %p172 = por %p170, %p171
      %p173 = scmp.ne.s32.totalorder %s164, %s165
      %p174 = scmp.eq.s32.totalorder %s32, 0
      %p175 = por %p173, %p174
      %p176 = scmp.ne.s32.totalorder %s164, %s165
      %p177 = scmp.eq.s32.totalorder %s33, 1
      %p178 = por %p176, %p177
      %p180 = scmp.ne.s32.totalorder %s165, %s179
      %p181 = scmp.eq.s32.totalorder %s33, 0
      %p182 = por %p180, %p181
      %s184 = sadd.s32 %s183, 1
      %p187 = scmp.eq.s32.totalorder %s27, 1
      %p188 = scmp.ne.s32.totalorder %s183, %s185
      %p189 = scmp.eq.s32.totalorder %s27, 0
      %p190 = por %p188, %p189
      %p191 = scmp.ne.s32.totalorder %s183, %s185
      %p192 = scmp.eq.s32.totalorder %s32, 1
      %p193 = por %p191, %p192
      %p194 = scmp.ne.s32.totalorder %s185, %s186
      %p195 = scmp.eq.s32.totalorder %s32, 0
      %p196 = por %p194, %p195
      %p197 = scmp.ne.s32.totalorder %s185, %s186
      %p198 = scmp.eq.s32.totalorder %s33, 1
      %p199 = por %p197, %p198
      %p201 = scmp.ne.s32.totalorder %s186, %s200
      %p202 = scmp.eq.s32.totalorder %s33, 0
      %p203 = por %p201, %p202
      %s205 = sadd.s32 %s204, 1
      %p208 = scmp.eq.s32.totalorder %s27, 1
      %p209 = scmp.ne.s32.totalorder %s204, %s206
      %p210 = scmp.eq.s32.totalorder %s27, 0
      %p211 = por %p209, %p210
      %p212 = scmp.ne.s32.totalorder %s204, %s206
      %p213 = scmp.eq.s32.totalorder %s32, 1
      %p214 = por %p212, %p213
      %p215 = scmp.ne.s32.totalorder %s206, %s207
      %p216 = scmp.eq.s32.totalorder %s32, 0
      %p217 = por %p215, %p216
      %p218 = scmp.ne.s32.totalorder %s206, %s207
      %p219 = scmp.eq.s32.totalorder %s33, 1
      %p220 = por %p218, %p219
      %p222 = scmp.ne.s32.totalorder %s207, %s221
      %p223 = scmp.eq.s32.totalorder %s33, 0
      %p224 = por %p222, %p223
      %s226 = sadd.s32 %s225, 1
      %p229 = scmp.eq.s32.totalorder %s27, 1
      %p230 = scmp.ne.s32.totalorder %s225, %s227
      %p231 = scmp.eq.s32.totalorder %s27, 0
      %p232 = por %p230, %p231
      %p233 = scmp.ne.s32.totalorder %s225, %s227
      %p234 = scmp.eq.s32.totalorder %s32, 1
      %p235 = por %p233, %p234
      %p236 = scmp.ne.s32.totalorder %s227, %s228
      %p237 = scmp.eq.s32.totalorder %s32, 0
      %p238 = por %p236, %p237
      %p239 = scmp.ne.s32.totalorder %s227, %s228
      %p240 = scmp.eq.s32.totalorder %s33, 1
      %p241 = por %p239, %p240
      %p243 = scmp.ne.s32.totalorder %s228, %s242
      %p244 = scmp.eq.s32.totalorder %s33, 0
      %p245 = por %p243, %p244
      %s247 = sadd.s32 %s246, 1
      %p250 = scmp.eq.s32.totalorder %s27, 1
      %p251 = scmp.ne.s32.totalorder %s246, %s248
      %p252 = scmp.eq.s32.totalorder %s27, 0
      %p253 = por %p251, %p252
      %p254 = scmp.ne.s32.totalorder %s246, %s248
      %p255 = scmp.eq.s32.totalorder %s32, 1
      %p256 = por %p254, %p255
      %p257 = scmp.ne.s32.totalorder %s248, %s249
      %p258 = scmp.eq.s32.totalorder %s32, 0
      %p259 = por %p257, %p258
      %p260 = scmp.ne.s32.totalorder %s248, %s249
      %p261 = scmp.eq.s32.totalorder %s33, 1
      %p262 = por %p260, %p261
      %p264 = scmp.ne.s32.totalorder %s249, %s263
      %p265 = scmp.eq.s32.totalorder %s33, 0
      %p266 = por %p264, %p265
      %s268 = sadd.s32 %s267, 1
      %p271 = scmp.eq.s32.totalorder %s27, 1
      %p272 = scmp.ne.s32.totalorder %s267, %s269
      %p273 = scmp.eq.s32.totalorder %s27, 0
      %p274 = por %p272, %p273
      %p275 = scmp.ne.s32.totalorder %s267, %s269
      %p276 = scmp.eq.s32.totalorder %s32, 1
      %p277 = por %p275, %p276
      %p278 = scmp.ne.s32.totalorder %s269, %s270
      %p279 = scmp.eq.s32.totalorder %s32, 0
      %p280 = por %p278, %p279
      %p281 = scmp.ne.s32.totalorder %s269, %s270
      %p282 = scmp.eq.s32.totalorder %s33, 1
      %p283 = por %p281, %p282
      %p285 = scmp.ne.s32.totalorder %s270, %s284
      %p286 = scmp.eq.s32.totalorder %s33, 0
      %p287 = por %p285, %p286
      %s289 = sadd.s32 %s288, 1
      %p292 = scmp.eq.s32.totalorder %s27, 1
      %p293 = scmp.ne.s32.totalorder %s288, %s290
      %p294 = scmp.eq.s32.totalorder %s27, 0
      %p295 = por %p293, %p294
      %p296 = scmp.ne.s32.totalorder %s288, %s290
      %p297 = scmp.eq.s32.totalorder %s32, 1
      %p298 = por %p296, %p297
      %p299 = scmp.ne.s32.totalorder %s290, %s291
      %p300 = scmp.eq.s32.totalorder %s32, 0
      %p301 = por %p299, %p300
      %p302 = scmp.ne.s32.totalorder %s290, %s291
      %p303 = scmp.eq.s32.totalorder %s33, 1
      %p304 = por %p302, %p303
      %p306 = scmp.ne.s32.totalorder %s291, %s305
      %p307 = scmp.eq.s32.totalorder %s33, 0
      %p308 = por %p306, %p307
      %s310 = sadd.s32 %s309, 1
      %p313 = scmp.eq.s32.totalorder %s27, 1
      %p314 = scmp.ne.s32.totalorder %s309, %s311
      %p315 = scmp.eq.s32.totalorder %s27, 0
      %p316 = por %p314, %p315
      %p317 = scmp.ne.s32.totalorder %s309, %s311
      %p318 = scmp.eq.s32.totalorder %s32, 1
      %p319 = por %p317, %p318
      %p320 = scmp.ne.s32.totalorder %s311, %s312
      %p321 = scmp.eq.s32.totalorder %s32, 0
      %p322 = por %p320, %p321
      %p323 = scmp.ne.s32.totalorder %s311, %s312
      %p324 = scmp.eq.s32.totalorder %s33, 1
      %p325 = por %p323, %p324
      %p327 = scmp.ne.s32.totalorder %s312, %s326
      %p328 = scmp.eq.s32.totalorder %s33, 0
      %p329 = por %p327, %p328
      %s331 = sadd.s32 %s330, 1
      %p334 = scmp.eq.s32.totalorder %s27, 1
      %p335 = scmp.ne.s32.totalorder %s330, %s332
      %p336 = scmp.eq.s32.totalorder %s27, 0
      %p337 = por %p335, %p336
      %p338 = scmp.ne.s32.totalorder %s330, %s332
      %p339 = scmp.eq.s32.totalorder %s32, 1
      %p340 = por %p338, %p339
      %p341 = scmp.ne.s32.totalorder %s332, %s333
      %p342 = scmp.eq.s32.totalorder %s32, 0
      %p343 = por %p341, %p342
      %p344 = scmp.ne.s32.totalorder %s332, %s333
      %p345 = scmp.eq.s32.totalorder %s33, 1
      %p346 = por %p344, %p345
      %p348 = scmp.ne.s32.totalorder %s333, %s347
      %p349 = scmp.eq.s32.totalorder %s33, 0
      %p350 = por %p348, %p349
      %s352 = sadd.s32 %s351, 1
      %p355 = scmp.eq.s32.totalorder %s27, 1
      %p356 = scmp.ne.s32.totalorder %s351, %s353
      %p357 = scmp.eq.s32.totalorder %s27, 0
      %p358 = por %p356, %p357
      %p359 = scmp.ne.s32.totalorder %s351, %s353
      %p360 = scmp.eq.s32.totalorder %s32, 1
      %p361 = por %p359, %p360
      %p362 = scmp.ne.s32.totalorder %s353, %s354
      %p363 = scmp.eq.s32.totalorder %s32, 0
      %p364 = por %p362, %p363
      %p365 = scmp.ne.s32.totalorder %s353, %s354
      %p366 = scmp.eq.s32.totalorder %s33, 1
      %p367 = por %p365, %p366
      %p369 = scmp.ne.s32.totalorder %s354, %s368
      %p370 = scmp.eq.s32.totalorder %s33, 0
      %p371 = por %p369, %p370
      %s373 = sadd.s32 %s372, 1
      %p376 = scmp.eq.s32.totalorder %s27, 1
      %p377 = scmp.ne.s32.totalorder %s372, %s374
      %p378 = scmp.eq.s32.totalorder %s27, 0
      %p379 = por %p377, %p378
      %p380 = scmp.ne.s32.totalorder %s372, %s374
      %p381 = scmp.eq.s32.totalorder %s32, 1
      %p382 = por %p380, %p381
      %p383 = scmp.ne.s32.totalorder %s374, %s375
      %p384 = scmp.eq.s32.totalorder %s32, 0
      %p385 = por %p383, %p384
      %p386 = scmp.ne.s32.totalorder %s374, %s375
      %p387 = scmp.eq.s32.totalorder %s33, 1
      %p388 = por %p386, %p387
      %p390 = scmp.ne.s32.totalorder %s375, %s389
      %p391 = scmp.eq.s32.totalorder %s33, 0
      %p392 = por %p390, %p391
      %s394 = sadd.s32 %s393, 1
      %p397 = scmp.eq.s32.totalorder %s27, 1
      %p398 = scmp.ne.s32.totalorder %s393, %s395
      %p399 = scmp.eq.s32.totalorder %s27, 0
      %p400 = por %p398, %p399
      %p401 = scmp.ne.s32.totalorder %s393, %s395
      %p402 = scmp.eq.s32.totalorder %s32, 1
      %p403 = por %p401, %p402
      %p404 = scmp.ne.s32.totalorder %s395, %s396
      %p405 = scmp.eq.s32.totalorder %s32, 0
      %p406 = por %p404, %p405
      %p407 = scmp.ne.s32.totalorder %s395, %s396
      %p408 = scmp.eq.s32.totalorder %s33, 1
      %p409 = por %p407, %p408
      %p411 = scmp.ne.s32.totalorder %s396, %s410
      %p412 = scmp.eq.s32.totalorder %s33, 0
      %p413 = por %p411, %p412
      %s415 = sadd.s32 %s414, 1
      %p418 = scmp.eq.s32.totalorder %s27, 1
      %p419 = scmp.ne.s32.totalorder %s414, %s416
      %p420 = scmp.eq.s32.totalorder %s27, 0
      %p421 = por %p419, %p420
      %p422 = scmp.ne.s32.totalorder %s414, %s416
      %p423 = scmp.eq.s32.totalorder %s32, 1
      %p424 = por %p422, %p423
      %p425 = scmp.ne.s32.totalorder %s416, %s417
      %p426 = scmp.eq.s32.totalorder %s32, 0
      %p427 = por %p425, %p426
      %p428 = scmp.ne.s32.totalorder %s416, %s417
      %p429 = scmp.eq.s32.totalorder %s33, 1
      %p430 = por %p428, %p429
      %p432 = scmp.ne.s32.totalorder %s417, %s431
      %p433 = scmp.eq.s32.totalorder %s33, 0
      %p434 = por %p432, %p433
      %s435 = ssub.s32 %s34, %s46
      %s436 = ssub.s32 %s35, %s42
      %s437 = sor.u32 %s435, %s436
      %p438 = scmp.eq.s32.totalorder %s437, 0
      %s440 = sadd.s32 %s439, 1
      %s441 = scalar_select %p438, %s439, %s440
      %p444 = pneg %p438
      %p445 = scmp.eq.s32.totalorder %s27, 1
      %p446 = por %p444, %p445
      %p447 = scmp.ne.s32.totalorder %s439, %s442
      %p448 = scmp.eq.s32.totalorder %s27, 0
      %p449 = por %p447, %p448
      %p450 = scmp.ne.s32.totalorder %s439, %s442
      %p451 = scmp.eq.s32.totalorder %s32, 1
      %p452 = por %p450, %p451
      %p453 = scmp.ne.s32.totalorder %s442, %s443
      %p454 = scmp.eq.s32.totalorder %s32, 0
      %p455 = por %p453, %p454
      %p456 = scmp.ne.s32.totalorder %s442, %s443
      %p457 = scmp.eq.s32.totalorder %s33, 1
      %p458 = por %p456, %p457
      %p460 = scmp.ne.s32.totalorder %s443, %s459
      %p461 = scmp.eq.s32.totalorder %s33, 0
      %p462 = por %p460, %p461
      %p463 = scmp.le.s32.totalorder 1, %s27
      %p464 = scmp.lt.s32.totalorder %s27, 3
      %p465 = pnand %p463, %p464
      %p466 = pneg %p465
      // Predicated region
      $region9: #{encoder_forward.3} parent=5 // pred_check
        _
      $region10: #{encoder_forward.3} parent=5 // pred_check_branch
        %468 = sbr.rel (%p465) target = $region12
      $region11: #{encoder_forward.3} parent=5 // pred_region
        %s469 = ssub.s32 %s27, 1
        // Predicated region
        $region13: #{encoder_forward.3} parent=11 // pred_check
          %p470 = pneg %p112
        $region14: #{encoder_forward.3} parent=11 // pred_check_branch
          %472 = sbr.rel (%p470) target = $region16
        $region15: #{encoder_forward.3} parent=11 // pred_region
          _
        $region16: #{encoder_forward.3} parent=11 // pred_fallthru
          _
        // Predicated region
        $region17: #{encoder_forward.3} parent=11 // pred_check
          %p473 = pneg %p133
        $region18: #{encoder_forward.3} parent=11 // pred_check_branch
          %475 = sbr.rel (%p473) target = $region20
        $region19: #{encoder_forward.3} parent=11 // pred_region
          _
        $region20: #{encoder_forward.3} parent=11 // pred_fallthru
          _
        // Predicated region
        $region21: #{encoder_forward.3} parent=11 // pred_check
          %p476 = pneg %p154
        $region22: #{encoder_forward.3} parent=11 // pred_check_branch
          %478 = sbr.rel (%p476) target = $region24
        $region23: #{encoder_forward.3} parent=11 // pred_region
          _
        $region24: #{encoder_forward.3} parent=11 // pred_fallthru
          _
        // Predicated region
        $region25: #{encoder_forward.3} parent=11 // pred_check
          %p479 = pneg %p175
        $region26: #{encoder_forward.3} parent=11 // pred_check_branch
          %481 = sbr.rel (%p479) target = $region28
        $region27: #{encoder_forward.3} parent=11 // pred_region
          _
        $region28: #{encoder_forward.3} parent=11 // pred_fallthru
          _
        // Predicated region
        $region29: #{encoder_forward.3} parent=11 // pred_check
          %p482 = pneg %p196
        $region30: #{encoder_forward.3} parent=11 // pred_check_branch
          %484 = sbr.rel (%p482) target = $region32
        $region31: #{encoder_forward.3} parent=11 // pred_region
          _
        $region32: #{encoder_forward.3} parent=11 // pred_fallthru
          _
        // Predicated region
        $region33: #{encoder_forward.3} parent=11 // pred_check
          %p485 = pneg %p217
        $region34: #{encoder_forward.3} parent=11 // pred_check_branch
          %487 = sbr.rel (%p485) target = $region36
        $region35: #{encoder_forward.3} parent=11 // pred_region
          _
        $region36: #{encoder_forward.3} parent=11 // pred_fallthru
          _
        // Predicated region
        $region37: #{encoder_forward.3} parent=11 // pred_check
          %p488 = pneg %p238
        $region38: #{encoder_forward.3} parent=11 // pred_check_branch
          %490 = sbr.rel (%p488) target = $region40
        $region39: #{encoder_forward.3} parent=11 // pred_region
          _
        $region40: #{encoder_forward.3} parent=11 // pred_fallthru
          _
        // Predicated region
        $region41: #{encoder_forward.3} parent=11 // pred_check
          %p491 = pneg %p259
        $region42: #{encoder_forward.3} parent=11 // pred_check_branch
          %493 = sbr.rel (%p491) target = $region44
        $region43: #{encoder_forward.3} parent=11 // pred_region
          _
        $region44: #{encoder_forward.3} parent=11 // pred_fallthru
          _
        // Predicated region
        $region45: #{encoder_forward.3} parent=11 // pred_check
          %p494 = pneg %p280
        $region46: #{encoder_forward.3} parent=11 // pred_check_branch
          %496 = sbr.rel (%p494) target = $region48
        $region47: #{encoder_forward.3} parent=11 // pred_region
          _
        $region48: #{encoder_forward.3} parent=11 // pred_fallthru
          _
        // Predicated region
        $region49: #{encoder_forward.3} parent=11 // pred_check
          %p497 = pneg %p301
        $region50: #{encoder_forward.3} parent=11 // pred_check_branch
          %499 = sbr.rel (%p497) target = $region52
        $region51: #{encoder_forward.3} parent=11 // pred_region
          _
        $region52: #{encoder_forward.3} parent=11 // pred_fallthru
          _
        // Predicated region
        $region53: #{encoder_forward.3} parent=11 // pred_check
          %p500 = pneg %p322
        $region54: #{encoder_forward.3} parent=11 // pred_check_branch
          %502 = sbr.rel (%p500) target = $region56
        $region55: #{encoder_forward.3} parent=11 // pred_region
          _
        $region56: #{encoder_forward.3} parent=11 // pred_fallthru
          _
        // Predicated region
        $region57: #{encoder_forward.3} parent=11 // pred_check
          %p503 = pneg %p343
        $region58: #{encoder_forward.3} parent=11 // pred_check_branch
          %505 = sbr.rel (%p503) target = $region60
        $region59: #{encoder_forward.3} parent=11 // pred_region
          _
        $region60: #{encoder_forward.3} parent=11 // pred_fallthru
          _
        // Predicated region
        $region61: #{encoder_forward.3} parent=11 // pred_check
          %p506 = pneg %p364
        $region62: #{encoder_forward.3} parent=11 // pred_check_branch
          %508 = sbr.rel (%p506) target = $region64
        $region63: #{encoder_forward.3} parent=11 // pred_region
          _
        $region64: #{encoder_forward.3} parent=11 // pred_fallthru
          _
        // Predicated region
        $region65: #{encoder_forward.3} parent=11 // pred_check
          %p509 = pneg %p385
        $region66: #{encoder_forward.3} parent=11 // pred_check_branch
          %511 = sbr.rel (%p509) target = $region68
        $region67: #{encoder_forward.3} parent=11 // pred_region
          _
        $region68: #{encoder_forward.3} parent=11 // pred_fallthru
          _
        // Predicated region
        $region69: #{encoder_forward.3} parent=11 // pred_check
          %p512 = pneg %p406
        $region70: #{encoder_forward.3} parent=11 // pred_check_branch
          %514 = sbr.rel (%p512) target = $region72
        $region71: #{encoder_forward.3} parent=11 // pred_region
          _
        $region72: #{encoder_forward.3} parent=11 // pred_fallthru
          _
        // Predicated region
        $region73: #{encoder_forward.3} parent=11 // pred_check
          %p515 = pneg %p427
        $region74: #{encoder_forward.3} parent=11 // pred_check_branch
          %517 = sbr.rel (%p515) target = $region76
        $region75: #{encoder_forward.3} parent=11 // pred_region
          _
        $region76: #{encoder_forward.3} parent=11 // pred_fallthru
          _
      $region12: #{encoder_forward.3} parent=5 // pred_fallthru
        _
      %p518 = scmp.lt.s32.totalorder %s27, 2
      // Predicated region
      $region77: #{encoder_forward.3} parent=5 // pred_check
        %p519 = pneg %p518
      $region78: #{encoder_forward.3} parent=5 // pred_check_branch
        %521 = sbr.rel (%p519) target = $region80
      $region79: #{encoder_forward.3} parent=5 // pred_region
        // Predicated region
        $region81: #{encoder_forward.3} parent=79 // pred_check
          %p522 = pneg %p59
        $region82: #{encoder_forward.3} parent=79 // pred_check_branch
          %524 = sbr.rel (%p522) target = $region84
        $region83: #{encoder_forward.3} parent=79 // pred_region
          %p525 = scmp.lt.s32.totalorder %s34, 1
          %s526 = scalar_select %p525, %s34, 1
          %s527 = smul.addr %s526, 8
          %s528 = scalar_lea.vmem %s0, %s527
        $region84: #{encoder_forward.3} parent=79 // pred_fallthru
          _
        // Predicated region
        $region85: #{encoder_forward.3} parent=79 // pred_check
          %p529 = pneg %p85
        $region86: #{encoder_forward.3} parent=79 // pred_check_branch
          %531 = sbr.rel (%p529) target = $region88
        $region87: #{encoder_forward.3} parent=79 // pred_region
          %p532 = scmp.lt.s32.totalorder %s34, 1
          %s533 = scalar_select %p532, %s34, 1
          %s534 = scalar_lea.vmem %s1, %s533
        $region88: #{encoder_forward.3} parent=79 // pred_fallthru
          _
      $region80: #{encoder_forward.3} parent=5 // pred_fallthru
        _
      %p535 = scmp.le.s32.totalorder 1, %s27
      %p536 = scmp.lt.s32.totalorder %s27, 3
      %p537 = pnand %p535, %p536
      %p538 = pneg %p537
      // Predicated region
      $region89: #{encoder_forward.3} parent=5 // pred_check
        _
      $region90: #{encoder_forward.3} parent=5 // pred_check_branch
        %540 = sbr.rel (%p537) target = $region92
      $region91: #{encoder_forward.3} parent=5 // pred_region
        %s541 = ssub.s32 %s27, 1
        %p542 = scmp.lt.s32.totalorder %s36, 1
        %s543 = scalar_select %p542, %s36, 1
        %s544 = smul.addr %s543, 8
        %s545 = scalar_lea.vmem %s0, %s544
        %p546 = pneg %p65
        %p547 = pneg %p62
        %p548 = scmp.lt.s32.totalorder %s36, 1
        %s549 = scalar_select %p548, %s36, 1
        %s550 = scalar_lea.vmem %s1, %s549
        %p551 = pneg %p91
        %p552 = pneg %p88
        %p553 = pneg %p112
        %p554 = pneg %p109
        %p555 = pneg %p133
        %p556 = pneg %p130
        %p557 = pneg %p154
        %p558 = pneg %p151
        %p559 = pneg %p175
        %p560 = pneg %p172
        %p561 = pneg %p196
        %p562 = pneg %p193
        %p563 = pneg %p217
        %p564 = pneg %p214
        %p565 = pneg %p238
        %p566 = pneg %p235
        %p567 = pneg %p259
        %p568 = pneg %p256
        %p569 = pneg %p280
        %p570 = pneg %p277
        %p571 = pneg %p301
        %p572 = pneg %p298
        %p573 = pneg %p322
        %p574 = pneg %p319
        %p575 = pneg %p343
        %p576 = pneg %p340
        %p577 = pneg %p364
        %p578 = pneg %p361
        %p579 = pneg %p385
        %p580 = pneg %p382
        %p581 = pneg %p406
        %p582 = pneg %p403
        %p583 = pneg %p427
        %p584 = pneg %p424
        %p585 = pneg %p455
        %p586 = pneg %p452
        %s587 = sand.u32 %s442, 1
        %s588 = scalar_lea.sflag [#allocation5], %s587
        %s589 = sand.u32 %s442, 1
        %s590 = smul.addr %s589, 8
        %s591 = scalar_lea.vmem [#allocation4], %s590
        %p592 = scmp.lt.s32.totalorder %s36, 1
        %s593 = scalar_select %p592, %s36, 1
        %s594 = smul.addr %s593, 8
        %s595 = scalar_lea.vmem %s0, %s594
        %p596 = scmp.lt.s32.totalorder %s36, 1
        %s597 = scalar_select %p596, %s36, 1
        %s598 = scalar_lea.vmem %s1, %s597
        %p599 = scmp.eq.s32.totalorder %s37, 0
        // Predicated region
        $region93: #{encoder_forward.3} parent=91 // pred_check
          %p600 = pneg %p599
        $region94: #{encoder_forward.3} parent=91 // pred_check_branch
          %602 = sbr.rel (%p600) target = $region96
        $region95: #{encoder_forward.3} parent=91 // pred_region
          %v603 = vld [vmem:[%s595] sm:$0xff]
          %v604 = vld [vmem:[%s2] sm:$0x1]
          %v605 = vld [vmem:[%s3] sm:$0x1]
          %vm606 = vcmask 261120
          %v607 = vsel %vm606, %v603, 0.0
          %608 = vadd.xlane.f32.xlu0 %v607
          %v609 = vpop.xlane.xlu0 %608
          %v610 = vrcp.pop 32.0
          %v611 = vmul.f32 %v609, %v610
          %v612 = vsub.f32 %v603, %v611
          %v613 = vmul.f32 %v612, %v612
          %v614 = vsel %vm606, %v613, 0.0
          %615 = vadd.xlane.f32.xlu0 %v614
          %v616 = vpop.xlane.xlu0 %615
          %v617 = vrcp.pop 31.0
          %v618 = vmul.f32 %v616, %v617
          %v620 = vlaneseq
          %v621 = vshrl.u32 %v620, 7
          %v622 = vsub.s32 0, %v621
          %v623 = vrot.slane %v604, %v622
          %v625 = vmul.f32 %v623, %v612
          %v626 = vrsqrt.pop %v618
          %v627 = vmul.f32 %v618, %v626
          %vm628 = vcmp.eq.f32.partialorder %v618, inf
          %v629 = vsel %vm628, %v618, %v627
          %vm630 = vcmp.eq.f32.partialorder %v618, 0.0
          %v631 = vand.u32 %v618, 2147483648
          %v632 = vsel %vm630, %v631, %v629
          %v633 = vadd.f32 %v632, 1e-06
          %v634 = vrcp.pop %v633
          %v635 = vmul.f32 %v625, %v634
          %v637 = vlaneseq
          %v638 = vshrl.u32 %v637, 7
          %v639 = vsub.s32 0, %v638
          %v640 = vrot.slane %v605, %v639
          %v642 = vadd.f32 %v635, %v640
          %v643 = vld [vmem:[%s6] sm:$0xff]
          %v644 = vld [vmem:[%s6 + $0x8] sm:$0xff]
          %v645 = vld [vmem:[%s6 + $0x10] sm:$0xff]
          %v646 = vld [vmem:[%s6 + $0x18] sm:$0xff]
          %v647 = vld [vmem:[%s7] sm:$0x1]
          %v649 = vlaneseq
          %v650 = vshrl.u32 %v649, 7
          %v651 = vsub.s32 0, %v650
          %v652 = vrot.slane %v647, %v651
          %v655 = vsel %vm606, %v642, 0
          %657 = vmatprep.subr.mxu0 0.0
          %658 = vmatpush1.msra.mxu0 0.0
          %659 = vmatprep.subr.mxu0 0.0
          %660 = vmatpush1.msra.mxu0 0.0
          %661 = vmatprep.subr.mxu0 0.0
          %662 = vmatpush1.msra.mxu0 0.0
          %663 = vmatprep.subr.mxu0 0.0
          %664 = vmatpush1.msra.mxu0 0.0
          %665 = vmatprep.subr.mxu0 0.0
          %666 = vmatpush1.msra.mxu0 0.0
          %667 = vmatprep.subr.mxu0 0.0
          %668 = vmatpush1.msra.mxu0 0.0
          %669 = vmatprep.subr.mxu0 0.0
          %670 = vmatpush1.msra.mxu0 0.0
          %671 = vmatprep.subr.mxu0 0.0
          %672 = vmatpush1.msra.mxu0 0.0
          %673 = vmatprep.subr.mxu0 0.0
          %674 = vmatpush1.msra.mxu0 0.0
          %675 = vmatprep.subr.mxu0 0.0
          %676 = vmatpush1.msra.mxu0 0.0
          %677 = vmatprep.subr.mxu0 0.0
          %678 = vmatpush1.msra.mxu0 0.0
          %679 = vmatprep.subr.mxu0 0.0
          %680 = vmatpush1.msra.mxu0 0.0
          %681 = vmatprep.subr.mxu0 0.0
          %682 = vmatpush1.msra.mxu0 %v646
          %683 = vmatprep.subr.mxu0 0.0
          %684 = vmatpush1.msra.mxu0 %v645
          %685 = vmatprep.subr.mxu0 0.0
          %686 = vmatpush1.msra.mxu0 %v644
          %687 = vmatprep.subr.mxu0 0.0
          %688 = vmatpush1.msra.mxu0 %v643
          %689 = vmatprep.subr.mxu0 0.0
          %690 = vmatpush2.msra.mxu0 0.0
          %691 = vmatprep.subr.mxu0 0.0
          %692 = vmatpush2.msra.mxu0 0.0
          %693 = vmatprep.subr.mxu0 0.0
          %694 = vmatpush2.msra.mxu0 0.0
          %695 = vmatprep.subr.mxu0 0.0
          %696 = vmatpush2.msra.mxu0 0.0
          %697 = vmatprep.subr.mxu0 0.0
          %698 = vmatpush2.msra.mxu0 0.0
          %699 = vmatprep.subr.mxu0 0.0
          %700 = vmatpush2.msra.mxu0 0.0
          %701 = vmatprep.subr.mxu0 0.0
          %702 = vmatpush2.msra.mxu0 0.0
          %703 = vmatprep.subr.mxu0 0.0
          %704 = vmatpush2.msra.mxu0 0.0
          %705 = vmatprep.subr.mxu0 0.0
          %706 = vmatpush2.msra.mxu0 0.0
          %707 = vmatprep.subr.mxu0 0.0
          %708 = vmatpush2.msra.mxu0 0.0
          %709 = vmatprep.subr.mxu0 0.0
          %710 = vmatpush2.msra.mxu0 0.0
          %711 = vmatprep.subr.mxu0 0.0
          %712 = vmatpush2.msra.mxu0 0.0
          %713 = vmatprep.subr.mxu0 0.0
          %714 = vmatpush2.msra.mxu0 0.0
          %715 = vmatprep.subr.mxu0 0.0
          %716 = vmatpush2.msra.mxu0 0.0
          %717 = vmatprep.subr.mxu0 0.0
          %718 = vmatpush2.msra.mxu0 0.0
          %719 = vmatprep.subr.mxu0 0.0
          %720 = vmatpush2.msra.mxu0 0.0
          %721 = vmatprep.mubr.f32.mxu0 0.0
          %722 = vmatmul.mubr.f32.gmra.mxu0 %v655
          %v723 = vpop.f32.mrf.mxu0
          %v724 = vadd.f32 %v652, %v723
          %v725 = vpop.f32.mrf.mxu0
          %726 = vdwg.mxu0
          %vm727 = vcmask 523264
          %728 = vst.msk [vmem:[#allocation2] sm:$0xff] %vm727, %v724
        $region96: #{encoder_forward.3} parent=91 // pred_fallthru
          _
        %s729 = smul.u32 %s37, 8
        %s730 = scalar_lea.vmem %s595, %s729
        %v731 = vld [vmem:[%s730] sm:$0xff]
        %v732 = vld [vmem:[%s2] sm:$0x1]
        %v733 = vld [vmem:[%s3] sm:$0x1]
        %vm734 = vcmask 261120
        %v735 = vsel %vm734, %v731, 0.0
        %736 = vadd.xlane.f32.xlu0 %v735
        %v737 = vpop.xlane.xlu0 %736
        %v738 = vrcp.pop 32.0
        %v739 = vmul.f32 %v737, %v738
        %v740 = vsub.f32 %v731, %v739
        %v741 = vmul.f32 %v740, %v740
        %v742 = vsel %vm734, %v741, 0.0
        %743 = vadd.xlane.f32.xlu0 %v742
        %v744 = vpop.xlane.xlu0 %743
        %v745 = vrcp.pop 31.0
        %v746 = vmul.f32 %v744, %v745
        %v748 = vlaneseq
        %v749 = vshrl.u32 %v748, 7
        %v750 = vsub.s32 0, %v749
        %v751 = vrot.slane %v732, %v750
        %v753 = vmul.f32 %v751, %v740
        %v754 = vrsqrt.pop %v746
        %v755 = vmul.f32 %v746, %v754
        %vm756 = vcmp.eq.f32.partialorder %v746, inf
        %v757 = vsel %vm756, %v746, %v755
        %vm758 = vcmp.eq.f32.partialorder %v746, 0.0
        %v759 = vand.u32 %v746, 2147483648
        %v760 = vsel %vm758, %v759, %v757
        %v761 = vadd.f32 %v760, 1e-06
        %v762 = vrcp.pop %v761
        %v763 = vmul.f32 %v753, %v762
        %v765 = vlaneseq
        %v766 = vshrl.u32 %v765, 7
        %v767 = vsub.s32 0, %v766
        %v768 = vrot.slane %v733, %v767
        %v770 = vadd.f32 %v763, %v768
        %v771 = vld [vmem:[%s4] sm:$0xff]
        %v772 = vld [vmem:[%s4 + $0x8] sm:$0xff]
        %v773 = vld [vmem:[%s4 + $0x10] sm:$0xff]
        %v774 = vld [vmem:[%s4 + $0x18] sm:$0xff]
        %v775 = vld [vmem:[%s5] sm:$0x1]
        %v777 = vlaneseq
        %v778 = vshrl.u32 %v777, 7
        %v779 = vsub.s32 0, %v778
        %v780 = vrot.slane %v775, %v779
        %v783 = vsel %vm734, %v770, 0
        %785 = vmatprep.subr.mxu0 0.0
        %786 = vmatpush1.msra.mxu0 0.0
        %787 = vmatprep.subr.mxu0 0.0
        %788 = vmatpush1.msra.mxu0 0.0
        %789 = vmatprep.subr.mxu0 0.0
        %790 = vmatpush1.msra.mxu0 0.0
        %791 = vmatprep.subr.mxu0 0.0
        %792 = vmatpush1.msra.mxu0 0.0
        %793 = vmatprep.subr.mxu0 0.0
        %794 = vmatpush1.msra.mxu0 0.0
        %795 = vmatprep.subr.mxu0 0.0
        %796 = vmatpush1.msra.mxu0 0.0
        %797 = vmatprep.subr.mxu0 0.0
        %798 = vmatpush1.msra.mxu0 0.0
        %799 = vmatprep.subr.mxu0 0.0
        %800 = vmatpush1.msra.mxu0 0.0
        %801 = vmatprep.subr.mxu0 0.0
        %802 = vmatpush1.msra.mxu0 0.0
        %803 = vmatprep.subr.mxu0 0.0
        %804 = vmatpush1.msra.mxu0 0.0
        %805 = vmatprep.subr.mxu0 0.0
        %806 = vmatpush1.msra.mxu0 0.0
        %807 = vmatprep.subr.mxu0 0.0
        %808 = vmatpush1.msra.mxu0 0.0
        %809 = vmatprep.subr.mxu0 0.0
        %810 = vmatpush1.msra.mxu0 %v774
        %811 = vmatprep.subr.mxu0 0.0
        %812 = vmatpush1.msra.mxu0 %v773
        %813 = vmatprep.subr.mxu0 0.0
        %814 = vmatpush1.msra.mxu0 %v772
        %815 = vmatprep.subr.mxu0 0.0
        %816 = vmatpush1.msra.mxu0 %v771
        %817 = vmatprep.subr.mxu0 0.0
        %818 = vmatpush2.msra.mxu0 0.0
        %819 = vmatprep.subr.mxu0 0.0
        %820 = vmatpush2.msra.mxu0 0.0
        %821 = vmatprep.subr.mxu0 0.0
        %822 = vmatpush2.msra.mxu0 0.0
        %823 = vmatprep.subr.mxu0 0.0
        %824 = vmatpush2.msra.mxu0 0.0
        %825 = vmatprep.subr.mxu0 0.0
        %826 = vmatpush2.msra.mxu0 0.0
        %827 = vmatprep.subr.mxu0 0.0
        %828 = vmatpush2.msra.mxu0 0.0
        %829 = vmatprep.subr.mxu0 0.0
        %830 = vmatpush2.msra.mxu0 0.0
        %831 = vmatprep.subr.mxu0 0.0
        %832 = vmatpush2.msra.mxu0 0.0
        %833 = vmatprep.subr.mxu0 0.0
        %834 = vmatpush2.msra.mxu0 0.0
        %835 = vmatprep.subr.mxu0 0.0
        %836 = vmatpush2.msra.mxu0 0.0
        %837 = vmatprep.subr.mxu0 0.0
        %838 = vmatpush2.msra.mxu0 0.0
        %839 = vmatprep.subr.mxu0 0.0
        %840 = vmatpush2.msra.mxu0 0.0
        %841 = vmatprep.subr.mxu0 0.0
        %842 = vmatpush2.msra.mxu0 0.0
        %843 = vmatprep.subr.mxu0 0.0
        %844 = vmatpush2.msra.mxu0 0.0
        %845 = vmatprep.subr.mxu0 0.0
        %846 = vmatpush2.msra.mxu0 0.0
        %847 = vmatprep.subr.mxu0 0.0
        %848 = vmatpush2.msra.mxu0 0.0
        %849 = vmatprep.mubr.f32.mxu0 0.0
        %850 = vmatmul.mubr.f32.gmra.mxu0 %v783
        %v851 = vpop.f32.mrf.mxu0
        %v852 = vadd.f32 %v780, %v851
        %v853 = vpop.f32.mrf.mxu0
        %854 = vdwg.mxu0
        %v855 = vld [vmem:[#allocation2] sm:$0xff]
        %v856 = vld [vmem:[%s598] sm:$0x1]
        %vm857 = vcmp.eq.f32.partialorder %v856, 0.0
        %vm858 = vcmask 64512
        %v860 = vsel %vm858, %v852, 0
        %v863 = vsel %vm858, %v855, 0
        %865 = vmatprep.subr.mxu0 0.0
        %866 = vmatpush1.xpose.msra.mxu0 0.0
        %867 = vmatprep.subr.mxu0 0.0
        %868 = vmatpush1.xpose.msra.mxu0 0.0
        %869 = vmatprep.subr.mxu0 0.0
        %870 = vmatpush1.xpose.msra.mxu0 0.0
        %871 = vmatprep.subr.mxu0 0.0
        %872 = vmatpush1.xpose.msra.mxu0 0.0
        %873 = vmatprep.subr.mxu0 0.0
        %874 = vmatpush1.xpose.msra.mxu0 0.0
        %875 = vmatprep.subr.mxu0 0.0
        %876 = vmatpush1.xpose.msra.mxu0 0.0
        %877 = vmatprep.subr.mxu0 0.0
        %878 = vmatpush1.xpose.msra.mxu0 0.0
        %879 = vmatprep.subr.mxu0 0.0
        %880 = vmatpush1.xpose.msra.mxu0 0.0
        %881 = vmatprep.subr.mxu0 0.0
        %882 = vmatpush1.xpose.msra.mxu0 0.0
        %883 = vmatprep.subr.mxu0 0.0
        %884 = vmatpush1.xpose.msra.mxu0 0.0
        %885 = vmatprep.subr.mxu0 0.0
        %886 = vmatpush1.xpose.msra.mxu0 0.0
        %887 = vmatprep.subr.mxu0 0.0
        %888 = vmatpush1.xpose.msra.mxu0 0.0
        %889 = vmatprep.subr.mxu0 0.0
        %890 = vmatpush1.xpose.msra.mxu0 0.0
        %891 = vmatprep.subr.mxu0 0.0
        %892 = vmatpush1.xpose.msra.mxu0 0.0
        %893 = vmatprep.subr.mxu0 0.0
        %894 = vmatpush1.xpose.msra.mxu0 0.0
        %895 = vmatprep.subr.mxu0 0.0
        %896 = vmatpush1.xpose.msra.mxu0 %v863
        %897 = vmatprep.subr.mxu0 0.0
        %898 = vmatpush2.xpose.msra.mxu0 0.0
        %899 = vmatprep.subr.mxu0 0.0
        %900 = vmatpush2.xpose.msra.mxu0 0.0
        %901 = vmatprep.subr.mxu0 0.0
        %902 = vmatpush2.xpose.msra.mxu0 0.0
        %903 = vmatprep.subr.mxu0 0.0
        %904 = vmatpush2.xpose.msra.mxu0 0.0
        %905 = vmatprep.subr.mxu0 0.0
        %906 = vmatpush2.xpose.msra.mxu0 0.0
        %907 = vmatprep.subr.mxu0 0.0
        %908 = vmatpush2.xpose.msra.mxu0 0.0
        %909 = vmatprep.subr.mxu0 0.0
        %910 = vmatpush2.xpose.msra.mxu0 0.0
        %911 = vmatprep.subr.mxu0 0.0
        %912 = vmatpush2.xpose.msra.mxu0 0.0
        %913 = vmatprep.subr.mxu0 0.0
        %914 = vmatpush2.xpose.msra.mxu0 0.0
        %915 = vmatprep.subr.mxu0 0.0
        %916 = vmatpush2.xpose.msra.mxu0 0.0
        %917 = vmatprep.subr.mxu0 0.0
        %918 = vmatpush2.xpose.msra.mxu0 0.0
        %919 = vmatprep.subr.mxu0 0.0
        %920 = vmatpush2.xpose.msra.mxu0 0.0
        %921 = vmatprep.subr.mxu0 0.0
        %922 = vmatpush2.xpose.msra.mxu0 0.0
        %923 = vmatprep.subr.mxu0 0.0
        %924 = vmatpush2.xpose.msra.mxu0 0.0
        %925 = vmatprep.subr.mxu0 0.0
        %926 = vmatpush2.xpose.msra.mxu0 0.0
        %927 = vmatprep.subr.mxu0 0.0
        %928 = vmatpush2.xpose.msra.mxu0 0.0
        %929 = vmatprep.mubr.f32.mxu0 0.0
        %930 = vmatmul.mubr.f32.gmra.mxu0 %v860
        %v931 = vpop.f32.mrf.mxu0
        %v932 = vadd.f32 0.0, %v931
        %v933 = vpop.f32.mrf.mxu0
        %934 = vdwg.mxu0
        %v935 = vsel %vm857, 1, 0
        %v936 = vlaneseq
        %v937 = vshrl.u32 %v936, 7
        %v938 = vsub.s32 0, %v937
        %v939 = vrot.slane %v935, %v938
        %vm940 = vcmp.eq.s32.totalorder %v939, 1
        %v941 = vsel %vm940, -1e+09, %v932
        %v942 = vsel %vm858, %v941, -inf
        %943 = vmax.xlane.f32.xlu0 %v942
        %v944 = vpop.xlane.xlu0 %943
        %v945 = vsub.f32 %v941, %v944
        %v946 = vmul.f32 %v945, 1.442695
        %v947 = vpow.pop %v946
        %v948 = vsel %vm858, %v947, 0.0
        %949 = vadd.xlane.f32.xlu0 %v948
        %v950 = vpop.xlane.xlu0 %949
        %v951 = vrcp.pop %v950
        %v952 = vmul.f32 %v947, %v951
        %953 = vrot.lane.b32.xlu0 %v855, 96
        %v954 = vpop.permute.xlu0 %953
        %v957 = vsel %vm858, %v952, 0
        %959 = vmatprep.subr.mxu0 0.0
        %960 = vmatpush1.msra.mxu0 0.0
        %961 = vmatprep.subr.mxu0 0.0
        %962 = vmatpush1.msra.mxu0 0.0
        %963 = vmatprep.subr.mxu0 0.0
        %964 = vmatpush1.msra.mxu0 0.0
        %965 = vmatprep.subr.mxu0 0.0
        %966 = vmatpush1.msra.mxu0 0.0
        %967 = vmatprep.subr.mxu0 0.0
        %968 = vmatpush1.msra.mxu0 0.0
        %969 = vmatprep.subr.mxu0 0.0
        %970 = vmatpush1.msra.mxu0 0.0
        %971 = vmatprep.subr.mxu0 0.0
        %972 = vmatpush1.msra.mxu0 0.0
        %973 = vmatprep.subr.mxu0 0.0
        %974 = vmatpush1.msra.mxu0 0.0
        %975 = vmatprep.subr.mxu0 0.0
        %976 = vmatpush1.msra.mxu0 0.0
        %977 = vmatprep.subr.mxu0 0.0
        %978 = vmatpush1.msra.mxu0 0.0
        %979 = vmatprep.subr.mxu0 0.0
        %980 = vmatpush1.msra.mxu0 0.0
        %981 = vmatprep.subr.mxu0 0.0
        %982 = vmatpush1.msra.mxu0 0.0
        %983 = vmatprep.subr.mxu0 0.0
        %984 = vmatpush1.msra.mxu0 0.0
        %985 = vmatprep.subr.mxu0 0.0
        %986 = vmatpush1.msra.mxu0 0.0
        %987 = vmatprep.subr.mxu0 0.0
        %988 = vmatpush1.msra.mxu0 0.0
        %989 = vmatprep.subr.mxu0 0.0
        %990 = vmatpush1.msra.mxu0 %v954
        %991 = vmatprep.subr.mxu0 0.0
        %992 = vmatpush2.msra.mxu0 0.0
        %993 = vmatprep.subr.mxu0 0.0
        %994 = vmatpush2.msra.mxu0 0.0
        %995 = vmatprep.subr.mxu0 0.0
        %996 = vmatpush2.msra.mxu0 0.0
        %997 = vmatprep.subr.mxu0 0.0
        %998 = vmatpush2.msra.mxu0 0.0
        %999 = vmatprep.subr.mxu0 0.0
        %1000 = vmatpush2.msra.mxu0 0.0
        %1001 = vmatprep.subr.mxu0 0.0
        %1002 = vmatpush2.msra.mxu0 0.0
        %1003 = vmatprep.subr.mxu0 0.0
        %1004 = vmatpush2.msra.mxu0 0.0
        %1005 = vmatprep.subr.mxu0 0.0
        %1006 = vmatpush2.msra.mxu0 0.0
        %1007 = vmatprep.subr.mxu0 0.0
        %1008 = vmatpush2.msra.mxu0 0.0
        %1009 = vmatprep.subr.mxu0 0.0
        %1010 = vmatpush2.msra.mxu0 0.0
        %1011 = vmatprep.subr.mxu0 0.0
        %1012 = vmatpush2.msra.mxu0 0.0
        %1013 = vmatprep.subr.mxu0 0.0
        %1014 = vmatpush2.msra.mxu0 0.0
        %1015 = vmatprep.subr.mxu0 0.0
        %1016 = vmatpush2.msra.mxu0 0.0
        %1017 = vmatprep.subr.mxu0 0.0
        %1018 = vmatpush2.msra.mxu0 0.0
        %1019 = vmatprep.subr.mxu0 0.0
        %1020 = vmatpush2.msra.mxu0 0.0
        %1021 = vmatprep.subr.mxu0 0.0
        %1022 = vmatpush2.msra.mxu0 0.0
        %1023 = vmatprep.mubr.f32.mxu0 0.0
        %1024 = vmatmul.mubr.f32.gmra.mxu0 %v957
        %v1025 = vpop.f32.mrf.mxu0
        %v1026 = vadd.f32 0.0, %v1025
        %v1027 = vpop.f32.mrf.mxu0
        %1028 = vdwg.mxu0
        %1029 = vst.msk [vmem:[#allocation3] sm:$0xff] %vm858, %v1026
        %1030 = vrot.lane.b32.xlu0 %v852, 120
        %v1031 = vpop.permute.xlu0 %1030
        %1032 = vrot.lane.b32.xlu0 %v855, 120
        %v1033 = vpop.permute.xlu0 %1032
        %v1034 = vsel %vm858, %v1031, 0
        %v1036 = vsel %vm858, %v1033, 0
        %1038 = vmatprep.subr.mxu0 0.0
        %1039 = vmatpush1.xpose.msra.mxu0 0.0
        %1040 = vmatprep.subr.mxu0 0.0
        %1041 = vmatpush1.xpose.msra.mxu0 0.0
        %1042 = vmatprep.subr.mxu0 0.0
        %1043 = vmatpush1.xpose.msra.mxu0 0.0
        %1044 = vmatprep.subr.mxu0 0.0
        %1045 = vmatpush1.xpose.msra.mxu0 0.0
        %1046 = vmatprep.subr.mxu0 0.0
        %1047 = vmatpush1.xpose.msra.mxu0 0.0
        %1048 = vmatprep.subr.mxu0 0.0
        %1049 = vmatpush1.xpose.msra.mxu0 0.0
        %1050 = vmatprep.subr.mxu0 0.0
        %1051 = vmatpush1.xpose.msra.mxu0 0.0
        %1052 = vmatprep.subr.mxu0 0.0
        %1053 = vmatpush1.xpose.msra.mxu0 0.0
        %1054 = vmatprep.subr.mxu0 0.0
        %1055 = vmatpush1.xpose.msra.mxu0 0.0
        %1056 = vmatprep.subr.mxu0 0.0
        %1057 = vmatpush1.xpose.msra.mxu0 0.0
        %1058 = vmatprep.subr.mxu0 0.0
        %1059 = vmatpush1.xpose.msra.mxu0 0.0
        %1060 = vmatprep.subr.mxu0 0.0
        %1061 = vmatpush1.xpose.msra.mxu0 0.0
        %1062 = vmatprep.subr.mxu0 0.0
        %1063 = vmatpush1.xpose.msra.mxu0 0.0
        %1064 = vmatprep.subr.mxu0 0.0
        %1065 = vmatpush1.xpose.msra.mxu0 0.0
        %1066 = vmatprep.subr.mxu0 0.0
        %1067 = vmatpush1.xpose.msra.mxu0 0.0
        %1068 = vmatprep.subr.mxu0 0.0
        %1069 = vmatpush1.xpose.msra.mxu0 %v1036
        %1070 = vmatprep.subr.mxu0 0.0
        %1071 = vmatpush2.xpose.msra.mxu0 0.0
        %1072 = vmatprep.subr.mxu0 0.0
        %1073 = vmatpush2.xpose.msra.mxu0 0.0
        %1074 = vmatprep.subr.mxu0 0.0
        %1075 = vmatpush2.xpose.msra.mxu0 0.0
        %1076 = vmatprep.subr.mxu0 0.0
        %1077 = vmatpush2.xpose.msra.mxu0 0.0
        %1078 = vmatprep.subr.mxu0 0.0
        %1079 = vmatpush2.xpose.msra.mxu0 0.0
        %1080 = vmatprep.subr.mxu0 0.0
        %1081 = vmatpush2.xpose.msra.mxu0 0.0
        %1082 = vmatprep.subr.mxu0 0.0
        %1083 = vmatpush2.xpose.msra.mxu0 0.0
        %1084 = vmatprep.subr.mxu0 0.0
        %1085 = vmatpush2.xpose.msra.mxu0 0.0
        %1086 = vmatprep.subr.mxu0 0.0
        %1087 = vmatpush2.xpose.msra.mxu0 0.0
        %1088 = vmatprep.subr.mxu0 0.0
        %1089 = vmatpush2.xpose.msra.mxu0 0.0
        %1090 = vmatprep.subr.mxu0 0.0
        %1091 = vmatpush2.xpose.msra.mxu0 0.0
        %1092 = vmatprep.subr.mxu0 0.0
        %1093 = vmatpush2.xpose.msra.mxu0 0.0
        %1094 = vmatprep.subr.mxu0 0.0
        %1095 = vmatpush2.xpose.msra.mxu0 0.0
        %1096 = vmatprep.subr.mxu0 0.0
        %1097 = vmatpush2.xpose.msra.mxu0 0.0
        %1098 = vmatprep.subr.mxu0 0.0
        %1099 = vmatpush2.xpose.msra.mxu0 0.0
        %1100 = vmatprep.subr.mxu0 0.0
        %1101 = vmatpush2.xpose.msra.mxu0 0.0
        %1102 = vmatprep.mubr.f32.mxu0 0.0
        %1103 = vmatmul.mubr.f32.gmra.mxu0 %v1034
        %v1104 = vpop.f32.mrf.mxu0
        %v1105 = vadd.f32 0.0, %v1104
        %v1106 = vpop.f32.mrf.mxu0
        %1107 = vdwg.mxu0
        %v1108 = vsel %vm940, -1e+09, %v1105
        %v1109 = vsel %vm858, %v1108, -inf
        %1110 = vmax.xlane.f32.xlu0 %v1109
        %v1111 = vpop.xlane.xlu0 %1110
        %v1112 = vsub.f32 %v1108, %v1111
        %v1113 = vmul.f32 %v1112, 1.442695
        %v1114 = vpow.pop %v1113
        %v1115 = vsel %vm858, %v1114, 0.0
        %1116 = vadd.xlane.f32.xlu0 %v1115
        %v1117 = vpop.xlane.xlu0 %1116
        %v1118 = vrcp.pop %v1117
        %v1119 = vmul.f32 %v1114, %v1118
        %1120 = vrot.lane.b32.xlu0 %v855, 88
        %v1121 = vpop.permute.xlu0 %1120
        %v1124 = vsel %vm858, %v1119, 0
        %1126 = vmatprep.subr.mxu0 0.0
        %1127 = vmatpush1.msra.mxu0 0.0
        %1128 = vmatprep.subr.mxu0 0.0
        %1129 = vmatpush1.msra.mxu0 0.0
        %1130 = vmatprep.subr.mxu0 0.0
        %1131 = vmatpush1.msra.mxu0 0.0
        %1132 = vmatprep.subr.mxu0 0.0
        %1133 = vmatpush1.msra.mxu0 0.0
        %1134 = vmatprep.subr.mxu0 0.0
        %1135 = vmatpush1.msra.mxu0 0.0
        %1136 = vmatprep.subr.mxu0 0.0
        %1137 = vmatpush1.msra.mxu0 0.0
        %1138 = vmatprep.subr.mxu0 0.0
        %1139 = vmatpush1.msra.mxu0 0.0
        %1140 = vmatprep.subr.mxu0 0.0
        %1141 = vmatpush1.msra.mxu0 0.0
        %1142 = vmatprep.subr.mxu0 0.0
        %1143 = vmatpush1.msra.mxu0 0.0
        %1144 = vmatprep.subr.mxu0 0.0
        %1145 = vmatpush1.msra.mxu0 0.0
        %1146 = vmatprep.subr.mxu0 0.0
        %1147 = vmatpush1.msra.mxu0 0.0
        %1148 = vmatprep.subr.mxu0 0.0
        %1149 = vmatpush1.msra.mxu0 0.0
        %1150 = vmatprep.subr.mxu0 0.0
        %1151 = vmatpush1.msra.mxu0 0.0
        %1152 = vmatprep.subr.mxu0 0.0
        %1153 = vmatpush1.msra.mxu0 0.0
        %1154 = vmatprep.subr.mxu0 0.0
        %1155 = vmatpush1.msra.mxu0 0.0
        %1156 = vmatprep.subr.mxu0 0.0
        %1157 = vmatpush1.msra.mxu0 %v1121
        %1158 = vmatprep.subr.mxu0 0.0
        %1159 = vmatpush2.msra.mxu0 0.0
        %1160 = vmatprep.subr.mxu0 0.0
        %1161 = vmatpush2.msra.mxu0 0.0
        %1162 = vmatprep.subr.mxu0 0.0
        %1163 = vmatpush2.msra.mxu0 0.0
        %1164 = vmatprep.subr.mxu0 0.0
        %1165 = vmatpush2.msra.mxu0 0.0
        %1166 = vmatprep.subr.mxu0 0.0
        %1167 = vmatpush2.msra.mxu0 0.0
        %1168 = vmatprep.subr.mxu0 0.0
        %1169 = vmatpush2.msra.mxu0 0.0
        %1170 = vmatprep.subr.mxu0 0.0
        %1171 = vmatpush2.msra.mxu0 0.0
        %1172 = vmatprep.subr.mxu0 0.0
        %1173 = vmatpush2.msra.mxu0 0.0
        %1174 = vmatprep.subr.mxu0 0.0
        %1175 = vmatpush2.msra.mxu0 0.0
        %1176 = vmatprep.subr.mxu0 0.0
        %1177 = vmatpush2.msra.mxu0 0.0
        %1178 = vmatprep.subr.mxu0 0.0
        %1179 = vmatpush2.msra.mxu0 0.0
        %1180 = vmatprep.subr.mxu0 0.0
        %1181 = vmatpush2.msra.mxu0 0.0
        %1182 = vmatprep.subr.mxu0 0.0
        %1183 = vmatpush2.msra.mxu0 0.0
        %1184 = vmatprep.subr.mxu0 0.0
        %1185 = vmatpush2.msra.mxu0 0.0
        %1186 = vmatprep.subr.mxu0 0.0
        %1187 = vmatpush2.msra.mxu0 0.0
        %1188 = vmatprep.subr.mxu0 0.0
        %1189 = vmatpush2.msra.mxu0 0.0
        %1190 = vmatprep.mubr.f32.mxu0 0.0
        %1191 = vmatmul.mubr.f32.gmra.mxu0 %v1124
        %v1192 = vpop.f32.mrf.mxu0
        %v1193 = vadd.f32 0.0, %v1192
        %v1194 = vpop.f32.mrf.mxu0
        %1195 = vdwg.mxu0
        %1197 = vrot.lane.b32.xlu0 %v1193, 8
        %v1198 = vpop.permute.xlu0 %1197
        %vm1200 = vcmask 130112
        %1201 = vst.msk [vmem:[#allocation3] sm:$0xff] %vm1200, %v1198
        %1202 = vrot.lane.b32.xlu0 %v852, 112
        %v1203 = vpop.permute.xlu0 %1202
        %1204 = vrot.lane.b32.xlu0 %v855, 112
        %v1205 = vpop.permute.xlu0 %1204
        %v1206 = vsel %vm858, %v1203, 0
        %v1208 = vsel %vm858, %v1205, 0
        %1210 = vmatprep.subr.mxu0 0.0
        %1211 = vmatpush1.xpose.msra.mxu0 0.0
        %1212 = vmatprep.subr.mxu0 0.0
        %1213 = vmatpush1.xpose.msra.mxu0 0.0
        %1214 = vmatprep.subr.mxu0 0.0
        %1215 = vmatpush1.xpose.msra.mxu0 0.0
        %1216 = vmatprep.subr.mxu0 0.0
        %1217 = vmatpush1.xpose.msra.mxu0 0.0
        %1218 = vmatprep.subr.mxu0 0.0
        %1219 = vmatpush1.xpose.msra.mxu0 0.0
        %1220 = vmatprep.subr.mxu0 0.0
        %1221 = vmatpush1.xpose.msra.mxu0 0.0
        %1222 = vmatprep.subr.mxu0 0.0
        %1223 = vmatpush1.xpose.msra.mxu0 0.0
        %1224 = vmatprep.subr.mxu0 0.0
        %1225 = vmatpush1.xpose.msra.mxu0 0.0
        %1226 = vmatprep.subr.mxu0 0.0
        %1227 = vmatpush1.xpose.msra.mxu0 0.0
        %1228 = vmatprep.subr.mxu0 0.0
        %1229 = vmatpush1.xpose.msra.mxu0 0.0
        %1230 = vmatprep.subr.mxu0 0.0
        %1231 = vmatpush1.xpose.msra.mxu0 0.0
        %1232 = vmatprep.subr.mxu0 0.0
        %1233 = vmatpush1.xpose.msra.mxu0 0.0
        %1234 = vmatprep.subr.mxu0 0.0
        %1235 = vmatpush1.xpose.msra.mxu0 0.0
        %1236 = vmatprep.subr.mxu0 0.0
        %1237 = vmatpush1.xpose.msra.mxu0 0.0
        %1238 = vmatprep.subr.mxu0 0.0
        %1239 = vmatpush1.xpose.msra.mxu0 0.0
        %1240 = vmatprep.subr.mxu0 0.0
        %1241 = vmatpush1.xpose.msra.mxu0 %v1208
        %1242 = vmatprep.subr.mxu0 0.0
        %1243 = vmatpush2.xpose.msra.mxu0 0.0
        %1244 = vmatprep.subr.mxu0 0.0
        %1245 = vmatpush2.xpose.msra.mxu0 0.0
        %1246 = vmatprep.subr.mxu0 0.0
        %1247 = vmatpush2.xpose.msra.mxu0 0.0
        %1248 = vmatprep.subr.mxu0 0.0
        %1249 = vmatpush2.xpose.msra.mxu0 0.0
        %1250 = vmatprep.subr.mxu0 0.0
        %1251 = vmatpush2.xpose.msra.mxu0 0.0
        %1252 = vmatprep.subr.mxu0 0.0
        %1253 = vmatpush2.xpose.msra.mxu0 0.0
        %1254 = vmatprep.subr.mxu0 0.0
        %1255 = vmatpush2.xpose.msra.mxu0 0.0
        %1256 = vmatprep.subr.mxu0 0.0
        %1257 = vmatpush2.xpose.msra.mxu0 0.0
        %1258 = vmatprep.subr.mxu0 0.0
        %1259 = vmatpush2.xpose.msra.mxu0 0.0
        %1260 = vmatprep.subr.mxu0 0.0
        %1261 = vmatpush2.xpose.msra.mxu0 0.0
        %1262 = vmatprep.subr.mxu0 0.0
        %1263 = vmatpush2.xpose.msra.mxu0 0.0
        %1264 = vmatprep.subr.mxu0 0.0
        %1265 = vmatpush2.xpose.msra.mxu0 0.0
        %1266 = vmatprep.subr.mxu0 0.0
        %1267 = vmatpush2.xpose.msra.mxu0 0.0
        %1268 = vmatprep.subr.mxu0 0.0
        %1269 = vmatpush2.xpose.msra.mxu0 0.0
        %1270 = vmatprep.subr.mxu0 0.0
        %1271 = vmatpush2.xpose.msra.mxu0 0.0
        %1272 = vmatprep.subr.mxu0 0.0
        %1273 = vmatpush2.xpose.msra.mxu0 0.0
        %1274 = vmatprep.mubr.f32.mxu0 0.0
        %1275 = vmatmul.mubr.f32.gmra.mxu0 %v1206
        %v1276 = vpop.f32.mrf.mxu0
        %v1277 = vadd.f32 0.0, %v1276
        %v1278 = vpop.f32.mrf.mxu0
        %1279 = vdwg.mxu0
        %v1280 = vsel %vm940, -1e+09, %v1277
        %v1281 = vsel %vm858, %v1280, -inf
        %1282 = vmax.xlane.f32.xlu0 %v1281
        %v1283 = vpop.xlane.xlu0 %1282
        %v1284 = vsub.f32 %v1280, %v1283
        %v1285 = vmul.f32 %v1284, 1.442695
        %v1286 = vpow.pop %v1285
        %v1287 = vsel %vm858, %v1286, 0.0
        %1288 = vadd.xlane.f32.xlu0 %v1287
        %v1289 = vpop.xlane.xlu0 %1288
        %v1290 = vrcp.pop %v1289
        %v1291 = vmul.f32 %v1286, %v1290
        %1292 = vrot.lane.b32.xlu0 %v855, 80
        %v1293 = vpop.permute.xlu0 %1292
        %v1296 = vsel %vm858, %v1291, 0
        %1298 = vmatprep.subr.mxu0 0.0
        %1299 = vmatpush1.msra.mxu0 0.0
        %1300 = vmatprep.subr.mxu0 0.0
        %1301 = vmatpush1.msra.mxu0 0.0
        %1302 = vmatprep.subr.mxu0 0.0
        %1303 = vmatpush1.msra.mxu0 0.0
        %1304 = vmatprep.subr.mxu0 0.0
        %1305 = vmatpush1.msra.mxu0 0.0
        %1306 = vmatprep.subr.mxu0 0.0
        %1307 = vmatpush1.msra.mxu0 0.0
        %1308 = vmatprep.subr.mxu0 0.0
        %1309 = vmatpush1.msra.mxu0 0.0
        %1310 = vmatprep.subr.mxu0 0.0
        %1311 = vmatpush1.msra.mxu0 0.0
        %1312 = vmatprep.subr.mxu0 0.0
        %1313 = vmatpush1.msra.mxu0 0.0
        %1314 = vmatprep.subr.mxu0 0.0
        %1315 = vmatpush1.msra.mxu0 0.0
        %1316 = vmatprep.subr.mxu0 0.0
        %1317 = vmatpush1.msra.mxu0 0.0
        %1318 = vmatprep.subr.mxu0 0.0
        %1319 = vmatpush1.msra.mxu0 0.0
        %1320 = vmatprep.subr.mxu0 0.0
        %1321 = vmatpush1.msra.mxu0 0.0
        %1322 = vmatprep.subr.mxu0 0.0
        %1323 = vmatpush1.msra.mxu0 0.0
        %1324 = vmatprep.subr.mxu0 0.0
        %1325 = vmatpush1.msra.mxu0 0.0
        %1326 = vmatprep.subr.mxu0 0.0
        %1327 = vmatpush1.msra.mxu0 0.0
        %1328 = vmatprep.subr.mxu0 0.0
        %1329 = vmatpush1.msra.mxu0 %v1293
        %1330 = vmatprep.subr.mxu0 0.0
        %1331 = vmatpush2.msra.mxu0 0.0
        %1332 = vmatprep.subr.mxu0 0.0
        %1333 = vmatpush2.msra.mxu0 0.0
        %1334 = vmatprep.subr.mxu0 0.0
        %1335 = vmatpush2.msra.mxu0 0.0
        %1336 = vmatprep.subr.mxu0 0.0
        %1337 = vmatpush2.msra.mxu0 0.0
        %1338 = vmatprep.subr.mxu0 0.0
        %1339 = vmatpush2.msra.mxu0 0.0
        %1340 = vmatprep.subr.mxu0 0.0
        %1341 = vmatpush2.msra.mxu0 0.0
        %1342 = vmatprep.subr.mxu0 0.0
        %1343 = vmatpush2.msra.mxu0 0.0
        %1344 = vmatprep.subr.mxu0 0.0
        %1345 = vmatpush2.msra.mxu0 0.0
        %1346 = vmatprep.subr.mxu0 0.0
        %1347 = vmatpush2.msra.mxu0 0.0
        %1348 = vmatprep.subr.mxu0 0.0
        %1349 = vmatpush2.msra.mxu0 0.0
        %1350 = vmatprep.subr.mxu0 0.0
        %1351 = vmatpush2.msra.mxu0 0.0
        %1352 = vmatprep.subr.mxu0 0.0
        %1353 = vmatpush2.msra.mxu0 0.0
        %1354 = vmatprep.subr.mxu0 0.0
        %1355 = vmatpush2.msra.mxu0 0.0
        %1356 = vmatprep.subr.mxu0 0.0
        %1357 = vmatpush2.msra.mxu0 0.0
        %1358 = vmatprep.subr.mxu0 0.0
        %1359 = vmatpush2.msra.mxu0 0.0
        %1360 = vmatprep.subr.mxu0 0.0
        %1361 = vmatpush2.msra.mxu0 0.0
        %1362 = vmatprep.mubr.f32.mxu0 0.0
        %1363 = vmatmul.mubr.f32.gmra.mxu0 %v1296
        %v1364 = vpop.f32.mrf.mxu0
        %v1365 = vadd.f32 0.0, %v1364
        %v1366 = vpop.f32.mrf.mxu0
        %1367 = vdwg.mxu0
        %1369 = vrot.lane.b32.xlu0 %v1365, 16
        %v1370 = vpop.permute.xlu0 %1369
        %vm1372 = vcmask 195712
        %1373 = vst.msk [vmem:[#allocation3] sm:$0xff] %vm1372, %v1370
        %1374 = vrot.lane.b32.xlu0 %v852, 104
        %v1375 = vpop.permute.xlu0 %1374
        %1376 = vrot.lane.b32.xlu0 %v855, 104
        %v1377 = vpop.permute.xlu0 %1376
        %v1378 = vsel %vm858, %v1375, 0
        %v1380 = vsel %vm858, %v1377, 0
        %1382 = vmatprep.subr.mxu0 0.0
        %1383 = vmatpush1.xpose.msra.mxu0 0.0
        %1384 = vmatprep.subr.mxu0 0.0
        %1385 = vmatpush1.xpose.msra.mxu0 0.0
        %1386 = vmatprep.subr.mxu0 0.0
        %1387 = vmatpush1.xpose.msra.mxu0 0.0
        %1388 = vmatprep.subr.mxu0 0.0
        %1389 = vmatpush1.xpose.msra.mxu0 0.0
        %1390 = vmatprep.subr.mxu0 0.0
        %1391 = vmatpush1.xpose.msra.mxu0 0.0
        %1392 = vmatprep.subr.mxu0 0.0
        %1393 = vmatpush1.xpose.msra.mxu0 0.0
        %1394 = vmatprep.subr.mxu0 0.0
        %1395 = vmatpush1.xpose.msra.mxu0 0.0
        %1396 = vmatprep.subr.mxu0 0.0
        %1397 = vmatpush1.xpose.msra.mxu0 0.0
        %1398 = vmatprep.subr.mxu0 0.0
        %1399 = vmatpush1.xpose.msra.mxu0 0.0
        %1400 = vmatprep.subr.mxu0 0.0
        %1401 = vmatpush1.xpose.msra.mxu0 0.0
        %1402 = vmatprep.subr.mxu0 0.0
        %1403 = vmatpush1.xpose.msra.mxu0 0.0
        %1404 = vmatprep.subr.mxu0 0.0
        %1405 = vmatpush1.xpose.msra.mxu0 0.0
        %1406 = vmatprep.subr.mxu0 0.0
        %1407 = vmatpush1.xpose.msra.mxu0 0.0
        %1408 = vmatprep.subr.mxu0 0.0
        %1409 = vmatpush1.xpose.msra.mxu0 0.0
        %1410 = vmatprep.subr.mxu0 0.0
        %1411 = vmatpush1.xpose.msra.mxu0 0.0
        %1412 = vmatprep.subr.mxu0 0.0
        %1413 = vmatpush1.xpose.msra.mxu0 %v1380
        %1414 = vmatprep.subr.mxu0 0.0
        %1415 = vmatpush2.xpose.msra.mxu0 0.0
        %1416 = vmatprep.subr.mxu0 0.0
        %1417 = vmatpush2.xpose.msra.mxu0 0.0
        %1418 = vmatprep.subr.mxu0 0.0
        %1419 = vmatpush2.xpose.msra.mxu0 0.0
        %1420 = vmatprep.subr.mxu0 0.0
        %1421 = vmatpush2.xpose.msra.mxu0 0.0
        %1422 = vmatprep.subr.mxu0 0.0
        %1423 = vmatpush2.xpose.msra.mxu0 0.0
        %1424 = vmatprep.subr.mxu0 0.0
        %1425 = vmatpush2.xpose.msra.mxu0 0.0
        %1426 = vmatprep.subr.mxu0 0.0
        %1427 = vmatpush2.xpose.msra.mxu0 0.0
        %1428 = vmatprep.subr.mxu0 0.0
        %1429 = vmatpush2.xpose.msra.mxu0 0.0
        %1430 = vmatprep.subr.mxu0 0.0
        %1431 = vmatpush2.xpose.msra.mxu0 0.0
        %1432 = vmatprep.subr.mxu0 0.0
        %1433 = vmatpush2.xpose.msra.mxu0 0.0
        %1434 = vmatprep.subr.mxu0 0.0
        %1435 = vmatpush2.xpose.msra.mxu0 0.0
        %1436 = vmatprep.subr.mxu0 0.0
        %1437 = vmatpush2.xpose.msra.mxu0 0.0
        %1438 = vmatprep.subr.mxu0 0.0
        %1439 = vmatpush2.xpose.msra.mxu0 0.0
        %1440 = vmatprep.subr.mxu0 0.0
        %1441 = vmatpush2.xpose.msra.mxu0 0.0
        %1442 = vmatprep.subr.mxu0 0.0
        %1443 = vmatpush2.xpose.msra.mxu0 0.0
        %1444 = vmatprep.subr.mxu0 0.0
        %1445 = vmatpush2.xpose.msra.mxu0 0.0
        %1446 = vmatprep.mubr.f32.mxu0 0.0
        %1447 = vmatmul.mubr.f32.gmra.mxu0 %v1378
        %v1448 = vpop.f32.mrf.mxu0
        %v1449 = vadd.f32 0.0, %v1448
        %v1450 = vpop.f32.mrf.mxu0
        %1451 = vdwg.mxu0
        %v1452 = vsel %vm940, -1e+09, %v1449
        %v1453 = vsel %vm858, %v1452, -inf
        %1454 = vmax.xlane.f32.xlu0 %v1453
        %v1455 = vpop.xlane.xlu0 %1454
        %v1456 = vsub.f32 %v1452, %v1455
        %v1457 = vmul.f32 %v1456, 1.442695
        %v1458 = vpow.pop %v1457
        %v1459 = vsel %vm858, %v1458, 0.0
        %1460 = vadd.xlane.f32.xlu0 %v1459
        %v1461 = vpop.xlane.xlu0 %1460
        %v1462 = vrcp.pop %v1461
        %v1463 = vmul.f32 %v1458, %v1462
        %1464 = vrot.lane.b32.xlu0 %v855, 72
        %v1465 = vpop.permute.xlu0 %1464
        %v1468 = vsel %vm858, %v1463, 0
        %1470 = vmatprep.subr.mxu0 0.0
        %1471 = vmatpush1.msra.mxu0 0.0
        %1472 = vmatprep.subr.mxu0 0.0
        %1473 = vmatpush1.msra.mxu0 0.0
        %1474 = vmatprep.subr.mxu0 0.0
        %1475 = vmatpush1.msra.mxu0 0.0
        %1476 = vmatprep.subr.mxu0 0.0
        %1477 = vmatpush1.msra.mxu0 0.0
        %1478 = vmatprep.subr.mxu0 0.0
        %1479 = vmatpush1.msra.mxu0 0.0
        %1480 = vmatprep.subr.mxu0 0.0
        %1481 = vmatpush1.msra.mxu0 0.0
        %1482 = vmatprep.subr.mxu0 0.0
        %1483 = vmatpush1.msra.mxu0 0.0
        %1484 = vmatprep.subr.mxu0 0.0
        %1485 = vmatpush1.msra.mxu0 0.0
        %1486 = vmatprep.subr.mxu0 0.0
        %1487 = vmatpush1.msra.mxu0 0.0
        %1488 = vmatprep.subr.mxu0 0.0
        %1489 = vmatpush1.msra.mxu0 0.0
        %1490 = vmatprep.subr.mxu0 0.0
        %1491 = vmatpush1.msra.mxu0 0.0
        %1492 = vmatprep.subr.mxu0 0.0
        %1493 = vmatpush1.msra.mxu0 0.0
        %1494 = vmatprep.subr.mxu0 0.0
        %1495 = vmatpush1.msra.mxu0 0.0
        %1496 = vmatprep.subr.mxu0 0.0
        %1497 = vmatpush1.msra.mxu0 0.0
        %1498 = vmatprep.subr.mxu0 0.0
        %1499 = vmatpush1.msra.mxu0 0.0
        %1500 = vmatprep.subr.mxu0 0.0
        %1501 = vmatpush1.msra.mxu0 %v1465
        %1502 = vmatprep.subr.mxu0 0.0
        %1503 = vmatpush2.msra.mxu0 0.0
        %1504 = vmatprep.subr.mxu0 0.0
        %1505 = vmatpush2.msra.mxu0 0.0
        %1506 = vmatprep.subr.mxu0 0.0
        %1507 = vmatpush2.msra.mxu0 0.0
        %1508 = vmatprep.subr.mxu0 0.0
        %1509 = vmatpush2.msra.mxu0 0.0
        %1510 = vmatprep.subr.mxu0 0.0
        %1511 = vmatpush2.msra.mxu0 0.0
        %1512 = vmatprep.subr.mxu0 0.0
        %1513 = vmatpush2.msra.mxu0 0.0
        %1514 = vmatprep.subr.mxu0 0.0
        %1515 = vmatpush2.msra.mxu0 0.0
        %1516 = vmatprep.subr.mxu0 0.0
        %1517 = vmatpush2.msra.mxu0 0.0
        %1518 = vmatprep.subr.mxu0 0.0
        %1519 = vmatpush2.msra.mxu0 0.0
        %1520 = vmatprep.subr.mxu0 0.0
        %1521 = vmatpush2.msra.mxu0 0.0
        %1522 = vmatprep.subr.mxu0 0.0
        %1523 = vmatpush2.msra.mxu0 0.0
        %1524 = vmatprep.subr.mxu0 0.0
        %1525 = vmatpush2.msra.mxu0 0.0
        %1526 = vmatprep.subr.mxu0 0.0
        %1527 = vmatpush2.msra.mxu0 0.0
        %1528 = vmatprep.subr.mxu0 0.0
        %1529 = vmatpush2.msra.mxu0 0.0
        %1530 = vmatprep.subr.mxu0 0.0
        %1531 = vmatpush2.msra.mxu0 0.0
        %1532 = vmatprep.subr.mxu0 0.0
        %1533 = vmatpush2.msra.mxu0 0.0
        %1534 = vmatprep.mubr.f32.mxu0 0.0
        %1535 = vmatmul.mubr.f32.gmra.mxu0 %v1468
        %v1536 = vpop.f32.mrf.mxu0
        %v1537 = vadd.f32 0.0, %v1536
        %v1538 = vpop.f32.mrf.mxu0
        %1539 = vdwg.mxu0
        %1541 = vrot.lane.b32.xlu0 %v1537, 24
        %v1542 = vpop.permute.xlu0 %1541
        %vm1544 = vcmask 261312
        %1545 = vst.msk [vmem:[#allocation3] sm:$0xff] %vm1544, %v1542
        %v1546 = vld [vmem:[#allocation3] sm:$0xff]
        %v1547 = vld [vmem:[%s8] sm:$0xff]
        %v1548 = vld [vmem:[%s8 + $0x8] sm:$0xff]
        %v1549 = vld [vmem:[%s8 + $0x10] sm:$0xff]
        %v1550 = vld [vmem:[%s8 + $0x18] sm:$0xff]
        %v1551 = vld [vmem:[%s9] sm:$0x1]
        %v1553 = vlaneseq
        %v1554 = vshrl.u32 %v1553, 7
        %v1555 = vsub.s32 0, %v1554
        %v1556 = vrot.slane %v1551, %v1555
        %v1559 = vsel %vm734, %v1546, 0
        %1561 = vmatprep.subr.mxu0 0.0
        %1562 = vmatpush1.msra.mxu0 0.0
        %1563 = vmatprep.subr.mxu0 0.0
        %1564 = vmatpush1.msra.mxu0 0.0
        %1565 = vmatprep.subr.mxu0 0.0
        %1566 = vmatpush1.msra.mxu0 0.0
        %1567 = vmatprep.subr.mxu0 0.0
        %1568 = vmatpush1.msra.mxu0 0.0
        %1569 = vmatprep.subr.mxu0 0.0
        %1570 = vmatpush1.msra.mxu0 0.0
        %1571 = vmatprep.subr.mxu0 0.0
        %1572 = vmatpush1.msra.mxu0 0.0
        %1573 = vmatprep.subr.mxu0 0.0
        %1574 = vmatpush1.msra.mxu0 0.0
        %1575 = vmatprep.subr.mxu0 0.0
        %1576 = vmatpush1.msra.mxu0 0.0
        %1577 = vmatprep.subr.mxu0 0.0
        %1578 = vmatpush1.msra.mxu0 0.0
        %1579 = vmatprep.subr.mxu0 0.0
        %1580 = vmatpush1.msra.mxu0 0.0
        %1581 = vmatprep.subr.mxu0 0.0
        %1582 = vmatpush1.msra.mxu0 0.0
        %1583 = vmatprep.subr.mxu0 0.0
        %1584 = vmatpush1.msra.mxu0 0.0
        %1585 = vmatprep.subr.mxu0 0.0
        %1586 = vmatpush1.msra.mxu0 %v1550
        %1587 = vmatprep.subr.mxu0 0.0
        %1588 = vmatpush1.msra.mxu0 %v1549
        %1589 = vmatprep.subr.mxu0 0.0
        %1590 = vmatpush1.msra.mxu0 %v1548
        %1591 = vmatprep.subr.mxu0 0.0
        %1592 = vmatpush1.msra.mxu0 %v1547
        %1593 = vmatprep.subr.mxu0 0.0
        %1594 = vmatpush2.msra.mxu0 0.0
        %1595 = vmatprep.subr.mxu0 0.0
        %1596 = vmatpush2.msra.mxu0 0.0
        %1597 = vmatprep.subr.mxu0 0.0
        %1598 = vmatpush2.msra.mxu0 0.0
        %1599 = vmatprep.subr.mxu0 0.0
        %1600 = vmatpush2.msra.mxu0 0.0
        %1601 = vmatprep.subr.mxu0 0.0
        %1602 = vmatpush2.msra.mxu0 0.0
        %1603 = vmatprep.subr.mxu0 0.0
        %1604 = vmatpush2.msra.mxu0 0.0
        %1605 = vmatprep.subr.mxu0 0.0
        %1606 = vmatpush2.msra.mxu0 0.0
        %1607 = vmatprep.subr.mxu0 0.0
        %1608 = vmatpush2.msra.mxu0 0.0
        %1609 = vmatprep.subr.mxu0 0.0
        %1610 = vmatpush2.msra.mxu0 0.0
        %1611 = vmatprep.subr.mxu0 0.0
        %1612 = vmatpush2.msra.mxu0 0.0
        %1613 = vmatprep.subr.mxu0 0.0
        %1614 = vmatpush2.msra.mxu0 0.0
        %1615 = vmatprep.subr.mxu0 0.0
        %1616 = vmatpush2.msra.mxu0 0.0
        %1617 = vmatprep.subr.mxu0 0.0
        %1618 = vmatpush2.msra.mxu0 0.0
        %1619 = vmatprep.subr.mxu0 0.0
        %1620 = vmatpush2.msra.mxu0 0.0
        %1621 = vmatprep.subr.mxu0 0.0
        %1622 = vmatpush2.msra.mxu0 0.0
        %1623 = vmatprep.subr.mxu0 0.0
        %1624 = vmatpush2.msra.mxu0 0.0
        %1625 = vmatprep.mubr.f32.mxu0 0.0
        %1626 = vmatmul.mubr.f32.gmra.mxu0 %v1559
        %v1627 = vpop.f32.mrf.mxu0
        %v1628 = vadd.f32 %v1556, %v1627
        %v1629 = vpop.f32.mrf.mxu0
        %1630 = vdwg.mxu0
        %v1631 = vadd.f32 %v731, %v1628
        %v1632 = vld [vmem:[%s10] sm:$0x1]
        %v1633 = vld [vmem:[%s11] sm:$0x1]
        %v1634 = vsel %vm734, %v1631, 0.0
        %1635 = vadd.xlane.f32.xlu0 %v1634
        %v1636 = vpop.xlane.xlu0 %1635
        %v1637 = vmul.f32 %v1636, %v738
        %v1638 = vsub.f32 %v1631, %v1637
        %v1639 = vmul.f32 %v1638, %v1638
        %v1640 = vsel %vm734, %v1639, 0.0
        %1641 = vadd.xlane.f32.xlu0 %v1640
        %v1642 = vpop.xlane.xlu0 %1641
        %v1643 = vmul.f32 %v1642, %v745
        %v1645 = vlaneseq
        %v1646 = vshrl.u32 %v1645, 7
        %v1647 = vsub.s32 0, %v1646
        %v1648 = vrot.slane %v1632, %v1647
        %v1650 = vmul.f32 %v1648, %v1638
        %v1651 = vrsqrt.pop %v1643
        %v1652 = vmul.f32 %v1643, %v1651
        %vm1653 = vcmp.eq.f32.partialorder %v1643, inf
        %v1654 = vsel %vm1653, %v1643, %v1652
        %vm1655 = vcmp.eq.f32.partialorder %v1643, 0.0
        %v1656 = vand.u32 %v1643, 2147483648
        %v1657 = vsel %vm1655, %v1656, %v1654
        %v1658 = vadd.f32 %v1657, 1e-06
        %v1659 = vrcp.pop %v1658
        %v1660 = vmul.f32 %v1650, %v1659
        %v1662 = vlaneseq
        %v1663 = vshrl.u32 %v1662, 7
        %v1664 = vsub.s32 0, %v1663
        %v1665 = vrot.slane %v1633, %v1664
        %v1667 = vadd.f32 %v1660, %v1665
        %v1668 = vld [vmem:[%s12] sm:$0xff]
        %v1669 = vld [vmem:[%s12 + $0x8] sm:$0xff]
        %v1670 = vld [vmem:[%s12 + $0x10] sm:$0xff]
        %v1671 = vld [vmem:[%s12 + $0x18] sm:$0xff]
        %v1672 = vld [vmem:[%s13] sm:$0x1]
        %v1674 = vlaneseq
        %v1675 = vshrl.u32 %v1674, 7
        %v1676 = vsub.s32 0, %v1675
        %v1677 = vrot.slane %v1672, %v1676
        %v1680 = vsel %vm734, %v1667, 0
        %1682 = vmatprep.subr.mxu0 0.0
        %1683 = vmatpush1.msra.mxu0 0.0
        %1684 = vmatprep.subr.mxu0 0.0
        %1685 = vmatpush1.msra.mxu0 0.0
        %1686 = vmatprep.subr.mxu0 0.0
        %1687 = vmatpush1.msra.mxu0 0.0
        %1688 = vmatprep.subr.mxu0 0.0
        %1689 = vmatpush1.msra.mxu0 0.0
        %1690 = vmatprep.subr.mxu0 0.0
        %1691 = vmatpush1.msra.mxu0 0.0
        %1692 = vmatprep.subr.mxu0 0.0
        %1693 = vmatpush1.msra.mxu0 0.0
        %1694 = vmatprep.subr.mxu0 0.0
        %1695 = vmatpush1.msra.mxu0 0.0
        %1696 = vmatprep.subr.mxu0 0.0
        %1697 = vmatpush1.msra.mxu0 0.0
        %1698 = vmatprep.subr.mxu0 0.0
        %1699 = vmatpush1.msra.mxu0 0.0
        %1700 = vmatprep.subr.mxu0 0.0
        %1701 = vmatpush1.msra.mxu0 0.0
        %1702 = vmatprep.subr.mxu0 0.0
        %1703 = vmatpush1.msra.mxu0 0.0
        %1704 = vmatprep.subr.mxu0 0.0
        %1705 = vmatpush1.msra.mxu0 0.0
        %1706 = vmatprep.subr.mxu0 0.0
        %1707 = vmatpush1.msra.mxu0 %v1671
        %1708 = vmatprep.subr.mxu0 0.0
        %1709 = vmatpush1.msra.mxu0 %v1670
        %1710 = vmatprep.subr.mxu0 0.0
        %1711 = vmatpush1.msra.mxu0 %v1669
        %1712 = vmatprep.subr.mxu0 0.0
        %1713 = vmatpush1.msra.mxu0 %v1668
        %1714 = vmatprep.subr.mxu0 0.0
        %1715 = vmatpush2.msra.mxu0 0.0
        %1716 = vmatprep.subr.mxu0 0.0
        %1717 = vmatpush2.msra.mxu0 0.0
        %1718 = vmatprep.subr.mxu0 0.0
        %1719 = vmatpush2.msra.mxu0 0.0
        %1720 = vmatprep.subr.mxu0 0.0
        %1721 = vmatpush2.msra.mxu0 0.0
        %1722 = vmatprep.subr.mxu0 0.0
        %1723 = vmatpush2.msra.mxu0 0.0
        %1724 = vmatprep.subr.mxu0 0.0
        %1725 = vmatpush2.msra.mxu0 0.0
        %1726 = vmatprep.subr.mxu0 0.0
        %1727 = vmatpush2.msra.mxu0 0.0
        %1728 = vmatprep.subr.mxu0 0.0
        %1729 = vmatpush2.msra.mxu0 0.0
        %1730 = vmatprep.subr.mxu0 0.0
        %1731 = vmatpush2.msra.mxu0 0.0
        %1732 = vmatprep.subr.mxu0 0.0
        %1733 = vmatpush2.msra.mxu0 0.0
        %1734 = vmatprep.subr.mxu0 0.0
        %1735 = vmatpush2.msra.mxu0 0.0
        %1736 = vmatprep.subr.mxu0 0.0
        %1737 = vmatpush2.msra.mxu0 0.0
        %1738 = vmatprep.subr.mxu0 0.0
        %1739 = vmatpush2.msra.mxu0 0.0
        %1740 = vmatprep.subr.mxu0 0.0
        %1741 = vmatpush2.msra.mxu0 0.0
        %1742 = vmatprep.subr.mxu0 0.0
        %1743 = vmatpush2.msra.mxu0 0.0
        %1744 = vmatprep.subr.mxu0 0.0
        %1745 = vmatpush2.msra.mxu0 0.0
        %1746 = vmatprep.mubr.f32.mxu0 0.0
        %1747 = vmatmul.mubr.f32.gmra.mxu0 %v1680
        %v1748 = vpop.f32.mrf.mxu0
        %v1749 = vadd.f32 %v1677, %v1748
        %v1750 = vpop.f32.mrf.mxu0
        %1751 = vdwg.mxu0
        %v1752 = vmax.f32 %v1749, 0.0
        %v1753 = vld [vmem:[%s14] sm:$0xff]
        %v1754 = vld [vmem:[%s14 + $0x8] sm:$0xff]
        %v1755 = vld [vmem:[%s14 + $0x10] sm:$0xff]
        %v1756 = vld [vmem:[%s14 + $0x18] sm:$0xff]
        %v1757 = vld [vmem:[%s14 + $0x20] sm:$0xff]
        %v1758 = vld [vmem:[%s14 + $0x28] sm:$0xff]
        %v1759 = vld [vmem:[%s14 + $0x30] sm:$0xff]
        %v1760 = vld [vmem:[%s14 + $0x38] sm:$0xff]
        %v1761 = vld [vmem:[%s15] sm:$0x1]
        %v1763 = vlaneseq
        %v1764 = vshrl.u32 %v1763, 7
        %v1765 = vsub.s32 0, %v1764
        %v1766 = vrot.slane %v1761, %v1765
        %vm1768 = vcmask 523264
        %v1770 = vsel %vm1768, %v1752, 0
        %1772 = vmatprep.subr.mxu0 0.0
        %1773 = vmatpush1.msra.mxu0 0.0
        %1774 = vmatprep.subr.mxu0 0.0
        %1775 = vmatpush1.msra.mxu0 0.0
        %1776 = vmatprep.subr.mxu0 0.0
        %1777 = vmatpush1.msra.mxu0 0.0
        %1778 = vmatprep.subr.mxu0 0.0
        %1779 = vmatpush1.msra.mxu0 0.0
        %1780 = vmatprep.subr.mxu0 0.0
        %1781 = vmatpush1.msra.mxu0 0.0
        %1782 = vmatprep.subr.mxu0 0.0
        %1783 = vmatpush1.msra.mxu0 0.0
        %1784 = vmatprep.subr.mxu0 0.0
        %1785 = vmatpush1.msra.mxu0 0.0
        %1786 = vmatprep.subr.mxu0 0.0
        %1787 = vmatpush1.msra.mxu0 0.0
        %1788 = vmatprep.subr.mxu0 0.0
        %1789 = vmatpush1.msra.mxu0 %v1760
        %1790 = vmatprep.subr.mxu0 0.0
        %1791 = vmatpush1.msra.mxu0 %v1759
        %1792 = vmatprep.subr.mxu0 0.0
        %1793 = vmatpush1.msra.mxu0 %v1758
        %1794 = vmatprep.subr.mxu0 0.0
        %1795 = vmatpush1.msra.mxu0 %v1757
        %1796 = vmatprep.subr.mxu0 0.0
        %1797 = vmatpush1.msra.mxu0 %v1756
        %1798 = vmatprep.subr.mxu0 0.0
        %1799 = vmatpush1.msra.mxu0 %v1755
        %1800 = vmatprep.subr.mxu0 0.0
        %1801 = vmatpush1.msra.mxu0 %v1754
        %1802 = vmatprep.subr.mxu0 0.0
        %1803 = vmatpush1.msra.mxu0 %v1753
        %1804 = vmatprep.subr.mxu0 0.0
        %1805 = vmatpush2.msra.mxu0 0.0
        %1806 = vmatprep.subr.mxu0 0.0
        %1807 = vmatpush2.msra.mxu0 0.0
        %1808 = vmatprep.subr.mxu0 0.0
        %1809 = vmatpush2.msra.mxu0 0.0
        %1810 = vmatprep.subr.mxu0 0.0
        %1811 = vmatpush2.msra.mxu0 0.0
        %1812 = vmatprep.subr.mxu0 0.0
        %1813 = vmatpush2.msra.mxu0 0.0
        %1814 = vmatprep.subr.mxu0 0.0
        %1815 = vmatpush2.msra.mxu0 0.0
        %1816 = vmatprep.subr.mxu0 0.0
        %1817 = vmatpush2.msra.mxu0 0.0
        %1818 = vmatprep.subr.mxu0 0.0
        %1819 = vmatpush2.msra.mxu0 0.0
        %1820 = vmatprep.subr.mxu0 0.0
        %1821 = vmatpush2.msra.mxu0 0.0
        %1822 = vmatprep.subr.mxu0 0.0
        %1823 = vmatpush2.msra.mxu0 0.0
        %1824 = vmatprep.subr.mxu0 0.0
        %1825 = vmatpush2.msra.mxu0 0.0
        %1826 = vmatprep.subr.mxu0 0.0
        %1827 = vmatpush2.msra.mxu0 0.0
        %1828 = vmatprep.subr.mxu0 0.0
        %1829 = vmatpush2.msra.mxu0 0.0
        %1830 = vmatprep.subr.mxu0 0.0
        %1831 = vmatpush2.msra.mxu0 0.0
        %1832 = vmatprep.subr.mxu0 0.0
        %1833 = vmatpush2.msra.mxu0 0.0
        %1834 = vmatprep.subr.mxu0 0.0
        %1835 = vmatpush2.msra.mxu0 0.0
        %1836 = vmatprep.mubr.f32.mxu0 0.0
        %1837 = vmatmul.mubr.f32.gmra.mxu0 %v1770
        %v1838 = vpop.f32.mrf.mxu0
        %v1839 = vadd.f32 %v1766, %v1838
        %v1840 = vpop.f32.mrf.mxu0
        %1841 = vdwg.mxu0
        %v1842 = vadd.f32 %v1631, %v1839
        %v1843 = vld [vmem:[%s16] sm:$0x1]
        %v1844 = vld [vmem:[%s17] sm:$0x1]
        %v1845 = vsel %vm734, %v1842, 0.0
        %1846 = vadd.xlane.f32.xlu0 %v1845
        %v1847 = vpop.xlane.xlu0 %1846
        %v1848 = vmul.f32 %v1847, %v738
        %v1849 = vsub.f32 %v1842, %v1848
        %v1850 = vmul.f32 %v1849, %v1849
        %v1851 = vsel %vm734, %v1850, 0.0
        %1852 = vadd.xlane.f32.xlu0 %v1851
        %v1853 = vpop.xlane.xlu0 %1852
        %v1854 = vmul.f32 %v1853, %v745
        %v1856 = vlaneseq
        %v1857 = vshrl.u32 %v1856, 7
        %v1858 = vsub.s32 0, %v1857
        %v1859 = vrot.slane %v1843, %v1858
        %v1861 = vmul.f32 %v1859, %v1849
        %v1862 = vrsqrt.pop %v1854
        %v1863 = vmul.f32 %v1854, %v1862
        %vm1864 = vcmp.eq.f32.partialorder %v1854, inf
        %v1865 = vsel %vm1864, %v1854, %v1863
        %vm1866 = vcmp.eq.f32.partialorder %v1854, 0.0
        %v1867 = vand.u32 %v1854, 2147483648
        %v1868 = vsel %vm1866, %v1867, %v1865
        %v1869 = vadd.f32 %v1868, 1e-06
        %v1870 = vrcp.pop %v1869
        %v1871 = vmul.f32 %v1861, %v1870
        %v1873 = vlaneseq
        %v1874 = vshrl.u32 %v1873, 7
        %v1875 = vsub.s32 0, %v1874
        %v1876 = vrot.slane %v1844, %v1875
        %v1878 = vadd.f32 %v1871, %v1876
        %1879 = vst.msk [vmem:[%s591] sm:$0xff] %vm734, %v1878
        %s1880 = sand.u32 %s442, 1
        %s1881 = scalar_lea.sflag [#allocation5], %s1880
        %s1882 = sand.u32 %s442, 1
        %s1883 = smul.addr %s1882, 8
        %s1884 = scalar_lea.vmem [#allocation4], %s1883
        // Predicated region
        $region97: #{encoder_forward.3} parent=91 // pred_check
          %p1885 = pneg %p452
        $region98: #{encoder_forward.3} parent=91 // pred_check_branch
          %1887 = sbr.rel (%p1885) target = $region100
        $region99: #{encoder_forward.3} parent=91 // pred_region
          %s1889 = ssub.s32 128, 128
          %1890 = vsyncadd %s1881, %s1889
          %s1891 = sadd.s32 %s37, %s36
          %s1892 = smul.addr %s1891, 128
          %s1893 = scalar_lea.hbm %s18, %s1892
          %s1895 = sshll.u32 %s1884, 4
          %s1896 = int_to_ptr.vmem [resolvable:$true] %s1895
          %1898 = dma.vmem_to_hbm [thread:$0]  %s1896, 128, %s1893, %s1881
        $region100: #{encoder_forward.3} parent=91 // pred_fallthru
          _
      $region92: #{encoder_forward.3} parent=5 // pred_fallthru
        _
      %p1899 = scmp.le.s32.totalorder 2, %s27
      // Predicated region
      $region101: #{encoder_forward.3} parent=5 // pred_check
        %p1900 = pneg %p1899
      $region102: #{encoder_forward.3} parent=5 // pred_check_branch
        %1902 = sbr.rel (%p1900) target = $region104
      $region103: #{encoder_forward.3} parent=5 // pred_region
        %s1903 = ssub.s32 %s27, 2
        // Predicated region
        $region105: #{encoder_forward.3} parent=103 // pred_check
          %p1904 = pneg %p458
        $region106: #{encoder_forward.3} parent=103 // pred_check_branch
          %1906 = sbr.rel (%p1904) target = $region108
        $region107: #{encoder_forward.3} parent=103 // pred_region
          %s1907 = sand.u32 %s443, 1
          %s1908 = scalar_lea.sflag [#allocation5], %s1907
          %s1909 = sand.u32 %s443, 1
          %s1910 = smul.addr %s1909, 8
          %s1911 = scalar_lea.vmem [#allocation4], %s1910
          %1912 = dma.done %s1908, 128
        $region108: #{encoder_forward.3} parent=103 // pred_fallthru
          _
      $region104: #{encoder_forward.3} parent=5 // pred_fallthru
        _
    $region6: #{encoder_forward.3} parent=1 // loop_footer
      %s31 = sadd.s32 1, %s27
    $region7: #{encoder_forward.3} parent=1 // loop_footer_branch
      %26 = sbr.rel target = $region3
    $region8: #{encoder_forward.3} parent=1 // loop_exit
      _
    %1913 = vsyncpa [#allocation5], 1
    %s1914 = scalar_lea.sflag [#allocation5], 1
    %1915 = vsyncpa %s1914, 1

// kernel: encoder_forward.2
$region0: #{encoder_forward.2}
  #allocation0 [shape = 'u32[]', space=smem, size = 0x4, offset = 0x4, fixed_abs, tag = 'smem constant byte address 0x4 - core index']
  #allocation1 [shape = 'u32[144,128]{1,0:T(1,128)}', space=vmem, size = 0x12000, scoped, tag = 'internal scratch']
  #allocation2 [shape = 'f32[8,64]{1,0:T(8,128)}', space=vmem, size = 0x1000, scoped, tag = 'scratch operand']
  #allocation3 [shape = 'f32[8,32]{1,0:T(8,128)}', space=vmem, size = 0x1000, scoped, tag = 'scratch operand']
  %s0 = inlined_call_operand.hbm [shape: f32[2,8,32], index: 0, kind: input, shape index: {}]
  %s1 = inlined_call_operand.vmem [shape: f32[2,1,8], index: 1, kind: input, shape index: {}]
  %s2 = inlined_call_operand.vmem [shape: f32[1,32], index: 2, kind: input, shape index: {}]
  %s3 = inlined_call_operand.vmem [shape: f32[1,32], index: 3, kind: input, shape index: {}]
  %s4 = inlined_call_operand.vmem [shape: f32[32,32], index: 4, kind: input, shape index: {}]
  %s5 = inlined_call_operand.vmem [shape: f32[1,32], index: 5, kind: input, shape index: {}]
  %s6 = inlined_call_operand.vmem [shape: f32[32,64], index: 6, kind: input, shape index: {}]
  %s7 = inlined_call_operand.hbm [shape: f32[1,64], index: 7, kind: input, shape index: {}]
  %s8 = inlined_call_operand.vmem [shape: f32[32,32], index: 8, kind: input, shape index: {}]
  %s9 = inlined_call_operand.hbm [shape: f32[1,32], index: 9, kind: input, shape index: {}]
  %s10 = inlined_call_operand.vmem [shape: f32[1,32], index: 10, kind: input, shape index: {}]
  %s11 = inlined_call_operand.vmem [shape: f32[1,32], index: 11, kind: input, shape index: {}]
  %s12 = inlined_call_operand.hbm [shape: f32[32,64], index: 12, kind: input, shape index: {}]
  %s13 = inlined_call_operand.hbm [shape: f32[1,64], index: 13, kind: input, shape index: {}]
  %s14 = inlined_call_operand.vmem [shape: f32[64,32], index: 14, kind: input, shape index: {}]
  %s15 = inlined_call_operand.hbm [shape: f32[1,32], index: 15, kind: input, shape index: {}]
  %s16 = inlined_call_operand.vmem [shape: f32[1,32], index: 16, kind: input, shape index: {}]
  %s17 = inlined_call_operand.vmem [shape: f32[1,32], index: 17, kind: input, shape index: {}]
  %s18 = inlined_call_operand.vmem [shape: f32[2,8,32], index: 18, kind: output, shape index: {}]
  %s19 = sld [smem:[#allocation0]]
  $region133: #{encoder_forward.2} parent=0
    _
  %s21 = ssub.s32 1, %s19
  %s22 = scalar_select 0, %s21, %s19
  $region1: #{encoder_forward.2} parent=0
    #allocation4 [shape = 'u8[8192]{0}', space=vmem, size = 0x2000, scoped, tag = 'input window, operand 0']
    #allocation5 [shape = 's32[2]{0}', space=sflag, size = 0x8, scoped, tag = 'scoped memory for encoder_forward.2']
    #allocation6 [shape = 'u8[512]{0}', space=vmem, size = 0x400, scoped, tag = 'input window, operand 7, single buffered']
    #allocation7 [shape = 's32[1]{0}', space=sflag, size = 0x4, scoped, tag = 'scoped memory for encoder_forward.2']
    #allocation8 [shape = 'u8[512]{0}', space=vmem, size = 0x400, scoped, tag = 'input window, operand 9, single buffered']
    #allocation9 [shape = 'u8[16384]{0}', space=vmem, size = 0x4000, scoped, tag = 'input window, operand 12, single buffered']
    #allocation10 [shape = 's32[1]{0}', space=sflag, size = 0x4, scoped, tag = 'scoped memory for encoder_forward.2']
    #allocation11 [shape = 'u8[512]{0}', space=vmem, size = 0x400, scoped, tag = 'input window, operand 13, single buffered']
    #allocation12 [shape = 'u8[512]{0}', space=vmem, size = 0x400, scoped, tag = 'input window, operand 15, single buffered']
    #allocation13 [shape = 's32[1]{0}', space=sflag, size = 0x4, scoped, tag = 'scoped memory for encoder_forward.2']
    %23 = vsyncpa [#allocation5], 0
    %s24 = scalar_lea.sflag [#allocation5], 1
    %25 = vsyncpa %s24, 0
    %26 = vsyncpa [#allocation7], 0
    %27 = vsyncpa [#allocation10], 0
    %28 = vsyncpa [#allocation13], 0
    loop: start=0, step=1, limit=4
    $region2: #{encoder_forward.2} parent=1 // loop_pre_header
      _
    $region3: #{encoder_forward.2} parent=1 // loop_header
      %s30 = sphi 0, %s34
      %p31 = scmp.ge.s32.totalorder %s30, 4
      %s37 = sphi 0, %s49
      %s38 = sphi 0, %s45
      %s39 = sphi 0, %s37
      %s40 = sphi 0, %s38
      %s41 = sphi 0, %s39
      %s42 = sphi 0, %s40
      %s52 = sphi 0, %s54
      %s55 = sphi 0, %s52
      %s56 = sphi 0, %s55
      %s72 = sphi 0, %s56
      %s78 = sphi 0, %s80
      %s81 = sphi 0, %s78
      %s82 = sphi 0, %s81
      %s98 = sphi 0, %s82
      %s102 = sphi 0, %s102
      %s104 = sphi 0, %s102
      %s105 = sphi 0, %s104
      %s119 = sphi 0, %s105
      %s123 = sphi 0, %s123
      %s125 = sphi 0, %s123
      %s126 = sphi 0, %s125
      %s140 = sphi 0, %s126
      %s144 = sphi 0, %s144
      %s146 = sphi 0, %s144
      %s147 = sphi 0, %s146
      %s161 = sphi 0, %s147
      %s165 = sphi 0, %s165
      %s167 = sphi 0, %s165
      %s168 = sphi 0, %s167
      %s182 = sphi 0, %s168
      %s186 = sphi 0, %s186
      %s188 = sphi 0, %s186
      %s189 = sphi 0, %s188
      %s203 = sphi 0, %s189
      %s207 = sphi 0, %s207
      %s209 = sphi 0, %s207
      %s210 = sphi 0, %s209
      %s224 = sphi 0, %s210
      %s228 = sphi 0, %s228
      %s230 = sphi 0, %s228
      %s231 = sphi 0, %s230
      %s245 = sphi 0, %s231
      %s249 = sphi 0, %s249
      %s251 = sphi 0, %s249
      %s252 = sphi 0, %s251
      %s266 = sphi 0, %s252
      %s270 = sphi 0, %s270
      %s272 = sphi 0, %s270
      %s273 = sphi 0, %s272
      %s287 = sphi 0, %s273
      %s291 = sphi 0, %s291
      %s293 = sphi 0, %s291
      %s294 = sphi 0, %s293
      %s308 = sphi 0, %s294
      %s312 = sphi 0, %s312
      %s314 = sphi 0, %s312
      %s315 = sphi 0, %s314
      %s329 = sphi 0, %s315
      %s333 = sphi 0, %s333
      %s335 = sphi 0, %s333
      %s336 = sphi 0, %s335
      %s350 = sphi 0, %s336
      %s354 = sphi 0, %s354
      %s356 = sphi 0, %s354
      %s357 = sphi 0, %s356
      %s371 = sphi 0, %s357
      %s375 = sphi 0, %s375
      %s377 = sphi 0, %s375
      %s378 = sphi 0, %s377
      %s392 = sphi 0, %s378
      %s396 = sphi 0, %s396
      %s398 = sphi 0, %s396
      %s399 = sphi 0, %s398
      %s413 = sphi 0, %s399
      %s417 = sphi 0, %s417
      %s419 = sphi 0, %s417
      %s420 = sphi 0, %s419
      %s434 = sphi 0, %s420
      %s442 = sphi 0, %s444
      %s445 = sphi 0, %s442
      %s446 = sphi 0, %s445
      %s462 = sphi 0, %s446
    $region4: #{encoder_forward.2} parent=1 // loop_header_branch
      %33 = sbr.rel (%p31) target = $region8
    $region5: #{encoder_forward.2} parent=1 // loop_body
      %s35 = ssub.s32 %s30, 1
      %s36 = ssub.s32 %s30, 2
      %s43 = sadd.s32 1, %s38
      %p44 = scmp.ge.s32.totalorder %s43, 1
      %s45 = scalar_select %p44, 0, %s43
      %s46 = sadd.s32 1, %s37
      %s47 = scalar_select %p44, %s46, %s37
      %p48 = scmp.ge.s32.totalorder %s47, 2
      %s49 = scalar_select %p48, 0, %s47
      %s50 = ssub.s32 %s37, %s49
      %p51 = scmp.eq.s32.totalorder %s50, 0
      %s53 = sadd.s32 %s52, 1
      %s54 = scalar_select %p51, %s52, %s53
      %p57 = pneg %p51
      %p58 = scmp.eq.s32.totalorder %s30, 1
      %p59 = por %p57, %p58
      %p60 = scmp.ne.s32.totalorder %s52, %s55
      %p61 = scmp.eq.s32.totalorder %s30, 0
      %p62 = por %p60, %p61
      %p63 = scmp.ne.s32.totalorder %s52, %s55
      %p64 = scmp.eq.s32.totalorder %s35, 1
      %p65 = por %p63, %p64
      %p66 = scmp.ne.s32.totalorder %s55, %s56
      %p67 = scmp.eq.s32.totalorder %s35, 0
      %p68 = por %p66, %p67
      %p69 = scmp.ne.s32.totalorder %s55, %s56
      %p70 = scmp.eq.s32.totalorder %s36, 1
      %p71 = por %p69, %p70
      %p73 = scmp.ne.s32.totalorder %s56, %s72
      %p74 = scmp.eq.s32.totalorder %s36, 0
      %p75 = por %p73, %p74
      %s76 = ssub.s32 %s37, %s49
      %p77 = scmp.eq.s32.totalorder %s76, 0
      %s79 = sadd.s32 %s78, 1
      %s80 = scalar_select %p77, %s78, %s79
      %p83 = pneg %p77
      %p84 = scmp.eq.s32.totalorder %s30, 1
      %p85 = por %p83, %p84
      %p86 = scmp.ne.s32.totalorder %s78, %s81
      %p87 = scmp.eq.s32.totalorder %s30, 0
      %p88 = por %p86, %p87
      %p89 = scmp.ne.s32.totalorder %s78, %s81
      %p90 = scmp.eq.s32.totalorder %s35, 1
      %p91 = por %p89, %p90
      %p92 = scmp.ne.s32.totalorder %s81, %s82
      %p93 = scmp.eq.s32.totalorder %s35, 0
      %p94 = por %p92, %p93
      %p95 = scmp.ne.s32.totalorder %s81, %s82
      %p96 = scmp.eq.s32.totalorder %s36, 1
      %p97 = por %p95, %p96
      %p99 = scmp.ne.s32.totalorder %s82, %s98
      %p100 = scmp.eq.s32.totalorder %s36, 0
      %p101 = por %p99, %p100
      %s103 = sadd.s32 %s102, 1
      %p106 = scmp.eq.s32.totalorder %s30, 1
      %p107 = scmp.ne.s32.totalorder %s102, %s104
      %p108 = scmp.eq.s32.totalorder %s30, 0
      %p109 = por %p107, %p108
      %p110 = scmp.ne.s32.totalorder %s102, %s104
      %p111 = scmp.eq.s32.totalorder %s35, 1
      %p112 = por %p110, %p111
      %p113 = scmp.ne.s32.totalorder %s104, %s105
      %p114 = scmp.eq.s32.totalorder %s35, 0
      %p115 = por %p113, %p114
      %p116 = scmp.ne.s32.totalorder %s104, %s105
      %p117 = scmp.eq.s32.totalorder %s36, 1
      %p118 = por %p116, %p117
      %p120 = scmp.ne.s32.totalorder %s105, %s119
      %p121 = scmp.eq.s32.totalorder %s36, 0
      %p122 = por %p120, %p121
      %s124 = sadd.s32 %s123, 1
      %p127 = scmp.eq.s32.totalorder %s30, 1
      %p128 = scmp.ne.s32.totalorder %s123, %s125
      %p129 = scmp.eq.s32.totalorder %s30, 0
      %p130 = por %p128, %p129
      %p131 = scmp.ne.s32.totalorder %s123, %s125
      %p132 = scmp.eq.s32.totalorder %s35, 1
      %p133 = por %p131, %p132
      %p134 = scmp.ne.s32.totalorder %s125, %s126
      %p135 = scmp.eq.s32.totalorder %s35, 0
      %p136 = por %p134, %p135
      %p137 = scmp.ne.s32.totalorder %s125, %s126
      %p138 = scmp.eq.s32.totalorder %s36, 1
      %p139 = por %p137, %p138
      %p141 = scmp.ne.s32.totalorder %s126, %s140
      %p142 = scmp.eq.s32.totalorder %s36, 0
      %p143 = por %p141, %p142
      %s145 = sadd.s32 %s144, 1
      %p148 = scmp.eq.s32.totalorder %s30, 1
      %p149 = scmp.ne.s32.totalorder %s144, %s146
      %p150 = scmp.eq.s32.totalorder %s30, 0
      %p151 = por %p149, %p150
      %p152 = scmp.ne.s32.totalorder %s144, %s146
      %p153 = scmp.eq.s32.totalorder %s35, 1
      %p154 = por %p152, %p153
      %p155 = scmp.ne.s32.totalorder %s146, %s147
      %p156 = scmp.eq.s32.totalorder %s35, 0
      %p157 = por %p155, %p156
      %p158 = scmp.ne.s32.totalorder %s146, %s147
      %p159 = scmp.eq.s32.totalorder %s36, 1
      %p160 = por %p158, %p159
      %p162 = scmp.ne.s32.totalorder %s147, %s161
      %p163 = scmp.eq.s32.totalorder %s36, 0
      %p164 = por %p162, %p163
      %s166 = sadd.s32 %s165, 1
      %p169 = scmp.eq.s32.totalorder %s30, 1
      %p170 = scmp.ne.s32.totalorder %s165, %s167
      %p171 = scmp.eq.s32.totalorder %s30, 0
      %p172 = por %p170, %p171
      %p173 = scmp.ne.s32.totalorder %s165, %s167
      %p174 = scmp.eq.s32.totalorder %s35, 1
      %p175 = por %p173, %p174
      %p176 = scmp.ne.s32.totalorder %s167, %s168
      %p177 = scmp.eq.s32.totalorder %s35, 0
      %p178 = por %p176, %p177
      %p179 = scmp.ne.s32.totalorder %s167, %s168
      %p180 = scmp.eq.s32.totalorder %s36, 1
      %p181 = por %p179, %p180
      %p183 = scmp.ne.s32.totalorder %s168, %s182
      %p184 = scmp.eq.s32.totalorder %s36, 0
      %p185 = por %p183, %p184
      %s187 = sadd.s32 %s186, 1
      %p190 = scmp.eq.s32.totalorder %s30, 1
      %p191 = scmp.ne.s32.totalorder %s186, %s188
      %p192 = scmp.eq.s32.totalorder %s30, 0
      %p193 = por %p191, %p192
      %p194 = scmp.ne.s32.totalorder %s186, %s188
      %p195 = scmp.eq.s32.totalorder %s35, 1
      %p196 = por %p194, %p195
      %p197 = scmp.ne.s32.totalorder %s188, %s189
      %p198 = scmp.eq.s32.totalorder %s35, 0
      %p199 = por %p197, %p198
      %p200 = scmp.ne.s32.totalorder %s188, %s189
      %p201 = scmp.eq.s32.totalorder %s36, 1
      %p202 = por %p200, %p201
      %p204 = scmp.ne.s32.totalorder %s189, %s203
      %p205 = scmp.eq.s32.totalorder %s36, 0
      %p206 = por %p204, %p205
      %s208 = sadd.s32 %s207, 1
      %p211 = scmp.eq.s32.totalorder %s30, 1
      %p212 = scmp.ne.s32.totalorder %s207, %s209
      %p213 = scmp.eq.s32.totalorder %s30, 0
      %p214 = por %p212, %p213
      %p215 = scmp.ne.s32.totalorder %s207, %s209
      %p216 = scmp.eq.s32.totalorder %s35, 1
      %p217 = por %p215, %p216
      %p218 = scmp.ne.s32.totalorder %s209, %s210
      %p219 = scmp.eq.s32.totalorder %s35, 0
      %p220 = por %p218, %p219
      %p221 = scmp.ne.s32.totalorder %s209, %s210
      %p222 = scmp.eq.s32.totalorder %s36, 1
      %p223 = por %p221, %p222
      %p225 = scmp.ne.s32.totalorder %s210, %s224
      %p226 = scmp.eq.s32.totalorder %s36, 0
      %p227 = por %p225, %p226
      %s229 = sadd.s32 %s228, 1
      %p232 = scmp.eq.s32.totalorder %s30, 1
      %p233 = scmp.ne.s32.totalorder %s228, %s230
      %p234 = scmp.eq.s32.totalorder %s30, 0
      %p235 = por %p233, %p234
      %p236 = scmp.ne.s32.totalorder %s228, %s230
      %p237 = scmp.eq.s32.totalorder %s35, 1
      %p238 = por %p236, %p237
      %p239 = scmp.ne.s32.totalorder %s230, %s231
      %p240 = scmp.eq.s32.totalorder %s35, 0
      %p241 = por %p239, %p240
      %p242 = scmp.ne.s32.totalorder %s230, %s231
      %p243 = scmp.eq.s32.totalorder %s36, 1
      %p244 = por %p242, %p243
      %p246 = scmp.ne.s32.totalorder %s231, %s245
      %p247 = scmp.eq.s32.totalorder %s36, 0
      %p248 = por %p246, %p247
      %s250 = sadd.s32 %s249, 1
      %p253 = scmp.eq.s32.totalorder %s30, 1
      %p254 = scmp.ne.s32.totalorder %s249, %s251
      %p255 = scmp.eq.s32.totalorder %s30, 0
      %p256 = por %p254, %p255
      %p257 = scmp.ne.s32.totalorder %s249, %s251
      %p258 = scmp.eq.s32.totalorder %s35, 1
      %p259 = por %p257, %p258
      %p260 = scmp.ne.s32.totalorder %s251, %s252
      %p261 = scmp.eq.s32.totalorder %s35, 0
      %p262 = por %p260, %p261
      %p263 = scmp.ne.s32.totalorder %s251, %s252
      %p264 = scmp.eq.s32.totalorder %s36, 1
      %p265 = por %p263, %p264
      %p267 = scmp.ne.s32.totalorder %s252, %s266
      %p268 = scmp.eq.s32.totalorder %s36, 0
      %p269 = por %p267, %p268
      %s271 = sadd.s32 %s270, 1
      %p274 = scmp.eq.s32.totalorder %s30, 1
      %p275 = scmp.ne.s32.totalorder %s270, %s272
      %p276 = scmp.eq.s32.totalorder %s30, 0
      %p277 = por %p275, %p276
      %p278 = scmp.ne.s32.totalorder %s270, %s272
      %p279 = scmp.eq.s32.totalorder %s35, 1
      %p280 = por %p278, %p279
      %p281 = scmp.ne.s32.totalorder %s272, %s273
      %p282 = scmp.eq.s32.totalorder %s35, 0
      %p283 = por %p281, %p282
      %p284 = scmp.ne.s32.totalorder %s272, %s273
      %p285 = scmp.eq.s32.totalorder %s36, 1
      %p286 = por %p284, %p285
      %p288 = scmp.ne.s32.totalorder %s273, %s287
      %p289 = scmp.eq.s32.totalorder %s36, 0
      %p290 = por %p288, %p289
      %s292 = sadd.s32 %s291, 1
      %p295 = scmp.eq.s32.totalorder %s30, 1
      %p296 = scmp.ne.s32.totalorder %s291, %s293
      %p297 = scmp.eq.s32.totalorder %s30, 0
      %p298 = por %p296, %p297
      %p299 = scmp.ne.s32.totalorder %s291, %s293
      %p300 = scmp.eq.s32.totalorder %s35, 1
      %p301 = por %p299, %p300
      %p302 = scmp.ne.s32.totalorder %s293, %s294
      %p303 = scmp.eq.s32.totalorder %s35, 0
      %p304 = por %p302, %p303
      %p305 = scmp.ne.s32.totalorder %s293, %s294
      %p306 = scmp.eq.s32.totalorder %s36, 1
      %p307 = por %p305, %p306
      %p309 = scmp.ne.s32.totalorder %s294, %s308
      %p310 = scmp.eq.s32.totalorder %s36, 0
      %p311 = por %p309, %p310
      %s313 = sadd.s32 %s312, 1
      %p316 = scmp.eq.s32.totalorder %s30, 1
      %p317 = scmp.ne.s32.totalorder %s312, %s314
      %p318 = scmp.eq.s32.totalorder %s30, 0
      %p319 = por %p317, %p318
      %p320 = scmp.ne.s32.totalorder %s312, %s314
      %p321 = scmp.eq.s32.totalorder %s35, 1
      %p322 = por %p320, %p321
      %p323 = scmp.ne.s32.totalorder %s314, %s315
      %p324 = scmp.eq.s32.totalorder %s35, 0
      %p325 = por %p323, %p324
      %p326 = scmp.ne.s32.totalorder %s314, %s315
      %p327 = scmp.eq.s32.totalorder %s36, 1
      %p328 = por %p326, %p327
      %p330 = scmp.ne.s32.totalorder %s315, %s329
      %p331 = scmp.eq.s32.totalorder %s36, 0
      %p332 = por %p330, %p331
      %s334 = sadd.s32 %s333, 1
      %p337 = scmp.eq.s32.totalorder %s30, 1
      %p338 = scmp.ne.s32.totalorder %s333, %s335
      %p339 = scmp.eq.s32.totalorder %s30, 0
      %p340 = por %p338, %p339
      %p341 = scmp.ne.s32.totalorder %s333, %s335
      %p342 = scmp.eq.s32.totalorder %s35, 1
      %p343 = por %p341, %p342
      %p344 = scmp.ne.s32.totalorder %s335, %s336
      %p345 = scmp.eq.s32.totalorder %s35, 0
      %p346 = por %p344, %p345
      %p347 = scmp.ne.s32.totalorder %s335, %s336
      %p348 = scmp.eq.s32.totalorder %s36, 1
      %p349 = por %p347, %p348
      %p351 = scmp.ne.s32.totalorder %s336, %s350
      %p352 = scmp.eq.s32.totalorder %s36, 0
      %p353 = por %p351, %p352
      %s355 = sadd.s32 %s354, 1
      %p358 = scmp.eq.s32.totalorder %s30, 1
      %p359 = scmp.ne.s32.totalorder %s354, %s356
      %p360 = scmp.eq.s32.totalorder %s30, 0
      %p361 = por %p359, %p360
      %p362 = scmp.ne.s32.totalorder %s354, %s356
      %p363 = scmp.eq.s32.totalorder %s35, 1
      %p364 = por %p362, %p363
      %p365 = scmp.ne.s32.totalorder %s356, %s357
      %p366 = scmp.eq.s32.totalorder %s35, 0
      %p367 = por %p365, %p366
      %p368 = scmp.ne.s32.totalorder %s356, %s357
      %p369 = scmp.eq.s32.totalorder %s36, 1
      %p370 = por %p368, %p369
      %p372 = scmp.ne.s32.totalorder %s357, %s371
      %p373 = scmp.eq.s32.totalorder %s36, 0
      %p374 = por %p372, %p373
      %s376 = sadd.s32 %s375, 1
      %p379 = scmp.eq.s32.totalorder %s30, 1
      %p380 = scmp.ne.s32.totalorder %s375, %s377
      %p381 = scmp.eq.s32.totalorder %s30, 0
      %p382 = por %p380, %p381
      %p383 = scmp.ne.s32.totalorder %s375, %s377
      %p384 = scmp.eq.s32.totalorder %s35, 1
      %p385 = por %p383, %p384
      %p386 = scmp.ne.s32.totalorder %s377, %s378
      %p387 = scmp.eq.s32.totalorder %s35, 0
      %p388 = por %p386, %p387
      %p389 = scmp.ne.s32.totalorder %s377, %s378
      %p390 = scmp.eq.s32.totalorder %s36, 1
      %p391 = por %p389, %p390
      %p393 = scmp.ne.s32.totalorder %s378, %s392
      %p394 = scmp.eq.s32.totalorder %s36, 0
      %p395 = por %p393, %p394
      %s397 = sadd.s32 %s396, 1
      %p400 = scmp.eq.s32.totalorder %s30, 1
      %p401 = scmp.ne.s32.totalorder %s396, %s398
      %p402 = scmp.eq.s32.totalorder %s30, 0
      %p403 = por %p401, %p402
      %p404 = scmp.ne.s32.totalorder %s396, %s398
      %p405 = scmp.eq.s32.totalorder %s35, 1
      %p406 = por %p404, %p405
      %p407 = scmp.ne.s32.totalorder %s398, %s399
      %p408 = scmp.eq.s32.totalorder %s35, 0
      %p409 = por %p407, %p408
      %p410 = scmp.ne.s32.totalorder %s398, %s399
      %p411 = scmp.eq.s32.totalorder %s36, 1
      %p412 = por %p410, %p411
      %p414 = scmp.ne.s32.totalorder %s399, %s413
      %p415 = scmp.eq.s32.totalorder %s36, 0
      %p416 = por %p414, %p415
      %s418 = sadd.s32 %s417, 1
      %p421 = scmp.eq.s32.totalorder %s30, 1
      %p422 = scmp.ne.s32.totalorder %s417, %s419
      %p423 = scmp.eq.s32.totalorder %s30, 0
      %p424 = por %p422, %p423
      %p425 = scmp.ne.s32.totalorder %s417, %s419
      %p426 = scmp.eq.s32.totalorder %s35, 1
      %p427 = por %p425, %p426
      %p428 = scmp.ne.s32.totalorder %s419, %s420
      %p429 = scmp.eq.s32.totalorder %s35, 0
      %p430 = por %p428, %p429
      %p431 = scmp.ne.s32.totalorder %s419, %s420
      %p432 = scmp.eq.s32.totalorder %s36, 1
      %p433 = por %p431, %p432
      %p435 = scmp.ne.s32.totalorder %s420, %s434
      %p436 = scmp.eq.s32.totalorder %s36, 0
      %p437 = por %p435, %p436
      %s438 = ssub.s32 %s37, %s49
      %s439 = ssub.s32 %s38, %s45
      %s440 = sor.u32 %s438, %s439
      %p441 = scmp.eq.s32.totalorder %s440, 0
      %s443 = sadd.s32 %s442, 1
      %s444 = scalar_select %p441, %s442, %s443
      %p447 = pneg %p441
      %p448 = scmp.eq.s32.totalorder %s30, 1
      %p449 = por %p447, %p448
      %p450 = scmp.ne.s32.totalorder %s442, %s445
      %p451 = scmp.eq.s32.totalorder %s30, 0
      %p452 = por %p450, %p451
      %p453 = scmp.ne.s32.totalorder %s442, %s445
      %p454 = scmp.eq.s32.totalorder %s35, 1
      %p455 = por %p453, %p454
      %p456 = scmp.ne.s32.totalorder %s445, %s446
      %p457 = scmp.eq.s32.totalorder %s35, 0
      %p458 = por %p456, %p457
      %p459 = scmp.ne.s32.totalorder %s445, %s446
      %p460 = scmp.eq.s32.totalorder %s36, 1
      %p461 = por %p459, %p460
      %p463 = scmp.ne.s32.totalorder %s446, %s462
      %p464 = scmp.eq.s32.totalorder %s36, 0
      %p465 = por %p463, %p464
      %p466 = scmp.le.s32.totalorder 1, %s30
      %p467 = scmp.lt.s32.totalorder %s30, 3
      %p468 = pnand %p466, %p467
      %p469 = pneg %p468
      // Predicated region
      $region9: #{encoder_forward.2} parent=5 // pred_check
        _
      $region10: #{encoder_forward.2} parent=5 // pred_check_branch
        %471 = sbr.rel (%p468) target = $region12
      $region11: #{encoder_forward.2} parent=5 // pred_region
        %s472 = ssub.s32 %s30, 1
        // Predicated region
        $region13: #{encoder_forward.2} parent=11 // pred_check
          %p473 = pneg %p115
        $region14: #{encoder_forward.2} parent=11 // pred_check_branch
          %475 = sbr.rel (%p473) target = $region16
        $region15: #{encoder_forward.2} parent=11 // pred_region
          _
        $region16: #{encoder_forward.2} parent=11 // pred_fallthru
          _
        // Predicated region
        $region17: #{encoder_forward.2} parent=11 // pred_check
          %p476 = pneg %p136
        $region18: #{encoder_forward.2} parent=11 // pred_check_branch
          %478 = sbr.rel (%p476) target = $region20
        $region19: #{encoder_forward.2} parent=11 // pred_region
          _
        $region20: #{encoder_forward.2} parent=11 // pred_fallthru
          _
        // Predicated region
        $region21: #{encoder_forward.2} parent=11 // pred_check
          %p479 = pneg %p157
        $region22: #{encoder_forward.2} parent=11 // pred_check_branch
          %481 = sbr.rel (%p479) target = $region24
        $region23: #{encoder_forward.2} parent=11 // pred_region
          _
        $region24: #{encoder_forward.2} parent=11 // pred_fallthru
          _
        // Predicated region
        $region25: #{encoder_forward.2} parent=11 // pred_check
          %p482 = pneg %p178
        $region26: #{encoder_forward.2} parent=11 // pred_check_branch
          %484 = sbr.rel (%p482) target = $region28
        $region27: #{encoder_forward.2} parent=11 // pred_region
          _
        $region28: #{encoder_forward.2} parent=11 // pred_fallthru
          _
        // Predicated region
        $region29: #{encoder_forward.2} parent=11 // pred_check
          %p485 = pneg %p199
        $region30: #{encoder_forward.2} parent=11 // pred_check_branch
          %487 = sbr.rel (%p485) target = $region32
        $region31: #{encoder_forward.2} parent=11 // pred_region
          _
        $region32: #{encoder_forward.2} parent=11 // pred_fallthru
          _
        // Predicated region
        $region33: #{encoder_forward.2} parent=11 // pred_check
          %p488 = pneg %p220
        $region34: #{encoder_forward.2} parent=11 // pred_check_branch
          %490 = sbr.rel (%p488) target = $region36
        $region35: #{encoder_forward.2} parent=11 // pred_region
          %s492 = ssub.s32 16, 16
          %493 = vsyncadd [#allocation7], %s492
          %s495 = sshll.u32 [#allocation6], 4
          %s496 = int_to_ptr.vmem [resolvable:$true] %s495
          %498 = dma.hbm_to_vmem [thread:$0]  %s7, 16, %s496, [#allocation7]
        $region36: #{encoder_forward.2} parent=11 // pred_fallthru
          _
        // Predicated region
        $region37: #{encoder_forward.2} parent=11 // pred_check
          %p499 = pneg %p241
        $region38: #{encoder_forward.2} parent=11 // pred_check_branch
          %501 = sbr.rel (%p499) target = $region40
        $region39: #{encoder_forward.2} parent=11 // pred_region
          _
        $region40: #{encoder_forward.2} parent=11 // pred_fallthru
          _
        // Predicated region
        $region41: #{encoder_forward.2} parent=11 // pred_check
          %p502 = pneg %p262
        $region42: #{encoder_forward.2} parent=11 // pred_check_branch
          %504 = sbr.rel (%p502) target = $region44
        $region43: #{encoder_forward.2} parent=11 // pred_region
          %s506 = ssub.s32 16, 16
          %507 = vsyncadd [#allocation7], %s506
          %s509 = sshll.u32 [#allocation8], 4
          %s510 = int_to_ptr.vmem [resolvable:$true] %s509
          %512 = dma.hbm_to_vmem [thread:$0]  %s9, 16, %s510, [#allocation7]
        $region44: #{encoder_forward.2} parent=11 // pred_fallthru
          _
        // Predicated region
        $region45: #{encoder_forward.2} parent=11 // pred_check
          %p513 = pneg %p283
        $region46: #{encoder_forward.2} parent=11 // pred_check_branch
          %515 = sbr.rel (%p513) target = $region48
        $region47: #{encoder_forward.2} parent=11 // pred_region
          _
        $region48: #{encoder_forward.2} parent=11 // pred_fallthru
          _
        // Predicated region
        $region49: #{encoder_forward.2} parent=11 // pred_check
          %p516 = pneg %p304
        $region50: #{encoder_forward.2} parent=11 // pred_check_branch
          %518 = sbr.rel (%p516) target = $region52
        $region51: #{encoder_forward.2} parent=11 // pred_region
          _
        $region52: #{encoder_forward.2} parent=11 // pred_fallthru
          _
        // Predicated region
        $region53: #{encoder_forward.2} parent=11 // pred_check
          %p519 = pneg %p325
        $region54: #{encoder_forward.2} parent=11 // pred_check_branch
          %521 = sbr.rel (%p519) target = $region56
        $region55: #{encoder_forward.2} parent=11 // pred_region
          %s523 = ssub.s32 512, 512
          %524 = vsyncadd [#allocation10], %s523
          %s525 = sshll.u32 [#allocation9], 4
          %s526 = int_to_ptr.vmem [resolvable:$true] %s525
          %531 = dma.hbm_to_vmem [thread:$0]  %s12, 512, %s526, [#allocation10], 128, 128, 8
        $region56: #{encoder_forward.2} parent=11 // pred_fallthru
          _
        // Predicated region
        $region57: #{encoder_forward.2} parent=11 // pred_check
          %p532 = pneg %p346
        $region58: #{encoder_forward.2} parent=11 // pred_check_branch
          %534 = sbr.rel (%p532) target = $region60
        $region59: #{encoder_forward.2} parent=11 // pred_region
          %s536 = ssub.s32 16, 16
          %537 = vsyncadd [#allocation10], %s536
          %s539 = sshll.u32 [#allocation11], 4
          %s540 = int_to_ptr.vmem [resolvable:$true] %s539
          %542 = dma.hbm_to_vmem [thread:$0]  %s13, 16, %s540, [#allocation10]
        $region60: #{encoder_forward.2} parent=11 // pred_fallthru
          _
        // Predicated region
        $region61: #{encoder_forward.2} parent=11 // pred_check
          %p543 = pneg %p367
        $region62: #{encoder_forward.2} parent=11 // pred_check_branch
          %545 = sbr.rel (%p543) target = $region64
        $region63: #{encoder_forward.2} parent=11 // pred_region
          _
        $region64: #{encoder_forward.2} parent=11 // pred_fallthru
          _
        // Predicated region
        $region65: #{encoder_forward.2} parent=11 // pred_check
          %p546 = pneg %p388
        $region66: #{encoder_forward.2} parent=11 // pred_check_branch
          %548 = sbr.rel (%p546) target = $region68
        $region67: #{encoder_forward.2} parent=11 // pred_region
          %s550 = ssub.s32 16, 16
          %551 = vsyncadd [#allocation13], %s550
          %s553 = sshll.u32 [#allocation12], 4
          %s554 = int_to_ptr.vmem [resolvable:$true] %s553
          %556 = dma.hbm_to_vmem [thread:$0]  %s15, 16, %s554, [#allocation13]
        $region68: #{encoder_forward.2} parent=11 // pred_fallthru
          _
        // Predicated region
        $region69: #{encoder_forward.2} parent=11 // pred_check
          %p557 = pneg %p409
        $region70: #{encoder_forward.2} parent=11 // pred_check_branch
          %559 = sbr.rel (%p557) target = $region72
        $region71: #{encoder_forward.2} parent=11 // pred_region
          _
        $region72: #{encoder_forward.2} parent=11 // pred_fallthru
          _
        // Predicated region
        $region73: #{encoder_forward.2} parent=11 // pred_check
          %p560 = pneg %p430
        $region74: #{encoder_forward.2} parent=11 // pred_check_branch
          %562 = sbr.rel (%p560) target = $region76
        $region75: #{encoder_forward.2} parent=11 // pred_region
          _
        $region76: #{encoder_forward.2} parent=11 // pred_fallthru
          _
      $region12: #{encoder_forward.2} parent=5 // pred_fallthru
        _
      %p563 = scmp.lt.s32.totalorder %s30, 2
      // Predicated region
      $region77: #{encoder_forward.2} parent=5 // pred_check
        %p564 = pneg %p563
      $region78: #{encoder_forward.2} parent=5 // pred_check_branch
        %566 = sbr.rel (%p564) target = $region80
      $region79: #{encoder_forward.2} parent=5 // pred_region
        // Predicated region
        $region81: #{encoder_forward.2} parent=79 // pred_check
          %p567 = pneg %p62
        $region82: #{encoder_forward.2} parent=79 // pred_check_branch
          %569 = sbr.rel (%p567) target = $region84
        $region83: #{encoder_forward.2} parent=79 // pred_region
          %s570 = sand.u32 %s52, 1
          %s571 = scalar_lea.sflag [#allocation5], %s570
          %s572 = sand.u32 %s52, 1
          %s573 = smul.addr %s572, 8
          %s574 = scalar_lea.vmem [#allocation4], %s573
          %s576 = ssub.s32 128, 128
          %577 = vsyncadd %s571, %s576
          %s578 = smul.addr %s37, 128
          %s579 = scalar_lea.hbm %s0, %s578
          %s581 = sshll.u32 %s574, 4
          %s582 = int_to_ptr.vmem [resolvable:$true] %s581
          %584 = dma.hbm_to_vmem [thread:$0]  %s579, 128, %s582, %s571
        $region84: #{encoder_forward.2} parent=79 // pred_fallthru
          _
        // Predicated region
        $region85: #{encoder_forward.2} parent=79 // pred_check
          %p585 = pneg %p88
        $region86: #{encoder_forward.2} parent=79 // pred_check_branch
          %587 = sbr.rel (%p585) target = $region88
        $region87: #{encoder_forward.2} parent=79 // pred_region
          %p588 = scmp.lt.s32.totalorder %s37, 1
          %s589 = scalar_select %p588, %s37, 1
          %s590 = scalar_lea.vmem %s1, %s589
        $region88: #{encoder_forward.2} parent=79 // pred_fallthru
          _
      $region80: #{encoder_forward.2} parent=5 // pred_fallthru
        _
      %p591 = scmp.le.s32.totalorder 1, %s30
      %p592 = scmp.lt.s32.totalorder %s30, 3
      %p593 = pnand %p591, %p592
      %p594 = pneg %p593
      // Predicated region
      $region89: #{encoder_forward.2} parent=5 // pred_check
        _
      $region90: #{encoder_forward.2} parent=5 // pred_check_branch
        %596 = sbr.rel (%p593) target = $region92
      $region91: #{encoder_forward.2} parent=5 // pred_region
        %s597 = ssub.s32 %s30, 1
        %s598 = sand.u32 %s55, 1
        %s599 = scalar_lea.sflag [#allocation5], %s598
        %s600 = sand.u32 %s55, 1
        %s601 = smul.addr %s600, 8
        %s602 = scalar_lea.vmem [#allocation4], %s601
        // Predicated region
        $region93: #{encoder_forward.2} parent=91 // pred_check
          %p603 = pneg %p68
        $region94: #{encoder_forward.2} parent=91 // pred_check_branch
          %605 = sbr.rel (%p603) target = $region96
        $region95: #{encoder_forward.2} parent=91 // pred_region
          %606 = dma.done %s599, 128
        $region96: #{encoder_forward.2} parent=91 // pred_fallthru
          _
        // Predicated region
        $region97: #{encoder_forward.2} parent=91 // pred_check
          %p607 = pneg %p220
        $region98: #{encoder_forward.2} parent=91 // pred_check_branch
          %609 = sbr.rel (%p607) target = $region100
        $region99: #{encoder_forward.2} parent=91 // pred_region
          %610 = dma.done [#allocation7], 16
        $region100: #{encoder_forward.2} parent=91 // pred_fallthru
          _
        // Predicated region
        $region101: #{encoder_forward.2} parent=91 // pred_check
          %p611 = pneg %p262
        $region102: #{encoder_forward.2} parent=91 // pred_check_branch
          %613 = sbr.rel (%p611) target = $region104
        $region103: #{encoder_forward.2} parent=91 // pred_region
          %614 = dma.done [#allocation7], 16
        $region104: #{encoder_forward.2} parent=91 // pred_fallthru
          _
        // Predicated region
        $region105: #{encoder_forward.2} parent=91 // pred_check
          %p615 = pneg %p325
        $region106: #{encoder_forward.2} parent=91 // pred_check_branch
          %617 = sbr.rel (%p615) target = $region108
        $region107: #{encoder_forward.2} parent=91 // pred_region
          %618 = dma.done [#allocation10], 512
        $region108: #{encoder_forward.2} parent=91 // pred_fallthru
          _
        // Predicated region
        $region109: #{encoder_forward.2} parent=91 // pred_check
          %p619 = pneg %p346
        $region110: #{encoder_forward.2} parent=91 // pred_check_branch
          %621 = sbr.rel (%p619) target = $region112
        $region111: #{encoder_forward.2} parent=91 // pred_region
          %622 = dma.done [#allocation10], 16
        $region112: #{encoder_forward.2} parent=91 // pred_fallthru
          _
        // Predicated region
        $region113: #{encoder_forward.2} parent=91 // pred_check
          %p623 = pneg %p388
        $region114: #{encoder_forward.2} parent=91 // pred_check_branch
          %625 = sbr.rel (%p623) target = $region116
        $region115: #{encoder_forward.2} parent=91 // pred_region
          %626 = dma.done [#allocation13], 16
        $region116: #{encoder_forward.2} parent=91 // pred_fallthru
          _
        %s627 = sand.u32 %s55, 1
        %s628 = scalar_lea.sflag [#allocation5], %s627
        %s629 = sand.u32 %s55, 1
        %s630 = smul.addr %s629, 8
        %s631 = scalar_lea.vmem [#allocation4], %s630
        %p632 = pneg %p68
        %p633 = pneg %p65
        %p634 = scmp.lt.s32.totalorder %s39, 1
        %s635 = scalar_select %p634, %s39, 1
        %s636 = scalar_lea.vmem %s1, %s635
        %p637 = pneg %p94
        %p638 = pneg %p91
        %p639 = pneg %p115
        %p640 = pneg %p112
        %p641 = pneg %p136
        %p642 = pneg %p133
        %p643 = pneg %p157
        %p644 = pneg %p154
        %p645 = pneg %p178
        %p646 = pneg %p175
        %p647 = pneg %p199
        %p648 = pneg %p196
        %p649 = pneg %p220
        %p650 = pneg %p217
        %p651 = pneg %p241
        %p652 = pneg %p238
        %p653 = pneg %p262
        %p654 = pneg %p259
        %p655 = pneg %p283
        %p656 = pneg %p280
        %p657 = pneg %p304
        %p658 = pneg %p301
        %p659 = pneg %p325
        %p660 = pneg %p322
        %p661 = pneg %p346
        %p662 = pneg %p343
        %p663 = pneg %p367
        %p664 = pneg %p364
        %p665 = pneg %p388
        %p666 = pneg %p385
        %p667 = pneg %p409
        %p668 = pneg %p406
        %p669 = pneg %p430
        %p670 = pneg %p427
        %p671 = pneg %p458
        %p672 = pneg %p455
        %p673 = scmp.lt.s32.totalorder %s39, 1
        %s674 = scalar_select %p673, %s39, 1
        %p675 = scmp.lt.s32.totalorder %s40, 0
        %s676 = scalar_select %p675, %s40, 0
        %s677 = sadd.s32 %s676, %s674
        %s678 = smul.addr %s677, 8
        %s679 = scalar_lea.vmem %s18, %s678
        %p680 = scmp.lt.s32.totalorder %s39, 1
        %s681 = scalar_select %p680, %s39, 1
        %s682 = scalar_lea.vmem %s1, %s681
        %p683 = scmp.lt.s32.totalorder %s39, 1
        %s684 = scalar_select %p683, %s39, 1
        %p685 = scmp.lt.s32.totalorder %s40, 0
        %s686 = scalar_select %p685, %s40, 0
        %s687 = sadd.s32 %s686, %s684
        %s688 = smul.addr %s687, 8
        %s689 = scalar_lea.vmem %s18, %s688
        %p690 = scmp.eq.s32.totalorder %s40, 0
        // Predicated region
        $region117: #{encoder_forward.2} parent=91 // pred_check
          %p691 = pneg %p690
        $region118: #{encoder_forward.2} parent=91 // pred_check_branch
          %693 = sbr.rel (%p691) target = $region120
        $region119: #{encoder_forward.2} parent=91 // pred_region
          %v694 = vld [vmem:[%s602] sm:$0xff]
          %v695 = vld [vmem:[%s2] sm:$0x1]
          %v696 = vld [vmem:[%s3] sm:$0x1]
          %vm697 = vcmask 261120
          %v698 = vsel %vm697, %v694, 0.0
          %699 = vadd.xlane.f32.xlu0 %v698
          %v700 = vpop.xlane.xlu0 %699
          %v701 = vrcp.pop 32.0
          %v702 = vmul.f32 %v700, %v701
          %v703 = vsub.f32 %v694, %v702
          %v704 = vmul.f32 %v703, %v703
          %v705 = vsel %vm697, %v704, 0.0
          %706 = vadd.xlane.f32.xlu0 %v705
          %v707 = vpop.xlane.xlu0 %706
          %v708 = vrcp.pop 31.0
          %v709 = vmul.f32 %v707, %v708
          %v711 = vlaneseq
          %v712 = vshrl.u32 %v711, 7
          %v713 = vsub.s32 0, %v712
          %v714 = vrot.slane %v695, %v713
          %v716 = vmul.f32 %v714, %v703
          %v717 = vrsqrt.pop %v709
          %v718 = vmul.f32 %v709, %v717
          %vm719 = vcmp.eq.f32.partialorder %v709, inf
          %v720 = vsel %vm719, %v709, %v718
          %vm721 = vcmp.eq.f32.partialorder %v709, 0.0
          %v722 = vand.u32 %v709, 2147483648
          %v723 = vsel %vm721, %v722, %v720
          %v724 = vadd.f32 %v723, 1e-06
          %v725 = vrcp.pop %v724
          %v726 = vmul.f32 %v716, %v725
          %v728 = vlaneseq
          %v729 = vshrl.u32 %v728, 7
          %v730 = vsub.s32 0, %v729
          %v731 = vrot.slane %v696, %v730
          %v733 = vadd.f32 %v726, %v731
          %v734 = vld [vmem:[%s6] sm:$0xff]
          %v735 = vld [vmem:[%s6 + $0x8] sm:$0xff]
          %v736 = vld [vmem:[%s6 + $0x10] sm:$0xff]
          %v737 = vld [vmem:[%s6 + $0x18] sm:$0xff]
          %v738 = vld [vmem:[#allocation6] sm:$0x1]
          %v740 = vlaneseq
          %v741 = vshrl.u32 %v740, 7
          %v742 = vsub.s32 0, %v741
          %v743 = vrot.slane %v738, %v742
          %v746 = vsel %vm697, %v733, 0
          %748 = vmatprep.subr.mxu0 0.0
          %749 = vmatpush1.msra.mxu0 0.0
          %750 = vmatprep.subr.mxu0 0.0
          %751 = vmatpush1.msra.mxu0 0.0
          %752 = vmatprep.subr.mxu0 0.0
          %753 = vmatpush1.msra.mxu0 0.0
          %754 = vmatprep.subr.mxu0 0.0
          %755 = vmatpush1.msra.mxu0 0.0
          %756 = vmatprep.subr.mxu0 0.0
          %757 = vmatpush1.msra.mxu0 0.0
          %758 = vmatprep.subr.mxu0 0.0
          %759 = vmatpush1.msra.mxu0 0.0
          %760 = vmatprep.subr.mxu0 0.0
          %761 = vmatpush1.msra.mxu0 0.0
          %762 = vmatprep.subr.mxu0 0.0
          %763 = vmatpush1.msra.mxu0 0.0
          %764 = vmatprep.subr.mxu0 0.0
          %765 = vmatpush1.msra.mxu0 0.0
          %766 = vmatprep.subr.mxu0 0.0
          %767 = vmatpush1.msra.mxu0 0.0
          %768 = vmatprep.subr.mxu0 0.0
          %769 = vmatpush1.msra.mxu0 0.0
          %770 = vmatprep.subr.mxu0 0.0
          %771 = vmatpush1.msra.mxu0 0.0
          %772 = vmatprep.subr.mxu0 0.0
          %773 = vmatpush1.msra.mxu0 %v737
          %774 = vmatprep.subr.mxu0 0.0
          %775 = vmatpush1.msra.mxu0 %v736
          %776 = vmatprep.subr.mxu0 0.0
          %777 = vmatpush1.msra.mxu0 %v735
          %778 = vmatprep.subr.mxu0 0.0
          %779 = vmatpush1.msra.mxu0 %v734
          %780 = vmatprep.subr.mxu0 0.0
          %781 = vmatpush2.msra.mxu0 0.0
          %782 = vmatprep.subr.mxu0 0.0
          %783 = vmatpush2.msra.mxu0 0.0
          %784 = vmatprep.subr.mxu0 0.0
          %785 = vmatpush2.msra.mxu0 0.0
          %786 = vmatprep.subr.mxu0 0.0
          %787 = vmatpush2.msra.mxu0 0.0
          %788 = vmatprep.subr.mxu0 0.0
          %789 = vmatpush2.msra.mxu0 0.0
          %790 = vmatprep.subr.mxu0 0.0
          %791 = vmatpush2.msra.mxu0 0.0
          %792 = vmatprep.subr.mxu0 0.0
          %793 = vmatpush2.msra.mxu0 0.0
          %794 = vmatprep.subr.mxu0 0.0
          %795 = vmatpush2.msra.mxu0 0.0
          %796 = vmatprep.subr.mxu0 0.0
          %797 = vmatpush2.msra.mxu0 0.0
          %798 = vmatprep.subr.mxu0 0.0
          %799 = vmatpush2.msra.mxu0 0.0
          %800 = vmatprep.subr.mxu0 0.0
          %801 = vmatpush2.msra.mxu0 0.0
          %802 = vmatprep.subr.mxu0 0.0
          %803 = vmatpush2.msra.mxu0 0.0
          %804 = vmatprep.subr.mxu0 0.0
          %805 = vmatpush2.msra.mxu0 0.0
          %806 = vmatprep.subr.mxu0 0.0
          %807 = vmatpush2.msra.mxu0 0.0
          %808 = vmatprep.subr.mxu0 0.0
          %809 = vmatpush2.msra.mxu0 0.0
          %810 = vmatprep.subr.mxu0 0.0
          %811 = vmatpush2.msra.mxu0 0.0
          %812 = vmatprep.mubr.f32.mxu0 0.0
          %813 = vmatmul.mubr.f32.gmra.mxu0 %v746
          %v814 = vpop.f32.mrf.mxu0
          %v815 = vadd.f32 %v743, %v814
          %v816 = vpop.f32.mrf.mxu0
          %817 = vdwg.mxu0
          %vm818 = vcmask 523264
          %819 = vst.msk [vmem:[#allocation2] sm:$0xff] %vm818, %v815
        $region120: #{encoder_forward.2} parent=91 // pred_fallthru
          _
        %s820 = smul.u32 %s40, 8
        %s821 = scalar_lea.vmem %s602, %s820 [#allocation4]
        %v822 = vld [vmem:[%s821] sm:$0xff]
        %v823 = vld [vmem:[%s2] sm:$0x1]
        %v824 = vld [vmem:[%s3] sm:$0x1]
        %vm825 = vcmask 261120
        %v826 = vsel %vm825, %v822, 0.0
        %827 = vadd.xlane.f32.xlu0 %v826
        %v828 = vpop.xlane.xlu0 %827
        %v829 = vrcp.pop 32.0
        %v830 = vmul.f32 %v828, %v829
        %v831 = vsub.f32 %v822, %v830
        %v832 = vmul.f32 %v831, %v831
        %v833 = vsel %vm825, %v832, 0.0
        %834 = vadd.xlane.f32.xlu0 %v833
        %v835 = vpop.xlane.xlu0 %834
        %v836 = vrcp.pop 31.0
        %v837 = vmul.f32 %v835, %v836
        %v839 = vlaneseq
        %v840 = vshrl.u32 %v839, 7
        %v841 = vsub.s32 0, %v840
        %v842 = vrot.slane %v823, %v841
        %v844 = vmul.f32 %v842, %v831
        %v845 = vrsqrt.pop %v837
        %v846 = vmul.f32 %v837, %v845
        %vm847 = vcmp.eq.f32.partialorder %v837, inf
        %v848 = vsel %vm847, %v837, %v846
        %vm849 = vcmp.eq.f32.partialorder %v837, 0.0
        %v850 = vand.u32 %v837, 2147483648
        %v851 = vsel %vm849, %v850, %v848
        %v852 = vadd.f32 %v851, 1e-06
        %v853 = vrcp.pop %v852
        %v854 = vmul.f32 %v844, %v853
        %v856 = vlaneseq
        %v857 = vshrl.u32 %v856, 7
        %v858 = vsub.s32 0, %v857
        %v859 = vrot.slane %v824, %v858
        %v861 = vadd.f32 %v854, %v859
        %v862 = vld [vmem:[%s4] sm:$0xff]
        %v863 = vld [vmem:[%s4 + $0x8] sm:$0xff]
        %v864 = vld [vmem:[%s4 + $0x10] sm:$0xff]
        %v865 = vld [vmem:[%s4 + $0x18] sm:$0xff]
        %v866 = vld [vmem:[%s5] sm:$0x1]
        %v868 = vlaneseq
        %v869 = vshrl.u32 %v868, 7
        %v870 = vsub.s32 0, %v869
        %v871 = vrot.slane %v866, %v870
        %v874 = vsel %vm825, %v861, 0
        %876 = vmatprep.subr.mxu0 0.0
        %877 = vmatpush1.msra.mxu0 0.0
        %878 = vmatprep.subr.mxu0 0.0
        %879 = vmatpush1.msra.mxu0 0.0
        %880 = vmatprep.subr.mxu0 0.0
        %881 = vmatpush1.msra.mxu0 0.0
        %882 = vmatprep.subr.mxu0 0.0
        %883 = vmatpush1.msra.mxu0 0.0
        %884 = vmatprep.subr.mxu0 0.0
        %885 = vmatpush1.msra.mxu0 0.0
        %886 = vmatprep.subr.mxu0 0.0
        %887 = vmatpush1.msra.mxu0 0.0
        %888 = vmatprep.subr.mxu0 0.0
        %889 = vmatpush1.msra.mxu0 0.0
        %890 = vmatprep.subr.mxu0 0.0
        %891 = vmatpush1.msra.mxu0 0.0
        %892 = vmatprep.subr.mxu0 0.0
        %893 = vmatpush1.msra.mxu0 0.0
        %894 = vmatprep.subr.mxu0 0.0
        %895 = vmatpush1.msra.mxu0 0.0
        %896 = vmatprep.subr.mxu0 0.0
        %897 = vmatpush1.msra.mxu0 0.0
        %898 = vmatprep.subr.mxu0 0.0
        %899 = vmatpush1.msra.mxu0 0.0
        %900 = vmatprep.subr.mxu0 0.0
        %901 = vmatpush1.msra.mxu0 %v865
        %902 = vmatprep.subr.mxu0 0.0
        %903 = vmatpush1.msra.mxu0 %v864
        %904 = vmatprep.subr.mxu0 0.0
        %905 = vmatpush1.msra.mxu0 %v863
        %906 = vmatprep.subr.mxu0 0.0
        %907 = vmatpush1.msra.mxu0 %v862
        %908 = vmatprep.subr.mxu0 0.0
        %909 = vmatpush2.msra.mxu0 0.0
        %910 = vmatprep.subr.mxu0 0.0
        %911 = vmatpush2.msra.mxu0 0.0
        %912 = vmatprep.subr.mxu0 0.0
        %913 = vmatpush2.msra.mxu0 0.0
        %914 = vmatprep.subr.mxu0 0.0
        %915 = vmatpush2.msra.mxu0 0.0
        %916 = vmatprep.subr.mxu0 0.0
        %917 = vmatpush2.msra.mxu0 0.0
        %918 = vmatprep.subr.mxu0 0.0
        %919 = vmatpush2.msra.mxu0 0.0
        %920 = vmatprep.subr.mxu0 0.0
        %921 = vmatpush2.msra.mxu0 0.0
        %922 = vmatprep.subr.mxu0 0.0
        %923 = vmatpush2.msra.mxu0 0.0
        %924 = vmatprep.subr.mxu0 0.0
        %925 = vmatpush2.msra.mxu0 0.0
        %926 = vmatprep.subr.mxu0 0.0
        %927 = vmatpush2.msra.mxu0 0.0
        %928 = vmatprep.subr.mxu0 0.0
        %929 = vmatpush2.msra.mxu0 0.0
        %930 = vmatprep.subr.mxu0 0.0
        %931 = vmatpush2.msra.mxu0 0.0
        %932 = vmatprep.subr.mxu0 0.0
        %933 = vmatpush2.msra.mxu0 0.0
        %934 = vmatprep.subr.mxu0 0.0
        %935 = vmatpush2.msra.mxu0 0.0
        %936 = vmatprep.subr.mxu0 0.0
        %937 = vmatpush2.msra.mxu0 0.0
        %938 = vmatprep.subr.mxu0 0.0
        %939 = vmatpush2.msra.mxu0 0.0
        %940 = vmatprep.mubr.f32.mxu0 0.0
        %941 = vmatmul.mubr.f32.gmra.mxu0 %v874
        %v942 = vpop.f32.mrf.mxu0
        %v943 = vadd.f32 %v871, %v942
        %v944 = vpop.f32.mrf.mxu0
        %945 = vdwg.mxu0
        %v946 = vld [vmem:[#allocation2] sm:$0xff]
        %v947 = vld [vmem:[%s682] sm:$0x1]
        %vm948 = vcmp.eq.f32.partialorder %v947, 0.0
        %vm949 = vcmask 64512
        %v951 = vsel %vm949, %v943, 0
        %v954 = vsel %vm949, %v946, 0
        %956 = vmatprep.subr.mxu0 0.0
        %957 = vmatpush1.xpose.msra.mxu0 0.0
        %958 = vmatprep.subr.mxu0 0.0
        %959 = vmatpush1.xpose.msra.mxu0 0.0
        %960 = vmatprep.subr.mxu0 0.0
        %961 = vmatpush1.xpose.msra.mxu0 0.0
        %962 = vmatprep.subr.mxu0 0.0
        %963 = vmatpush1.xpose.msra.mxu0 0.0
        %964 = vmatprep.subr.mxu0 0.0
        %965 = vmatpush1.xpose.msra.mxu0 0.0
        %966 = vmatprep.subr.mxu0 0.0
        %967 = vmatpush1.xpose.msra.mxu0 0.0
        %968 = vmatprep.subr.mxu0 0.0
        %969 = vmatpush1.xpose.msra.mxu0 0.0
        %970 = vmatprep.subr.mxu0 0.0
        %971 = vmatpush1.xpose.msra.mxu0 0.0
        %972 = vmatprep.subr.mxu0 0.0
        %973 = vmatpush1.xpose.msra.mxu0 0.0
        %974 = vmatprep.subr.mxu0 0.0
        %975 = vmatpush1.xpose.msra.mxu0 0.0
        %976 = vmatprep.subr.mxu0 0.0
        %977 = vmatpush1.xpose.msra.mxu0 0.0
        %978 = vmatprep.subr.mxu0 0.0
        %979 = vmatpush1.xpose.msra.mxu0 0.0
        %980 = vmatprep.subr.mxu0 0.0
        %981 = vmatpush1.xpose.msra.mxu0 0.0
        %982 = vmatprep.subr.mxu0 0.0
        %983 = vmatpush1.xpose.msra.mxu0 0.0
        %984 = vmatprep.subr.mxu0 0.0
        %985 = vmatpush1.xpose.msra.mxu0 0.0
        %986 = vmatprep.subr.mxu0 0.0
        %987 = vmatpush1.xpose.msra.mxu0 %v954
        %988 = vmatprep.subr.mxu0 0.0
        %989 = vmatpush2.xpose.msra.mxu0 0.0
        %990 = vmatprep.subr.mxu0 0.0
        %991 = vmatpush2.xpose.msra.mxu0 0.0
        %992 = vmatprep.subr.mxu0 0.0
        %993 = vmatpush2.xpose.msra.mxu0 0.0
        %994 = vmatprep.subr.mxu0 0.0
        %995 = vmatpush2.xpose.msra.mxu0 0.0
        %996 = vmatprep.subr.mxu0 0.0
        %997 = vmatpush2.xpose.msra.mxu0 0.0
        %998 = vmatprep.subr.mxu0 0.0
        %999 = vmatpush2.xpose.msra.mxu0 0.0
        %1000 = vmatprep.subr.mxu0 0.0
        %1001 = vmatpush2.xpose.msra.mxu0 0.0
        %1002 = vmatprep.subr.mxu0 0.0
        %1003 = vmatpush2.xpose.msra.mxu0 0.0
        %1004 = vmatprep.subr.mxu0 0.0
        %1005 = vmatpush2.xpose.msra.mxu0 0.0
        %1006 = vmatprep.subr.mxu0 0.0
        %1007 = vmatpush2.xpose.msra.mxu0 0.0
        %1008 = vmatprep.subr.mxu0 0.0
        %1009 = vmatpush2.xpose.msra.mxu0 0.0
        %1010 = vmatprep.subr.mxu0 0.0
        %1011 = vmatpush2.xpose.msra.mxu0 0.0
        %1012 = vmatprep.subr.mxu0 0.0
        %1013 = vmatpush2.xpose.msra.mxu0 0.0
        %1014 = vmatprep.subr.mxu0 0.0
        %1015 = vmatpush2.xpose.msra.mxu0 0.0
        %1016 = vmatprep.subr.mxu0 0.0
        %1017 = vmatpush2.xpose.msra.mxu0 0.0
        %1018 = vmatprep.subr.mxu0 0.0
        %1019 = vmatpush2.xpose.msra.mxu0 0.0
        %1020 = vmatprep.mubr.f32.mxu0 0.0
        %1021 = vmatmul.mubr.f32.gmra.mxu0 %v951
        %v1022 = vpop.f32.mrf.mxu0
        %v1023 = vadd.f32 0.0, %v1022
        %v1024 = vpop.f32.mrf.mxu0
        %1025 = vdwg.mxu0
        %v1026 = vsel %vm948, 1, 0
        %v1027 = vlaneseq
        %v1028 = vshrl.u32 %v1027, 7
        %v1029 = vsub.s32 0, %v1028
        %v1030 = vrot.slane %v1026, %v1029
        %vm1031 = vcmp.eq.s32.totalorder %v1030, 1
        %v1032 = vsel %vm1031, -1e+09, %v1023
        %v1033 = vsel %vm949, %v1032, -inf
        %1034 = vmax.xlane.f32.xlu0 %v1033
        %v1035 = vpop.xlane.xlu0 %1034
        %v1036 = vsub.f32 %v1032, %v1035
        %v1037 = vmul.f32 %v1036, 1.442695
        %v1038 = vpow.pop %v1037
        %v1039 = vsel %vm949, %v1038, 0.0
        %1040 = vadd.xlane.f32.xlu0 %v1039
        %v1041 = vpop.xlane.xlu0 %1040
        %v1042 = vrcp.pop %v1041
        %v1043 = vmul.f32 %v1038, %v1042
        %1044 = vrot.lane.b32.xlu0 %v946, 96
        %v1045 = vpop.permute.xlu0 %1044
        %v1048 = vsel %vm949, %v1043, 0
        %1050 = vmatprep.subr.mxu0 0.0
        %1051 = vmatpush1.msra.mxu0 0.0
        %1052 = vmatprep.subr.mxu0 0.0
        %1053 = vmatpush1.msra.mxu0 0.0
        %1054 = vmatprep.subr.mxu0 0.0
        %1055 = vmatpush1.msra.mxu0 0.0
        %1056 = vmatprep.subr.mxu0 0.0
        %1057 = vmatpush1.msra.mxu0 0.0
        %1058 = vmatprep.subr.mxu0 0.0
        %1059 = vmatpush1.msra.mxu0 0.0
        %1060 = vmatprep.subr.mxu0 0.0
        %1061 = vmatpush1.msra.mxu0 0.0
        %1062 = vmatprep.subr.mxu0 0.0
        %1063 = vmatpush1.msra.mxu0 0.0
        %1064 = vmatprep.subr.mxu0 0.0
        %1065 = vmatpush1.msra.mxu0 0.0
        %1066 = vmatprep.subr.mxu0 0.0
        %1067 = vmatpush1.msra.mxu0 0.0
        %1068 = vmatprep.subr.mxu0 0.0
        %1069 = vmatpush1.msra.mxu0 0.0
        %1070 = vmatprep.subr.mxu0 0.0
        %1071 = vmatpush1.msra.mxu0 0.0
        %1072 = vmatprep.subr.mxu0 0.0
        %1073 = vmatpush1.msra.mxu0 0.0
        %1074 = vmatprep.subr.mxu0 0.0
        %1075 = vmatpush1.msra.mxu0 0.0
        %1076 = vmatprep.subr.mxu0 0.0
        %1077 = vmatpush1.msra.mxu0 0.0
        %1078 = vmatprep.subr.mxu0 0.0
        %1079 = vmatpush1.msra.mxu0 0.0
        %1080 = vmatprep.subr.mxu0 0.0
        %1081 = vmatpush1.msra.mxu0 %v1045
        %1082 = vmatprep.subr.mxu0 0.0
        %1083 = vmatpush2.msra.mxu0 0.0
        %1084 = vmatprep.subr.mxu0 0.0
        %1085 = vmatpush2.msra.mxu0 0.0
        %1086 = vmatprep.subr.mxu0 0.0
        %1087 = vmatpush2.msra.mxu0 0.0
        %1088 = vmatprep.subr.mxu0 0.0
        %1089 = vmatpush2.msra.mxu0 0.0
        %1090 = vmatprep.subr.mxu0 0.0
        %1091 = vmatpush2.msra.mxu0 0.0
        %1092 = vmatprep.subr.mxu0 0.0
        %1093 = vmatpush2.msra.mxu0 0.0
        %1094 = vmatprep.subr.mxu0 0.0
        %1095 = vmatpush2.msra.mxu0 0.0
        %1096 = vmatprep.subr.mxu0 0.0
        %1097 = vmatpush2.msra.mxu0 0.0
        %1098 = vmatprep.subr.mxu0 0.0
        %1099 = vmatpush2.msra.mxu0 0.0
        %1100 = vmatprep.subr.mxu0 0.0
        %1101 = vmatpush2.msra.mxu0 0.0
        %1102 = vmatprep.subr.mxu0 0.0
        %1103 = vmatpush2.msra.mxu0 0.0
        %1104 = vmatprep.subr.mxu0 0.0
        %1105 = vmatpush2.msra.mxu0 0.0
        %1106 = vmatprep.subr.mxu0 0.0
        %1107 = vmatpush2.msra.mxu0 0.0
        %1108 = vmatprep.subr.mxu0 0.0
        %1109 = vmatpush2.msra.mxu0 0.0
        %1110 = vmatprep.subr.mxu0 0.0
        %1111 = vmatpush2.msra.mxu0 0.0
        %1112 = vmatprep.subr.mxu0 0.0
        %1113 = vmatpush2.msra.mxu0 0.0
        %1114 = vmatprep.mubr.f32.mxu0 0.0
        %1115 = vmatmul.mubr.f32.gmra.mxu0 %v1048
        %v1116 = vpop.f32.mrf.mxu0
        %v1117 = vadd.f32 0.0, %v1116
        %v1118 = vpop.f32.mrf.mxu0
        %1119 = vdwg.mxu0
        %1120 = vst.msk [vmem:[#allocation3] sm:$0xff] %vm949, %v1117
        %1121 = vrot.lane.b32.xlu0 %v943, 120
        %v1122 = vpop.permute.xlu0 %1121
        %1123 = vrot.lane.b32.xlu0 %v946, 120
        %v1124 = vpop.permute.xlu0 %1123
        %v1125 = vsel %vm949, %v1122, 0
        %v1127 = vsel %vm949, %v1124, 0
        %1129 = vmatprep.subr.mxu0 0.0
        %1130 = vmatpush1.xpose.msra.mxu0 0.0
        %1131 = vmatprep.subr.mxu0 0.0
        %1132 = vmatpush1.xpose.msra.mxu0 0.0
        %1133 = vmatprep.subr.mxu0 0.0
        %1134 = vmatpush1.xpose.msra.mxu0 0.0
        %1135 = vmatprep.subr.mxu0 0.0
        %1136 = vmatpush1.xpose.msra.mxu0 0.0
        %1137 = vmatprep.subr.mxu0 0.0
        %1138 = vmatpush1.xpose.msra.mxu0 0.0
        %1139 = vmatprep.subr.mxu0 0.0
        %1140 = vmatpush1.xpose.msra.mxu0 0.0
        %1141 = vmatprep.subr.mxu0 0.0
        %1142 = vmatpush1.xpose.msra.mxu0 0.0
        %1143 = vmatprep.subr.mxu0 0.0
        %1144 = vmatpush1.xpose.msra.mxu0 0.0
        %1145 = vmatprep.subr.mxu0 0.0
        %1146 = vmatpush1.xpose.msra.mxu0 0.0
        %1147 = vmatprep.subr.mxu0 0.0
        %1148 = vmatpush1.xpose.msra.mxu0 0.0
        %1149 = vmatprep.subr.mxu0 0.0
        %1150 = vmatpush1.xpose.msra.mxu0 0.0
        %1151 = vmatprep.subr.mxu0 0.0
        %1152 = vmatpush1.xpose.msra.mxu0 0.0
        %1153 = vmatprep.subr.mxu0 0.0
        %1154 = vmatpush1.xpose.msra.mxu0 0.0
        %1155 = vmatprep.subr.mxu0 0.0
        %1156 = vmatpush1.xpose.msra.mxu0 0.0
        %1157 = vmatprep.subr.mxu0 0.0
        %1158 = vmatpush1.xpose.msra.mxu0 0.0
        %1159 = vmatprep.subr.mxu0 0.0
        %1160 = vmatpush1.xpose.msra.mxu0 %v1127
        %1161 = vmatprep.subr.mxu0 0.0
        %1162 = vmatpush2.xpose.msra.mxu0 0.0
        %1163 = vmatprep.subr.mxu0 0.0
        %1164 = vmatpush2.xpose.msra.mxu0 0.0
        %1165 = vmatprep.subr.mxu0 0.0
        %1166 = vmatpush2.xpose.msra.mxu0 0.0
        %1167 = vmatprep.subr.mxu0 0.0
        %1168 = vmatpush2.xpose.msra.mxu0 0.0
        %1169 = vmatprep.subr.mxu0 0.0
        %1170 = vmatpush2.xpose.msra.mxu0 0.0
        %1171 = vmatprep.subr.mxu0 0.0
        %1172 = vmatpush2.xpose.msra.mxu0 0.0
        %1173 = vmatprep.subr.mxu0 0.0
        %1174 = vmatpush2.xpose.msra.mxu0 0.0
        %1175 = vmatprep.subr.mxu0 0.0
        %1176 = vmatpush2.xpose.msra.mxu0 0.0
        %1177 = vmatprep.subr.mxu0 0.0
        %1178 = vmatpush2.xpose.msra.mxu0 0.0
        %1179 = vmatprep.subr.mxu0 0.0
        %1180 = vmatpush2.xpose.msra.mxu0 0.0
        %1181 = vmatprep.subr.mxu0 0.0
        %1182 = vmatpush2.xpose.msra.mxu0 0.0
        %1183 = vmatprep.subr.mxu0 0.0
        %1184 = vmatpush2.xpose.msra.mxu0 0.0
        %1185 = vmatprep.subr.mxu0 0.0
        %1186 = vmatpush2.xpose.msra.mxu0 0.0
        %1187 = vmatprep.subr.mxu0 0.0
        %1188 = vmatpush2.xpose.msra.mxu0 0.0
        %1189 = vmatprep.subr.mxu0 0.0
        %1190 = vmatpush2.xpose.msra.mxu0 0.0
        %1191 = vmatprep.subr.mxu0 0.0
        %1192 = vmatpush2.xpose.msra.mxu0 0.0
        %1193 = vmatprep.mubr.f32.mxu0 0.0
        %1194 = vmatmul.mubr.f32.gmra.mxu0 %v1125
        %v1195 = vpop.f32.mrf.mxu0
        %v1196 = vadd.f32 0.0, %v1195
        %v1197 = vpop.f32.mrf.mxu0
        %1198 = vdwg.mxu0
        %v1199 = vsel %vm1031, -1e+09, %v1196
        %v1200 = vsel %vm949, %v1199, -inf
        %1201 = vmax.xlane.f32.xlu0 %v1200
        %v1202 = vpop.xlane.xlu0 %1201
        %v1203 = vsub.f32 %v1199, %v1202
        %v1204 = vmul.f32 %v1203, 1.442695
        %v1205 = vpow.pop %v1204
        %v1206 = vsel %vm949, %v1205, 0.0
        %1207 = vadd.xlane.f32.xlu0 %v1206
        %v1208 = vpop.xlane.xlu0 %1207
        %v1209 = vrcp.pop %v1208
        %v1210 = vmul.f32 %v1205, %v1209
        %1211 = vrot.lane.b32.xlu0 %v946, 88
        %v1212 = vpop.permute.xlu0 %1211
        %v1215 = vsel %vm949, %v1210, 0
        %1217 = vmatprep.subr.mxu0 0.0
        %1218 = vmatpush1.msra.mxu0 0.0
        %1219 = vmatprep.subr.mxu0 0.0
        %1220 = vmatpush1.msra.mxu0 0.0
        %1221 = vmatprep.subr.mxu0 0.0
        %1222 = vmatpush1.msra.mxu0 0.0
        %1223 = vmatprep.subr.mxu0 0.0
        %1224 = vmatpush1.msra.mxu0 0.0
        %1225 = vmatprep.subr.mxu0 0.0
        %1226 = vmatpush1.msra.mxu0 0.0
        %1227 = vmatprep.subr.mxu0 0.0
        %1228 = vmatpush1.msra.mxu0 0.0
        %1229 = vmatprep.subr.mxu0 0.0
        %1230 = vmatpush1.msra.mxu0 0.0
        %1231 = vmatprep.subr.mxu0 0.0
        %1232 = vmatpush1.msra.mxu0 0.0
        %1233 = vmatprep.subr.mxu0 0.0
        %1234 = vmatpush1.msra.mxu0 0.0
        %1235 = vmatprep.subr.mxu0 0.0
        %1236 = vmatpush1.msra.mxu0 0.0
        %1237 = vmatprep.subr.mxu0 0.0
        %1238 = vmatpush1.msra.mxu0 0.0
        %1239 = vmatprep.subr.mxu0 0.0
        %1240 = vmatpush1.msra.mxu0 0.0
        %1241 = vmatprep.subr.mxu0 0.0
        %1242 = vmatpush1.msra.mxu0 0.0
        %1243 = vmatprep.subr.mxu0 0.0
        %1244 = vmatpush1.msra.mxu0 0.0
        %1245 = vmatprep.subr.mxu0 0.0
        %1246 = vmatpush1.msra.mxu0 0.0
        %1247 = vmatprep.subr.mxu0 0.0
        %1248 = vmatpush1.msra.mxu0 %v1212
        %1249 = vmatprep.subr.mxu0 0.0
        %1250 = vmatpush2.msra.mxu0 0.0
        %1251 = vmatprep.subr.mxu0 0.0
        %1252 = vmatpush2.msra.mxu0 0.0
        %1253 = vmatprep.subr.mxu0 0.0
        %1254 = vmatpush2.msra.mxu0 0.0
        %1255 = vmatprep.subr.mxu0 0.0
        %1256 = vmatpush2.msra.mxu0 0.0
        %1257 = vmatprep.subr.mxu0 0.0
        %1258 = vmatpush2.msra.mxu0 0.0
        %1259 = vmatprep.subr.mxu0 0.0
        %1260 = vmatpush2.msra.mxu0 0.0
        %1261 = vmatprep.subr.mxu0 0.0
        %1262 = vmatpush2.msra.mxu0 0.0
        %1263 = vmatprep.subr.mxu0 0.0
        %1264 = vmatpush2.msra.mxu0 0.0
        %1265 = vmatprep.subr.mxu0 0.0
        %1266 = vmatpush2.msra.mxu0 0.0
        %1267 = vmatprep.subr.mxu0 0.0
        %1268 = vmatpush2.msra.mxu0 0.0
        %1269 = vmatprep.subr.mxu0 0.0
        %1270 = vmatpush2.msra.mxu0 0.0
        %1271 = vmatprep.subr.mxu0 0.0
        %1272 = vmatpush2.msra.mxu0 0.0
        %1273 = vmatprep.subr.mxu0 0.0
        %1274 = vmatpush2.msra.mxu0 0.0
        %1275 = vmatprep.subr.mxu0 0.0
        %1276 = vmatpush2.msra.mxu0 0.0
        %1277 = vmatprep.subr.mxu0 0.0
        %1278 = vmatpush2.msra.mxu0 0.0
        %1279 = vmatprep.subr.mxu0 0.0
        %1280 = vmatpush2.msra.mxu0 0.0
        %1281 = vmatprep.mubr.f32.mxu0 0.0
        %1282 = vmatmul.mubr.f32.gmra.mxu0 %v1215
        %v1283 = vpop.f32.mrf.mxu0
        %v1284 = vadd.f32 0.0, %v1283
        %v1285 = vpop.f32.mrf.mxu0
        %1286 = vdwg.mxu0
        %1288 = vrot.lane.b32.xlu0 %v1284, 8
        %v1289 = vpop.permute.xlu0 %1288
        %vm1291 = vcmask 130112
        %1292 = vst.msk [vmem:[#allocation3] sm:$0xff] %vm1291, %v1289
        %1293 = vrot.lane.b32.xlu0 %v943, 112
        %v1294 = vpop.permute.xlu0 %1293
        %1295 = vrot.lane.b32.xlu0 %v946, 112
        %v1296 = vpop.permute.xlu0 %1295
        %v1297 = vsel %vm949, %v1294, 0
        %v1299 = vsel %vm949, %v1296, 0
        %1301 = vmatprep.subr.mxu0 0.0
        %1302 = vmatpush1.xpose.msra.mxu0 0.0
        %1303 = vmatprep.subr.mxu0 0.0
        %1304 = vmatpush1.xpose.msra.mxu0 0.0
        %1305 = vmatprep.subr.mxu0 0.0
        %1306 = vmatpush1.xpose.msra.mxu0 0.0
        %1307 = vmatprep.subr.mxu0 0.0
        %1308 = vmatpush1.xpose.msra.mxu0 0.0
        %1309 = vmatprep.subr.mxu0 0.0
        %1310 = vmatpush1.xpose.msra.mxu0 0.0
        %1311 = vmatprep.subr.mxu0 0.0
        %1312 = vmatpush1.xpose.msra.mxu0 0.0
        %1313 = vmatprep.subr.mxu0 0.0
        %1314 = vmatpush1.xpose.msra.mxu0 0.0
        %1315 = vmatprep.subr.mxu0 0.0
        %1316 = vmatpush1.xpose.msra.mxu0 0.0
        %1317 = vmatprep.subr.mxu0 0.0
        %1318 = vmatpush1.xpose.msra.mxu0 0.0
        %1319 = vmatprep.subr.mxu0 0.0
        %1320 = vmatpush1.xpose.msra.mxu0 0.0
        %1321 = vmatprep.subr.mxu0 0.0
        %1322 = vmatpush1.xpose.msra.mxu0 0.0
        %1323 = vmatprep.subr.mxu0 0.0
        %1324 = vmatpush1.xpose.msra.mxu0 0.0
        %1325 = vmatprep.subr.mxu0 0.0
        %1326 = vmatpush1.xpose.msra.mxu0 0.0
        %1327 = vmatprep.subr.mxu0 0.0
        %1328 = vmatpush1.xpose.msra.mxu0 0.0
        %1329 = vmatprep.subr.mxu0 0.0
        %1330 = vmatpush1.xpose.msra.mxu0 0.0
        %1331 = vmatprep.subr.mxu0 0.0
        %1332 = vmatpush1.xpose.msra.mxu0 %v1299
        %1333 = vmatprep.subr.mxu0 0.0
        %1334 = vmatpush2.xpose.msra.mxu0 0.0
        %1335 = vmatprep.subr.mxu0 0.0
        %1336 = vmatpush2.xpose.msra.mxu0 0.0
        %1337 = vmatprep.subr.mxu0 0.0
        %1338 = vmatpush2.xpose.msra.mxu0 0.0
        %1339 = vmatprep.subr.mxu0 0.0
        %1340 = vmatpush2.xpose.msra.mxu0 0.0
        %1341 = vmatprep.subr.mxu0 0.0
        %1342 = vmatpush2.xpose.msra.mxu0 0.0
        %1343 = vmatprep.subr.mxu0 0.0
        %1344 = vmatpush2.xpose.msra.mxu0 0.0
        %1345 = vmatprep.subr.mxu0 0.0
        %1346 = vmatpush2.xpose.msra.mxu0 0.0
        %1347 = vmatprep.subr.mxu0 0.0
        %1348 = vmatpush2.xpose.msra.mxu0 0.0
        %1349 = vmatprep.subr.mxu0 0.0
        %1350 = vmatpush2.xpose.msra.mxu0 0.0
        %1351 = vmatprep.subr.mxu0 0.0
        %1352 = vmatpush2.xpose.msra.mxu0 0.0
        %1353 = vmatprep.subr.mxu0 0.0
        %1354 = vmatpush2.xpose.msra.mxu0 0.0
        %1355 = vmatprep.subr.mxu0 0.0
        %1356 = vmatpush2.xpose.msra.mxu0 0.0
        %1357 = vmatprep.subr.mxu0 0.0
        %1358 = vmatpush2.xpose.msra.mxu0 0.0
        %1359 = vmatprep.subr.mxu0 0.0
        %1360 = vmatpush2.xpose.msra.mxu0 0.0
        %1361 = vmatprep.subr.mxu0 0.0
        %1362 = vmatpush2.xpose.msra.mxu0 0.0
        %1363 = vmatprep.subr.mxu0 0.0
        %1364 = vmatpush2.xpose.msra.mxu0 0.0
        %1365 = vmatprep.mubr.f32.mxu0 0.0
        %1366 = vmatmul.mubr.f32.gmra.mxu0 %v1297
        %v1367 = vpop.f32.mrf.mxu0
        %v1368 = vadd.f32 0.0, %v1367
        %v1369 = vpop.f32.mrf.mxu0
        %1370 = vdwg.mxu0
        %v1371 = vsel %vm1031, -1e+09, %v1368
        %v1372 = vsel %vm949, %v1371, -inf
        %1373 = vmax.xlane.f32.xlu0 %v1372
        %v1374 = vpop.xlane.xlu0 %1373
        %v1375 = vsub.f32 %v1371, %v1374
        %v1376 = vmul.f32 %v1375, 1.442695
        %v1377 = vpow.pop %v1376
        %v1378 = vsel %vm949, %v1377, 0.0
        %1379 = vadd.xlane.f32.xlu0 %v1378
        %v1380 = vpop.xlane.xlu0 %1379
        %v1381 = vrcp.pop %v1380
        %v1382 = vmul.f32 %v1377, %v1381
        %1383 = vrot.lane.b32.xlu0 %v946, 80
        %v1384 = vpop.permute.xlu0 %1383
        %v1387 = vsel %vm949, %v1382, 0
        %1389 = vmatprep.subr.mxu0 0.0
        %1390 = vmatpush1.msra.mxu0 0.0
        %1391 = vmatprep.subr.mxu0 0.0
        %1392 = vmatpush1.msra.mxu0 0.0
        %1393 = vmatprep.subr.mxu0 0.0
        %1394 = vmatpush1.msra.mxu0 0.0
        %1395 = vmatprep.subr.mxu0 0.0
        %1396 = vmatpush1.msra.mxu0 0.0
        %1397 = vmatprep.subr.mxu0 0.0
        %1398 = vmatpush1.msra.mxu0 0.0
        %1399 = vmatprep.subr.mxu0 0.0
        %1400 = vmatpush1.msra.mxu0 0.0
        %1401 = vmatprep.subr.mxu0 0.0
        %1402 = vmatpush1.msra.mxu0 0.0
        %1403 = vmatprep.subr.mxu0 0.0
        %1404 = vmatpush1.msra.mxu0 0.0
        %1405 = vmatprep.subr.mxu0 0.0
        %1406 = vmatpush1.msra.mxu0 0.0
        %1407 = vmatprep.subr.mxu0 0.0
        %1408 = vmatpush1.msra.mxu0 0.0
        %1409 = vmatprep.subr.mxu0 0.0
        %1410 = vmatpush1.msra.mxu0 0.0
        %1411 = vmatprep.subr.mxu0 0.0
        %1412 = vmatpush1.msra.mxu0 0.0
        %1413 = vmatprep.subr.mxu0 0.0
        %1414 = vmatpush1.msra.mxu0 0.0
        %1415 = vmatprep.subr.mxu0 0.0
        %1416 = vmatpush1.msra.mxu0 0.0
        %1417 = vmatprep.subr.mxu0 0.0
        %1418 = vmatpush1.msra.mxu0 0.0
        %1419 = vmatprep.subr.mxu0 0.0
        %1420 = vmatpush1.msra.mxu0 %v1384
        %1421 = vmatprep.subr.mxu0 0.0
        %1422 = vmatpush2.msra.mxu0 0.0
        %1423 = vmatprep.subr.mxu0 0.0
        %1424 = vmatpush2.msra.mxu0 0.0
        %1425 = vmatprep.subr.mxu0 0.0
        %1426 = vmatpush2.msra.mxu0 0.0
        %1427 = vmatprep.subr.mxu0 0.0
        %1428 = vmatpush2.msra.mxu0 0.0
        %1429 = vmatprep.subr.mxu0 0.0
        %1430 = vmatpush2.msra.mxu0 0.0
        %1431 = vmatprep.subr.mxu0 0.0
        %1432 = vmatpush2.msra.mxu0 0.0
        %1433 = vmatprep.subr.mxu0 0.0
        %1434 = vmatpush2.msra.mxu0 0.0
        %1435 = vmatprep.subr.mxu0 0.0
        %1436 = vmatpush2.msra.mxu0 0.0
        %1437 = vmatprep.subr.mxu0 0.0
        %1438 = vmatpush2.msra.mxu0 0.0
        %1439 = vmatprep.subr.mxu0 0.0
        %1440 = vmatpush2.msra.mxu0 0.0
        %1441 = vmatprep.subr.mxu0 0.0
        %1442 = vmatpush2.msra.mxu0 0.0
        %1443 = vmatprep.subr.mxu0 0.0
        %1444 = vmatpush2.msra.mxu0 0.0
        %1445 = vmatprep.subr.mxu0 0.0
        %1446 = vmatpush2.msra.mxu0 0.0
        %1447 = vmatprep.subr.mxu0 0.0
        %1448 = vmatpush2.msra.mxu0 0.0
        %1449 = vmatprep.subr.mxu0 0.0
        %1450 = vmatpush2.msra.mxu0 0.0
        %1451 = vmatprep.subr.mxu0 0.0
        %1452 = vmatpush2.msra.mxu0 0.0
        %1453 = vmatprep.mubr.f32.mxu0 0.0
        %1454 = vmatmul.mubr.f32.gmra.mxu0 %v1387
        %v1455 = vpop.f32.mrf.mxu0
        %v1456 = vadd.f32 0.0, %v1455
        %v1457 = vpop.f32.mrf.mxu0
        %1458 = vdwg.mxu0
        %1460 = vrot.lane.b32.xlu0 %v1456, 16
        %v1461 = vpop.permute.xlu0 %1460
        %vm1463 = vcmask 195712
        %1464 = vst.msk [vmem:[#allocation3] sm:$0xff] %vm1463, %v1461
        %1465 = vrot.lane.b32.xlu0 %v943, 104
        %v1466 = vpop.permute.xlu0 %1465
        %1467 = vrot.lane.b32.xlu0 %v946, 104
        %v1468 = vpop.permute.xlu0 %1467
        %v1469 = vsel %vm949, %v1466, 0
        %v1471 = vsel %vm949, %v1468, 0
        %1473 = vmatprep.subr.mxu0 0.0
        %1474 = vmatpush1.xpose.msra.mxu0 0.0
        %1475 = vmatprep.subr.mxu0 0.0
        %1476 = vmatpush1.xpose.msra.mxu0 0.0
        %1477 = vmatprep.subr.mxu0 0.0
        %1478 = vmatpush1.xpose.msra.mxu0 0.0
        %1479 = vmatprep.subr.mxu0 0.0
        %1480 = vmatpush1.xpose.msra.mxu0 0.0
        %1481 = vmatprep.subr.mxu0 0.0
        %1482 = vmatpush1.xpose.msra.mxu0 0.0
        %1483 = vmatprep.subr.mxu0 0.0
        %1484 = vmatpush1.xpose.msra.mxu0 0.0
        %1485 = vmatprep.subr.mxu0 0.0
        %1486 = vmatpush1.xpose.msra.mxu0 0.0
        %1487 = vmatprep.subr.mxu0 0.0
        %1488 = vmatpush1.xpose.msra.mxu0 0.0
        %1489 = vmatprep.subr.mxu0 0.0
        %1490 = vmatpush1.xpose.msra.mxu0 0.0
        %1491 = vmatprep.subr.mxu0 0.0
        %1492 = vmatpush1.xpose.msra.mxu0 0.0
        %1493 = vmatprep.subr.mxu0 0.0
        %1494 = vmatpush1.xpose.msra.mxu0 0.0
        %1495 = vmatprep.subr.mxu0 0.0
        %1496 = vmatpush1.xpose.msra.mxu0 0.0
        %1497 = vmatprep.subr.mxu0 0.0
        %1498 = vmatpush1.xpose.msra.mxu0 0.0
        %1499 = vmatprep.subr.mxu0 0.0
        %1500 = vmatpush1.xpose.msra.mxu0 0.0
        %1501 = vmatprep.subr.mxu0 0.0
        %1502 = vmatpush1.xpose.msra.mxu0 0.0
        %1503 = vmatprep.subr.mxu0 0.0
        %1504 = vmatpush1.xpose.msra.mxu0 %v1471
        %1505 = vmatprep.subr.mxu0 0.0
        %1506 = vmatpush2.xpose.msra.mxu0 0.0
        %1507 = vmatprep.subr.mxu0 0.0
        %1508 = vmatpush2.xpose.msra.mxu0 0.0
        %1509 = vmatprep.subr.mxu0 0.0
        %1510 = vmatpush2.xpose.msra.mxu0 0.0
        %1511 = vmatprep.subr.mxu0 0.0
        %1512 = vmatpush2.xpose.msra.mxu0 0.0
        %1513 = vmatprep.subr.mxu0 0.0
        %1514 = vmatpush2.xpose.msra.mxu0 0.0
        %1515 = vmatprep.subr.mxu0 0.0
        %1516 = vmatpush2.xpose.msra.mxu0 0.0
        %1517 = vmatprep.subr.mxu0 0.0
        %1518 = vmatpush2.xpose.msra.mxu0 0.0
        %1519 = vmatprep.subr.mxu0 0.0
        %1520 = vmatpush2.xpose.msra.mxu0 0.0
        %1521 = vmatprep.subr.mxu0 0.0
        %1522 = vmatpush2.xpose.msra.mxu0 0.0
        %1523 = vmatprep.subr.mxu0 0.0
        %1524 = vmatpush2.xpose.msra.mxu0 0.0
        %1525 = vmatprep.subr.mxu0 0.0
        %1526 = vmatpush2.xpose.msra.mxu0 0.0
        %1527 = vmatprep.subr.mxu0 0.0
        %1528 = vmatpush2.xpose.msra.mxu0 0.0
        %1529 = vmatprep.subr.mxu0 0.0
        %1530 = vmatpush2.xpose.msra.mxu0 0.0
        %1531 = vmatprep.subr.mxu0 0.0
        %1532 = vmatpush2.xpose.msra.mxu0 0.0
        %1533 = vmatprep.subr.mxu0 0.0
        %1534 = vmatpush2.xpose.msra.mxu0 0.0
        %1535 = vmatprep.subr.mxu0 0.0
        %1536 = vmatpush2.xpose.msra.mxu0 0.0
        %1537 = vmatprep.mubr.f32.mxu0 0.0
        %1538 = vmatmul.mubr.f32.gmra.mxu0 %v1469
        %v1539 = vpop.f32.mrf.mxu0
        %v1540 = vadd.f32 0.0, %v1539
        %v1541 = vpop.f32.mrf.mxu0
        %1542 = vdwg.mxu0
        %v1543 = vsel %vm1031, -1e+09, %v1540
        %v1544 = vsel %vm949, %v1543, -inf
        %1545 = vmax.xlane.f32.xlu0 %v1544
        %v1546 = vpop.xlane.xlu0 %1545
        %v1547 = vsub.f32 %v1543, %v1546
        %v1548 = vmul.f32 %v1547, 1.442695
        %v1549 = vpow.pop %v1548
        %v1550 = vsel %vm949, %v1549, 0.0
        %1551 = vadd.xlane.f32.xlu0 %v1550
        %v1552 = vpop.xlane.xlu0 %1551
        %v1553 = vrcp.pop %v1552
        %v1554 = vmul.f32 %v1549, %v1553
        %1555 = vrot.lane.b32.xlu0 %v946, 72
        %v1556 = vpop.permute.xlu0 %1555
        %v1559 = vsel %vm949, %v1554, 0
        %1561 = vmatprep.subr.mxu0 0.0
        %1562 = vmatpush1.msra.mxu0 0.0
        %1563 = vmatprep.subr.mxu0 0.0
        %1564 = vmatpush1.msra.mxu0 0.0
        %1565 = vmatprep.subr.mxu0 0.0
        %1566 = vmatpush1.msra.mxu0 0.0
        %1567 = vmatprep.subr.mxu0 0.0
        %1568 = vmatpush1.msra.mxu0 0.0
        %1569 = vmatprep.subr.mxu0 0.0
        %1570 = vmatpush1.msra.mxu0 0.0
        %1571 = vmatprep.subr.mxu0 0.0
        %1572 = vmatpush1.msra.mxu0 0.0
        %1573 = vmatprep.subr.mxu0 0.0
        %1574 = vmatpush1.msra.mxu0 0.0
        %1575 = vmatprep.subr.mxu0 0.0
        %1576 = vmatpush1.msra.mxu0 0.0
        %1577 = vmatprep.subr.mxu0 0.0
        %1578 = vmatpush1.msra.mxu0 0.0
        %1579 = vmatprep.subr.mxu0 0.0
        %1580 = vmatpush1.msra.mxu0 0.0
        %1581 = vmatprep.subr.mxu0 0.0
        %1582 = vmatpush1.msra.mxu0 0.0
        %1583 = vmatprep.subr.mxu0 0.0
        %1584 = vmatpush1.msra.mxu0 0.0
        %1585 = vmatprep.subr.mxu0 0.0
        %1586 = vmatpush1.msra.mxu0 0.0
        %1587 = vmatprep.subr.mxu0 0.0
        %1588 = vmatpush1.msra.mxu0 0.0
        %1589 = vmatprep.subr.mxu0 0.0
        %1590 = vmatpush1.msra.mxu0 0.0
        %1591 = vmatprep.subr.mxu0 0.0
        %1592 = vmatpush1.msra.mxu0 %v1556
        %1593 = vmatprep.subr.mxu0 0.0
        %1594 = vmatpush2.msra.mxu0 0.0
        %1595 = vmatprep.subr.mxu0 0.0
        %1596 = vmatpush2.msra.mxu0 0.0
        %1597 = vmatprep.subr.mxu0 0.0
        %1598 = vmatpush2.msra.mxu0 0.0
        %1599 = vmatprep.subr.mxu0 0.0
        %1600 = vmatpush2.msra.mxu0 0.0
        %1601 = vmatprep.subr.mxu0 0.0
        %1602 = vmatpush2.msra.mxu0 0.0
        %1603 = vmatprep.subr.mxu0 0.0
        %1604 = vmatpush2.msra.mxu0 0.0
        %1605 = vmatprep.subr.mxu0 0.0
        %1606 = vmatpush2.msra.mxu0 0.0
        %1607 = vmatprep.subr.mxu0 0.0
        %1608 = vmatpush2.msra.mxu0 0.0
        %1609 = vmatprep.subr.mxu0 0.0
        %1610 = vmatpush2.msra.mxu0 0.0
        %1611 = vmatprep.subr.mxu0 0.0
        %1612 = vmatpush2.msra.mxu0 0.0
        %1613 = vmatprep.subr.mxu0 0.0
        %1614 = vmatpush2.msra.mxu0 0.0
        %1615 = vmatprep.subr.mxu0 0.0
        %1616 = vmatpush2.msra.mxu0 0.0
        %1617 = vmatprep.subr.mxu0 0.0
        %1618 = vmatpush2.msra.mxu0 0.0
        %1619 = vmatprep.subr.mxu0 0.0
        %1620 = vmatpush2.msra.mxu0 0.0
        %1621 = vmatprep.subr.mxu0 0.0
        %1622 = vmatpush2.msra.mxu0 0.0
        %1623 = vmatprep.subr.mxu0 0.0
        %1624 = vmatpush2.msra.mxu0 0.0
        %1625 = vmatprep.mubr.f32.mxu0 0.0
        %1626 = vmatmul.mubr.f32.gmra.mxu0 %v1559
        %v1627 = vpop.f32.mrf.mxu0
        %v1628 = vadd.f32 0.0, %v1627
        %v1629 = vpop.f32.mrf.mxu0
        %1630 = vdwg.mxu0
        %1632 = vrot.lane.b32.xlu0 %v1628, 24
        %v1633 = vpop.permute.xlu0 %1632
        %vm1635 = vcmask 261312
        %1636 = vst.msk [vmem:[#allocation3] sm:$0xff] %vm1635, %v1633
        %v1637 = vld [vmem:[#allocation3] sm:$0xff]
        %v1638 = vld [vmem:[%s8] sm:$0xff]
        %v1639 = vld [vmem:[%s8 + $0x8] sm:$0xff]
        %v1640 = vld [vmem:[%s8 + $0x10] sm:$0xff]
        %v1641 = vld [vmem:[%s8 + $0x18] sm:$0xff]
        %v1642 = vld [vmem:[#allocation8] sm:$0x1]
        %v1644 = vlaneseq
        %v1645 = vshrl.u32 %v1644, 7
        %v1646 = vsub.s32 0, %v1645
        %v1647 = vrot.slane %v1642, %v1646
        %v1650 = vsel %vm825, %v1637, 0
        %1652 = vmatprep.subr.mxu0 0.0
        %1653 = vmatpush1.msra.mxu0 0.0
        %1654 = vmatprep.subr.mxu0 0.0
        %1655 = vmatpush1.msra.mxu0 0.0
        %1656 = vmatprep.subr.mxu0 0.0
        %1657 = vmatpush1.msra.mxu0 0.0
        %1658 = vmatprep.subr.mxu0 0.0
        %1659 = vmatpush1.msra.mxu0 0.0
        %1660 = vmatprep.subr.mxu0 0.0
        %1661 = vmatpush1.msra.mxu0 0.0
        %1662 = vmatprep.subr.mxu0 0.0
        %1663 = vmatpush1.msra.mxu0 0.0
        %1664 = vmatprep.subr.mxu0 0.0
        %1665 = vmatpush1.msra.mxu0 0.0
        %1666 = vmatprep.subr.mxu0 0.0
        %1667 = vmatpush1.msra.mxu0 0.0
        %1668 = vmatprep.subr.mxu0 0.0
        %1669 = vmatpush1.msra.mxu0 0.0
        %1670 = vmatprep.subr.mxu0 0.0
        %1671 = vmatpush1.msra.mxu0 0.0
        %1672 = vmatprep.subr.mxu0 0.0
        %1673 = vmatpush1.msra.mxu0 0.0
        %1674 = vmatprep.subr.mxu0 0.0
        %1675 = vmatpush1.msra.mxu0 0.0
        %1676 = vmatprep.subr.mxu0 0.0
        %1677 = vmatpush1.msra.mxu0 %v1641
        %1678 = vmatprep.subr.mxu0 0.0
        %1679 = vmatpush1.msra.mxu0 %v1640
        %1680 = vmatprep.subr.mxu0 0.0
        %1681 = vmatpush1.msra.mxu0 %v1639
        %1682 = vmatprep.subr.mxu0 0.0
        %1683 = vmatpush1.msra.mxu0 %v1638
        %1684 = vmatprep.subr.mxu0 0.0
        %1685 = vmatpush2.msra.mxu0 0.0
        %1686 = vmatprep.subr.mxu0 0.0
        %1687 = vmatpush2.msra.mxu0 0.0
        %1688 = vmatprep.subr.mxu0 0.0
        %1689 = vmatpush2.msra.mxu0 0.0
        %1690 = vmatprep.subr.mxu0 0.0
        %1691 = vmatpush2.msra.mxu0 0.0
        %1692 = vmatprep.subr.mxu0 0.0
        %1693 = vmatpush2.msra.mxu0 0.0
        %1694 = vmatprep.subr.mxu0 0.0
        %1695 = vmatpush2.msra.mxu0 0.0
        %1696 = vmatprep.subr.mxu0 0.0
        %1697 = vmatpush2.msra.mxu0 0.0
        %1698 = vmatprep.subr.mxu0 0.0
        %1699 = vmatpush2.msra.mxu0 0.0
        %1700 = vmatprep.subr.mxu0 0.0
        %1701 = vmatpush2.msra.mxu0 0.0
        %1702 = vmatprep.subr.mxu0 0.0
        %1703 = vmatpush2.msra.mxu0 0.0
        %1704 = vmatprep.subr.mxu0 0.0
        %1705 = vmatpush2.msra.mxu0 0.0
        %1706 = vmatprep.subr.mxu0 0.0
        %1707 = vmatpush2.msra.mxu0 0.0
        %1708 = vmatprep.subr.mxu0 0.0
        %1709 = vmatpush2.msra.mxu0 0.0
        %1710 = vmatprep.subr.mxu0 0.0
        %1711 = vmatpush2.msra.mxu0 0.0
        %1712 = vmatprep.subr.mxu0 0.0
        %1713 = vmatpush2.msra.mxu0 0.0
        %1714 = vmatprep.subr.mxu0 0.0
        %1715 = vmatpush2.msra.mxu0 0.0
        %1716 = vmatprep.mubr.f32.mxu0 0.0
        %1717 = vmatmul.mubr.f32.gmra.mxu0 %v1650
        %v1718 = vpop.f32.mrf.mxu0
        %v1719 = vadd.f32 %v1647, %v1718
        %v1720 = vpop.f32.mrf.mxu0
        %1721 = vdwg.mxu0
        %v1722 = vadd.f32 %v822, %v1719
        %v1723 = vld [vmem:[%s10] sm:$0x1]
        %v1724 = vld [vmem:[%s11] sm:$0x1]
        %v1725 = vsel %vm825, %v1722, 0.0
        %1726 = vadd.xlane.f32.xlu0 %v1725
        %v1727 = vpop.xlane.xlu0 %1726
        %v1728 = vmul.f32 %v1727, %v829
        %v1729 = vsub.f32 %v1722, %v1728
        %v1730 = vmul.f32 %v1729, %v1729
        %v1731 = vsel %vm825, %v1730, 0.0
        %1732 = vadd.xlane.f32.xlu0 %v1731
        %v1733 = vpop.xlane.xlu0 %1732
        %v1734 = vmul.f32 %v1733, %v836
        %v1736 = vlaneseq
        %v1737 = vshrl.u32 %v1736, 7
        %v1738 = vsub.s32 0, %v1737
        %v1739 = vrot.slane %v1723, %v1738
        %v1741 = vmul.f32 %v1739, %v1729
        %v1742 = vrsqrt.pop %v1734
        %v1743 = vmul.f32 %v1734, %v1742
        %vm1744 = vcmp.eq.f32.partialorder %v1734, inf
        %v1745 = vsel %vm1744, %v1734, %v1743
        %vm1746 = vcmp.eq.f32.partialorder %v1734, 0.0
        %v1747 = vand.u32 %v1734, 2147483648
        %v1748 = vsel %vm1746, %v1747, %v1745
        %v1749 = vadd.f32 %v1748, 1e-06
        %v1750 = vrcp.pop %v1749
        %v1751 = vmul.f32 %v1741, %v1750
        %v1753 = vlaneseq
        %v1754 = vshrl.u32 %v1753, 7
        %v1755 = vsub.s32 0, %v1754
        %v1756 = vrot.slane %v1724, %v1755
        %v1758 = vadd.f32 %v1751, %v1756
        %v1759 = vld [vmem:[#allocation9] sm:$0xff]
        %v1760 = vld [vmem:[#allocation9 + $0x8] sm:$0xff]
        %v1761 = vld [vmem:[#allocation9 + $0x10] sm:$0xff]
        %v1762 = vld [vmem:[#allocation9 + $0x18] sm:$0xff]
        %v1763 = vld [vmem:[#allocation11] sm:$0x1]
        %v1765 = vlaneseq
        %v1766 = vshrl.u32 %v1765, 7
        %v1767 = vsub.s32 0, %v1766
        %v1768 = vrot.slane %v1763, %v1767
        %v1771 = vsel %vm825, %v1758, 0
        %1773 = vmatprep.subr.mxu0 0.0
        %1774 = vmatpush1.msra.mxu0 0.0
        %1775 = vmatprep.subr.mxu0 0.0
        %1776 = vmatpush1.msra.mxu0 0.0
        %1777 = vmatprep.subr.mxu0 0.0
        %1778 = vmatpush1.msra.mxu0 0.0
        %1779 = vmatprep.subr.mxu0 0.0
        %1780 = vmatpush1.msra.mxu0 0.0
        %1781 = vmatprep.subr.mxu0 0.0
        %1782 = vmatpush1.msra.mxu0 0.0
        %1783 = vmatprep.subr.mxu0 0.0
        %1784 = vmatpush1.msra.mxu0 0.0
        %1785 = vmatprep.subr.mxu0 0.0
        %1786 = vmatpush1.msra.mxu0 0.0
        %1787 = vmatprep.subr.mxu0 0.0
        %1788 = vmatpush1.msra.mxu0 0.0
        %1789 = vmatprep.subr.mxu0 0.0
        %1790 = vmatpush1.msra.mxu0 0.0
        %1791 = vmatprep.subr.mxu0 0.0
        %1792 = vmatpush1.msra.mxu0 0.0
        %1793 = vmatprep.subr.mxu0 0.0
        %1794 = vmatpush1.msra.mxu0 0.0
        %1795 = vmatprep.subr.mxu0 0.0
        %1796 = vmatpush1.msra.mxu0 0.0
        %1797 = vmatprep.subr.mxu0 0.0
        %1798 = vmatpush1.msra.mxu0 %v1762
        %1799 = vmatprep.subr.mxu0 0.0
        %1800 = vmatpush1.msra.mxu0 %v1761
        %1801 = vmatprep.subr.mxu0 0.0
        %1802 = vmatpush1.msra.mxu0 %v1760
        %1803 = vmatprep.subr.mxu0 0.0
        %1804 = vmatpush1.msra.mxu0 %v1759
        %1805 = vmatprep.subr.mxu0 0.0
        %1806 = vmatpush2.msra.mxu0 0.0
        %1807 = vmatprep.subr.mxu0 0.0
        %1808 = vmatpush2.msra.mxu0 0.0
        %1809 = vmatprep.subr.mxu0 0.0
        %1810 = vmatpush2.msra.mxu0 0.0
        %1811 = vmatprep.subr.mxu0 0.0
        %1812 = vmatpush2.msra.mxu0 0.0
        %1813 = vmatprep.subr.mxu0 0.0
        %1814 = vmatpush2.msra.mxu0 0.0
        %1815 = vmatprep.subr.mxu0 0.0
        %1816 = vmatpush2.msra.mxu0 0.0
        %1817 = vmatprep.subr.mxu0 0.0
        %1818 = vmatpush2.msra.mxu0 0.0
        %1819 = vmatprep.subr.mxu0 0.0
        %1820 = vmatpush2.msra.mxu0 0.0
        %1821 = vmatprep.subr.mxu0 0.0
        %1822 = vmatpush2.msra.mxu0 0.0
        %1823 = vmatprep.subr.mxu0 0.0
        %1824 = vmatpush2.msra.mxu0 0.0
        %1825 = vmatprep.subr.mxu0 0.0
        %1826 = vmatpush2.msra.mxu0 0.0
        %1827 = vmatprep.subr.mxu0 0.0
        %1828 = vmatpush2.msra.mxu0 0.0
        %1829 = vmatprep.subr.mxu0 0.0
        %1830 = vmatpush2.msra.mxu0 0.0
        %1831 = vmatprep.subr.mxu0 0.0
        %1832 = vmatpush2.msra.mxu0 0.0
        %1833 = vmatprep.subr.mxu0 0.0
        %1834 = vmatpush2.msra.mxu0 0.0
        %1835 = vmatprep.subr.mxu0 0.0
        %1836 = vmatpush2.msra.mxu0 0.0
        %1837 = vmatprep.mubr.f32.mxu0 0.0
        %1838 = vmatmul.mubr.f32.gmra.mxu0 %v1771
        %v1839 = vpop.f32.mrf.mxu0
        %v1840 = vadd.f32 %v1768, %v1839
        %v1841 = vpop.f32.mrf.mxu0
        %1842 = vdwg.mxu0
        %v1843 = vmax.f32 %v1840, 0.0
        %v1844 = vld [vmem:[%s14] sm:$0xff]
        %v1845 = vld [vmem:[%s14 + $0x8] sm:$0xff]
        %v1846 = vld [vmem:[%s14 + $0x10] sm:$0xff]
        %v1847 = vld [vmem:[%s14 + $0x18] sm:$0xff]
        %v1848 = vld [vmem:[%s14 + $0x20] sm:$0xff]
        %v1849 = vld [vmem:[%s14 + $0x28] sm:$0xff]
        %v1850 = vld [vmem:[%s14 + $0x30] sm:$0xff]
        %v1851 = vld [vmem:[%s14 + $0x38] sm:$0xff]
        %v1852 = vld [vmem:[#allocation12] sm:$0x1]
        %v1854 = vlaneseq
        %v1855 = vshrl.u32 %v1854, 7
        %v1856 = vsub.s32 0, %v1855
        %v1857 = vrot.slane %v1852, %v1856
        %vm1859 = vcmask 523264
        %v1861 = vsel %vm1859, %v1843, 0
        %1863 = vmatprep.subr.mxu0 0.0
        %1864 = vmatpush1.msra.mxu0 0.0
        %1865 = vmatprep.subr.mxu0 0.0
        %1866 = vmatpush1.msra.mxu0 0.0
        %1867 = vmatprep.subr.mxu0 0.0
        %1868 = vmatpush1.msra.mxu0 0.0
        %1869 = vmatprep.subr.mxu0 0.0
        %1870 = vmatpush1.msra.mxu0 0.0
        %1871 = vmatprep.subr.mxu0 0.0
        %1872 = vmatpush1.msra.mxu0 0.0
        %1873 = vmatprep.subr.mxu0 0.0
        %1874 = vmatpush1.msra.mxu0 0.0
        %1875 = vmatprep.subr.mxu0 0.0
        %1876 = vmatpush1.msra.mxu0 0.0
        %1877 = vmatprep.subr.mxu0 0.0
        %1878 = vmatpush1.msra.mxu0 0.0
        %1879 = vmatprep.subr.mxu0 0.0
        %1880 = vmatpush1.msra.mxu0 %v1851
        %1881 = vmatprep.subr.mxu0 0.0
        %1882 = vmatpush1.msra.mxu0 %v1850
        %1883 = vmatprep.subr.mxu0 0.0
        %1884 = vmatpush1.msra.mxu0 %v1849
        %1885 = vmatprep.subr.mxu0 0.0
        %1886 = vmatpush1.msra.mxu0 %v1848
        %1887 = vmatprep.subr.mxu0 0.0
        %1888 = vmatpush1.msra.mxu0 %v1847
        %1889 = vmatprep.subr.mxu0 0.0
        %1890 = vmatpush1.msra.mxu0 %v1846
        %1891 = vmatprep.subr.mxu0 0.0
        %1892 = vmatpush1.msra.mxu0 %v1845
        %1893 = vmatprep.subr.mxu0 0.0
        %1894 = vmatpush1.msra.mxu0 %v1844
        %1895 = vmatprep.subr.mxu0 0.0
        %1896 = vmatpush2.msra.mxu0 0.0
        %1897 = vmatprep.subr.mxu0 0.0
        %1898 = vmatpush2.msra.mxu0 0.0
        %1899 = vmatprep.subr.mxu0 0.0
        %1900 = vmatpush2.msra.mxu0 0.0
        %1901 = vmatprep.subr.mxu0 0.0
        %1902 = vmatpush2.msra.mxu0 0.0
        %1903 = vmatprep.subr.mxu0 0.0
        %1904 = vmatpush2.msra.mxu0 0.0
        %1905 = vmatprep.subr.mxu0 0.0
        %1906 = vmatpush2.msra.mxu0 0.0
        %1907 = vmatprep.subr.mxu0 0.0
        %1908 = vmatpush2.msra.mxu0 0.0
        %1909 = vmatprep.subr.mxu0 0.0
        %1910 = vmatpush2.msra.mxu0 0.0
        %1911 = vmatprep.subr.mxu0 0.0
        %1912 = vmatpush2.msra.mxu0 0.0
        %1913 = vmatprep.subr.mxu0 0.0
        %1914 = vmatpush2.msra.mxu0 0.0
        %1915 = vmatprep.subr.mxu0 0.0
        %1916 = vmatpush2.msra.mxu0 0.0
        %1917 = vmatprep.subr.mxu0 0.0
        %1918 = vmatpush2.msra.mxu0 0.0
        %1919 = vmatprep.subr.mxu0 0.0
        %1920 = vmatpush2.msra.mxu0 0.0
        %1921 = vmatprep.subr.mxu0 0.0
        %1922 = vmatpush2.msra.mxu0 0.0
        %1923 = vmatprep.subr.mxu0 0.0
        %1924 = vmatpush2.msra.mxu0 0.0
        %1925 = vmatprep.subr.mxu0 0.0
        %1926 = vmatpush2.msra.mxu0 0.0
        %1927 = vmatprep.mubr.f32.mxu0 0.0
        %1928 = vmatmul.mubr.f32.gmra.mxu0 %v1861
        %v1929 = vpop.f32.mrf.mxu0
        %v1930 = vadd.f32 %v1857, %v1929
        %v1931 = vpop.f32.mrf.mxu0
        %1932 = vdwg.mxu0
        %v1933 = vadd.f32 %v1722, %v1930
        %1934 = vst.msk [vmem:[%s689] sm:$0xff] %vm825, %v1933
        %p1935 = scmp.lt.s32.totalorder %s39, 1
        %s1936 = scalar_select %p1935, %s39, 1
        %p1937 = scmp.lt.s32.totalorder %s40, 0
        %s1938 = scalar_select %p1937, %s40, 0
        %s1939 = sadd.s32 %s1938, %s1936
        %s1940 = smul.addr %s1939, 8
        %s1941 = scalar_lea.vmem %s18, %s1940
        // Predicated region
        $region121: #{encoder_forward.2} parent=91 // pred_check
          %p1942 = pneg %p455
        $region122: #{encoder_forward.2} parent=91 // pred_check_branch
          %1944 = sbr.rel (%p1942) target = $region124
        $region123: #{encoder_forward.2} parent=91 // pred_region
          _
        $region124: #{encoder_forward.2} parent=91 // pred_fallthru
          _
      $region92: #{encoder_forward.2} parent=5 // pred_fallthru
        _
      %p1945 = scmp.le.s32.totalorder 2, %s30
      // Predicated region
      $region125: #{encoder_forward.2} parent=5 // pred_check
        %p1946 = pneg %p1945
      $region126: #{encoder_forward.2} parent=5 // pred_check_branch
        %1948 = sbr.rel (%p1946) target = $region128
      $region127: #{encoder_forward.2} parent=5 // pred_region
        %s1949 = ssub.s32 %s30, 2
        // Predicated region
        $region129: #{encoder_forward.2} parent=127 // pred_check
          %p1950 = pneg %p461
        $region130: #{encoder_forward.2} parent=127 // pred_check_branch
          %1952 = sbr.rel (%p1950) target = $region132
        $region131: #{encoder_forward.2} parent=127 // pred_region
          %p1953 = scmp.lt.s32.totalorder %s41, 1
          %s1954 = scalar_select %p1953, %s41, 1
          %p1955 = scmp.lt.s32.totalorder %s42, 0
          %s1956 = scalar_select %p1955, %s42, 0
          %s1957 = sadd.s32 %s1956, %s1954
          %s1958 = smul.addr %s1957, 8
          %s1959 = scalar_lea.vmem %s18, %s1958
        $region132: #{encoder_forward.2} parent=127 // pred_fallthru
          _
      $region128: #{encoder_forward.2} parent=5 // pred_fallthru
        _
    $region6: #{encoder_forward.2} parent=1 // loop_footer
      %s34 = sadd.s32 1, %s30
    $region7: #{encoder_forward.2} parent=1 // loop_footer_branch
      %29 = sbr.rel target = $region3
    $region8: #{encoder_forward.2} parent=1 // loop_exit
      _
    %1960 = vsyncpa [#allocation5], 1
    %s1961 = scalar_lea.sflag [#allocation5], 1
    %1962 = vsyncpa %s1961, 1
    %1963 = vsyncpa [#allocation7], 1
    %1964 = vsyncpa [#allocation10], 1
    %1965 = vsyncpa [#allocation13], 1

// kernel: encoder_forward.2
$region0: #{encoder_forward.2}
  #allocation0 [shape = 'u32[]', space=smem, size = 0x4, offset = 0x4, fixed_abs, tag = 'smem constant byte address 0x4 - core index']
  #allocation1 [shape = 'u32[144,128]{1,0:T(1,128)}', space=vmem, size = 0x12000, scoped, tag = 'internal scratch']
  #allocation2 [shape = 'f32[8,64]{1,0:T(8,128)}', space=vmem, size = 0x1000, scoped, tag = 'scratch operand']
  #allocation3 [shape = 'f32[8,32]{1,0:T(8,128)}', space=vmem, size = 0x1000, scoped, tag = 'scratch operand']
  %s0 = inlined_call_operand.hbm [shape: f32[2,8,32], index: 0, kind: input, shape index: {}]
  %s1 = inlined_call_operand.vmem [shape: f32[2,1,8], index: 1, kind: input, shape index: {}]
  %s2 = inlined_call_operand.vmem [shape: f32[1,32], index: 2, kind: input, shape index: {}]
  %s3 = inlined_call_operand.vmem [shape: f32[1,32], index: 3, kind: input, shape index: {}]
  %s4 = inlined_call_operand.vmem [shape: f32[32,32], index: 4, kind: input, shape index: {}]
  %s5 = inlined_call_operand.vmem [shape: f32[1,32], index: 5, kind: input, shape index: {}]
  %s6 = inlined_call_operand.vmem [shape: f32[32,64], index: 6, kind: input, shape index: {}]
  %s7 = inlined_call_operand.hbm [shape: f32[1,64], index: 7, kind: input, shape index: {}]
  %s8 = inlined_call_operand.vmem [shape: f32[32,32], index: 8, kind: input, shape index: {}]
  %s9 = inlined_call_operand.hbm [shape: f32[1,32], index: 9, kind: input, shape index: {}]
  %s10 = inlined_call_operand.vmem [shape: f32[1,32], index: 10, kind: input, shape index: {}]
  %s11 = inlined_call_operand.vmem [shape: f32[1,32], index: 11, kind: input, shape index: {}]
  %s12 = inlined_call_operand.hbm [shape: f32[32,64], index: 12, kind: input, shape index: {}]
  %s13 = inlined_call_operand.hbm [shape: f32[1,64], index: 13, kind: input, shape index: {}]
  %s14 = inlined_call_operand.vmem [shape: f32[64,32], index: 14, kind: input, shape index: {}]
  %s15 = inlined_call_operand.hbm [shape: f32[1,32], index: 15, kind: input, shape index: {}]
  %s16 = inlined_call_operand.vmem [shape: f32[1,32], index: 16, kind: input, shape index: {}]
  %s17 = inlined_call_operand.vmem [shape: f32[1,32], index: 17, kind: input, shape index: {}]
  %s18 = inlined_call_operand.vmem [shape: f32[2,8,32], index: 18, kind: output, shape index: {}]
  %s19 = sld [smem:[#allocation0]]
  $region133: #{encoder_forward.2} parent=0
    _
  %s21 = ssub.s32 1, %s19
  %s22 = scalar_select 0, %s21, %s19
  $region1: #{encoder_forward.2} parent=0
    #allocation4 [shape = 'u8[8192]{0}', space=vmem, size = 0x2000, scoped, tag = 'input window, operand 0']
    #allocation5 [shape = 's32[2]{0}', space=sflag, size = 0x8, scoped, tag = 'scoped memory for encoder_forward.2']
    #allocation6 [shape = 'u8[512]{0}', space=vmem, size = 0x400, scoped, tag = 'input window, operand 7, single buffered']
    #allocation7 [shape = 's32[1]{0}', space=sflag, size = 0x4, scoped, tag = 'scoped memory for encoder_forward.2']
    #allocation8 [shape = 'u8[512]{0}', space=vmem, size = 0x400, scoped, tag = 'input window, operand 9, single buffered']
    #allocation9 [shape = 'u8[16384]{0}', space=vmem, size = 0x4000, scoped, tag = 'input window, operand 12, single buffered']
    #allocation10 [shape = 's32[1]{0}', space=sflag, size = 0x4, scoped, tag = 'scoped memory for encoder_forward.2']
    #allocation11 [shape = 'u8[512]{0}', space=vmem, size = 0x400, scoped, tag = 'input window, operand 13, single buffered']
    #allocation12 [shape = 'u8[512]{0}', space=vmem, size = 0x400, scoped, tag = 'input window, operand 15, single buffered']
    #allocation13 [shape = 's32[1]{0}', space=sflag, size = 0x4, scoped, tag = 'scoped memory for encoder_forward.2']
    %23 = vsyncpa [#allocation5], 0
    %s24 = scalar_lea.sflag [#allocation5], 1
    %25 = vsyncpa %s24, 0
    %26 = vsyncpa [#allocation7], 0
    %27 = vsyncpa [#allocation10], 0
    %28 = vsyncpa [#allocation13], 0
    loop: start=0, step=1, limit=4
    $region2: #{encoder_forward.2} parent=1 // loop_pre_header
      _
    $region3: #{encoder_forward.2} parent=1 // loop_header
      %s30 = sphi 0, %s34
      %p31 = scmp.ge.s32.totalorder %s30, 4
      %s37 = sphi 0, %s49
      %s38 = sphi 0, %s45
      %s39 = sphi 0, %s37
      %s40 = sphi 0, %s38
      %s41 = sphi 0, %s39
      %s42 = sphi 0, %s40
      %s52 = sphi 0, %s54
      %s55 = sphi 0, %s52
      %s56 = sphi 0, %s55
      %s72 = sphi 0, %s56
      %s78 = sphi 0, %s80
      %s81 = sphi 0, %s78
      %s82 = sphi 0, %s81
      %s98 = sphi 0, %s82
      %s102 = sphi 0, %s102
      %s104 = sphi 0, %s102
      %s105 = sphi 0, %s104
      %s119 = sphi 0, %s105
      %s123 = sphi 0, %s123
      %s125 = sphi 0, %s123
      %s126 = sphi 0, %s125
      %s140 = sphi 0, %s126
      %s144 = sphi 0, %s144
      %s146 = sphi 0, %s144
      %s147 = sphi 0, %s146
      %s161 = sphi 0, %s147
      %s165 = sphi 0, %s165
      %s167 = sphi 0, %s165
      %s168 = sphi 0, %s167
      %s182 = sphi 0, %s168
      %s186 = sphi 0, %s186
      %s188 = sphi 0, %s186
      %s189 = sphi 0, %s188
      %s203 = sphi 0, %s189
      %s207 = sphi 0, %s207
      %s209 = sphi 0, %s207
      %s210 = sphi 0, %s209
      %s224 = sphi 0, %s210
      %s228 = sphi 0, %s228
      %s230 = sphi 0, %s228
      %s231 = sphi 0, %s230
      %s245 = sphi 0, %s231
      %s249 = sphi 0, %s249
      %s251 = sphi 0, %s249
      %s252 = sphi 0, %s251
      %s266 = sphi 0, %s252
      %s270 = sphi 0, %s270
      %s272 = sphi 0, %s270
      %s273 = sphi 0, %s272
      %s287 = sphi 0, %s273
      %s291 = sphi 0, %s291
      %s293 = sphi 0, %s291
      %s294 = sphi 0, %s293
      %s308 = sphi 0, %s294
      %s312 = sphi 0, %s312
      %s314 = sphi 0, %s312
      %s315 = sphi 0, %s314
      %s329 = sphi 0, %s315
      %s333 = sphi 0, %s333
      %s335 = sphi 0, %s333
      %s336 = sphi 0, %s335
      %s350 = sphi 0, %s336
      %s354 = sphi 0, %s354
      %s356 = sphi 0, %s354
      %s357 = sphi 0, %s356
      %s371 = sphi 0, %s357
      %s375 = sphi 0, %s375
      %s377 = sphi 0, %s375
      %s378 = sphi 0, %s377
      %s392 = sphi 0, %s378
      %s396 = sphi 0, %s396
      %s398 = sphi 0, %s396
      %s399 = sphi 0, %s398
      %s413 = sphi 0, %s399
      %s417 = sphi 0, %s417
      %s419 = sphi 0, %s417
      %s420 = sphi 0, %s419
      %s434 = sphi 0, %s420
      %s442 = sphi 0, %s444
      %s445 = sphi 0, %s442
      %s446 = sphi 0, %s445
      %s462 = sphi 0, %s446
    $region4: #{encoder_forward.2} parent=1 // loop_header_branch
      %33 = sbr.rel (%p31) target = $region8
    $region5: #{encoder_forward.2} parent=1 // loop_body
      %s35 = ssub.s32 %s30, 1
      %s36 = ssub.s32 %s30, 2
      %s43 = sadd.s32 1, %s38
      %p44 = scmp.ge.s32.totalorder %s43, 1
      %s45 = scalar_select %p44, 0, %s43
      %s46 = sadd.s32 1, %s37
      %s47 = scalar_select %p44, %s46, %s37
      %p48 = scmp.ge.s32.totalorder %s47, 2
      %s49 = scalar_select %p48, 0, %s47
      %s50 = ssub.s32 %s37, %s49
      %p51 = scmp.eq.s32.totalorder %s50, 0
      %s53 = sadd.s32 %s52, 1
      %s54 = scalar_select %p51, %s52, %s53
      %p57 = pneg %p51
      %p58 = scmp.eq.s32.totalorder %s30, 1
      %p59 = por %p57, %p58
      %p60 = scmp.ne.s32.totalorder %s52, %s55
      %p61 = scmp.eq.s32.totalorder %s30, 0
      %p62 = por %p60, %p61
      %p63 = scmp.ne.s32.totalorder %s52, %s55
      %p64 = scmp.eq.s32.totalorder %s35, 1
      %p65 = por %p63, %p64
      %p66 = scmp.ne.s32.totalorder %s55, %s56
      %p67 = scmp.eq.s32.totalorder %s35, 0
      %p68 = por %p66, %p67
      %p69 = scmp.ne.s32.totalorder %s55, %s56
      %p70 = scmp.eq.s32.totalorder %s36, 1
      %p71 = por %p69, %p70
      %p73 = scmp.ne.s32.totalorder %s56, %s72
      %p74 = scmp.eq.s32.totalorder %s36, 0
      %p75 = por %p73, %p74
      %s76 = ssub.s32 %s37, %s49
      %p77 = scmp.eq.s32.totalorder %s76, 0
      %s79 = sadd.s32 %s78, 1
      %s80 = scalar_select %p77, %s78, %s79
      %p83 = pneg %p77
      %p84 = scmp.eq.s32.totalorder %s30, 1
      %p85 = por %p83, %p84
      %p86 = scmp.ne.s32.totalorder %s78, %s81
      %p87 = scmp.eq.s32.totalorder %s30, 0
      %p88 = por %p86, %p87
      %p89 = scmp.ne.s32.totalorder %s78, %s81
      %p90 = scmp.eq.s32.totalorder %s35, 1
      %p91 = por %p89, %p90
      %p92 = scmp.ne.s32.totalorder %s81, %s82
      %p93 = scmp.eq.s32.totalorder %s35, 0
      %p94 = por %p92, %p93
      %p95 = scmp.ne.s32.totalorder %s81, %s82
      %p96 = scmp.eq.s32.totalorder %s36, 1
      %p97 = por %p95, %p96
      %p99 = scmp.ne.s32.totalorder %s82, %s98
      %p100 = scmp.eq.s32.totalorder %s36, 0
      %p101 = por %p99, %p100
      %s103 = sadd.s32 %s102, 1
      %p106 = scmp.eq.s32.totalorder %s30, 1
      %p107 = scmp.ne.s32.totalorder %s102, %s104
      %p108 = scmp.eq.s32.totalorder %s30, 0
      %p109 = por %p107, %p108
      %p110 = scmp.ne.s32.totalorder %s102, %s104
      %p111 = scmp.eq.s32.totalorder %s35, 1
      %p112 = por %p110, %p111
      %p113 = scmp.ne.s32.totalorder %s104, %s105
      %p114 = scmp.eq.s32.totalorder %s35, 0
      %p115 = por %p113, %p114
      %p116 = scmp.ne.s32.totalorder %s104, %s105
      %p117 = scmp.eq.s32.totalorder %s36, 1
      %p118 = por %p116, %p117
      %p120 = scmp.ne.s32.totalorder %s105, %s119
      %p121 = scmp.eq.s32.totalorder %s36, 0
      %p122 = por %p120, %p121
      %s124 = sadd.s32 %s123, 1
      %p127 = scmp.eq.s32.totalorder %s30, 1
      %p128 = scmp.ne.s32.totalorder %s123, %s125
      %p129 = scmp.eq.s32.totalorder %s30, 0
      %p130 = por %p128, %p129
      %p131 = scmp.ne.s32.totalorder %s123, %s125
      %p132 = scmp.eq.s32.totalorder %s35, 1
      %p133 = por %p131, %p132
      %p134 = scmp.ne.s32.totalorder %s125, %s126
      %p135 = scmp.eq.s32.totalorder %s35, 0
      %p136 = por %p134, %p135
      %p137 = scmp.ne.s32.totalorder %s125, %s126
      %p138 = scmp.eq.s32.totalorder %s36, 1
      %p139 = por %p137, %p138
      %p141 = scmp.ne.s32.totalorder %s126, %s140
      %p142 = scmp.eq.s32.totalorder %s36, 0
      %p143 = por %p141, %p142
      %s145 = sadd.s32 %s144, 1
      %p148 = scmp.eq.s32.totalorder %s30, 1
      %p149 = scmp.ne.s32.totalorder %s144, %s146
      %p150 = scmp.eq.s32.totalorder %s30, 0
      %p151 = por %p149, %p150
      %p152 = scmp.ne.s32.totalorder %s144, %s146
      %p153 = scmp.eq.s32.totalorder %s35, 1
      %p154 = por %p152, %p153
      %p155 = scmp.ne.s32.totalorder %s146, %s147
      %p156 = scmp.eq.s32.totalorder %s35, 0
      %p157 = por %p155, %p156
      %p158 = scmp.ne.s32.totalorder %s146, %s147
      %p159 = scmp.eq.s32.totalorder %s36, 1
      %p160 = por %p158, %p159
      %p162 = scmp.ne.s32.totalorder %s147, %s161
      %p163 = scmp.eq.s32.totalorder %s36, 0
      %p164 = por %p162, %p163
      %s166 = sadd.s32 %s165, 1
      %p169 = scmp.eq.s32.totalorder %s30, 1
      %p170 = scmp.ne.s32.totalorder %s165, %s167
      %p171 = scmp.eq.s32.totalorder %s30, 0
      %p172 = por %p170, %p171
      %p173 = scmp.ne.s32.totalorder %s165, %s167
      %p174 = scmp.eq.s32.totalorder %s35, 1
      %p175 = por %p173, %p174
      %p176 = scmp.ne.s32.totalorder %s167, %s168
      %p177 = scmp.eq.s32.totalorder %s35, 0
      %p178 = por %p176, %p177
      %p179 = scmp.ne.s32.totalorder %s167, %s168
      %p180 = scmp.eq.s32.totalorder %s36, 1
      %p181 = por %p179, %p180
      %p183 = scmp.ne.s32.totalorder %s168, %s182
      %p184 = scmp.eq.s32.totalorder %s36, 0
      %p185 = por %p183, %p184
      %s187 = sadd.s32 %s186, 1
      %p190 = scmp.eq.s32.totalorder %s30, 1
      %p191 = scmp.ne.s32.totalorder %s186, %s188
      %p192 = scmp.eq.s32.totalorder %s30, 0
      %p193 = por %p191, %p192
      %p194 = scmp.ne.s32.totalorder %s186, %s188
      %p195 = scmp.eq.s32.totalorder %s35, 1
      %p196 = por %p194, %p195
      %p197 = scmp.ne.s32.totalorder %s188, %s189
      %p198 = scmp.eq.s32.totalorder %s35, 0
      %p199 = por %p197, %p198
      %p200 = scmp.ne.s32.totalorder %s188, %s189
      %p201 = scmp.eq.s32.totalorder %s36, 1
      %p202 = por %p200, %p201
      %p204 = scmp.ne.s32.totalorder %s189, %s203
      %p205 = scmp.eq.s32.totalorder %s36, 0
      %p206 = por %p204, %p205
      %s208 = sadd.s32 %s207, 1
      %p211 = scmp.eq.s32.totalorder %s30, 1
      %p212 = scmp.ne.s32.totalorder %s207, %s209
      %p213 = scmp.eq.s32.totalorder %s30, 0
      %p214 = por %p212, %p213
      %p215 = scmp.ne.s32.totalorder %s207, %s209
      %p216 = scmp.eq.s32.totalorder %s35, 1
      %p217 = por %p215, %p216
      %p218 = scmp.ne.s32.totalorder %s209, %s210
      %p219 = scmp.eq.s32.totalorder %s35, 0
      %p220 = por %p218, %p219
      %p221 = scmp.ne.s32.totalorder %s209, %s210
      %p222 = scmp.eq.s32.totalorder %s36, 1
      %p223 = por %p221, %p222
      %p225 = scmp.ne.s32.totalorder %s210, %s224
      %p226 = scmp.eq.s32.totalorder %s36, 0
      %p227 = por %p225, %p226
      %s229 = sadd.s32 %s228, 1
      %p232 = scmp.eq.s32.totalorder %s30, 1
      %p233 = scmp.ne.s32.totalorder %s228, %s230
      %p234 = scmp.eq.s32.totalorder %s30, 0
      %p235 = por %p233, %p234
      %p236 = scmp.ne.s32.totalorder %s228, %s230
      %p237 = scmp.eq.s32.totalorder %s35, 1
      %p238 = por %p236, %p237
      %p239 = scmp.ne.s32.totalorder %s230, %s231
      %p240 = scmp.eq.s32.totalorder %s35, 0
      %p241 = por %p239, %p240
      %p242 = scmp.ne.s32.totalorder %s230, %s231
      %p243 = scmp.eq.s32.totalorder %s36, 1
      %p244 = por %p242, %p243
      %p246 = scmp.ne.s32.totalorder %s231, %s245
      %p247 = scmp.eq.s32.totalorder %s36, 0
      %p248 = por %p246, %p247
      %s250 = sadd.s32 %s249, 1
      %p253 = scmp.eq.s32.totalorder %s30, 1
      %p254 = scmp.ne.s32.totalorder %s249, %s251
      %p255 = scmp.eq.s32.totalorder %s30, 0
      %p256 = por %p254, %p255
      %p257 = scmp.ne.s32.totalorder %s249, %s251
      %p258 = scmp.eq.s32.totalorder %s35, 1
      %p259 = por %p257, %p258
      %p260 = scmp.ne.s32.totalorder %s251, %s252
      %p261 = scmp.eq.s32.totalorder %s35, 0
      %p262 = por %p260, %p261
      %p263 = scmp.ne.s32.totalorder %s251, %s252
      %p264 = scmp.eq.s32.totalorder %s36, 1
      %p265 = por %p263, %p264
      %p267 = scmp.ne.s32.totalorder %s252, %s266
      %p268 = scmp.eq.s32.totalorder %s36, 0
      %p269 = por %p267, %p268
      %s271 = sadd.s32 %s270, 1
      %p274 = scmp.eq.s32.totalorder %s30, 1
      %p275 = scmp.ne.s32.totalorder %s270, %s272
      %p276 = scmp.eq.s32.totalorder %s30, 0
      %p277 = por %p275, %p276
      %p278 = scmp.ne.s32.totalorder %s270, %s272
      %p279 = scmp.eq.s32.totalorder %s35, 1
      %p280 = por %p278, %p279
      %p281 = scmp.ne.s32.totalorder %s272, %s273
      %p282 = scmp.eq.s32.totalorder %s35, 0
      %p283 = por %p281, %p282
      %p284 = scmp.ne.s32.totalorder %s272, %s273
      %p285 = scmp.eq.s32.totalorder %s36, 1
      %p286 = por %p284, %p285
      %p288 = scmp.ne.s32.totalorder %s273, %s287
      %p289 = scmp.eq.s32.totalorder %s36, 0
      %p290 = por %p288, %p289
      %s292 = sadd.s32 %s291, 1
      %p295 = scmp.eq.s32.totalorder %s30, 1
      %p296 = scmp.ne.s32.totalorder %s291, %s293
      %p297 = scmp.eq.s32.totalorder %s30, 0
      %p298 = por %p296, %p297
      %p299 = scmp.ne.s32.totalorder %s291, %s293
      %p300 = scmp.eq.s32.totalorder %s35, 1
      %p301 = por %p299, %p300
      %p302 = scmp.ne.s32.totalorder %s293, %s294
      %p303 = scmp.eq.s32.totalorder %s35, 0
      %p304 = por %p302, %p303
      %p305 = scmp.ne.s32.totalorder %s293, %s294
      %p306 = scmp.eq.s32.totalorder %s36, 1
      %p307 = por %p305, %p306
      %p309 = scmp.ne.s32.totalorder %s294, %s308
      %p310 = scmp.eq.s32.totalorder %s36, 0
      %p311 = por %p309, %p310
      %s313 = sadd.s32 %s312, 1
      %p316 = scmp.eq.s32.totalorder %s30, 1
      %p317 = scmp.ne.s32.totalorder %s312, %s314
      %p318 = scmp.eq.s32.totalorder %s30, 0
      %p319 = por %p317, %p318
      %p320 = scmp.ne.s32.totalorder %s312, %s314
      %p321 = scmp.eq.s32.totalorder %s35, 1
      %p322 = por %p320, %p321
      %p323 = scmp.ne.s32.totalorder %s314, %s315
      %p324 = scmp.eq.s32.totalorder %s35, 0
      %p325 = por %p323, %p324
      %p326 = scmp.ne.s32.totalorder %s314, %s315
      %p327 = scmp.eq.s32.totalorder %s36, 1
      %p328 = por %p326, %p327
      %p330 = scmp.ne.s32.totalorder %s315, %s329
      %p331 = scmp.eq.s32.totalorder %s36, 0
      %p332 = por %p330, %p331
      %s334 = sadd.s32 %s333, 1
      %p337 = scmp.eq.s32.totalorder %s30, 1
      %p338 = scmp.ne.s32.totalorder %s333, %s335
      %p339 = scmp.eq.s32.totalorder %s30, 0
      %p340 = por %p338, %p339
      %p341 = scmp.ne.s32.totalorder %s333, %s335
      %p342 = scmp.eq.s32.totalorder %s35, 1
      %p343 = por %p341, %p342
      %p344 = scmp.ne.s32.totalorder %s335, %s336
      %p345 = scmp.eq.s32.totalorder %s35, 0
      %p346 = por %p344, %p345
      %p347 = scmp.ne.s32.totalorder %s335, %s336
      %p348 = scmp.eq.s32.totalorder %s36, 1
      %p349 = por %p347, %p348
      %p351 = scmp.ne.s32.totalorder %s336, %s350
      %p352 = scmp.eq.s32.totalorder %s36, 0
      %p353 = por %p351, %p352
      %s355 = sadd.s32 %s354, 1
      %p358 = scmp.eq.s32.totalorder %s30, 1
      %p359 = scmp.ne.s32.totalorder %s354, %s356
      %p360 = scmp.eq.s32.totalorder %s30, 0
      %p361 = por %p359, %p360
      %p362 = scmp.ne.s32.totalorder %s354, %s356
      %p363 = scmp.eq.s32.totalorder %s35, 1
      %p364 = por %p362, %p363
      %p365 = scmp.ne.s32.totalorder %s356, %s357
      %p366 = scmp.eq.s32.totalorder %s35, 0
      %p367 = por %p365, %p366
      %p368 = scmp.ne.s32.totalorder %s356, %s357
      %p369 = scmp.eq.s32.totalorder %s36, 1
      %p370 = por %p368, %p369
      %p372 = scmp.ne.s32.totalorder %s357, %s371
      %p373 = scmp.eq.s32.totalorder %s36, 0
      %p374 = por %p372, %p373
      %s376 = sadd.s32 %s375, 1
      %p379 = scmp.eq.s32.totalorder %s30, 1
      %p380 = scmp.ne.s32.totalorder %s375, %s377
      %p381 = scmp.eq.s32.totalorder %s30, 0
      %p382 = por %p380, %p381
      %p383 = scmp.ne.s32.totalorder %s375, %s377
      %p384 = scmp.eq.s32.totalorder %s35, 1
      %p385 = por %p383, %p384
      %p386 = scmp.ne.s32.totalorder %s377, %s378
      %p387 = scmp.eq.s32.totalorder %s35, 0
      %p388 = por %p386, %p387
      %p389 = scmp.ne.s32.totalorder %s377, %s378
      %p390 = scmp.eq.s32.totalorder %s36, 1
      %p391 = por %p389, %p390
      %p393 = scmp.ne.s32.totalorder %s378, %s392
      %p394 = scmp.eq.s32.totalorder %s36, 0
      %p395 = por %p393, %p394
      %s397 = sadd.s32 %s396, 1
      %p400 = scmp.eq.s32.totalorder %s30, 1
      %p401 = scmp.ne.s32.totalorder %s396, %s398
      %p402 = scmp.eq.s32.totalorder %s30, 0
      %p403 = por %p401, %p402
      %p404 = scmp.ne.s32.totalorder %s396, %s398
      %p405 = scmp.eq.s32.totalorder %s35, 1
      %p406 = por %p404, %p405
      %p407 = scmp.ne.s32.totalorder %s398, %s399
      %p408 = scmp.eq.s32.totalorder %s35, 0
      %p409 = por %p407, %p408
      %p410 = scmp.ne.s32.totalorder %s398, %s399
      %p411 = scmp.eq.s32.totalorder %s36, 1
      %p412 = por %p410, %p411
      %p414 = scmp.ne.s32.totalorder %s399, %s413
      %p415 = scmp.eq.s32.totalorder %s36, 0
      %p416 = por %p414, %p415
      %s418 = sadd.s32 %s417, 1
      %p421 = scmp.eq.s32.totalorder %s30, 1
      %p422 = scmp.ne.s32.totalorder %s417, %s419
      %p423 = scmp.eq.s32.totalorder %s30, 0
      %p424 = por %p422, %p423
      %p425 = scmp.ne.s32.totalorder %s417, %s419
      %p426 = scmp.eq.s32.totalorder %s35, 1
      %p427 = por %p425, %p426
      %p428 = scmp.ne.s32.totalorder %s419, %s420
      %p429 = scmp.eq.s32.totalorder %s35, 0
      %p430 = por %p428, %p429
      %p431 = scmp.ne.s32.totalorder %s419, %s420
      %p432 = scmp.eq.s32.totalorder %s36, 1
      %p433 = por %p431, %p432
      %p435 = scmp.ne.s32.totalorder %s420, %s434
      %p436 = scmp.eq.s32.totalorder %s36, 0
      %p437 = por %p435, %p436
      %s438 = ssub.s32 %s37, %s49
      %s439 = ssub.s32 %s38, %s45
      %s440 = sor.u32 %s438, %s439
      %p441 = scmp.eq.s32.totalorder %s440, 0
      %s443 = sadd.s32 %s442, 1
      %s444 = scalar_select %p441, %s442, %s443
      %p447 = pneg %p441
      %p448 = scmp.eq.s32.totalorder %s30, 1
      %p449 = por %p447, %p448
      %p450 = scmp.ne.s32.totalorder %s442, %s445
      %p451 = scmp.eq.s32.totalorder %s30, 0
      %p452 = por %p450, %p451
      %p453 = scmp.ne.s32.totalorder %s442, %s445
      %p454 = scmp.eq.s32.totalorder %s35, 1
      %p455 = por %p453, %p454
      %p456 = scmp.ne.s32.totalorder %s445, %s446
      %p457 = scmp.eq.s32.totalorder %s35, 0
      %p458 = por %p456, %p457
      %p459 = scmp.ne.s32.totalorder %s445, %s446
      %p460 = scmp.eq.s32.totalorder %s36, 1
      %p461 = por %p459, %p460
      %p463 = scmp.ne.s32.totalorder %s446, %s462
      %p464 = scmp.eq.s32.totalorder %s36, 0
      %p465 = por %p463, %p464
      %p466 = scmp.le.s32.totalorder 1, %s30
      %p467 = scmp.lt.s32.totalorder %s30, 3
      %p468 = pnand %p466, %p467
      %p469 = pneg %p468
      // Predicated region
      $region9: #{encoder_forward.2} parent=5 // pred_check
        _
      $region10: #{encoder_forward.2} parent=5 // pred_check_branch
        %471 = sbr.rel (%p468) target = $region12
      $region11: #{encoder_forward.2} parent=5 // pred_region
        %s472 = ssub.s32 %s30, 1
        // Predicated region
        $region13: #{encoder_forward.2} parent=11 // pred_check
          %p473 = pneg %p115
        $region14: #{encoder_forward.2} parent=11 // pred_check_branch
          %475 = sbr.rel (%p473) target = $region16
        $region15: #{encoder_forward.2} parent=11 // pred_region
          _
        $region16: #{encoder_forward.2} parent=11 // pred_fallthru
          _
        // Predicated region
        $region17: #{encoder_forward.2} parent=11 // pred_check
          %p476 = pneg %p136
        $region18: #{encoder_forward.2} parent=11 // pred_check_branch
          %478 = sbr.rel (%p476) target = $region20
        $region19: #{encoder_forward.2} parent=11 // pred_region
          _
        $region20: #{encoder_forward.2} parent=11 // pred_fallthru
          _
        // Predicated region
        $region21: #{encoder_forward.2} parent=11 // pred_check
          %p479 = pneg %p157
        $region22: #{encoder_forward.2} parent=11 // pred_check_branch
          %481 = sbr.rel (%p479) target = $region24
        $region23: #{encoder_forward.2} parent=11 // pred_region
          _
        $region24: #{encoder_forward.2} parent=11 // pred_fallthru
          _
        // Predicated region
        $region25: #{encoder_forward.2} parent=11 // pred_check
          %p482 = pneg %p178
        $region26: #{encoder_forward.2} parent=11 // pred_check_branch
          %484 = sbr.rel (%p482) target = $region28
        $region27: #{encoder_forward.2} parent=11 // pred_region
          _
        $region28: #{encoder_forward.2} parent=11 // pred_fallthru
          _
        // Predicated region
        $region29: #{encoder_forward.2} parent=11 // pred_check
          %p485 = pneg %p199
        $region30: #{encoder_forward.2} parent=11 // pred_check_branch
          %487 = sbr.rel (%p485) target = $region32
        $region31: #{encoder_forward.2} parent=11 // pred_region
          _
        $region32: #{encoder_forward.2} parent=11 // pred_fallthru
          _
        // Predicated region
        $region33: #{encoder_forward.2} parent=11 // pred_check
          %p488 = pneg %p220
        $region34: #{encoder_forward.2} parent=11 // pred_check_branch
          %490 = sbr.rel (%p488) target = $region36
        $region35: #{encoder_forward.2} parent=11 // pred_region
          %s492 = ssub.s32 16, 16
          %493 = vsyncadd [#allocation7], %s492
          %s495 = sshll.u32 [#allocation6], 4
          %s496 = int_to_ptr.vmem [resolvable:$true] %s495
          %498 = dma.hbm_to_vmem [thread:$0]  %s7, 16, %s496, [#allocation7]
        $region36: #{encoder_forward.2} parent=11 // pred_fallthru
          _
        // Predicated region
        $region37: #{encoder_forward.2} parent=11 // pred_check
          %p499 = pneg %p241
        $region38: #{encoder_forward.2} parent=11 // pred_check_branch
          %501 = sbr.rel (%p499) target = $region40
        $region39: #{encoder_forward.2} parent=11 // pred_region
          _
        $region40: #{encoder_forward.2} parent=11 // pred_fallthru
          _
        // Predicated region
        $region41: #{encoder_forward.2} parent=11 // pred_check
          %p502 = pneg %p262
        $region42: #{encoder_forward.2} parent=11 // pred_check_branch
          %504 = sbr.rel (%p502) target = $region44
        $region43: #{encoder_forward.2} parent=11 // pred_region
          %s506 = ssub.s32 16, 16
          %507 = vsyncadd [#allocation7], %s506
          %s509 = sshll.u32 [#allocation8], 4
          %s510 = int_to_ptr.vmem [resolvable:$true] %s509
          %512 = dma.hbm_to_vmem [thread:$0]  %s9, 16, %s510, [#allocation7]
        $region44: #{encoder_forward.2} parent=11 // pred_fallthru
          _
        // Predicated region
        $region45: #{encoder_forward.2} parent=11 // pred_check
          %p513 = pneg %p283
        $region46: #{encoder_forward.2} parent=11 // pred_check_branch
          %515 = sbr.rel (%p513) target = $region48
        $region47: #{encoder_forward.2} parent=11 // pred_region
          _
        $region48: #{encoder_forward.2} parent=11 // pred_fallthru
          _
        // Predicated region
        $region49: #{encoder_forward.2} parent=11 // pred_check
          %p516 = pneg %p304
        $region50: #{encoder_forward.2} parent=11 // pred_check_branch
          %518 = sbr.rel (%p516) target = $region52
        $region51: #{encoder_forward.2} parent=11 // pred_region
          _
        $region52: #{encoder_forward.2} parent=11 // pred_fallthru
          _
        // Predicated region
        $region53: #{encoder_forward.2} parent=11 // pred_check
          %p519 = pneg %p325
        $region54: #{encoder_forward.2} parent=11 // pred_check_branch
          %521 = sbr.rel (%p519) target = $region56
        $region55: #{encoder_forward.2} parent=11 // pred_region
          %s523 = ssub.s32 512, 512
          %524 = vsyncadd [#allocation10], %s523
          %s525 = sshll.u32 [#allocation9], 4
          %s526 = int_to_ptr.vmem [resolvable:$true] %s525
          %531 = dma.hbm_to_vmem [thread:$0]  %s12, 512, %s526, [#allocation10], 128, 128, 8
        $region56: #{encoder_forward.2} parent=11 // pred_fallthru
          _
        // Predicated region
        $region57: #{encoder_forward.2} parent=11 // pred_check
          %p532 = pneg %p346
        $region58: #{encoder_forward.2} parent=11 // pred_check_branch
          %534 = sbr.rel (%p532) target = $region60
        $region59: #{encoder_forward.2} parent=11 // pred_region
          %s536 = ssub.s32 16, 16
          %537 = vsyncadd [#allocation10], %s536
          %s539 = sshll.u32 [#allocation11], 4
          %s540 = int_to_ptr.vmem [resolvable:$true] %s539
          %542 = dma.hbm_to_vmem [thread:$0]  %s13, 16, %s540, [#allocation10]
        $region60: #{encoder_forward.2} parent=11 // pred_fallthru
          _
        // Predicated region
        $region61: #{encoder_forward.2} parent=11 // pred_check
          %p543 = pneg %p367
        $region62: #{encoder_forward.2} parent=11 // pred_check_branch
          %545 = sbr.rel (%p543) target = $region64
        $region63: #{encoder_forward.2} parent=11 // pred_region
          _
        $region64: #{encoder_forward.2} parent=11 // pred_fallthru
          _
        // Predicated region
        $region65: #{encoder_forward.2} parent=11 // pred_check
          %p546 = pneg %p388
        $region66: #{encoder_forward.2} parent=11 // pred_check_branch
          %548 = sbr.rel (%p546) target = $region68
        $region67: #{encoder_forward.2} parent=11 // pred_region
          %s550 = ssub.s32 16, 16
          %551 = vsyncadd [#allocation13], %s550
          %s553 = sshll.u32 [#allocation12], 4
          %s554 = int_to_ptr.vmem [resolvable:$true] %s553
          %556 = dma.hbm_to_vmem [thread:$0]  %s15, 16, %s554, [#allocation13]
        $region68: #{encoder_forward.2} parent=11 // pred_fallthru
          _
        // Predicated region
        $region69: #{encoder_forward.2} parent=11 // pred_check
          %p557 = pneg %p409
        $region70: #{encoder_forward.2} parent=11 // pred_check_branch
          %559 = sbr.rel (%p557) target = $region72
        $region71: #{encoder_forward.2} parent=11 // pred_region
          _
        $region72: #{encoder_forward.2} parent=11 // pred_fallthru
          _
        // Predicated region
        $region73: #{encoder_forward.2} parent=11 // pred_check
          %p560 = pneg %p430
        $region74: #{encoder_forward.2} parent=11 // pred_check_branch
          %562 = sbr.rel (%p560) target = $region76
        $region75: #{encoder_forward.2} parent=11 // pred_region
          _
        $region76: #{encoder_forward.2} parent=11 // pred_fallthru
          _
      $region12: #{encoder_forward.2} parent=5 // pred_fallthru
        _
      %p563 = scmp.lt.s32.totalorder %s30, 2
      // Predicated region
      $region77: #{encoder_forward.2} parent=5 // pred_check
        %p564 = pneg %p563
      $region78: #{encoder_forward.2} parent=5 // pred_check_branch
        %566 = sbr.rel (%p564) target = $region80
      $region79: #{encoder_forward.2} parent=5 // pred_region
        // Predicated region
        $region81: #{encoder_forward.2} parent=79 // pred_check
          %p567 = pneg %p62
        $region82: #{encoder_forward.2} parent=79 // pred_check_branch
          %569 = sbr.rel (%p567) target = $region84
        $region83: #{encoder_forward.2} parent=79 // pred_region
          %s570 = sand.u32 %s52, 1
          %s571 = scalar_lea.sflag [#allocation5], %s570
          %s572 = sand.u32 %s52, 1
          %s573 = smul.addr %s572, 8
          %s574 = scalar_lea.vmem [#allocation4], %s573
          %s576 = ssub.s32 128, 128
          %577 = vsyncadd %s571, %s576
          %s578 = smul.addr %s37, 128
          %s579 = scalar_lea.hbm %s0, %s578
          %s581 = sshll.u32 %s574, 4
          %s582 = int_to_ptr.vmem [resolvable:$true] %s581
          %584 = dma.hbm_to_vmem [thread:$0]  %s579, 128, %s582, %s571
        $region84: #{encoder_forward.2} parent=79 // pred_fallthru
          _
        // Predicated region
        $region85: #{encoder_forward.2} parent=79 // pred_check
          %p585 = pneg %p88
        $region86: #{encoder_forward.2} parent=79 // pred_check_branch
          %587 = sbr.rel (%p585) target = $region88
        $region87: #{encoder_forward.2} parent=79 // pred_region
          %p588 = scmp.lt.s32.totalorder %s37, 1
          %s589 = scalar_select %p588, %s37, 1
          %s590 = scalar_lea.vmem %s1, %s589
        $region88: #{encoder_forward.2} parent=79 // pred_fallthru
          _
      $region80: #{encoder_forward.2} parent=5 // pred_fallthru
        _
      %p591 = scmp.le.s32.totalorder 1, %s30
      %p592 = scmp.lt.s32.totalorder %s30, 3
      %p593 = pnand %p591, %p592
      %p594 = pneg %p593
      // Predicated region
      $region89: #{encoder_forward.2} parent=5 // pred_check
        _
      $region90: #{encoder_forward.2} parent=5 // pred_check_branch
        %596 = sbr.rel (%p593) target = $region92
      $region91: #{encoder_forward.2} parent=5 // pred_region
        %s597 = ssub.s32 %s30, 1
        %s598 = sand.u32 %s55, 1
        %s599 = scalar_lea.sflag [#allocation5], %s598
        %s600 = sand.u32 %s55, 1
        %s601 = smul.addr %s600, 8
        %s602 = scalar_lea.vmem [#allocation4], %s601
        // Predicated region
        $region93: #{encoder_forward.2} parent=91 // pred_check
          %p603 = pneg %p68
        $region94: #{encoder_forward.2} parent=91 // pred_check_branch
          %605 = sbr.rel (%p603) target = $region96
        $region95: #{encoder_forward.2} parent=91 // pred_region
          %606 = dma.done %s599, 128
        $region96: #{encoder_forward.2} parent=91 // pred_fallthru
          _
        // Predicated region
        $region97: #{encoder_forward.2} parent=91 // pred_check
          %p607 = pneg %p220
        $region98: #{encoder_forward.2} parent=91 // pred_check_branch
          %609 = sbr.rel (%p607) target = $region100
        $region99: #{encoder_forward.2} parent=91 // pred_region
          %610 = dma.done [#allocation7], 16
        $region100: #{encoder_forward.2} parent=91 // pred_fallthru
          _
        // Predicated region
        $region101: #{encoder_forward.2} parent=91 // pred_check
          %p611 = pneg %p262
        $region102: #{encoder_forward.2} parent=91 // pred_check_branch
          %613 = sbr.rel (%p611) target = $region104
        $region103: #{encoder_forward.2} parent=91 // pred_region
          %614 = dma.done [#allocation7], 16
        $region104: #{encoder_forward.2} parent=91 // pred_fallthru
          _
        // Predicated region
        $region105: #{encoder_forward.2} parent=91 // pred_check
          %p615 = pneg %p325
        $region106: #{encoder_forward.2} parent=91 // pred_check_branch
          %617 = sbr.rel (%p615) target = $region108
        $region107: #{encoder_forward.2} parent=91 // pred_region
          %618 = dma.done [#allocation10], 512
        $region108: #{encoder_forward.2} parent=91 // pred_fallthru
          _
        // Predicated region
        $region109: #{encoder_forward.2} parent=91 // pred_check
          %p619 = pneg %p346
        $region110: #{encoder_forward.2} parent=91 // pred_check_branch
          %621 = sbr.rel (%p619) target = $region112
        $region111: #{encoder_forward.2} parent=91 // pred_region
          %622 = dma.done [#allocation10], 16
        $region112: #{encoder_forward.2} parent=91 // pred_fallthru
          _
        // Predicated region
        $region113: #{encoder_forward.2} parent=91 // pred_check
          %p623 = pneg %p388
        $region114: #{encoder_forward.2} parent=91 // pred_check_branch
          %625 = sbr.rel (%p623) target = $region116
        $region115: #{encoder_forward.2} parent=91 // pred_region
          %626 = dma.done [#allocation13], 16
        $region116: #{encoder_forward.2} parent=91 // pred_fallthru
          _
        %s627 = sand.u32 %s55, 1
        %s628 = scalar_lea.sflag [#allocation5], %s627
        %s629 = sand.u32 %s55, 1
        %s630 = smul.addr %s629, 8
        %s631 = scalar_lea.vmem [#allocation4], %s630
        %p632 = pneg %p68
        %p633 = pneg %p65
        %p634 = scmp.lt.s32.totalorder %s39, 1
        %s635 = scalar_select %p634, %s39, 1
        %s636 = scalar_lea.vmem %s1, %s635
        %p637 = pneg %p94
        %p638 = pneg %p91
        %p639 = pneg %p115
        %p640 = pneg %p112
        %p641 = pneg %p136
        %p642 = pneg %p133
        %p643 = pneg %p157
        %p644 = pneg %p154
        %p645 = pneg %p178
        %p646 = pneg %p175
        %p647 = pneg %p199
        %p648 = pneg %p196
        %p649 = pneg %p220
        %p650 = pneg %p217
        %p651 = pneg %p241
        %p652 = pneg %p238
        %p653 = pneg %p262
        %p654 = pneg %p259
        %p655 = pneg %p283
        %p656 = pneg %p280
        %p657 = pneg %p304
        %p658 = pneg %p301
        %p659 = pneg %p325
        %p660 = pneg %p322
        %p661 = pneg %p346
        %p662 = pneg %p343
        %p663 = pneg %p367
        %p664 = pneg %p364
        %p665 = pneg %p388
        %p666 = pneg %p385
        %p667 = pneg %p409
        %p668 = pneg %p406
        %p669 = pneg %p430
        %p670 = pneg %p427
        %p671 = pneg %p458
        %p672 = pneg %p455
        %p673 = scmp.lt.s32.totalorder %s39, 1
        %s674 = scalar_select %p673, %s39, 1
        %p675 = scmp.lt.s32.totalorder %s40, 0
        %s676 = scalar_select %p675, %s40, 0
        %s677 = sadd.s32 %s676, %s674
        %s678 = smul.addr %s677, 8
        %s679 = scalar_lea.vmem %s18, %s678
        %p680 = scmp.lt.s32.totalorder %s39, 1
        %s681 = scalar_select %p680, %s39, 1
        %s682 = scalar_lea.vmem %s1, %s681
        %p683 = scmp.lt.s32.totalorder %s39, 1
        %s684 = scalar_select %p683, %s39, 1
        %p685 = scmp.lt.s32.totalorder %s40, 0
        %s686 = scalar_select %p685, %s40, 0
        %s687 = sadd.s32 %s686, %s684
        %s688 = smul.addr %s687, 8
        %s689 = scalar_lea.vmem %s18, %s688
        %p690 = scmp.eq.s32.totalorder %s40, 0
        // Predicated region
        $region117: #{encoder_forward.2} parent=91 // pred_check
          %p691 = pneg %p690
        $region118: #{encoder_forward.2} parent=91 // pred_check_branch
          %693 = sbr.rel (%p691) target = $region120
        $region119: #{encoder_forward.2} parent=91 // pred_region
          %v694 = vld [vmem:[%s602] sm:$0xff]
          %v695 = vld [vmem:[%s2] sm:$0x1]
          %v696 = vld [vmem:[%s3] sm:$0x1]
          %vm697 = vcmask 261120
          %v698 = vsel %vm697, %v694, 0.0
          %699 = vadd.xlane.f32.xlu0 %v698
          %v700 = vpop.xlane.xlu0 %699
          %v701 = vrcp.pop 32.0
          %v702 = vmul.f32 %v700, %v701
          %v703 = vsub.f32 %v694, %v702
          %v704 = vmul.f32 %v703, %v703
          %v705 = vsel %vm697, %v704, 0.0
          %706 = vadd.xlane.f32.xlu0 %v705
          %v707 = vpop.xlane.xlu0 %706
          %v708 = vrcp.pop 31.0
          %v709 = vmul.f32 %v707, %v708
          %v711 = vlaneseq
          %v712 = vshrl.u32 %v711, 7
          %v713 = vsub.s32 0, %v712
          %v714 = vrot.slane %v695, %v713
          %v716 = vmul.f32 %v714, %v703
          %v717 = vrsqrt.pop %v709
          %v718 = vmul.f32 %v709, %v717
          %vm719 = vcmp.eq.f32.partialorder %v709, inf
          %v720 = vsel %vm719, %v709, %v718
          %vm721 = vcmp.eq.f32.partialorder %v709, 0.0
          %v722 = vand.u32 %v709, 2147483648
          %v723 = vsel %vm721, %v722, %v720
          %v724 = vadd.f32 %v723, 1e-06
          %v725 = vrcp.pop %v724
          %v726 = vmul.f32 %v716, %v725
          %v728 = vlaneseq
          %v729 = vshrl.u32 %v728, 7
          %v730 = vsub.s32 0, %v729
          %v731 = vrot.slane %v696, %v730
          %v733 = vadd.f32 %v726, %v731
          %v734 = vld [vmem:[%s6] sm:$0xff]
          %v735 = vld [vmem:[%s6 + $0x8] sm:$0xff]
          %v736 = vld [vmem:[%s6 + $0x10] sm:$0xff]
          %v737 = vld [vmem:[%s6 + $0x18] sm:$0xff]
          %v738 = vld [vmem:[#allocation6] sm:$0x1]
          %v740 = vlaneseq
          %v741 = vshrl.u32 %v740, 7
          %v742 = vsub.s32 0, %v741
          %v743 = vrot.slane %v738, %v742
          %v746 = vsel %vm697, %v733, 0
          %748 = vmatprep.subr.mxu0 0.0
          %749 = vmatpush1.msra.mxu0 0.0
          %750 = vmatprep.subr.mxu0 0.0
          %751 = vmatpush1.msra.mxu0 0.0
          %752 = vmatprep.subr.mxu0 0.0
          %753 = vmatpush1.msra.mxu0 0.0
          %754 = vmatprep.subr.mxu0 0.0
          %755 = vmatpush1.msra.mxu0 0.0
          %756 = vmatprep.subr.mxu0 0.0
          %757 = vmatpush1.msra.mxu0 0.0
          %758 = vmatprep.subr.mxu0 0.0
          %759 = vmatpush1.msra.mxu0 0.0
          %760 = vmatprep.subr.mxu0 0.0
          %761 = vmatpush1.msra.mxu0 0.0
          %762 = vmatprep.subr.mxu0 0.0
          %763 = vmatpush1.msra.mxu0 0.0
          %764 = vmatprep.subr.mxu0 0.0
          %765 = vmatpush1.msra.mxu0 0.0
          %766 = vmatprep.subr.mxu0 0.0
          %767 = vmatpush1.msra.mxu0 0.0
          %768 = vmatprep.subr.mxu0 0.0
          %769 = vmatpush1.msra.mxu0 0.0
          %770 = vmatprep.subr.mxu0 0.0
          %771 = vmatpush1.msra.mxu0 0.0
          %772 = vmatprep.subr.mxu0 0.0
          %773 = vmatpush1.msra.mxu0 %v737
          %774 = vmatprep.subr.mxu0 0.0
          %775 = vmatpush1.msra.mxu0 %v736
          %776 = vmatprep.subr.mxu0 0.0
          %777 = vmatpush1.msra.mxu0 %v735
          %778 = vmatprep.subr.mxu0 0.0
          %779 = vmatpush1.msra.mxu0 %v734
          %780 = vmatprep.subr.mxu0 0.0
          %781 = vmatpush2.msra.mxu0 0.0
          %782 = vmatprep.subr.mxu0 0.0
          %783 = vmatpush2.msra.mxu0 0.0
          %784 = vmatprep.subr.mxu0 0.0
          %785 = vmatpush2.msra.mxu0 0.0
          %786 = vmatprep.subr.mxu0 0.0
          %787 = vmatpush2.msra.mxu0 0.0
          %788 = vmatprep.subr.mxu0 0.0
          %789 = vmatpush2.msra.mxu0 0.0
          %790 = vmatprep.subr.mxu0 0.0
          %791 = vmatpush2.msra.mxu0 0.0
          %792 = vmatprep.subr.mxu0 0.0
          %793 = vmatpush2.msra.mxu0 0.0
          %794 = vmatprep.subr.mxu0 0.0
          %795 = vmatpush2.msra.mxu0 0.0
          %796 = vmatprep.subr.mxu0 0.0
          %797 = vmatpush2.msra.mxu0 0.0
          %798 = vmatprep.subr.mxu0 0.0
          %799 = vmatpush2.msra.mxu0 0.0
          %800 = vmatprep.subr.mxu0 0.0
          %801 = vmatpush2.msra.mxu0 0.0
          %802 = vmatprep.subr.mxu0 0.0
          %803 = vmatpush2.msra.mxu0 0.0
          %804 = vmatprep.subr.mxu0 0.0
          %805 = vmatpush2.msra.mxu0 0.0
          %806 = vmatprep.subr.mxu0 0.0
          %807 = vmatpush2.msra.mxu0 0.0
          %808 = vmatprep.subr.mxu0 0.0
          %809 = vmatpush2.msra.mxu0 0.0
          %810 = vmatprep.subr.mxu0 0.0
          %811 = vmatpush2.msra.mxu0 0.0
          %812 = vmatprep.mubr.f32.mxu0 0.0
          %813 = vmatmul.mubr.f32.gmra.mxu0 %v746
          %v814 = vpop.f32.mrf.mxu0
          %v815 = vadd.f32 %v743, %v814
          %v816 = vpop.f32.mrf.mxu0
          %817 = vdwg.mxu0
          %vm818 = vcmask 523264
          %819 = vst.msk [vmem:[#allocation2] sm:$0xff] %vm818, %v815
        $region120: #{encoder_forward.2} parent=91 // pred_fallthru
          _
        %s820 = smul.u32 %s40, 8
        %s821 = scalar_lea.vmem %s602, %s820 [#allocation4]
        %v822 = vld [vmem:[%s821] sm:$0xff]
        %v823 = vld [vmem:[%s2] sm:$0x1]
        %v824 = vld [vmem:[%s3] sm:$0x1]
        %vm825 = vcmask 261120
        %v826 = vsel %vm825, %v822, 0.0
        %827 = vadd.xlane.f32.xlu0 %v826
        %v828 = vpop.xlane.xlu0 %827
        %v829 = vrcp.pop 32.0
        %v830 = vmul.f32 %v828, %v829
        %v831 = vsub.f32 %v822, %v830
        %v832 = vmul.f32 %v831, %v831
        %v833 = vsel %vm825, %v832, 0.0
        %834 = vadd.xlane.f32.xlu0 %v833
        %v835 = vpop.xlane.xlu0 %834
        %v836 = vrcp.pop 31.0
        %v837 = vmul.f32 %v835, %v836
        %v839 = vlaneseq
        %v840 = vshrl.u32 %v839, 7
        %v841 = vsub.s32 0, %v840
        %v842 = vrot.slane %v823, %v841
        %v844 = vmul.f32 %v842, %v831
        %v845 = vrsqrt.pop %v837
        %v846 = vmul.f32 %v837, %v845
        %vm847 = vcmp.eq.f32.partialorder %v837, inf
        %v848 = vsel %vm847, %v837, %v846
        %vm849 = vcmp.eq.f32.partialorder %v837, 0.0
        %v850 = vand.u32 %v837, 2147483648
        %v851 = vsel %vm849, %v850, %v848
        %v852 = vadd.f32 %v851, 1e-06
        %v853 = vrcp.pop %v852
        %v854 = vmul.f32 %v844, %v853
        %v856 = vlaneseq
        %v857 = vshrl.u32 %v856, 7
        %v858 = vsub.s32 0, %v857
        %v859 = vrot.slane %v824, %v858
        %v861 = vadd.f32 %v854, %v859
        %v862 = vld [vmem:[%s4] sm:$0xff]
        %v863 = vld [vmem:[%s4 + $0x8] sm:$0xff]
        %v864 = vld [vmem:[%s4 + $0x10] sm:$0xff]
        %v865 = vld [vmem:[%s4 + $0x18] sm:$0xff]
        %v866 = vld [vmem:[%s5] sm:$0x1]
        %v868 = vlaneseq
        %v869 = vshrl.u32 %v868, 7
        %v870 = vsub.s32 0, %v869
        %v871 = vrot.slane %v866, %v870
        %v874 = vsel %vm825, %v861, 0
        %876 = vmatprep.subr.mxu0 0.0
        %877 = vmatpush1.msra.mxu0 0.0
        %878 = vmatprep.subr.mxu0 0.0
        %879 = vmatpush1.msra.mxu0 0.0
        %880 = vmatprep.subr.mxu0 0.0
        %881 = vmatpush1.msra.mxu0 0.0
        %882 = vmatprep.subr.mxu0 0.0
        %883 = vmatpush1.msra.mxu0 0.0
        %884 = vmatprep.subr.mxu0 0.0
        %885 = vmatpush1.msra.mxu0 0.0
        %886 = vmatprep.subr.mxu0 0.0
        %887 = vmatpush1.msra.mxu0 0.0
        %888 = vmatprep.subr.mxu0 0.0
        %889 = vmatpush1.msra.mxu0 0.0
        %890 = vmatprep.subr.mxu0 0.0
        %891 = vmatpush1.msra.mxu0 0.0
        %892 = vmatprep.subr.mxu0 0.0
        %893 = vmatpush1.msra.mxu0 0.0
        %894 = vmatprep.subr.mxu0 0.0
        %895 = vmatpush1.msra.mxu0 0.0
        %896 = vmatprep.subr.mxu0 0.0
        %897 = vmatpush1.msra.mxu0 0.0
        %898 = vmatprep.subr.mxu0 0.0
        %899 = vmatpush1.msra.mxu0 0.0
        %900 = vmatprep.subr.mxu0 0.0
        %901 = vmatpush1.msra.mxu0 %v865
        %902 = vmatprep.subr.mxu0 0.0
        %903 = vmatpush1.msra.mxu0 %v864
        %904 = vmatprep.subr.mxu0 0.0
        %905 = vmatpush1.msra.mxu0 %v863
        %906 = vmatprep.subr.mxu0 0.0
        %907 = vmatpush1.msra.mxu0 %v862
        %908 = vmatprep.subr.mxu0 0.0
        %909 = vmatpush2.msra.mxu0 0.0
        %910 = vmatprep.subr.mxu0 0.0
        %911 = vmatpush2.msra.mxu0 0.0
        %912 = vmatprep.subr.mxu0 0.0
        %913 = vmatpush2.msra.mxu0 0.0
        %914 = vmatprep.subr.mxu0 0.0
        %915 = vmatpush2.msra.mxu0 0.0
        %916 = vmatprep.subr.mxu0 0.0
        %917 = vmatpush2.msra.mxu0 0.0
        %918 = vmatprep.subr.mxu0 0.0
        %919 = vmatpush2.msra.mxu0 0.0
        %920 = vmatprep.subr.mxu0 0.0
        %921 = vmatpush2.msra.mxu0 0.0
        %922 = vmatprep.subr.mxu0 0.0
        %923 = vmatpush2.msra.mxu0 0.0
        %924 = vmatprep.subr.mxu0 0.0
        %925 = vmatpush2.msra.mxu0 0.0
        %926 = vmatprep.subr.mxu0 0.0
        %927 = vmatpush2.msra.mxu0 0.0
        %928 = vmatprep.subr.mxu0 0.0
        %929 = vmatpush2.msra.mxu0 0.0
        %930 = vmatprep.subr.mxu0 0.0
        %931 = vmatpush2.msra.mxu0 0.0
        %932 = vmatprep.subr.mxu0 0.0
        %933 = vmatpush2.msra.mxu0 0.0
        %934 = vmatprep.subr.mxu0 0.0
        %935 = vmatpush2.msra.mxu0 0.0
        %936 = vmatprep.subr.mxu0 0.0
        %937 = vmatpush2.msra.mxu0 0.0
        %938 = vmatprep.subr.mxu0 0.0
        %939 = vmatpush2.msra.mxu0 0.0
        %940 = vmatprep.mubr.f32.mxu0 0.0
        %941 = vmatmul.mubr.f32.gmra.mxu0 %v874
        %v942 = vpop.f32.mrf.mxu0
        %v943 = vadd.f32 %v871, %v942
        %v944 = vpop.f32.mrf.mxu0
        %945 = vdwg.mxu0
        %v946 = vld [vmem:[#allocation2] sm:$0xff]
        %v947 = vld [vmem:[%s682] sm:$0x1]
        %vm948 = vcmp.eq.f32.partialorder %v947, 0.0
        %vm949 = vcmask 64512
        %v951 = vsel %vm949, %v943, 0
        %v954 = vsel %vm949, %v946, 0
        %956 = vmatprep.subr.mxu0 0.0
        %957 = vmatpush1.xpose.msra.mxu0 0.0
        %958 = vmatprep.subr.mxu0 0.0
        %959 = vmatpush1.xpose.msra.mxu0 0.0
        %960 = vmatprep.subr.mxu0 0.0
        %961 = vmatpush1.xpose.msra.mxu0 0.0
        %962 = vmatprep.subr.mxu0 0.0
        %963 = vmatpush1.xpose.msra.mxu0 0.0
        %964 = vmatprep.subr.mxu0 0.0
        %965 = vmatpush1.xpose.msra.mxu0 0.0
        %966 = vmatprep.subr.mxu0 0.0
        %967 = vmatpush1.xpose.msra.mxu0 0.0
        %968 = vmatprep.subr.mxu0 0.0
        %969 = vmatpush1.xpose.msra.mxu0 0.0
        %970 = vmatprep.subr.mxu0 0.0
        %971 = vmatpush1.xpose.msra.mxu0 0.0
        %972 = vmatprep.subr.mxu0 0.0
        %973 = vmatpush1.xpose.msra.mxu0 0.0
        %974 = vmatprep.subr.mxu0 0.0
        %975 = vmatpush1.xpose.msra.mxu0 0.0
        %976 = vmatprep.subr.mxu0 0.0
        %977 = vmatpush1.xpose.msra.mxu0 0.0
        %978 = vmatprep.subr.mxu0 0.0
        %979 = vmatpush1.xpose.msra.mxu0 0.0
        %980 = vmatprep.subr.mxu0 0.0
        %981 = vmatpush1.xpose.msra.mxu0 0.0
        %982 = vmatprep.subr.mxu0 0.0
        %983 = vmatpush1.xpose.msra.mxu0 0.0
        %984 = vmatprep.subr.mxu0 0.0
        %985 = vmatpush1.xpose.msra.mxu0 0.0
        %986 = vmatprep.subr.mxu0 0.0
        %987 = vmatpush1.xpose.msra.mxu0 %v954
        %988 = vmatprep.subr.mxu0 0.0
        %989 = vmatpush2.xpose.msra.mxu0 0.0
        %990 = vmatprep.subr.mxu0 0.0
        %991 = vmatpush2.xpose.msra.mxu0 0.0
        %992 = vmatprep.subr.mxu0 0.0
        %993 = vmatpush2.xpose.msra.mxu0 0.0
        %994 = vmatprep.subr.mxu0 0.0
        %995 = vmatpush2.xpose.msra.mxu0 0.0
        %996 = vmatprep.subr.mxu0 0.0
        %997 = vmatpush2.xpose.msra.mxu0 0.0
        %998 = vmatprep.subr.mxu0 0.0
        %999 = vmatpush2.xpose.msra.mxu0 0.0
        %1000 = vmatprep.subr.mxu0 0.0
        %1001 = vmatpush2.xpose.msra.mxu0 0.0
        %1002 = vmatprep.subr.mxu0 0.0
        %1003 = vmatpush2.xpose.msra.mxu0 0.0
        %1004 = vmatprep.subr.mxu0 0.0
        %1005 = vmatpush2.xpose.msra.mxu0 0.0
        %1006 = vmatprep.subr.mxu0 0.0
        %1007 = vmatpush2.xpose.msra.mxu0 0.0
        %1008 = vmatprep.subr.mxu0 0.0
        %1009 = vmatpush2.xpose.msra.mxu0 0.0
        %1010 = vmatprep.subr.mxu0 0.0
        %1011 = vmatpush2.xpose.msra.mxu0 0.0
        %1012 = vmatprep.subr.mxu0 0.0
        %1013 = vmatpush2.xpose.msra.mxu0 0.0
        %1014 = vmatprep.subr.mxu0 0.0
        %1015 = vmatpush2.xpose.msra.mxu0 0.0
        %1016 = vmatprep.subr.mxu0 0.0
        %1017 = vmatpush2.xpose.msra.mxu0 0.0
        %1018 = vmatprep.subr.mxu0 0.0
        %1019 = vmatpush2.xpose.msra.mxu0 0.0
        %1020 = vmatprep.mubr.f32.mxu0 0.0
        %1021 = vmatmul.mubr.f32.gmra.mxu0 %v951
        %v1022 = vpop.f32.mrf.mxu0
        %v1023 = vadd.f32 0.0, %v1022
        %v1024 = vpop.f32.mrf.mxu0
        %1025 = vdwg.mxu0
        %v1026 = vsel %vm948, 1, 0
        %v1027 = vlaneseq
        %v1028 = vshrl.u32 %v1027, 7
        %v1029 = vsub.s32 0, %v1028
        %v1030 = vrot.slane %v1026, %v1029
        %vm1031 = vcmp.eq.s32.totalorder %v1030, 1
        %v1032 = vsel %vm1031, -1e+09, %v1023
        %v1033 = vsel %vm949, %v1032, -inf
        %1034 = vmax.xlane.f32.xlu0 %v1033
        %v1035 = vpop.xlane.xlu0 %1034
        %v1036 = vsub.f32 %v1032, %v1035
        %v1037 = vmul.f32 %v1036, 1.442695
        %v1038 = vpow.pop %v1037
        %v1039 = vsel %vm949, %v1038, 0.0
        %1040 = vadd.xlane.f32.xlu0 %v1039
        %v1041 = vpop.xlane.xlu0 %1040
        %v1042 = vrcp.pop %v1041
        %v1043 = vmul.f32 %v1038, %v1042
        %1044 = vrot.lane.b32.xlu0 %v946, 96
        %v1045 = vpop.permute.xlu0 %1044
        %v1048 = vsel %vm949, %v1043, 0
        %1050 = vmatprep.subr.mxu0 0.0
        %1051 = vmatpush1.msra.mxu0 0.0
        %1052 = vmatprep.subr.mxu0 0.0
        %1053 = vmatpush1.msra.mxu0 0.0
        %1054 = vmatprep.subr.mxu0 0.0
        %1055 = vmatpush1.msra.mxu0 0.0
        %1056 = vmatprep.subr.mxu0 0.0
        %1057 = vmatpush1.msra.mxu0 0.0
        %1058 = vmatprep.subr.mxu0 0.0
        %1059 = vmatpush1.msra.mxu0 0.0
        %1060 = vmatprep.subr.mxu0 0.0
        %1061 = vmatpush1.msra.mxu0 0.0
        %1062 = vmatprep.subr.mxu0 0.0
        %1063 = vmatpush1.msra.mxu0 0.0
        %1064 = vmatprep.subr.mxu0 0.0
        %1065 = vmatpush1.msra.mxu0 0.0
        %1066 = vmatprep.subr.mxu0 0.0
        %1067 = vmatpush1.msra.mxu0 0.0
        %1068 = vmatprep.subr.mxu0 0.0
        %1069 = vmatpush1.msra.mxu0 0.0
        %1070 = vmatprep.subr.mxu0 0.0
        %1071 = vmatpush1.msra.mxu0 0.0
        %1072 = vmatprep.subr.mxu0 0.0
        %1073 = vmatpush1.msra.mxu0 0.0
        %1074 = vmatprep.subr.mxu0 0.0
        %1075 = vmatpush1.msra.mxu0 0.0
        %1076 = vmatprep.subr.mxu0 0.0
        %1077 = vmatpush1.msra.mxu0 0.0
        %1078 = vmatprep.subr.mxu0 0.0
        %1079 = vmatpush1.msra.mxu0 0.0
        %1080 = vmatprep.subr.mxu0 0.0
        %1081 = vmatpush1.msra.mxu0 %v1045
        %1082 = vmatprep.subr.mxu0 0.0
        %1083 = vmatpush2.msra.mxu0 0.0
        %1084 = vmatprep.subr.mxu0 0.0
        %1085 = vmatpush2.msra.mxu0 0.0
        %1086 = vmatprep.subr.mxu0 0.0
        %1087 = vmatpush2.msra.mxu0 0.0
        %1088 = vmatprep.subr.mxu0 0.0
        %1089 = vmatpush2.msra.mxu0 0.0
        %1090 = vmatprep.subr.mxu0 0.0
        %1091 = vmatpush2.msra.mxu0 0.0
        %1092 = vmatprep.subr.mxu0 0.0
        %1093 = vmatpush2.msra.mxu0 0.0
        %1094 = vmatprep.subr.mxu0 0.0
        %1095 = vmatpush2.msra.mxu0 0.0
        %1096 = vmatprep.subr.mxu0 0.0
        %1097 = vmatpush2.msra.mxu0 0.0
        %1098 = vmatprep.subr.mxu0 0.0
        %1099 = vmatpush2.msra.mxu0 0.0
        %1100 = vmatprep.subr.mxu0 0.0
        %1101 = vmatpush2.msra.mxu0 0.0
        %1102 = vmatprep.subr.mxu0 0.0
        %1103 = vmatpush2.msra.mxu0 0.0
        %1104 = vmatprep.subr.mxu0 0.0
        %1105 = vmatpush2.msra.mxu0 0.0
        %1106 = vmatprep.subr.mxu0 0.0
        %1107 = vmatpush2.msra.mxu0 0.0
        %1108 = vmatprep.subr.mxu0 0.0
        %1109 = vmatpush2.msra.mxu0 0.0
        %1110 = vmatprep.subr.mxu0 0.0
        %1111 = vmatpush2.msra.mxu0 0.0
        %1112 = vmatprep.subr.mxu0 0.0
        %1113 = vmatpush2.msra.mxu0 0.0
        %1114 = vmatprep.mubr.f32.mxu0 0.0
        %1115 = vmatmul.mubr.f32.gmra.mxu0 %v1048
        %v1116 = vpop.f32.mrf.mxu0
        %v1117 = vadd.f32 0.0, %v1116
        %v1118 = vpop.f32.mrf.mxu0
        %1119 = vdwg.mxu0
        %1120 = vst.msk [vmem:[#allocation3] sm:$0xff] %vm949, %v1117
        %1121 = vrot.lane.b32.xlu0 %v943, 120
        %v1122 = vpop.permute.xlu0 %1121
        %1123 = vrot.lane.b32.xlu0 %v946, 120
        %v1124 = vpop.permute.xlu0 %1123
        %v1125 = vsel %vm949, %v1122, 0
        %v1127 = vsel %vm949, %v1124, 0
        %1129 = vmatprep.subr.mxu0 0.0
        %1130 = vmatpush1.xpose.msra.mxu0 0.0
        %1131 = vmatprep.subr.mxu0 0.0
        %1132 = vmatpush1.xpose.msra.mxu0 0.0
        %1133 = vmatprep.subr.mxu0 0.0
        %1134 = vmatpush1.xpose.msra.mxu0 0.0
        %1135 = vmatprep.subr.mxu0 0.0
        %1136 = vmatpush1.xpose.msra.mxu0 0.0
        %1137 = vmatprep.subr.mxu0 0.0
        %1138 = vmatpush1.xpose.msra.mxu0 0.0
        %1139 = vmatprep.subr.mxu0 0.0
        %1140 = vmatpush1.xpose.msra.mxu0 0.0
        %1141 = vmatprep.subr.mxu0 0.0
        %1142 = vmatpush1.xpose.msra.mxu0 0.0
        %1143 = vmatprep.subr.mxu0 0.0
        %1144 = vmatpush1.xpose.msra.mxu0 0.0
        %1145 = vmatprep.subr.mxu0 0.0
        %1146 = vmatpush1.xpose.msra.mxu0 0.0
        %1147 = vmatprep.subr.mxu0 0.0
        %1148 = vmatpush1.xpose.msra.mxu0 0.0
        %1149 = vmatprep.subr.mxu0 0.0
        %1150 = vmatpush1.xpose.msra.mxu0 0.0
        %1151 = vmatprep.subr.mxu0 0.0
        %1152 = vmatpush1.xpose.msra.mxu0 0.0
        %1153 = vmatprep.subr.mxu0 0.0
        %1154 = vmatpush1.xpose.msra.mxu0 0.0
        %1155 = vmatprep.subr.mxu0 0.0
        %1156 = vmatpush1.xpose.msra.mxu0 0.0
        %1157 = vmatprep.subr.mxu0 0.0
        %1158 = vmatpush1.xpose.msra.mxu0 0.0
        %1159 = vmatprep.subr.mxu0 0.0
        %1160 = vmatpush1.xpose.msra.mxu0 %v1127
        %1161 = vmatprep.subr.mxu0 0.0
        %1162 = vmatpush2.xpose.msra.mxu0 0.0
        %1163 = vmatprep.subr.mxu0 0.0
        %1164 = vmatpush2.xpose.msra.mxu0 0.0
        %1165 = vmatprep.subr.mxu0 0.0
        %1166 = vmatpush2.xpose.msra.mxu0 0.0
        %1167 = vmatprep.subr.mxu0 0.0
        %1168 = vmatpush2.xpose.msra.mxu0 0.0
        %1169 = vmatprep.subr.mxu0 0.0
        %1170 = vmatpush2.xpose.msra.mxu0 0.0
        %1171 = vmatprep.subr.mxu0 0.0
        %1172 = vmatpush2.xpose.msra.mxu0 0.0
        %1173 = vmatprep.subr.mxu0 0.0
        %1174 = vmatpush2.xpose.msra.mxu0 0.0
        %1175 = vmatprep.subr.mxu0 0.0
        %1176 = vmatpush2.xpose.msra.mxu0 0.0
        %1177 = vmatprep.subr.mxu0 0.0
        %1178 = vmatpush2.xpose.msra.mxu0 0.0
        %1179 = vmatprep.subr.mxu0 0.0
        %1180 = vmatpush2.xpose.msra.mxu0 0.0
        %1181 = vmatprep.subr.mxu0 0.0
        %1182 = vmatpush2.xpose.msra.mxu0 0.0
        %1183 = vmatprep.subr.mxu0 0.0
        %1184 = vmatpush2.xpose.msra.mxu0 0.0
        %1185 = vmatprep.subr.mxu0 0.0
        %1186 = vmatpush2.xpose.msra.mxu0 0.0
        %1187 = vmatprep.subr.mxu0 0.0
        %1188 = vmatpush2.xpose.msra.mxu0 0.0
        %1189 = vmatprep.subr.mxu0 0.0
        %1190 = vmatpush2.xpose.msra.mxu0 0.0
        %1191 = vmatprep.subr.mxu0 0.0
        %1192 = vmatpush2.xpose.msra.mxu0 0.0
        %1193 = vmatprep.mubr.f32.mxu0 0.0
        %1194 = vmatmul.mubr.f32.gmra.mxu0 %v1125
        %v1195 = vpop.f32.mrf.mxu0
        %v1196 = vadd.f32 0.0, %v1195
        %v1197 = vpop.f32.mrf.mxu0
        %1198 = vdwg.mxu0
        %v1199 = vsel %vm1031, -1e+09, %v1196
        %v1200 = vsel %vm949, %v1199, -inf
        %1201 = vmax.xlane.f32.xlu0 %v1200
        %v1202 = vpop.xlane.xlu0 %1201
        %v1203 = vsub.f32 %v1199, %v1202
        %v1204 = vmul.f32 %v1203, 1.442695
        %v1205 = vpow.pop %v1204
        %v1206 = vsel %vm949, %v1205, 0.0
        %1207 = vadd.xlane.f32.xlu0 %v1206
        %v1208 = vpop.xlane.xlu0 %1207
        %v1209 = vrcp.pop %v1208
        %v1210 = vmul.f32 %v1205, %v1209
        %1211 = vrot.lane.b32.xlu0 %v946, 88
        %v1212 = vpop.permute.xlu0 %1211
        %v1215 = vsel %vm949, %v1210, 0
        %1217 = vmatprep.subr.mxu0 0.0
        %1218 = vmatpush1.msra.mxu0 0.0
        %1219 = vmatprep.subr.mxu0 0.0
        %1220 = vmatpush1.msra.mxu0 0.0
        %1221 = vmatprep.subr.mxu0 0.0
        %1222 = vmatpush1.msra.mxu0 0.0
        %1223 = vmatprep.subr.mxu0 0.0
        %1224 = vmatpush1.msra.mxu0 0.0
        %1225 = vmatprep.subr.mxu0 0.0
        %1226 = vmatpush1.msra.mxu0 0.0
        %1227 = vmatprep.subr.mxu0 0.0
        %1228 = vmatpush1.msra.mxu0 0.0
        %1229 = vmatprep.subr.mxu0 0.0
        %1230 = vmatpush1.msra.mxu0 0.0
        %1231 = vmatprep.subr.mxu0 0.0
        %1232 = vmatpush1.msra.mxu0 0.0
        %1233 = vmatprep.subr.mxu0 0.0
        %1234 = vmatpush1.msra.mxu0 0.0
        %1235 = vmatprep.subr.mxu0 0.0
        %1236 = vmatpush1.msra.mxu0 0.0
        %1237 = vmatprep.subr.mxu0 0.0
        %1238 = vmatpush1.msra.mxu0 0.0
        %1239 = vmatprep.subr.mxu0 0.0
        %1240 = vmatpush1.msra.mxu0 0.0
        %1241 = vmatprep.subr.mxu0 0.0
        %1242 = vmatpush1.msra.mxu0 0.0
        %1243 = vmatprep.subr.mxu0 0.0
        %1244 = vmatpush1.msra.mxu0 0.0
        %1245 = vmatprep.subr.mxu0 0.0
        %1246 = vmatpush1.msra.mxu0 0.0
        %1247 = vmatprep.subr.mxu0 0.0
        %1248 = vmatpush1.msra.mxu0 %v1212
        %1249 = vmatprep.subr.mxu0 0.0
        %1250 = vmatpush2.msra.mxu0 0.0
        %1251 = vmatprep.subr.mxu0 0.0
        %1252 = vmatpush2.msra.mxu0 0.0
        %1253 = vmatprep.subr.mxu0 0.0
        %1254 = vmatpush2.msra.mxu0 0.0
        %1255 = vmatprep.subr.mxu0 0.0
        %1256 = vmatpush2.msra.mxu0 0.0
        %1257 = vmatprep.subr.mxu0 0.0
        %1258 = vmatpush2.msra.mxu0 0.0
        %1259 = vmatprep.subr.mxu0 0.0
        %1260 = vmatpush2.msra.mxu0 0.0
        %1261 = vmatprep.subr.mxu0 0.0
        %1262 = vmatpush2.msra.mxu0 0.0
        %1263 = vmatprep.subr.mxu0 0.0
        %1264 = vmatpush2.msra.mxu0 0.0
        %1265 = vmatprep.subr.mxu0 0.0
        %1266 = vmatpush2.msra.mxu0 0.0
        %1267 = vmatprep.subr.mxu0 0.0
        %1268 = vmatpush2.msra.mxu0 0.0
        %1269 = vmatprep.subr.mxu0 0.0
        %1270 = vmatpush2.msra.mxu0 0.0
        %1271 = vmatprep.subr.mxu0 0.0
        %1272 = vmatpush2.msra.mxu0 0.0
        %1273 = vmatprep.subr.mxu0 0.0
        %1274 = vmatpush2.msra.mxu0 0.0
        %1275 = vmatprep.subr.mxu0 0.0
        %1276 = vmatpush2.msra.mxu0 0.0
        %1277 = vmatprep.subr.mxu0 0.0
        %1278 = vmatpush2.msra.mxu0 0.0
        %1279 = vmatprep.subr.mxu0 0.0
        %1280 = vmatpush2.msra.mxu0 0.0
        %1281 = vmatprep.mubr.f32.mxu0 0.0
        %1282 = vmatmul.mubr.f32.gmra.mxu0 %v1215
        %v1283 = vpop.f32.mrf.mxu0
        %v1284 = vadd.f32 0.0, %v1283
        %v1285 = vpop.f32.mrf.mxu0
        %1286 = vdwg.mxu0
        %1288 = vrot.lane.b32.xlu0 %v1284, 8
        %v1289 = vpop.permute.xlu0 %1288
        %vm1291 = vcmask 130112
        %1292 = vst.msk [vmem:[#allocation3] sm:$0xff] %vm1291, %v1289
        %1293 = vrot.lane.b32.xlu0 %v943, 112
        %v1294 = vpop.permute.xlu0 %1293
        %1295 = vrot.lane.b32.xlu0 %v946, 112
        %v1296 = vpop.permute.xlu0 %1295
        %v1297 = vsel %vm949, %v1294, 0
        %v1299 = vsel %vm949, %v1296, 0
        %1301 = vmatprep.subr.mxu0 0.0
        %1302 = vmatpush1.xpose.msra.mxu0 0.0
        %1303 = vmatprep.subr.mxu0 0.0
        %1304 = vmatpush1.xpose.msra.mxu0 0.0
        %1305 = vmatprep.subr.mxu0 0.0
        %1306 = vmatpush1.xpose.msra.mxu0 0.0
        %1307 = vmatprep.subr.mxu0 0.0
        %1308 = vmatpush1.xpose.msra.mxu0 0.0
        %1309 = vmatprep.subr.mxu0 0.0
        %1310 = vmatpush1.xpose.msra.mxu0 0.0
        %1311 = vmatprep.subr.mxu0 0.0
        %1312 = vmatpush1.xpose.msra.mxu0 0.0
        %1313 = vmatprep.subr.mxu0 0.0
        %1314 = vmatpush1.xpose.msra.mxu0 0.0
        %1315 = vmatprep.subr.mxu0 0.0
        %1316 = vmatpush1.xpose.msra.mxu0 0.0
        %1317 = vmatprep.subr.mxu0 0.0
        %1318 = vmatpush1.xpose.msra.mxu0 0.0
        %1319 = vmatprep.subr.mxu0 0.0
        %1320 = vmatpush1.xpose.msra.mxu0 0.0
        %1321 = vmatprep.subr.mxu0 0.0
        %1322 = vmatpush1.xpose.msra.mxu0 0.0
        %1323 = vmatprep.subr.mxu0 0.0
        %1324 = vmatpush1.xpose.msra.mxu0 0.0
        %1325 = vmatprep.subr.mxu0 0.0
        %1326 = vmatpush1.xpose.msra.mxu0 0.0
        %1327 = vmatprep.subr.mxu0 0.0
        %1328 = vmatpush1.xpose.msra.mxu0 0.0
        %1329 = vmatprep.subr.mxu0 0.0
        %1330 = vmatpush1.xpose.msra.mxu0 0.0
        %1331 = vmatprep.subr.mxu0 0.0
        %1332 = vmatpush1.xpose.msra.mxu0 %v1299
        %1333 = vmatprep.subr.mxu0 0.0
        %1334 = vmatpush2.xpose.msra.mxu0 0.0
        %1335 = vmatprep.subr.mxu0 0.0
        %1336 = vmatpush2.xpose.msra.mxu0 0.0
        %1337 = vmatprep.subr.mxu0 0.0
        %1338 = vmatpush2.xpose.msra.mxu0 0.0
        %1339 = vmatprep.subr.mxu0 0.0
        %1340 = vmatpush2.xpose.msra.mxu0 0.0
        %1341 = vmatprep.subr.mxu0 0.0
        %1342 = vmatpush2.xpose.msra.mxu0 0.0
        %1343 = vmatprep.subr.mxu0 0.0
        %1344 = vmatpush2.xpose.msra.mxu0 0.0
        %1345 = vmatprep.subr.mxu0 0.0
        %1346 = vmatpush2.xpose.msra.mxu0 0.0
        %1347 = vmatprep.subr.mxu0 0.0
        %1348 = vmatpush2.xpose.msra.mxu0 0.0
        %1349 = vmatprep.subr.mxu0 0.0
        %1350 = vmatpush2.xpose.msra.mxu0 0.0
        %1351 = vmatprep.subr.mxu0 0.0
        %1352 = vmatpush2.xpose.msra.mxu0 0.0
        %1353 = vmatprep.subr.mxu0 0.0
        %1354 = vmatpush2.xpose.msra.mxu0 0.0
        %1355 = vmatprep.subr.mxu0 0.0
        %1356 = vmatpush2.xpose.msra.mxu0 0.0
        %1357 = vmatprep.subr.mxu0 0.0
        %1358 = vmatpush2.xpose.msra.mxu0 0.0
        %1359 = vmatprep.subr.mxu0 0.0
        %1360 = vmatpush2.xpose.msra.mxu0 0.0
        %1361 = vmatprep.subr.mxu0 0.0
        %1362 = vmatpush2.xpose.msra.mxu0 0.0
        %1363 = vmatprep.subr.mxu0 0.0
        %1364 = vmatpush2.xpose.msra.mxu0 0.0
        %1365 = vmatprep.mubr.f32.mxu0 0.0
        %1366 = vmatmul.mubr.f32.gmra.mxu0 %v1297
        %v1367 = vpop.f32.mrf.mxu0
        %v1368 = vadd.f32 0.0, %v1367
        %v1369 = vpop.f32.mrf.mxu0
        %1370 = vdwg.mxu0
        %v1371 = vsel %vm1031, -1e+09, %v1368
        %v1372 = vsel %vm949, %v1371, -inf
        %1373 = vmax.xlane.f32.xlu0 %v1372
        %v1374 = vpop.xlane.xlu0 %1373
        %v1375 = vsub.f32 %v1371, %v1374
        %v1376 = vmul.f32 %v1375, 1.442695
        %v1377 = vpow.pop %v1376
        %v1378 = vsel %vm949, %v1377, 0.0
        %1379 = vadd.xlane.f32.xlu0 %v1378
        %v1380 = vpop.xlane.xlu0 %1379
        %v1381 = vrcp.pop %v1380
        %v1382 = vmul.f32 %v1377, %v1381
        %1383 = vrot.lane.b32.xlu0 %v946, 80
        %v1384 = vpop.permute.xlu0 %1383
        %v1387 = vsel %vm949, %v1382, 0
        %1389 = vmatprep.subr.mxu0 0.0
        %1390 = vmatpush1.msra.mxu0 0.0
        %1391 = vmatprep.subr.mxu0 0.0
        %1392 = vmatpush1.msra.mxu0 0.0
        %1393 = vmatprep.subr.mxu0 0.0
        %1394 = vmatpush1.msra.mxu0 0.0
        %1395 = vmatprep.subr.mxu0 0.0
        %1396 = vmatpush1.msra.mxu0 0.0
        %1397 = vmatprep.subr.mxu0 0.0
        %1398 = vmatpush1.msra.mxu0 0.0
        %1399 = vmatprep.subr.mxu0 0.0
        %1400 = vmatpush1.msra.mxu0 0.0
        %1401 = vmatprep.subr.mxu0 0.0
        %1402 = vmatpush1.msra.mxu0 0.0
        %1403 = vmatprep.subr.mxu0 0.0
        %1404 = vmatpush1.msra.mxu0 0.0
        %1405 = vmatprep.subr.mxu0 0.0
        %1406 = vmatpush1.msra.mxu0 0.0
        %1407 = vmatprep.subr.mxu0 0.0
        %1408 = vmatpush1.msra.mxu0 0.0
        %1409 = vmatprep.subr.mxu0 0.0
        %1410 = vmatpush1.msra.mxu0 0.0
        %1411 = vmatprep.subr.mxu0 0.0
        %1412 = vmatpush1.msra.mxu0 0.0
        %1413 = vmatprep.subr.mxu0 0.0
        %1414 = vmatpush1.msra.mxu0 0.0
        %1415 = vmatprep.subr.mxu0 0.0
        %1416 = vmatpush1.msra.mxu0 0.0
        %1417 = vmatprep.subr.mxu0 0.0
        %1418 = vmatpush1.msra.mxu0 0.0
        %1419 = vmatprep.subr.mxu0 0.0
        %1420 = vmatpush1.msra.mxu0 %v1384
        %1421 = vmatprep.subr.mxu0 0.0
        %1422 = vmatpush2.msra.mxu0 0.0
        %1423 = vmatprep.subr.mxu0 0.0
        %1424 = vmatpush2.msra.mxu0 0.0
        %1425 = vmatprep.subr.mxu0 0.0
        %1426 = vmatpush2.msra.mxu0 0.0
        %1427 = vmatprep.subr.mxu0 0.0
        %1428 = vmatpush2.msra.mxu0 0.0
        %1429 = vmatprep.subr.mxu0 0.0
        %1430 = vmatpush2.msra.mxu0 0.0
        %1431 = vmatprep.subr.mxu0 0.0
        %1432 = vmatpush2.msra.mxu0 0.0
        %1433 = vmatprep.subr.mxu0 0.0
        %1434 = vmatpush2.msra.mxu0 0.0
        %1435 = vmatprep.subr.mxu0 0.0
        %1436 = vmatpush2.msra.mxu0 0.0
        %1437 = vmatprep.subr.mxu0 0.0
        %1438 = vmatpush2.msra.mxu0 0.0
        %1439 = vmatprep.subr.mxu0 0.0
        %1440 = vmatpush2.msra.mxu0 0.0
        %1441 = vmatprep.subr.mxu0 0.0
        %1442 = vmatpush2.msra.mxu0 0.0
        %1443 = vmatprep.subr.mxu0 0.0
        %1444 = vmatpush2.msra.mxu0 0.0
        %1445 = vmatprep.subr.mxu0 0.0
        %1446 = vmatpush2.msra.mxu0 0.0
        %1447 = vmatprep.subr.mxu0 0.0
        %1448 = vmatpush2.msra.mxu0 0.0
        %1449 = vmatprep.subr.mxu0 0.0
        %1450 = vmatpush2.msra.mxu0 0.0
        %1451 = vmatprep.subr.mxu0 0.0
        %1452 = vmatpush2.msra.mxu0 0.0
        %1453 = vmatprep.mubr.f32.mxu0 0.0
        %1454 = vmatmul.mubr.f32.gmra.mxu0 %v1387
        %v1455 = vpop.f32.mrf.mxu0
        %v1456 = vadd.f32 0.0, %v1455
        %v1457 = vpop.f32.mrf.mxu0
        %1458 = vdwg.mxu0
        %1460 = vrot.lane.b32.xlu0 %v1456, 16
        %v1461 = vpop.permute.xlu0 %1460
        %vm1463 = vcmask 195712
        %1464 = vst.msk [vmem:[#allocation3] sm:$0xff] %vm1463, %v1461
        %1465 = vrot.lane.b32.xlu0 %v943, 104
        %v1466 = vpop.permute.xlu0 %1465
        %1467 = vrot.lane.b32.xlu0 %v946, 104
        %v1468 = vpop.permute.xlu0 %1467
        %v1469 = vsel %vm949, %v1466, 0
        %v1471 = vsel %vm949, %v1468, 0
        %1473 = vmatprep.subr.mxu0 0.0
        %1474 = vmatpush1.xpose.msra.mxu0 0.0
        %1475 = vmatprep.subr.mxu0 0.0
        %1476 = vmatpush1.xpose.msra.mxu0 0.0
        %1477 = vmatprep.subr.mxu0 0.0
        %1478 = vmatpush1.xpose.msra.mxu0 0.0
        %1479 = vmatprep.subr.mxu0 0.0
        %1480 = vmatpush1.xpose.msra.mxu0 0.0
        %1481 = vmatprep.subr.mxu0 0.0
        %1482 = vmatpush1.xpose.msra.mxu0 0.0
        %1483 = vmatprep.subr.mxu0 0.0
        %1484 = vmatpush1.xpose.msra.mxu0 0.0
        %1485 = vmatprep.subr.mxu0 0.0
        %1486 = vmatpush1.xpose.msra.mxu0 0.0
        %1487 = vmatprep.subr.mxu0 0.0
        %1488 = vmatpush1.xpose.msra.mxu0 0.0
        %1489 = vmatprep.subr.mxu0 0.0
        %1490 = vmatpush1.xpose.msra.mxu0 0.0
        %1491 = vmatprep.subr.mxu0 0.0
        %1492 = vmatpush1.xpose.msra.mxu0 0.0
        %1493 = vmatprep.subr.mxu0 0.0
        %1494 = vmatpush1.xpose.msra.mxu0 0.0
        %1495 = vmatprep.subr.mxu0 0.0
        %1496 = vmatpush1.xpose.msra.mxu0 0.0
        %1497 = vmatprep.subr.mxu0 0.0
        %1498 = vmatpush1.xpose.msra.mxu0 0.0
        %1499 = vmatprep.subr.mxu0 0.0
        %1500 = vmatpush1.xpose.msra.mxu0 0.0
        %1501 = vmatprep.subr.mxu0 0.0
        %1502 = vmatpush1.xpose.msra.mxu0 0.0
        %1503 = vmatprep.subr.mxu0 0.0
        %1504 = vmatpush1.xpose.msra.mxu0 %v1471
        %1505 = vmatprep.subr.mxu0 0.0
        %1506 = vmatpush2.xpose.msra.mxu0 0.0
        %1507 = vmatprep.subr.mxu0 0.0
        %1508 = vmatpush2.xpose.msra.mxu0 0.0
        %1509 = vmatprep.subr.mxu0 0.0
        %1510 = vmatpush2.xpose.msra.mxu0 0.0
        %1511 = vmatprep.subr.mxu0 0.0
        %1512 = vmatpush2.xpose.msra.mxu0 0.0
        %1513 = vmatprep.subr.mxu0 0.0
        %1514 = vmatpush2.xpose.msra.mxu0 0.0
        %1515 = vmatprep.subr.mxu0 0.0
        %1516 = vmatpush2.xpose.msra.mxu0 0.0
        %1517 = vmatprep.subr.mxu0 0.0
        %1518 = vmatpush2.xpose.msra.mxu0 0.0
        %1519 = vmatprep.subr.mxu0 0.0
        %1520 = vmatpush2.xpose.msra.mxu0 0.0
        %1521 = vmatprep.subr.mxu0 0.0
        %1522 = vmatpush2.xpose.msra.mxu0 0.0
        %1523 = vmatprep.subr.mxu0 0.0
        %1524 = vmatpush2.xpose.msra.mxu0 0.0
        %1525 = vmatprep.subr.mxu0 0.0
        %1526 = vmatpush2.xpose.msra.mxu0 0.0
        %1527 = vmatprep.subr.mxu0 0.0
        %1528 = vmatpush2.xpose.msra.mxu0 0.0
        %1529 = vmatprep.subr.mxu0 0.0
        %1530 = vmatpush2.xpose.msra.mxu0 0.0
        %1531 = vmatprep.subr.mxu0 0.0
        %1532 = vmatpush2.xpose.msra.mxu0 0.0
        %1533 = vmatprep.subr.mxu0 0.0
        %1534 = vmatpush2.xpose.msra.mxu0 0.0
        %1535 = vmatprep.subr.mxu0 0.0
        %1536 = vmatpush2.xpose.msra.mxu0 0.0
        %1537 = vmatprep.mubr.f32.mxu0 0.0
        %1538 = vmatmul.mubr.f32.gmra.mxu0 %v1469
        %v1539 = vpop.f32.mrf.mxu0
        %v1540 = vadd.f32 0.0, %v1539
        %v1541 = vpop.f32.mrf.mxu0
        %1542 = vdwg.mxu0
        %v1543 = vsel %vm1031, -1e+09, %v1540
        %v1544 = vsel %vm949, %v1543, -inf
        %1545 = vmax.xlane.f32.xlu0 %v1544
        %v1546 = vpop.xlane.xlu0 %1545
        %v1547 = vsub.f32 %v1543, %v1546
        %v1548 = vmul.f32 %v1547, 1.442695
        %v1549 = vpow.pop %v1548
        %v1550 = vsel %vm949, %v1549, 0.0
        %1551 = vadd.xlane.f32.xlu0 %v1550
        %v1552 = vpop.xlane.xlu0 %1551
        %v1553 = vrcp.pop %v1552
        %v1554 = vmul.f32 %v1549, %v1553
        %1555 = vrot.lane.b32.xlu0 %v946, 72
        %v1556 = vpop.permute.xlu0 %1555
        %v1559 = vsel %vm949, %v1554, 0
        %1561 = vmatprep.subr.mxu0 0.0
        %1562 = vmatpush1.msra.mxu0 0.0
        %1563 = vmatprep.subr.mxu0 0.0
        %1564 = vmatpush1.msra.mxu0 0.0
        %1565 = vmatprep.subr.mxu0 0.0
        %1566 = vmatpush1.msra.mxu0 0.0
        %1567 = vmatprep.subr.mxu0 0.0
        %1568 = vmatpush1.msra.mxu0 0.0
        %1569 = vmatprep.subr.mxu0 0.0
        %1570 = vmatpush1.msra.mxu0 0.0
        %1571 = vmatprep.subr.mxu0 0.0
        %1572 = vmatpush1.msra.mxu0 0.0
        %1573 = vmatprep.subr.mxu0 0.0
        %1574 = vmatpush1.msra.mxu0 0.0
        %1575 = vmatprep.subr.mxu0 0.0
        %1576 = vmatpush1.msra.mxu0 0.0
        %1577 = vmatprep.subr.mxu0 0.0
        %1578 = vmatpush1.msra.mxu0 0.0
        %1579 = vmatprep.subr.mxu0 0.0
        %1580 = vmatpush1.msra.mxu0 0.0
        %1581 = vmatprep.subr.mxu0 0.0
        %1582 = vmatpush1.msra.mxu0 0.0
        %1583 = vmatprep.subr.mxu0 0.0
        %1584 = vmatpush1.msra.mxu0 0.0
        %1585 = vmatprep.subr.mxu0 0.0
        %1586 = vmatpush1.msra.mxu0 0.0
        %1587 = vmatprep.subr.mxu0 0.0
        %1588 = vmatpush1.msra.mxu0 0.0
        %1589 = vmatprep.subr.mxu0 0.0
        %1590 = vmatpush1.msra.mxu0 0.0
        %1591 = vmatprep.subr.mxu0 0.0
        %1592 = vmatpush1.msra.mxu0 %v1556
        %1593 = vmatprep.subr.mxu0 0.0
        %1594 = vmatpush2.msra.mxu0 0.0
        %1595 = vmatprep.subr.mxu0 0.0
        %1596 = vmatpush2.msra.mxu0 0.0
        %1597 = vmatprep.subr.mxu0 0.0
        %1598 = vmatpush2.msra.mxu0 0.0
        %1599 = vmatprep.subr.mxu0 0.0
        %1600 = vmatpush2.msra.mxu0 0.0
        %1601 = vmatprep.subr.mxu0 0.0
        %1602 = vmatpush2.msra.mxu0 0.0
        %1603 = vmatprep.subr.mxu0 0.0
        %1604 = vmatpush2.msra.mxu0 0.0
        %1605 = vmatprep.subr.mxu0 0.0
        %1606 = vmatpush2.msra.mxu0 0.0
        %1607 = vmatprep.subr.mxu0 0.0
        %1608 = vmatpush2.msra.mxu0 0.0
        %1609 = vmatprep.subr.mxu0 0.0
        %1610 = vmatpush2.msra.mxu0 0.0
        %1611 = vmatprep.subr.mxu0 0.0
        %1612 = vmatpush2.msra.mxu0 0.0
        %1613 = vmatprep.subr.mxu0 0.0
        %1614 = vmatpush2.msra.mxu0 0.0
        %1615 = vmatprep.subr.mxu0 0.0
        %1616 = vmatpush2.msra.mxu0 0.0
        %1617 = vmatprep.subr.mxu0 0.0
        %1618 = vmatpush2.msra.mxu0 0.0
        %1619 = vmatprep.subr.mxu0 0.0
        %1620 = vmatpush2.msra.mxu0 0.0
        %1621 = vmatprep.subr.mxu0 0.0
        %1622 = vmatpush2.msra.mxu0 0.0
        %1623 = vmatprep.subr.mxu0 0.0
        %1624 = vmatpush2.msra.mxu0 0.0
        %1625 = vmatprep.mubr.f32.mxu0 0.0
        %1626 = vmatmul.mubr.f32.gmra.mxu0 %v1559
        %v1627 = vpop.f32.mrf.mxu0
        %v1628 = vadd.f32 0.0, %v1627
        %v1629 = vpop.f32.mrf.mxu0
        %1630 = vdwg.mxu0
        %1632 = vrot.lane.b32.xlu0 %v1628, 24
        %v1633 = vpop.permute.xlu0 %1632
        %vm1635 = vcmask 261312
        %1636 = vst.msk [vmem:[#allocation3] sm:$0xff] %vm1635, %v1633
        %v1637 = vld [vmem:[#allocation3] sm:$0xff]
        %v1638 = vld [vmem:[%s8] sm:$0xff]
        %v1639 = vld [vmem:[%s8 + $0x8] sm:$0xff]
        %v1640 = vld [vmem:[%s8 + $0x10] sm:$0xff]
        %v1641 = vld [vmem:[%s8 + $0x18] sm:$0xff]
        %v1642 = vld [vmem:[#allocation8] sm:$0x1]
        %v1644 = vlaneseq
        %v1645 = vshrl.u32 %v1644, 7
        %v1646 = vsub.s32 0, %v1645
        %v1647 = vrot.slane %v1642, %v1646
        %v1650 = vsel %vm825, %v1637, 0
        %1652 = vmatprep.subr.mxu0 0.0
        %1653 = vmatpush1.msra.mxu0 0.0
        %1654 = vmatprep.subr.mxu0 0.0
        %1655 = vmatpush1.msra.mxu0 0.0
        %1656 = vmatprep.subr.mxu0 0.0
        %1657 = vmatpush1.msra.mxu0 0.0
        %1658 = vmatprep.subr.mxu0 0.0
        %1659 = vmatpush1.msra.mxu0 0.0
        %1660 = vmatprep.subr.mxu0 0.0
        %1661 = vmatpush1.msra.mxu0 0.0
        %1662 = vmatprep.subr.mxu0 0.0
        %1663 = vmatpush1.msra.mxu0 0.0
        %1664 = vmatprep.subr.mxu0 0.0
        %1665 = vmatpush1.msra.mxu0 0.0
        %1666 = vmatprep.subr.mxu0 0.0
        %1667 = vmatpush1.msra.mxu0 0.0
        %1668 = vmatprep.subr.mxu0 0.0
        %1669 = vmatpush1.msra.mxu0 0.0
        %1670 = vmatprep.subr.mxu0 0.0
        %1671 = vmatpush1.msra.mxu0 0.0
        %1672 = vmatprep.subr.mxu0 0.0
        %1673 = vmatpush1.msra.mxu0 0.0
        %1674 = vmatprep.subr.mxu0 0.0
        %1675 = vmatpush1.msra.mxu0 0.0
        %1676 = vmatprep.subr.mxu0 0.0
        %1677 = vmatpush1.msra.mxu0 %v1641
        %1678 = vmatprep.subr.mxu0 0.0
        %1679 = vmatpush1.msra.mxu0 %v1640
        %1680 = vmatprep.subr.mxu0 0.0
        %1681 = vmatpush1.msra.mxu0 %v1639
        %1682 = vmatprep.subr.mxu0 0.0
        %1683 = vmatpush1.msra.mxu0 %v1638
        %1684 = vmatprep.subr.mxu0 0.0
        %1685 = vmatpush2.msra.mxu0 0.0
        %1686 = vmatprep.subr.mxu0 0.0
        %1687 = vmatpush2.msra.mxu0 0.0
        %1688 = vmatprep.subr.mxu0 0.0
        %1689 = vmatpush2.msra.mxu0 0.0
        %1690 = vmatprep.subr.mxu0 0.0
        %1691 = vmatpush2.msra.mxu0 0.0
        %1692 = vmatprep.subr.mxu0 0.0
        %1693 = vmatpush2.msra.mxu0 0.0
        %1694 = vmatprep.subr.mxu0 0.0
        %1695 = vmatpush2.msra.mxu0 0.0
        %1696 = vmatprep.subr.mxu0 0.0
        %1697 = vmatpush2.msra.mxu0 0.0
        %1698 = vmatprep.subr.mxu0 0.0
        %1699 = vmatpush2.msra.mxu0 0.0
        %1700 = vmatprep.subr.mxu0 0.0
        %1701 = vmatpush2.msra.mxu0 0.0
        %1702 = vmatprep.subr.mxu0 0.0
        %1703 = vmatpush2.msra.mxu0 0.0
        %1704 = vmatprep.subr.mxu0 0.0
        %1705 = vmatpush2.msra.mxu0 0.0
        %1706 = vmatprep.subr.mxu0 0.0
        %1707 = vmatpush2.msra.mxu0 0.0
        %1708 = vmatprep.subr.mxu0 0.0
        %1709 = vmatpush2.msra.mxu0 0.0
        %1710 = vmatprep.subr.mxu0 0.0
        %1711 = vmatpush2.msra.mxu0 0.0
        %1712 = vmatprep.subr.mxu0 0.0
        %1713 = vmatpush2.msra.mxu0 0.0
        %1714 = vmatprep.subr.mxu0 0.0
        %1715 = vmatpush2.msra.mxu0 0.0
        %1716 = vmatprep.mubr.f32.mxu0 0.0
        %1717 = vmatmul.mubr.f32.gmra.mxu0 %v1650
        %v1718 = vpop.f32.mrf.mxu0
        %v1719 = vadd.f32 %v1647, %v1718
        %v1720 = vpop.f32.mrf.mxu0
        %1721 = vdwg.mxu0
        %v1722 = vadd.f32 %v822, %v1719
        %v1723 = vld [vmem:[%s10] sm:$0x1]
        %v1724 = vld [vmem:[%s11] sm:$0x1]
        %v1725 = vsel %vm825, %v1722, 0.0
        %1726 = vadd.xlane.f32.xlu0 %v1725
        %v1727 = vpop.xlane.xlu0 %1726
        %v1728 = vmul.f32 %v1727, %v829
        %v1729 = vsub.f32 %v1722, %v1728
        %v1730 = vmul.f32 %v1729, %v1729
        %v1731 = vsel %vm825, %v1730, 0.0
        %1732 = vadd.xlane.f32.xlu0 %v1731
        %v1733 = vpop.xlane.xlu0 %1732
        %v1734 = vmul.f32 %v1733, %v836
        %v1736 = vlaneseq
        %v1737 = vshrl.u32 %v1736, 7
        %v1738 = vsub.s32 0, %v1737
        %v1739 = vrot.slane %v1723, %v1738
        %v1741 = vmul.f32 %v1739, %v1729
        %v1742 = vrsqrt.pop %v1734
        %v1743 = vmul.f32 %v1734, %v1742
        %vm1744 = vcmp.eq.f32.partialorder %v1734, inf
        %v1745 = vsel %vm1744, %v1734, %v1743
        %vm1746 = vcmp.eq.f32.partialorder %v1734, 0.0
        %v1747 = vand.u32 %v1734, 2147483648
        %v1748 = vsel %vm1746, %v1747, %v1745
        %v1749 = vadd.f32 %v1748, 1e-06
        %v1750 = vrcp.pop %v1749
        %v1751 = vmul.f32 %v1741, %v1750
        %v1753 = vlaneseq
        %v1754 = vshrl.u32 %v1753, 7
        %v1755 = vsub.s32 0, %v1754
        %v1756 = vrot.slane %v1724, %v1755
        %v1758 = vadd.f32 %v1751, %v1756
        %v1759 = vld [vmem:[#allocation9] sm:$0xff]
        %v1760 = vld [vmem:[#allocation9 + $0x8] sm:$0xff]
        %v1761 = vld [vmem:[#allocation9 + $0x10] sm:$0xff]
        %v1762 = vld [vmem:[#allocation9 + $0x18] sm:$0xff]
        %v1763 = vld [vmem:[#allocation11] sm:$0x1]
        %v1765 = vlaneseq
        %v1766 = vshrl.u32 %v1765, 7
        %v1767 = vsub.s32 0, %v1766
        %v1768 = vrot.slane %v1763, %v1767
        %v1771 = vsel %vm825, %v1758, 0
        %1773 = vmatprep.subr.mxu0 0.0
        %1774 = vmatpush1.msra.mxu0 0.0
        %1775 = vmatprep.subr.mxu0 0.0
        %1776 = vmatpush1.msra.mxu0 0.0
        %1777 = vmatprep.subr.mxu0 0.0
        %1778 = vmatpush1.msra.mxu0 0.0
        %1779 = vmatprep.subr.mxu0 0.0
        %1780 = vmatpush1.msra.mxu0 0.0
        %1781 = vmatprep.subr.mxu0 0.0
        %1782 = vmatpush1.msra.mxu0 0.0
        %1783 = vmatprep.subr.mxu0 0.0
        %1784 = vmatpush1.msra.mxu0 0.0
        %1785 = vmatprep.subr.mxu0 0.0
        %1786 = vmatpush1.msra.mxu0 0.0
        %1787 = vmatprep.subr.mxu0 0.0
        %1788 = vmatpush1.msra.mxu0 0.0
        %1789 = vmatprep.subr.mxu0 0.0
        %1790 = vmatpush1.msra.mxu0 0.0
        %1791 = vmatprep.subr.mxu0 0.0
        %1792 = vmatpush1.msra.mxu0 0.0
        %1793 = vmatprep.subr.mxu0 0.0
        %1794 = vmatpush1.msra.mxu0 0.0
        %1795 = vmatprep.subr.mxu0 0.0
        %1796 = vmatpush1.msra.mxu0 0.0
        %1797 = vmatprep.subr.mxu0 0.0
        %1798 = vmatpush1.msra.mxu0 %v1762
        %1799 = vmatprep.subr.mxu0 0.0
        %1800 = vmatpush1.msra.mxu0 %v1761
        %1801 = vmatprep.subr.mxu0 0.0
        %1802 = vmatpush1.msra.mxu0 %v1760
        %1803 = vmatprep.subr.mxu0 0.0
        %1804 = vmatpush1.msra.mxu0 %v1759
        %1805 = vmatprep.subr.mxu0 0.0
        %1806 = vmatpush2.msra.mxu0 0.0
        %1807 = vmatprep.subr.mxu0 0.0
        %1808 = vmatpush2.msra.mxu0 0.0
        %1809 = vmatprep.subr.mxu0 0.0
        %1810 = vmatpush2.msra.mxu0 0.0
        %1811 = vmatprep.subr.mxu0 0.0
        %1812 = vmatpush2.msra.mxu0 0.0
        %1813 = vmatprep.subr.mxu0 0.0
        %1814 = vmatpush2.msra.mxu0 0.0
        %1815 = vmatprep.subr.mxu0 0.0
        %1816 = vmatpush2.msra.mxu0 0.0
        %1817 = vmatprep.subr.mxu0 0.0
        %1818 = vmatpush2.msra.mxu0 0.0
        %1819 = vmatprep.subr.mxu0 0.0
        %1820 = vmatpush2.msra.mxu0 0.0
        %1821 = vmatprep.subr.mxu0 0.0
        %1822 = vmatpush2.msra.mxu0 0.0
        %1823 = vmatprep.subr.mxu0 0.0
        %1824 = vmatpush2.msra.mxu0 0.0
        %1825 = vmatprep.subr.mxu0 0.0
        %1826 = vmatpush2.msra.mxu0 0.0
        %1827 = vmatprep.subr.mxu0 0.0
        %1828 = vmatpush2.msra.mxu0 0.0
        %1829 = vmatprep.subr.mxu0 0.0
        %1830 = vmatpush2.msra.mxu0 0.0
        %1831 = vmatprep.subr.mxu0 0.0
        %1832 = vmatpush2.msra.mxu0 0.0
        %1833 = vmatprep.subr.mxu0 0.0
        %1834 = vmatpush2.msra.mxu0 0.0
        %1835 = vmatprep.subr.mxu0 0.0
        %1836 = vmatpush2.msra.mxu0 0.0
        %1837 = vmatprep.mubr.f32.mxu0 0.0
        %1838 = vmatmul.mubr.f32.gmra.mxu0 %v1771
        %v1839 = vpop.f32.mrf.mxu0
        %v1840 = vadd.f32 %v1768, %v1839
        %v1841 = vpop.f32.mrf.mxu0
        %1842 = vdwg.mxu0
        %v1843 = vmax.f32 %v1840, 0.0
        %v1844 = vld [vmem:[%s14] sm:$0xff]
        %v1845 = vld [vmem:[%s14 + $0x8] sm:$0xff]
        %v1846 = vld [vmem:[%s14 + $0x10] sm:$0xff]
        %v1847 = vld [vmem:[%s14 + $0x18] sm:$0xff]
        %v1848 = vld [vmem:[%s14 + $0x20] sm:$0xff]
        %v1849 = vld [vmem:[%s14 + $0x28] sm:$0xff]
        %v1850 = vld [vmem:[%s14 + $0x30] sm:$0xff]
        %v1851 = vld [vmem:[%s14 + $0x38] sm:$0xff]
        %v1852 = vld [vmem:[#allocation12] sm:$0x1]
        %v1854 = vlaneseq
        %v1855 = vshrl.u32 %v1854, 7
        %v1856 = vsub.s32 0, %v1855
        %v1857 = vrot.slane %v1852, %v1856
        %vm1859 = vcmask 523264
        %v1861 = vsel %vm1859, %v1843, 0
        %1863 = vmatprep.subr.mxu0 0.0
        %1864 = vmatpush1.msra.mxu0 0.0
        %1865 = vmatprep.subr.mxu0 0.0
        %1866 = vmatpush1.msra.mxu0 0.0
        %1867 = vmatprep.subr.mxu0 0.0
        %1868 = vmatpush1.msra.mxu0 0.0
        %1869 = vmatprep.subr.mxu0 0.0
        %1870 = vmatpush1.msra.mxu0 0.0
        %1871 = vmatprep.subr.mxu0 0.0
        %1872 = vmatpush1.msra.mxu0 0.0
        %1873 = vmatprep.subr.mxu0 0.0
        %1874 = vmatpush1.msra.mxu0 0.0
        %1875 = vmatprep.subr.mxu0 0.0
        %1876 = vmatpush1.msra.mxu0 0.0
        %1877 = vmatprep.subr.mxu0 0.0
        %1878 = vmatpush1.msra.mxu0 0.0
        %1879 = vmatprep.subr.mxu0 0.0
        %1880 = vmatpush1.msra.mxu0 %v1851
        %1881 = vmatprep.subr.mxu0 0.0
        %1882 = vmatpush1.msra.mxu0 %v1850
        %1883 = vmatprep.subr.mxu0 0.0
        %1884 = vmatpush1.msra.mxu0 %v1849
        %1885 = vmatprep.subr.mxu0 0.0
        %1886 = vmatpush1.msra.mxu0 %v1848
        %1887 = vmatprep.subr.mxu0 0.0
        %1888 = vmatpush1.msra.mxu0 %v1847
        %1889 = vmatprep.subr.mxu0 0.0
        %1890 = vmatpush1.msra.mxu0 %v1846
        %1891 = vmatprep.subr.mxu0 0.0
        %1892 = vmatpush1.msra.mxu0 %v1845
        %1893 = vmatprep.subr.mxu0 0.0
        %1894 = vmatpush1.msra.mxu0 %v1844
        %1895 = vmatprep.subr.mxu0 0.0
        %1896 = vmatpush2.msra.mxu0 0.0
        %1897 = vmatprep.subr.mxu0 0.0
        %1898 = vmatpush2.msra.mxu0 0.0
        %1899 = vmatprep.subr.mxu0 0.0
        %1900 = vmatpush2.msra.mxu0 0.0
        %1901 = vmatprep.subr.mxu0 0.0
        %1902 = vmatpush2.msra.mxu0 0.0
        %1903 = vmatprep.subr.mxu0 0.0
        %1904 = vmatpush2.msra.mxu0 0.0
        %1905 = vmatprep.subr.mxu0 0.0
        %1906 = vmatpush2.msra.mxu0 0.0
        %1907 = vmatprep.subr.mxu0 0.0
        %1908 = vmatpush2.msra.mxu0 0.0
        %1909 = vmatprep.subr.mxu0 0.0
        %1910 = vmatpush2.msra.mxu0 0.0
        %1911 = vmatprep.subr.mxu0 0.0
        %1912 = vmatpush2.msra.mxu0 0.0
        %1913 = vmatprep.subr.mxu0 0.0
        %1914 = vmatpush2.msra.mxu0 0.0
        %1915 = vmatprep.subr.mxu0 0.0
        %1916 = vmatpush2.msra.mxu0 0.0
        %1917 = vmatprep.subr.mxu0 0.0
        %1918 = vmatpush2.msra.mxu0 0.0
        %1919 = vmatprep.subr.mxu0 0.0
        %1920 = vmatpush2.msra.mxu0 0.0
        %1921 = vmatprep.subr.mxu0 0.0
        %1922 = vmatpush2.msra.mxu0 0.0
        %1923 = vmatprep.subr.mxu0 0.0
        %1924 = vmatpush2.msra.mxu0 0.0
        %1925 = vmatprep.subr.mxu0 0.0
        %1926 = vmatpush2.msra.mxu0 0.0
        %1927 = vmatprep.mubr.f32.mxu0 0.0
        %1928 = vmatmul.mubr.f32.gmra.mxu0 %v1861
        %v1929 = vpop.f32.mrf.mxu0
        %v1930 = vadd.f32 %v1857, %v1929
        %v1931 = vpop.f32.mrf.mxu0
        %1932 = vdwg.mxu0
        %v1933 = vadd.f32 %v1722, %v1930
        %1934 = vst.msk [vmem:[%s689] sm:$0xff] %vm825, %v1933
        %p1935 = scmp.lt.s32.totalorder %s39, 1
        %s1936 = scalar_select %p1935, %s39, 1
        %p1937 = scmp.lt.s32.totalorder %s40, 0
        %s1938 = scalar_select %p1937, %s40, 0
        %s1939 = sadd.s32 %s1938, %s1936
        %s1940 = smul.addr %s1939, 8
        %s1941 = scalar_lea.vmem %s18, %s1940
        // Predicated region
        $region121: #{encoder_forward.2} parent=91 // pred_check
          %p1942 = pneg %p455
        $region122: #{encoder_forward.2} parent=91 // pred_check_branch
          %1944 = sbr.rel (%p1942) target = $region124
        $region123: #{encoder_forward.2} parent=91 // pred_region
          _
        $region124: #{encoder_forward.2} parent=91 // pred_fallthru
          _
      $region92: #{encoder_forward.2} parent=5 // pred_fallthru
        _
      %p1945 = scmp.le.s32.totalorder 2, %s30
      // Predicated region
      $region125: #{encoder_forward.2} parent=5 // pred_check
        %p1946 = pneg %p1945
      $region126: #{encoder_forward.2} parent=5 // pred_check_branch
        %1948 = sbr.rel (%p1946) target = $region128
      $region127: #{encoder_forward.2} parent=5 // pred_region
        %s1949 = ssub.s32 %s30, 2
        // Predicated region
        $region129: #{encoder_forward.2} parent=127 // pred_check
          %p1950 = pneg %p461
        $region130: #{encoder_forward.2} parent=127 // pred_check_branch
          %1952 = sbr.rel (%p1950) target = $region132
        $region131: #{encoder_forward.2} parent=127 // pred_region
          %p1953 = scmp.lt.s32.totalorder %s41, 1
          %s1954 = scalar_select %p1953, %s41, 1
          %p1955 = scmp.lt.s32.totalorder %s42, 0
          %s1956 = scalar_select %p1955, %s42, 0
          %s1957 = sadd.s32 %s1956, %s1954
          %s1958 = smul.addr %s1957, 8
          %s1959 = scalar_lea.vmem %s18, %s1958
        $region132: #{encoder_forward.2} parent=127 // pred_fallthru
          _
      $region128: #{encoder_forward.2} parent=5 // pred_fallthru
        _
    $region6: #{encoder_forward.2} parent=1 // loop_footer
      %s34 = sadd.s32 1, %s30
    $region7: #{encoder_forward.2} parent=1 // loop_footer_branch
      %29 = sbr.rel target = $region3
    $region8: #{encoder_forward.2} parent=1 // loop_exit
      _
    %1960 = vsyncpa [#allocation5], 1
    %s1961 = scalar_lea.sflag [#allocation5], 1
    %1962 = vsyncpa %s1961, 1
    %1963 = vsyncpa [#allocation7], 1
    %1964 = vsyncpa [#allocation10], 1
    %1965 = vsyncpa [#allocation13], 1

// kernel: encoder_forward.3
$region0: #{encoder_forward.3}
  #allocation0 [shape = 'u32[]', space=smem, size = 0x4, offset = 0x4, fixed_abs, tag = 'smem constant byte address 0x4 - core index']
  #allocation1 [shape = 'u32[144,128]{1,0:T(1,128)}', space=vmem, size = 0x12000, scoped, tag = 'internal scratch']
  #allocation2 [shape = 'f32[8,64]{1,0:T(8,128)}', space=vmem, size = 0x1000, scoped, tag = 'scratch operand']
  #allocation3 [shape = 'f32[8,32]{1,0:T(8,128)}', space=vmem, size = 0x1000, scoped, tag = 'scratch operand']
  %s0 = inlined_call_operand.vmem [shape: f32[2,8,32], index: 0, kind: input, shape index: {}]
  %s1 = inlined_call_operand.vmem [shape: f32[2,1,8], index: 1, kind: input, shape index: {}]
  %s2 = inlined_call_operand.vmem [shape: f32[1,32], index: 2, kind: input, shape index: {}]
  %s3 = inlined_call_operand.vmem [shape: f32[1,32], index: 3, kind: input, shape index: {}]
  %s4 = inlined_call_operand.vmem [shape: f32[32,32], index: 4, kind: input, shape index: {}]
  %s5 = inlined_call_operand.vmem [shape: f32[1,32], index: 5, kind: input, shape index: {}]
  %s6 = inlined_call_operand.vmem [shape: f32[32,64], index: 6, kind: input, shape index: {}]
  %s7 = inlined_call_operand.vmem [shape: f32[1,64], index: 7, kind: input, shape index: {}]
  %s8 = inlined_call_operand.vmem [shape: f32[32,32], index: 8, kind: input, shape index: {}]
  %s9 = inlined_call_operand.vmem [shape: f32[1,32], index: 9, kind: input, shape index: {}]
  %s10 = inlined_call_operand.vmem [shape: f32[1,32], index: 10, kind: input, shape index: {}]
  %s11 = inlined_call_operand.vmem [shape: f32[1,32], index: 11, kind: input, shape index: {}]
  %s12 = inlined_call_operand.vmem [shape: f32[32,64], index: 12, kind: input, shape index: {}]
  %s13 = inlined_call_operand.vmem [shape: f32[1,64], index: 13, kind: input, shape index: {}]
  %s14 = inlined_call_operand.vmem [shape: f32[64,32], index: 14, kind: input, shape index: {}]
  %s15 = inlined_call_operand.vmem [shape: f32[1,32], index: 15, kind: input, shape index: {}]
  %s16 = inlined_call_operand.vmem [shape: f32[1,32], index: 16, kind: input, shape index: {}]
  %s17 = inlined_call_operand.vmem [shape: f32[1,32], index: 17, kind: input, shape index: {}]
  %s18 = inlined_call_operand.hbm [shape: f32[2,8,32], index: 18, kind: output, shape index: {}]
  %s19 = sld [smem:[#allocation0]]
  $region109: #{encoder_forward.3} parent=0
    _
  %s21 = ssub.s32 1, %s19
  %s22 = scalar_select 0, %s21, %s19
  $region1: #{encoder_forward.3} parent=0
    #allocation4 [shape = 'u8[8192]{0}', space=vmem, size = 0x2000, scoped, tag = 'output window, operand 0']
    #allocation5 [shape = 's32[2]{0}', space=sflag, size = 0x8, scoped, tag = 'scoped memory for encoder_forward.3']
    %23 = vsyncpa [#allocation5], 0
    %s24 = scalar_lea.sflag [#allocation5], 1
    %25 = vsyncpa %s24, 0
    loop: start=0, step=1, limit=4
    $region2: #{encoder_forward.3} parent=1 // loop_pre_header
      _
    $region3: #{encoder_forward.3} parent=1 // loop_header
      %s27 = sphi 0, %s31
      %p28 = scmp.ge.s32.totalorder %s27, 4
      %s34 = sphi 0, %s46
      %s35 = sphi 0, %s42
      %s36 = sphi 0, %s34
      %s37 = sphi 0, %s35
      %s38 = sphi 0, %s36
      %s39 = sphi 0, %s37
      %s49 = sphi 0, %s51
      %s52 = sphi 0, %s49
      %s53 = sphi 0, %s52
      %s69 = sphi 0, %s53
      %s75 = sphi 0, %s77
      %s78 = sphi 0, %s75
      %s79 = sphi 0, %s78
      %s95 = sphi 0, %s79
      %s99 = sphi 0, %s99
      %s101 = sphi 0, %s99
      %s102 = sphi 0, %s101
      %s116 = sphi 0, %s102
      %s120 = sphi 0, %s120
      %s122 = sphi 0, %s120
      %s123 = sphi 0, %s122
      %s137 = sphi 0, %s123
      %s141 = sphi 0, %s141
      %s143 = sphi 0, %s141
      %s144 = sphi 0, %s143
      %s158 = sphi 0, %s144
      %s162 = sphi 0, %s162
      %s164 = sphi 0, %s162
      %s165 = sphi 0, %s164
      %s179 = sphi 0, %s165
      %s183 = sphi 0, %s183
      %s185 = sphi 0, %s183
      %s186 = sphi 0, %s185
      %s200 = sphi 0, %s186
      %s204 = sphi 0, %s204
      %s206 = sphi 0, %s204
      %s207 = sphi 0, %s206
      %s221 = sphi 0, %s207
      %s225 = sphi 0, %s225
      %s227 = sphi 0, %s225
      %s228 = sphi 0, %s227
      %s242 = sphi 0, %s228
      %s246 = sphi 0, %s246
      %s248 = sphi 0, %s246
      %s249 = sphi 0, %s248
      %s263 = sphi 0, %s249
      %s267 = sphi 0, %s267
      %s269 = sphi 0, %s267
      %s270 = sphi 0, %s269
      %s284 = sphi 0, %s270
      %s288 = sphi 0, %s288
      %s290 = sphi 0, %s288
      %s291 = sphi 0, %s290
      %s305 = sphi 0, %s291
      %s309 = sphi 0, %s309
      %s311 = sphi 0, %s309
      %s312 = sphi 0, %s311
      %s326 = sphi 0, %s312
      %s330 = sphi 0, %s330
      %s332 = sphi 0, %s330
      %s333 = sphi 0, %s332
      %s347 = sphi 0, %s333
      %s351 = sphi 0, %s351
      %s353 = sphi 0, %s351
      %s354 = sphi 0, %s353
      %s368 = sphi 0, %s354
      %s372 = sphi 0, %s372
      %s374 = sphi 0, %s372
      %s375 = sphi 0, %s374
      %s389 = sphi 0, %s375
      %s393 = sphi 0, %s393
      %s395 = sphi 0, %s393
      %s396 = sphi 0, %s395
      %s410 = sphi 0, %s396
      %s414 = sphi 0, %s414
      %s416 = sphi 0, %s414
      %s417 = sphi 0, %s416
      %s431 = sphi 0, %s417
      %s439 = sphi 0, %s441
      %s442 = sphi 0, %s439
      %s443 = sphi 0, %s442
      %s459 = sphi 0, %s443
    $region4: #{encoder_forward.3} parent=1 // loop_header_branch
      %30 = sbr.rel (%p28) target = $region8
    $region5: #{encoder_forward.3} parent=1 // loop_body
      %s32 = ssub.s32 %s27, 1
      %s33 = ssub.s32 %s27, 2
      %s40 = sadd.s32 1, %s35
      %p41 = scmp.ge.s32.totalorder %s40, 1
      %s42 = scalar_select %p41, 0, %s40
      %s43 = sadd.s32 1, %s34
      %s44 = scalar_select %p41, %s43, %s34
      %p45 = scmp.ge.s32.totalorder %s44, 2
      %s46 = scalar_select %p45, 0, %s44
      %s47 = ssub.s32 %s34, %s46
      %p48 = scmp.eq.s32.totalorder %s47, 0
      %s50 = sadd.s32 %s49, 1
      %s51 = scalar_select %p48, %s49, %s50
      %p54 = pneg %p48
      %p55 = scmp.eq.s32.totalorder %s27, 1
      %p56 = por %p54, %p55
      %p57 = scmp.ne.s32.totalorder %s49, %s52
      %p58 = scmp.eq.s32.totalorder %s27, 0
      %p59 = por %p57, %p58
      %p60 = scmp.ne.s32.totalorder %s49, %s52
      %p61 = scmp.eq.s32.totalorder %s32, 1
      %p62 = por %p60, %p61
      %p63 = scmp.ne.s32.totalorder %s52, %s53
      %p64 = scmp.eq.s32.totalorder %s32, 0
      %p65 = por %p63, %p64
      %p66 = scmp.ne.s32.totalorder %s52, %s53
      %p67 = scmp.eq.s32.totalorder %s33, 1
      %p68 = por %p66, %p67
      %p70 = scmp.ne.s32.totalorder %s53, %s69
      %p71 = scmp.eq.s32.totalorder %s33, 0
      %p72 = por %p70, %p71
      %s73 = ssub.s32 %s34, %s46
      %p74 = scmp.eq.s32.totalorder %s73, 0
      %s76 = sadd.s32 %s75, 1
      %s77 = scalar_select %p74, %s75, %s76
      %p80 = pneg %p74
      %p81 = scmp.eq.s32.totalorder %s27, 1
      %p82 = por %p80, %p81
      %p83 = scmp.ne.s32.totalorder %s75, %s78
      %p84 = scmp.eq.s32.totalorder %s27, 0
      %p85 = por %p83, %p84
      %p86 = scmp.ne.s32.totalorder %s75, %s78
      %p87 = scmp.eq.s32.totalorder %s32, 1
      %p88 = por %p86, %p87
      %p89 = scmp.ne.s32.totalorder %s78, %s79
      %p90 = scmp.eq.s32.totalorder %s32, 0
      %p91 = por %p89, %p90
      %p92 = scmp.ne.s32.totalorder %s78, %s79
      %p93 = scmp.eq.s32.totalorder %s33, 1
      %p94 = por %p92, %p93
      %p96 = scmp.ne.s32.totalorder %s79, %s95
      %p97 = scmp.eq.s32.totalorder %s33, 0
      %p98 = por %p96, %p97
      %s100 = sadd.s32 %s99, 1
      %p103 = scmp.eq.s32.totalorder %s27, 1
      %p104 = scmp.ne.s32.totalorder %s99, %s101
      %p105 = scmp.eq.s32.totalorder %s27, 0
      %p106 = por %p104, %p105
      %p107 = scmp.ne.s32.totalorder %s99, %s101
      %p108 = scmp.eq.s32.totalorder %s32, 1
      %p109 = por %p107, %p108
      %p110 = scmp.ne.s32.totalorder %s101, %s102
      %p111 = scmp.eq.s32.totalorder %s32, 0
      %p112 = por %p110, %p111
      %p113 = scmp.ne.s32.totalorder %s101, %s102
      %p114 = scmp.eq.s32.totalorder %s33, 1
      %p115 = por %p113, %p114
      %p117 = scmp.ne.s32.totalorder %s102, %s116
      %p118 = scmp.eq.s32.totalorder %s33, 0
      %p119 = por %p117, %p118
      %s121 = sadd.s32 %s120, 1
      %p124 = scmp.eq.s32.totalorder %s27, 1
      %p125 = scmp.ne.s32.totalorder %s120, %s122
      %p126 = scmp.eq.s32.totalorder %s27, 0
      %p127 = por %p125, %p126
      %p128 = scmp.ne.s32.totalorder %s120, %s122
      %p129 = scmp.eq.s32.totalorder %s32, 1
      %p130 = por %p128, %p129
      %p131 = scmp.ne.s32.totalorder %s122, %s123
      %p132 = scmp.eq.s32.totalorder %s32, 0
      %p133 = por %p131, %p132
      %p134 = scmp.ne.s32.totalorder %s122, %s123
      %p135 = scmp.eq.s32.totalorder %s33, 1
      %p136 = por %p134, %p135
      %p138 = scmp.ne.s32.totalorder %s123, %s137
      %p139 = scmp.eq.s32.totalorder %s33, 0
      %p140 = por %p138, %p139
      %s142 = sadd.s32 %s141, 1
      %p145 = scmp.eq.s32.totalorder %s27, 1
      %p146 = scmp.ne.s32.totalorder %s141, %s143
      %p147 = scmp.eq.s32.totalorder %s27, 0
      %p148 = por %p146, %p147
      %p149 = scmp.ne.s32.totalorder %s141, %s143
      %p150 = scmp.eq.s32.totalorder %s32, 1
      %p151 = por %p149, %p150
      %p152 = scmp.ne.s32.totalorder %s143, %s144
      %p153 = scmp.eq.s32.totalorder %s32, 0
      %p154 = por %p152, %p153
      %p155 = scmp.ne.s32.totalorder %s143, %s144
      %p156 = scmp.eq.s32.totalorder %s33, 1
      %p157 = por %p155, %p156
      %p159 = scmp.ne.s32.totalorder %s144, %s158
      %p160 = scmp.eq.s32.totalorder %s33, 0
      %p161 = por %p159, %p160
      %s163 = sadd.s32 %s162, 1
      %p166 = scmp.eq.s32.totalorder %s27, 1
      %p167 = scmp.ne.s32.totalorder %s162, %s164
      %p168 = scmp.eq.s32.totalorder %s27, 0
      %p169 = por %p167, %p168
      %p170 = scmp.ne.s32.totalorder %s162, %s164
      %p171 = scmp.eq.s32.totalorder %s32, 1
      %p172 = por %p170, %p171
      %p173 = scmp.ne.s32.totalorder %s164, %s165
      %p174 = scmp.eq.s32.totalorder %s32, 0
      %p175 = por %p173, %p174
      %p176 = scmp.ne.s32.totalorder %s164, %s165
      %p177 = scmp.eq.s32.totalorder %s33, 1
      %p178 = por %p176, %p177
      %p180 = scmp.ne.s32.totalorder %s165, %s179
      %p181 = scmp.eq.s32.totalorder %s33, 0
      %p182 = por %p180, %p181
      %s184 = sadd.s32 %s183, 1
      %p187 = scmp.eq.s32.totalorder %s27, 1
      %p188 = scmp.ne.s32.totalorder %s183, %s185
      %p189 = scmp.eq.s32.totalorder %s27, 0
      %p190 = por %p188, %p189
      %p191 = scmp.ne.s32.totalorder %s183, %s185
      %p192 = scmp.eq.s32.totalorder %s32, 1
      %p193 = por %p191, %p192
      %p194 = scmp.ne.s32.totalorder %s185, %s186
      %p195 = scmp.eq.s32.totalorder %s32, 0
      %p196 = por %p194, %p195
      %p197 = scmp.ne.s32.totalorder %s185, %s186
      %p198 = scmp.eq.s32.totalorder %s33, 1
      %p199 = por %p197, %p198
      %p201 = scmp.ne.s32.totalorder %s186, %s200
      %p202 = scmp.eq.s32.totalorder %s33, 0
      %p203 = por %p201, %p202
      %s205 = sadd.s32 %s204, 1
      %p208 = scmp.eq.s32.totalorder %s27, 1
      %p209 = scmp.ne.s32.totalorder %s204, %s206
      %p210 = scmp.eq.s32.totalorder %s27, 0
      %p211 = por %p209, %p210
      %p212 = scmp.ne.s32.totalorder %s204, %s206
      %p213 = scmp.eq.s32.totalorder %s32, 1
      %p214 = por %p212, %p213
      %p215 = scmp.ne.s32.totalorder %s206, %s207
      %p216 = scmp.eq.s32.totalorder %s32, 0
      %p217 = por %p215, %p216
      %p218 = scmp.ne.s32.totalorder %s206, %s207
      %p219 = scmp.eq.s32.totalorder %s33, 1
      %p220 = por %p218, %p219
      %p222 = scmp.ne.s32.totalorder %s207, %s221
      %p223 = scmp.eq.s32.totalorder %s33, 0
      %p224 = por %p222, %p223
      %s226 = sadd.s32 %s225, 1
      %p229 = scmp.eq.s32.totalorder %s27, 1
      %p230 = scmp.ne.s32.totalorder %s225, %s227
      %p231 = scmp.eq.s32.totalorder %s27, 0
      %p232 = por %p230, %p231
      %p233 = scmp.ne.s32.totalorder %s225, %s227
      %p234 = scmp.eq.s32.totalorder %s32, 1
      %p235 = por %p233, %p234
      %p236 = scmp.ne.s32.totalorder %s227, %s228
      %p237 = scmp.eq.s32.totalorder %s32, 0
      %p238 = por %p236, %p237
      %p239 = scmp.ne.s32.totalorder %s227, %s228
      %p240 = scmp.eq.s32.totalorder %s33, 1
      %p241 = por %p239, %p240
      %p243 = scmp.ne.s32.totalorder %s228, %s242
      %p244 = scmp.eq.s32.totalorder %s33, 0
      %p245 = por %p243, %p244
      %s247 = sadd.s32 %s246, 1
      %p250 = scmp.eq.s32.totalorder %s27, 1
      %p251 = scmp.ne.s32.totalorder %s246, %s248
      %p252 = scmp.eq.s32.totalorder %s27, 0
      %p253 = por %p251, %p252
      %p254 = scmp.ne.s32.totalorder %s246, %s248
      %p255 = scmp.eq.s32.totalorder %s32, 1
      %p256 = por %p254, %p255
      %p257 = scmp.ne.s32.totalorder %s248, %s249
      %p258 = scmp.eq.s32.totalorder %s32, 0
      %p259 = por %p257, %p258
      %p260 = scmp.ne.s32.totalorder %s248, %s249
      %p261 = scmp.eq.s32.totalorder %s33, 1
      %p262 = por %p260, %p261
      %p264 = scmp.ne.s32.totalorder %s249, %s263
      %p265 = scmp.eq.s32.totalorder %s33, 0
      %p266 = por %p264, %p265
      %s268 = sadd.s32 %s267, 1
      %p271 = scmp.eq.s32.totalorder %s27, 1
      %p272 = scmp.ne.s32.totalorder %s267, %s269
      %p273 = scmp.eq.s32.totalorder %s27, 0
      %p274 = por %p272, %p273
      %p275 = scmp.ne.s32.totalorder %s267, %s269
      %p276 = scmp.eq.s32.totalorder %s32, 1
      %p277 = por %p275, %p276
      %p278 = scmp.ne.s32.totalorder %s269, %s270
      %p279 = scmp.eq.s32.totalorder %s32, 0
      %p280 = por %p278, %p279
      %p281 = scmp.ne.s32.totalorder %s269, %s270
      %p282 = scmp.eq.s32.totalorder %s33, 1
      %p283 = por %p281, %p282
      %p285 = scmp.ne.s32.totalorder %s270, %s284
      %p286 = scmp.eq.s32.totalorder %s33, 0
      %p287 = por %p285, %p286
      %s289 = sadd.s32 %s288, 1
      %p292 = scmp.eq.s32.totalorder %s27, 1
      %p293 = scmp.ne.s32.totalorder %s288, %s290
      %p294 = scmp.eq.s32.totalorder %s27, 0
      %p295 = por %p293, %p294
      %p296 = scmp.ne.s32.totalorder %s288, %s290
      %p297 = scmp.eq.s32.totalorder %s32, 1
      %p298 = por %p296, %p297
      %p299 = scmp.ne.s32.totalorder %s290, %s291
      %p300 = scmp.eq.s32.totalorder %s32, 0
      %p301 = por %p299, %p300
      %p302 = scmp.ne.s32.totalorder %s290, %s291
      %p303 = scmp.eq.s32.totalorder %s33, 1
      %p304 = por %p302, %p303
      %p306 = scmp.ne.s32.totalorder %s291, %s305
      %p307 = scmp.eq.s32.totalorder %s33, 0
      %p308 = por %p306, %p307
      %s310 = sadd.s32 %s309, 1
      %p313 = scmp.eq.s32.totalorder %s27, 1
      %p314 = scmp.ne.s32.totalorder %s309, %s311
      %p315 = scmp.eq.s32.totalorder %s27, 0
      %p316 = por %p314, %p315
      %p317 = scmp.ne.s32.totalorder %s309, %s311
      %p318 = scmp.eq.s32.totalorder %s32, 1
      %p319 = por %p317, %p318
      %p320 = scmp.ne.s32.totalorder %s311, %s312
      %p321 = scmp.eq.s32.totalorder %s32, 0
      %p322 = por %p320, %p321
      %p323 = scmp.ne.s32.totalorder %s311, %s312
      %p324 = scmp.eq.s32.totalorder %s33, 1
      %p325 = por %p323, %p324
      %p327 = scmp.ne.s32.totalorder %s312, %s326
      %p328 = scmp.eq.s32.totalorder %s33, 0
      %p329 = por %p327, %p328
      %s331 = sadd.s32 %s330, 1
      %p334 = scmp.eq.s32.totalorder %s27, 1
      %p335 = scmp.ne.s32.totalorder %s330, %s332
      %p336 = scmp.eq.s32.totalorder %s27, 0
      %p337 = por %p335, %p336
      %p338 = scmp.ne.s32.totalorder %s330, %s332
      %p339 = scmp.eq.s32.totalorder %s32, 1
      %p340 = por %p338, %p339
      %p341 = scmp.ne.s32.totalorder %s332, %s333
      %p342 = scmp.eq.s32.totalorder %s32, 0
      %p343 = por %p341, %p342
      %p344 = scmp.ne.s32.totalorder %s332, %s333
      %p345 = scmp.eq.s32.totalorder %s33, 1
      %p346 = por %p344, %p345
      %p348 = scmp.ne.s32.totalorder %s333, %s347
      %p349 = scmp.eq.s32.totalorder %s33, 0
      %p350 = por %p348, %p349
      %s352 = sadd.s32 %s351, 1
      %p355 = scmp.eq.s32.totalorder %s27, 1
      %p356 = scmp.ne.s32.totalorder %s351, %s353
      %p357 = scmp.eq.s32.totalorder %s27, 0
      %p358 = por %p356, %p357
      %p359 = scmp.ne.s32.totalorder %s351, %s353
      %p360 = scmp.eq.s32.totalorder %s32, 1
      %p361 = por %p359, %p360
      %p362 = scmp.ne.s32.totalorder %s353, %s354
      %p363 = scmp.eq.s32.totalorder %s32, 0
      %p364 = por %p362, %p363
      %p365 = scmp.ne.s32.totalorder %s353, %s354
      %p366 = scmp.eq.s32.totalorder %s33, 1
      %p367 = por %p365, %p366
      %p369 = scmp.ne.s32.totalorder %s354, %s368
      %p370 = scmp.eq.s32.totalorder %s33, 0
      %p371 = por %p369, %p370
      %s373 = sadd.s32 %s372, 1
      %p376 = scmp.eq.s32.totalorder %s27, 1
      %p377 = scmp.ne.s32.totalorder %s372, %s374
      %p378 = scmp.eq.s32.totalorder %s27, 0
      %p379 = por %p377, %p378
      %p380 = scmp.ne.s32.totalorder %s372, %s374
      %p381 = scmp.eq.s32.totalorder %s32, 1
      %p382 = por %p380, %p381
      %p383 = scmp.ne.s32.totalorder %s374, %s375
      %p384 = scmp.eq.s32.totalorder %s32, 0
      %p385 = por %p383, %p384
      %p386 = scmp.ne.s32.totalorder %s374, %s375
      %p387 = scmp.eq.s32.totalorder %s33, 1
      %p388 = por %p386, %p387
      %p390 = scmp.ne.s32.totalorder %s375, %s389
      %p391 = scmp.eq.s32.totalorder %s33, 0
      %p392 = por %p390, %p391
      %s394 = sadd.s32 %s393, 1
      %p397 = scmp.eq.s32.totalorder %s27, 1
      %p398 = scmp.ne.s32.totalorder %s393, %s395
      %p399 = scmp.eq.s32.totalorder %s27, 0
      %p400 = por %p398, %p399
      %p401 = scmp.ne.s32.totalorder %s393, %s395
      %p402 = scmp.eq.s32.totalorder %s32, 1
      %p403 = por %p401, %p402
      %p404 = scmp.ne.s32.totalorder %s395, %s396
      %p405 = scmp.eq.s32.totalorder %s32, 0
      %p406 = por %p404, %p405
      %p407 = scmp.ne.s32.totalorder %s395, %s396
      %p408 = scmp.eq.s32.totalorder %s33, 1
      %p409 = por %p407, %p408
      %p411 = scmp.ne.s32.totalorder %s396, %s410
      %p412 = scmp.eq.s32.totalorder %s33, 0
      %p413 = por %p411, %p412
      %s415 = sadd.s32 %s414, 1
      %p418 = scmp.eq.s32.totalorder %s27, 1
      %p419 = scmp.ne.s32.totalorder %s414, %s416
      %p420 = scmp.eq.s32.totalorder %s27, 0
      %p421 = por %p419, %p420
      %p422 = scmp.ne.s32.totalorder %s414, %s416
      %p423 = scmp.eq.s32.totalorder %s32, 1
      %p424 = por %p422, %p423
      %p425 = scmp.ne.s32.totalorder %s416, %s417
      %p426 = scmp.eq.s32.totalorder %s32, 0
      %p427 = por %p425, %p426
      %p428 = scmp.ne.s32.totalorder %s416, %s417
      %p429 = scmp.eq.s32.totalorder %s33, 1
      %p430 = por %p428, %p429
      %p432 = scmp.ne.s32.totalorder %s417, %s431
      %p433 = scmp.eq.s32.totalorder %s33, 0
      %p434 = por %p432, %p433
      %s435 = ssub.s32 %s34, %s46
      %s436 = ssub.s32 %s35, %s42
      %s437 = sor.u32 %s435, %s436
      %p438 = scmp.eq.s32.totalorder %s437, 0
      %s440 = sadd.s32 %s439, 1
      %s441 = scalar_select %p438, %s439, %s440
      %p444 = pneg %p438
      %p445 = scmp.eq.s32.totalorder %s27, 1
      %p446 = por %p444, %p445
      %p447 = scmp.ne.s32.totalorder %s439, %s442
      %p448 = scmp.eq.s32.totalorder %s27, 0
      %p449 = por %p447, %p448
      %p450 = scmp.ne.s32.totalorder %s439, %s442
      %p451 = scmp.eq.s32.totalorder %s32, 1
      %p452 = por %p450, %p451
      %p453 = scmp.ne.s32.totalorder %s442, %s443
      %p454 = scmp.eq.s32.totalorder %s32, 0
      %p455 = por %p453, %p454
      %p456 = scmp.ne.s32.totalorder %s442, %s443
      %p457 = scmp.eq.s32.totalorder %s33, 1
      %p458 = por %p456, %p457
      %p460 = scmp.ne.s32.totalorder %s443, %s459
      %p461 = scmp.eq.s32.totalorder %s33, 0
      %p462 = por %p460, %p461
      %p463 = scmp.le.s32.totalorder 1, %s27
      %p464 = scmp.lt.s32.totalorder %s27, 3
      %p465 = pnand %p463, %p464
      %p466 = pneg %p465
      // Predicated region
      $region9: #{encoder_forward.3} parent=5 // pred_check
        _
      $region10: #{encoder_forward.3} parent=5 // pred_check_branch
        %468 = sbr.rel (%p465) target = $region12
      $region11: #{encoder_forward.3} parent=5 // pred_region
        %s469 = ssub.s32 %s27, 1
        // Predicated region
        $region13: #{encoder_forward.3} parent=11 // pred_check
          %p470 = pneg %p112
        $region14: #{encoder_forward.3} parent=11 // pred_check_branch
          %472 = sbr.rel (%p470) target = $region16
        $region15: #{encoder_forward.3} parent=11 // pred_region
          _
        $region16: #{encoder_forward.3} parent=11 // pred_fallthru
          _
        // Predicated region
        $region17: #{encoder_forward.3} parent=11 // pred_check
          %p473 = pneg %p133
        $region18: #{encoder_forward.3} parent=11 // pred_check_branch
          %475 = sbr.rel (%p473) target = $region20
        $region19: #{encoder_forward.3} parent=11 // pred_region
          _
        $region20: #{encoder_forward.3} parent=11 // pred_fallthru
          _
        // Predicated region
        $region21: #{encoder_forward.3} parent=11 // pred_check
          %p476 = pneg %p154
        $region22: #{encoder_forward.3} parent=11 // pred_check_branch
          %478 = sbr.rel (%p476) target = $region24
        $region23: #{encoder_forward.3} parent=11 // pred_region
          _
        $region24: #{encoder_forward.3} parent=11 // pred_fallthru
          _
        // Predicated region
        $region25: #{encoder_forward.3} parent=11 // pred_check
          %p479 = pneg %p175
        $region26: #{encoder_forward.3} parent=11 // pred_check_branch
          %481 = sbr.rel (%p479) target = $region28
        $region27: #{encoder_forward.3} parent=11 // pred_region
          _
        $region28: #{encoder_forward.3} parent=11 // pred_fallthru
          _
        // Predicated region
        $region29: #{encoder_forward.3} parent=11 // pred_check
          %p482 = pneg %p196
        $region30: #{encoder_forward.3} parent=11 // pred_check_branch
          %484 = sbr.rel (%p482) target = $region32
        $region31: #{encoder_forward.3} parent=11 // pred_region
          _
        $region32: #{encoder_forward.3} parent=11 // pred_fallthru
          _
        // Predicated region
        $region33: #{encoder_forward.3} parent=11 // pred_check
          %p485 = pneg %p217
        $region34: #{encoder_forward.3} parent=11 // pred_check_branch
          %487 = sbr.rel (%p485) target = $region36
        $region35: #{encoder_forward.3} parent=11 // pred_region
          _
        $region36: #{encoder_forward.3} parent=11 // pred_fallthru
          _
        // Predicated region
        $region37: #{encoder_forward.3} parent=11 // pred_check
          %p488 = pneg %p238
        $region38: #{encoder_forward.3} parent=11 // pred_check_branch
          %490 = sbr.rel (%p488) target = $region40
        $region39: #{encoder_forward.3} parent=11 // pred_region
          _
        $region40: #{encoder_forward.3} parent=11 // pred_fallthru
          _
        // Predicated region
        $region41: #{encoder_forward.3} parent=11 // pred_check
          %p491 = pneg %p259
        $region42: #{encoder_forward.3} parent=11 // pred_check_branch
          %493 = sbr.rel (%p491) target = $region44
        $region43: #{encoder_forward.3} parent=11 // pred_region
          _
        $region44: #{encoder_forward.3} parent=11 // pred_fallthru
          _
        // Predicated region
        $region45: #{encoder_forward.3} parent=11 // pred_check
          %p494 = pneg %p280
        $region46: #{encoder_forward.3} parent=11 // pred_check_branch
          %496 = sbr.rel (%p494) target = $region48
        $region47: #{encoder_forward.3} parent=11 // pred_region
          _
        $region48: #{encoder_forward.3} parent=11 // pred_fallthru
          _
        // Predicated region
        $region49: #{encoder_forward.3} parent=11 // pred_check
          %p497 = pneg %p301
        $region50: #{encoder_forward.3} parent=11 // pred_check_branch
          %499 = sbr.rel (%p497) target = $region52
        $region51: #{encoder_forward.3} parent=11 // pred_region
          _
        $region52: #{encoder_forward.3} parent=11 // pred_fallthru
          _
        // Predicated region
        $region53: #{encoder_forward.3} parent=11 // pred_check
          %p500 = pneg %p322
        $region54: #{encoder_forward.3} parent=11 // pred_check_branch
          %502 = sbr.rel (%p500) target = $region56
        $region55: #{encoder_forward.3} parent=11 // pred_region
          _
        $region56: #{encoder_forward.3} parent=11 // pred_fallthru
          _
        // Predicated region
        $region57: #{encoder_forward.3} parent=11 // pred_check
          %p503 = pneg %p343
        $region58: #{encoder_forward.3} parent=11 // pred_check_branch
          %505 = sbr.rel (%p503) target = $region60
        $region59: #{encoder_forward.3} parent=11 // pred_region
          _
        $region60: #{encoder_forward.3} parent=11 // pred_fallthru
          _
        // Predicated region
        $region61: #{encoder_forward.3} parent=11 // pred_check
          %p506 = pneg %p364
        $region62: #{encoder_forward.3} parent=11 // pred_check_branch
          %508 = sbr.rel (%p506) target = $region64
        $region63: #{encoder_forward.3} parent=11 // pred_region
          _
        $region64: #{encoder_forward.3} parent=11 // pred_fallthru
          _
        // Predicated region
        $region65: #{encoder_forward.3} parent=11 // pred_check
          %p509 = pneg %p385
        $region66: #{encoder_forward.3} parent=11 // pred_check_branch
          %511 = sbr.rel (%p509) target = $region68
        $region67: #{encoder_forward.3} parent=11 // pred_region
          _
        $region68: #{encoder_forward.3} parent=11 // pred_fallthru
          _
        // Predicated region
        $region69: #{encoder_forward.3} parent=11 // pred_check
          %p512 = pneg %p406
        $region70: #{encoder_forward.3} parent=11 // pred_check_branch
          %514 = sbr.rel (%p512) target = $region72
        $region71: #{encoder_forward.3} parent=11 // pred_region
          _
        $region72: #{encoder_forward.3} parent=11 // pred_fallthru
          _
        // Predicated region
        $region73: #{encoder_forward.3} parent=11 // pred_check
          %p515 = pneg %p427
        $region74: #{encoder_forward.3} parent=11 // pred_check_branch
          %517 = sbr.rel (%p515) target = $region76
        $region75: #{encoder_forward.3} parent=11 // pred_region
          _
        $region76: #{encoder_forward.3} parent=11 // pred_fallthru
          _
      $region12: #{encoder_forward.3} parent=5 // pred_fallthru
        _
      %p518 = scmp.lt.s32.totalorder %s27, 2
      // Predicated region
      $region77: #{encoder_forward.3} parent=5 // pred_check
        %p519 = pneg %p518
      $region78: #{encoder_forward.3} parent=5 // pred_check_branch
        %521 = sbr.rel (%p519) target = $region80
      $region79: #{encoder_forward.3} parent=5 // pred_region
        // Predicated region
        $region81: #{encoder_forward.3} parent=79 // pred_check
          %p522 = pneg %p59
        $region82: #{encoder_forward.3} parent=79 // pred_check_branch
          %524 = sbr.rel (%p522) target = $region84
        $region83: #{encoder_forward.3} parent=79 // pred_region
          %p525 = scmp.lt.s32.totalorder %s34, 1
          %s526 = scalar_select %p525, %s34, 1
          %s527 = smul.addr %s526, 8
          %s528 = scalar_lea.vmem %s0, %s527
        $region84: #{encoder_forward.3} parent=79 // pred_fallthru
          _
        // Predicated region
        $region85: #{encoder_forward.3} parent=79 // pred_check
          %p529 = pneg %p85
        $region86: #{encoder_forward.3} parent=79 // pred_check_branch
          %531 = sbr.rel (%p529) target = $region88
        $region87: #{encoder_forward.3} parent=79 // pred_region
          %p532 = scmp.lt.s32.totalorder %s34, 1
          %s533 = scalar_select %p532, %s34, 1
          %s534 = scalar_lea.vmem %s1, %s533
        $region88: #{encoder_forward.3} parent=79 // pred_fallthru
          _
      $region80: #{encoder_forward.3} parent=5 // pred_fallthru
        _
      %p535 = scmp.le.s32.totalorder 1, %s27
      %p536 = scmp.lt.s32.totalorder %s27, 3
      %p537 = pnand %p535, %p536
      %p538 = pneg %p537
      // Predicated region
      $region89: #{encoder_forward.3} parent=5 // pred_check
        _
      $region90: #{encoder_forward.3} parent=5 // pred_check_branch
        %540 = sbr.rel (%p537) target = $region92
      $region91: #{encoder_forward.3} parent=5 // pred_region
        %s541 = ssub.s32 %s27, 1
        %p542 = scmp.lt.s32.totalorder %s36, 1
        %s543 = scalar_select %p542, %s36, 1
        %s544 = smul.addr %s543, 8
        %s545 = scalar_lea.vmem %s0, %s544
        %p546 = pneg %p65
        %p547 = pneg %p62
        %p548 = scmp.lt.s32.totalorder %s36, 1
        %s549 = scalar_select %p548, %s36, 1
        %s550 = scalar_lea.vmem %s1, %s549
        %p551 = pneg %p91
        %p552 = pneg %p88
        %p553 = pneg %p112
        %p554 = pneg %p109
        %p555 = pneg %p133
        %p556 = pneg %p130
        %p557 = pneg %p154
        %p558 = pneg %p151
        %p559 = pneg %p175
        %p560 = pneg %p172
        %p561 = pneg %p196
        %p562 = pneg %p193
        %p563 = pneg %p217
        %p564 = pneg %p214
        %p565 = pneg %p238
        %p566 = pneg %p235
        %p567 = pneg %p259
        %p568 = pneg %p256
        %p569 = pneg %p280
        %p570 = pneg %p277
        %p571 = pneg %p301
        %p572 = pneg %p298
        %p573 = pneg %p322
        %p574 = pneg %p319
        %p575 = pneg %p343
        %p576 = pneg %p340
        %p577 = pneg %p364
        %p578 = pneg %p361
        %p579 = pneg %p385
        %p580 = pneg %p382
        %p581 = pneg %p406
        %p582 = pneg %p403
        %p583 = pneg %p427
        %p584 = pneg %p424
        %p585 = pneg %p455
        %p586 = pneg %p452
        %s587 = sand.u32 %s442, 1
        %s588 = scalar_lea.sflag [#allocation5], %s587
        %s589 = sand.u32 %s442, 1
        %s590 = smul.addr %s589, 8
        %s591 = scalar_lea.vmem [#allocation4], %s590
        %p592 = scmp.lt.s32.totalorder %s36, 1
        %s593 = scalar_select %p592, %s36, 1
        %s594 = smul.addr %s593, 8
        %s595 = scalar_lea.vmem %s0, %s594
        %p596 = scmp.lt.s32.totalorder %s36, 1
        %s597 = scalar_select %p596, %s36, 1
        %s598 = scalar_lea.vmem %s1, %s597
        %p599 = scmp.eq.s32.totalorder %s37, 0
        // Predicated region
        $region93: #{encoder_forward.3} parent=91 // pred_check
          %p600 = pneg %p599
        $region94: #{encoder_forward.3} parent=91 // pred_check_branch
          %602 = sbr.rel (%p600) target = $region96
        $region95: #{encoder_forward.3} parent=91 // pred_region
          %v603 = vld [vmem:[%s595] sm:$0xff]
          %v604 = vld [vmem:[%s2] sm:$0x1]
          %v605 = vld [vmem:[%s3] sm:$0x1]
          %vm606 = vcmask 261120
          %v607 = vsel %vm606, %v603, 0.0
          %608 = vadd.xlane.f32.xlu0 %v607
          %v609 = vpop.xlane.xlu0 %608
          %v610 = vrcp.pop 32.0
          %v611 = vmul.f32 %v609, %v610
          %v612 = vsub.f32 %v603, %v611
          %v613 = vmul.f32 %v612, %v612
          %v614 = vsel %vm606, %v613, 0.0
          %615 = vadd.xlane.f32.xlu0 %v614
          %v616 = vpop.xlane.xlu0 %615
          %v617 = vrcp.pop 31.0
          %v618 = vmul.f32 %v616, %v617
          %v620 = vlaneseq
          %v621 = vshrl.u32 %v620, 7
          %v622 = vsub.s32 0, %v621
          %v623 = vrot.slane %v604, %v622
          %v625 = vmul.f32 %v623, %v612
          %v626 = vrsqrt.pop %v618
          %v627 = vmul.f32 %v618, %v626
          %vm628 = vcmp.eq.f32.partialorder %v618, inf
          %v629 = vsel %vm628, %v618, %v627
          %vm630 = vcmp.eq.f32.partialorder %v618, 0.0
          %v631 = vand.u32 %v618, 2147483648
          %v632 = vsel %vm630, %v631, %v629
          %v633 = vadd.f32 %v632, 1e-06
          %v634 = vrcp.pop %v633
          %v635 = vmul.f32 %v625, %v634
          %v637 = vlaneseq
          %v638 = vshrl.u32 %v637, 7
          %v639 = vsub.s32 0, %v638
          %v640 = vrot.slane %v605, %v639
          %v642 = vadd.f32 %v635, %v640
          %v643 = vld [vmem:[%s6] sm:$0xff]
          %v644 = vld [vmem:[%s6 + $0x8] sm:$0xff]
          %v645 = vld [vmem:[%s6 + $0x10] sm:$0xff]
          %v646 = vld [vmem:[%s6 + $0x18] sm:$0xff]
          %v647 = vld [vmem:[%s7] sm:$0x1]
          %v649 = vlaneseq
          %v650 = vshrl.u32 %v649, 7
          %v651 = vsub.s32 0, %v650
          %v652 = vrot.slane %v647, %v651
          %v655 = vsel %vm606, %v642, 0
          %657 = vmatprep.subr.mxu0 0.0
          %658 = vmatpush1.msra.mxu0 0.0
          %659 = vmatprep.subr.mxu0 0.0
          %660 = vmatpush1.msra.mxu0 0.0
          %661 = vmatprep.subr.mxu0 0.0
          %662 = vmatpush1.msra.mxu0 0.0
          %663 = vmatprep.subr.mxu0 0.0
          %664 = vmatpush1.msra.mxu0 0.0
          %665 = vmatprep.subr.mxu0 0.0
          %666 = vmatpush1.msra.mxu0 0.0
          %667 = vmatprep.subr.mxu0 0.0
          %668 = vmatpush1.msra.mxu0 0.0
          %669 = vmatprep.subr.mxu0 0.0
          %670 = vmatpush1.msra.mxu0 0.0
          %671 = vmatprep.subr.mxu0 0.0
          %672 = vmatpush1.msra.mxu0 0.0
          %673 = vmatprep.subr.mxu0 0.0
          %674 = vmatpush1.msra.mxu0 0.0
          %675 = vmatprep.subr.mxu0 0.0
          %676 = vmatpush1.msra.mxu0 0.0
          %677 = vmatprep.subr.mxu0 0.0
          %678 = vmatpush1.msra.mxu0 0.0
          %679 = vmatprep.subr.mxu0 0.0
          %680 = vmatpush1.msra.mxu0 0.0
          %681 = vmatprep.subr.mxu0 0.0
          %682 = vmatpush1.msra.mxu0 %v646
          %683 = vmatprep.subr.mxu0 0.0
          %684 = vmatpush1.msra.mxu0 %v645
          %685 = vmatprep.subr.mxu0 0.0
          %686 = vmatpush1.msra.mxu0 %v644
          %687 = vmatprep.subr.mxu0 0.0
          %688 = vmatpush1.msra.mxu0 %v643
          %689 = vmatprep.subr.mxu0 0.0
          %690 = vmatpush2.msra.mxu0 0.0
          %691 = vmatprep.subr.mxu0 0.0
          %692 = vmatpush2.msra.mxu0 0.0
          %693 = vmatprep.subr.mxu0 0.0
          %694 = vmatpush2.msra.mxu0 0.0
          %695 = vmatprep.subr.mxu0 0.0
          %696 = vmatpush2.msra.mxu0 0.0
          %697 = vmatprep.subr.mxu0 0.0
          %698 = vmatpush2.msra.mxu0 0.0
          %699 = vmatprep.subr.mxu0 0.0
          %700 = vmatpush2.msra.mxu0 0.0
          %701 = vmatprep.subr.mxu0 0.0
          %702 = vmatpush2.msra.mxu0 0.0
          %703 = vmatprep.subr.mxu0 0.0
          %704 = vmatpush2.msra.mxu0 0.0
          %705 = vmatprep.subr.mxu0 0.0
          %706 = vmatpush2.msra.mxu0 0.0
          %707 = vmatprep.subr.mxu0 0.0
          %708 = vmatpush2.msra.mxu0 0.0
          %709 = vmatprep.subr.mxu0 0.0
          %710 = vmatpush2.msra.mxu0 0.0
          %711 = vmatprep.subr.mxu0 0.0
          %712 = vmatpush2.msra.mxu0 0.0
          %713 = vmatprep.subr.mxu0 0.0
          %714 = vmatpush2.msra.mxu0 0.0
          %715 = vmatprep.subr.mxu0 0.0
          %716 = vmatpush2.msra.mxu0 0.0
          %717 = vmatprep.subr.mxu0 0.0
          %718 = vmatpush2.msra.mxu0 0.0
          %719 = vmatprep.subr.mxu0 0.0
          %720 = vmatpush2.msra.mxu0 0.0
          %721 = vmatprep.mubr.f32.mxu0 0.0
          %722 = vmatmul.mubr.f32.gmra.mxu0 %v655
          %v723 = vpop.f32.mrf.mxu0
          %v724 = vadd.f32 %v652, %v723
          %v725 = vpop.f32.mrf.mxu0
          %726 = vdwg.mxu0
          %vm727 = vcmask 523264
          %728 = vst.msk [vmem:[#allocation2] sm:$0xff] %vm727, %v724
        $region96: #{encoder_forward.3} parent=91 // pred_fallthru
          _
        %s729 = smul.u32 %s37, 8
        %s730 = scalar_lea.vmem %s595, %s729
        %v731 = vld [vmem:[%s730] sm:$0xff]
        %v732 = vld [vmem:[%s2] sm:$0x1]
        %v733 = vld [vmem:[%s3] sm:$0x1]
        %vm734 = vcmask 261120
        %v735 = vsel %vm734, %v731, 0.0
        %736 = vadd.xlane.f32.xlu0 %v735
        %v737 = vpop.xlane.xlu0 %736
        %v738 = vrcp.pop 32.0
        %v739 = vmul.f32 %v737, %v738
        %v740 = vsub.f32 %v731, %v739
        %v741 = vmul.f32 %v740, %v740
        %v742 = vsel %vm734, %v741, 0.0
        %743 = vadd.xlane.f32.xlu0 %v742
        %v744 = vpop.xlane.xlu0 %743
        %v745 = vrcp.pop 31.0
        %v746 = vmul.f32 %v744, %v745
        %v748 = vlaneseq
        %v749 = vshrl.u32 %v748, 7
        %v750 = vsub.s32 0, %v749
        %v751 = vrot.slane %v732, %v750
        %v753 = vmul.f32 %v751, %v740
        %v754 = vrsqrt.pop %v746
        %v755 = vmul.f32 %v746, %v754
        %vm756 = vcmp.eq.f32.partialorder %v746, inf
        %v757 = vsel %vm756, %v746, %v755
        %vm758 = vcmp.eq.f32.partialorder %v746, 0.0
        %v759 = vand.u32 %v746, 2147483648
        %v760 = vsel %vm758, %v759, %v757
        %v761 = vadd.f32 %v760, 1e-06
        %v762 = vrcp.pop %v761
        %v763 = vmul.f32 %v753, %v762
        %v765 = vlaneseq
        %v766 = vshrl.u32 %v765, 7
        %v767 = vsub.s32 0, %v766
        %v768 = vrot.slane %v733, %v767
        %v770 = vadd.f32 %v763, %v768
        %v771 = vld [vmem:[%s4] sm:$0xff]
        %v772 = vld [vmem:[%s4 + $0x8] sm:$0xff]
        %v773 = vld [vmem:[%s4 + $0x10] sm:$0xff]
        %v774 = vld [vmem:[%s4 + $0x18] sm:$0xff]
        %v775 = vld [vmem:[%s5] sm:$0x1]
        %v777 = vlaneseq
        %v778 = vshrl.u32 %v777, 7
        %v779 = vsub.s32 0, %v778
        %v780 = vrot.slane %v775, %v779
        %v783 = vsel %vm734, %v770, 0
        %785 = vmatprep.subr.mxu0 0.0
        %786 = vmatpush1.msra.mxu0 0.0
        %787 = vmatprep.subr.mxu0 0.0
        %788 = vmatpush1.msra.mxu0 0.0
        %789 = vmatprep.subr.mxu0 0.0
        %790 = vmatpush1.msra.mxu0 0.0
        %791 = vmatprep.subr.mxu0 0.0
        %792 = vmatpush1.msra.mxu0 0.0
        %793 = vmatprep.subr.mxu0 0.0
        %794 = vmatpush1.msra.mxu0 0.0
        %795 = vmatprep.subr.mxu0 0.0
        %796 = vmatpush1.msra.mxu0 0.0
        %797 = vmatprep.subr.mxu0 0.0
        %798 = vmatpush1.msra.mxu0 0.0
        %799 = vmatprep.subr.mxu0 0.0
        %800 = vmatpush1.msra.mxu0 0.0
        %801 = vmatprep.subr.mxu0 0.0
        %802 = vmatpush1.msra.mxu0 0.0
        %803 = vmatprep.subr.mxu0 0.0
        %804 = vmatpush1.msra.mxu0 0.0
        %805 = vmatprep.subr.mxu0 0.0
        %806 = vmatpush1.msra.mxu0 0.0
        %807 = vmatprep.subr.mxu0 0.0
        %808 = vmatpush1.msra.mxu0 0.0
        %809 = vmatprep.subr.mxu0 0.0
        %810 = vmatpush1.msra.mxu0 %v774
        %811 = vmatprep.subr.mxu0 0.0
        %812 = vmatpush1.msra.mxu0 %v773
        %813 = vmatprep.subr.mxu0 0.0
        %814 = vmatpush1.msra.mxu0 %v772
        %815 = vmatprep.subr.mxu0 0.0
        %816 = vmatpush1.msra.mxu0 %v771
        %817 = vmatprep.subr.mxu0 0.0
        %818 = vmatpush2.msra.mxu0 0.0
        %819 = vmatprep.subr.mxu0 0.0
        %820 = vmatpush2.msra.mxu0 0.0
        %821 = vmatprep.subr.mxu0 0.0
        %822 = vmatpush2.msra.mxu0 0.0
        %823 = vmatprep.subr.mxu0 0.0
        %824 = vmatpush2.msra.mxu0 0.0
        %825 = vmatprep.subr.mxu0 0.0
        %826 = vmatpush2.msra.mxu0 0.0
        %827 = vmatprep.subr.mxu0 0.0
        %828 = vmatpush2.msra.mxu0 0.0
        %829 = vmatprep.subr.mxu0 0.0
        %830 = vmatpush2.msra.mxu0 0.0
        %831 = vmatprep.subr.mxu0 0.0
        %832 = vmatpush2.msra.mxu0 0.0
        %833 = vmatprep.subr.mxu0 0.0
        %834 = vmatpush2.msra.mxu0 0.0
        %835 = vmatprep.subr.mxu0 0.0
        %836 = vmatpush2.msra.mxu0 0.0
        %837 = vmatprep.subr.mxu0 0.0
        %838 = vmatpush2.msra.mxu0 0.0
        %839 = vmatprep.subr.mxu0 0.0
        %840 = vmatpush2.msra.mxu0 0.0
        %841 = vmatprep.subr.mxu0 0.0
        %842 = vmatpush2.msra.mxu0 0.0
        %843 = vmatprep.subr.mxu0 0.0
        %844 = vmatpush2.msra.mxu0 0.0
        %845 = vmatprep.subr.mxu0 0.0
        %846 = vmatpush2.msra.mxu0 0.0
        %847 = vmatprep.subr.mxu0 0.0
        %848 = vmatpush2.msra.mxu0 0.0
        %849 = vmatprep.mubr.f32.mxu0 0.0
        %850 = vmatmul.mubr.f32.gmra.mxu0 %v783
        %v851 = vpop.f32.mrf.mxu0
        %v852 = vadd.f32 %v780, %v851
        %v853 = vpop.f32.mrf.mxu0
        %854 = vdwg.mxu0
        %v855 = vld [vmem:[#allocation2] sm:$0xff]
        %v856 = vld [vmem:[%s598] sm:$0x1]
        %vm857 = vcmp.eq.f32.partialorder %v856, 0.0
        %vm858 = vcmask 64512
        %v860 = vsel %vm858, %v852, 0
        %v863 = vsel %vm858, %v855, 0
        %865 = vmatprep.subr.mxu0 0.0
        %866 = vmatpush1.xpose.msra.mxu0 0.0
        %867 = vmatprep.subr.mxu0 0.0
        %868 = vmatpush1.xpose.msra.mxu0 0.0
        %869 = vmatprep.subr.mxu0 0.0
        %870 = vmatpush1.xpose.msra.mxu0 0.0
        %871 = vmatprep.subr.mxu0 0.0
        %872 = vmatpush1.xpose.msra.mxu0 0.0
        %873 = vmatprep.subr.mxu0 0.0
        %874 = vmatpush1.xpose.msra.mxu0 0.0
        %875 = vmatprep.subr.mxu0 0.0
        %876 = vmatpush1.xpose.msra.mxu0 0.0
        %877 = vmatprep.subr.mxu0 0.0
        %878 = vmatpush1.xpose.msra.mxu0 0.0
        %879 = vmatprep.subr.mxu0 0.0
        %880 = vmatpush1.xpose.msra.mxu0 0.0
        %881 = vmatprep.subr.mxu0 0.0
        %882 = vmatpush1.xpose.msra.mxu0 0.0
        %883 = vmatprep.subr.mxu0 0.0
        %884 = vmatpush1.xpose.msra.mxu0 0.0
        %885 = vmatprep.subr.mxu0 0.0
        %886 = vmatpush1.xpose.msra.mxu0 0.0
        %887 = vmatprep.subr.mxu0 0.0
        %888 = vmatpush1.xpose.msra.mxu0 0.0
        %889 = vmatprep.subr.mxu0 0.0
        %890 = vmatpush1.xpose.msra.mxu0 0.0
        %891 = vmatprep.subr.mxu0 0.0
        %892 = vmatpush1.xpose.msra.mxu0 0.0
        %893 = vmatprep.subr.mxu0 0.0
        %894 = vmatpush1.xpose.msra.mxu0 0.0
        %895 = vmatprep.subr.mxu0 0.0
        %896 = vmatpush1.xpose.msra.mxu0 %v863
        %897 = vmatprep.subr.mxu0 0.0
        %898 = vmatpush2.xpose.msra.mxu0 0.0
        %899 = vmatprep.subr.mxu0 0.0
        %900 = vmatpush2.xpose.msra.mxu0 0.0
        %901 = vmatprep.subr.mxu0 0.0
        %902 = vmatpush2.xpose.msra.mxu0 0.0
        %903 = vmatprep.subr.mxu0 0.0
        %904 = vmatpush2.xpose.msra.mxu0 0.0
        %905 = vmatprep.subr.mxu0 0.0
        %906 = vmatpush2.xpose.msra.mxu0 0.0
        %907 = vmatprep.subr.mxu0 0.0
        %908 = vmatpush2.xpose.msra.mxu0 0.0
        %909 = vmatprep.subr.mxu0 0.0
        %910 = vmatpush2.xpose.msra.mxu0 0.0
        %911 = vmatprep.subr.mxu0 0.0
        %912 = vmatpush2.xpose.msra.mxu0 0.0
        %913 = vmatprep.subr.mxu0 0.0
        %914 = vmatpush2.xpose.msra.mxu0 0.0
        %915 = vmatprep.subr.mxu0 0.0
        %916 = vmatpush2.xpose.msra.mxu0 0.0
        %917 = vmatprep.subr.mxu0 0.0
        %918 = vmatpush2.xpose.msra.mxu0 0.0
        %919 = vmatprep.subr.mxu0 0.0
        %920 = vmatpush2.xpose.msra.mxu0 0.0
        %921 = vmatprep.subr.mxu0 0.0
        %922 = vmatpush2.xpose.msra.mxu0 0.0
        %923 = vmatprep.subr.mxu0 0.0
        %924 = vmatpush2.xpose.msra.mxu0 0.0
        %925 = vmatprep.subr.mxu0 0.0
        %926 = vmatpush2.xpose.msra.mxu0 0.0
        %927 = vmatprep.subr.mxu0 0.0
        %928 = vmatpush2.xpose.msra.mxu0 0.0
        %929 = vmatprep.mubr.f32.mxu0 0.0
        %930 = vmatmul.mubr.f32.gmra.mxu0 %v860
        %v931 = vpop.f32.mrf.mxu0
        %v932 = vadd.f32 0.0, %v931
        %v933 = vpop.f32.mrf.mxu0
        %934 = vdwg.mxu0
        %v935 = vsel %vm857, 1, 0
        %v936 = vlaneseq
        %v937 = vshrl.u32 %v936, 7
        %v938 = vsub.s32 0, %v937
        %v939 = vrot.slane %v935, %v938
        %vm940 = vcmp.eq.s32.totalorder %v939, 1
        %v941 = vsel %vm940, -1e+09, %v932
        %v942 = vsel %vm858, %v941, -inf
        %943 = vmax.xlane.f32.xlu0 %v942
        %v944 = vpop.xlane.xlu0 %943
        %v945 = vsub.f32 %v941, %v944
        %v946 = vmul.f32 %v945, 1.442695
        %v947 = vpow.pop %v946
        %v948 = vsel %vm858, %v947, 0.0
        %949 = vadd.xlane.f32.xlu0 %v948
        %v950 = vpop.xlane.xlu0 %949
        %v951 = vrcp.pop %v950
        %v952 = vmul.f32 %v947, %v951
        %953 = vrot.lane.b32.xlu0 %v855, 96
        %v954 = vpop.permute.xlu0 %953
        %v957 = vsel %vm858, %v952, 0
        %959 = vmatprep.subr.mxu0 0.0
        %960 = vmatpush1.msra.mxu0 0.0
        %961 = vmatprep.subr.mxu0 0.0
        %962 = vmatpush1.msra.mxu0 0.0
        %963 = vmatprep.subr.mxu0 0.0
        %964 = vmatpush1.msra.mxu0 0.0
        %965 = vmatprep.subr.mxu0 0.0
        %966 = vmatpush1.msra.mxu0 0.0
        %967 = vmatprep.subr.mxu0 0.0
        %968 = vmatpush1.msra.mxu0 0.0
        %969 = vmatprep.subr.mxu0 0.0
        %970 = vmatpush1.msra.mxu0 0.0
        %971 = vmatprep.subr.mxu0 0.0
        %972 = vmatpush1.msra.mxu0 0.0
        %973 = vmatprep.subr.mxu0 0.0
        %974 = vmatpush1.msra.mxu0 0.0
        %975 = vmatprep.subr.mxu0 0.0
        %976 = vmatpush1.msra.mxu0 0.0
        %977 = vmatprep.subr.mxu0 0.0
        %978 = vmatpush1.msra.mxu0 0.0
        %979 = vmatprep.subr.mxu0 0.0
        %980 = vmatpush1.msra.mxu0 0.0
        %981 = vmatprep.subr.mxu0 0.0
        %982 = vmatpush1.msra.mxu0 0.0
        %983 = vmatprep.subr.mxu0 0.0
        %984 = vmatpush1.msra.mxu0 0.0
        %985 = vmatprep.subr.mxu0 0.0
        %986 = vmatpush1.msra.mxu0 0.0
        %987 = vmatprep.subr.mxu0 0.0
        %988 = vmatpush1.msra.mxu0 0.0
        %989 = vmatprep.subr.mxu0 0.0
        %990 = vmatpush1.msra.mxu0 %v954
        %991 = vmatprep.subr.mxu0 0.0
        %992 = vmatpush2.msra.mxu0 0.0
        %993 = vmatprep.subr.mxu0 0.0
        %994 = vmatpush2.msra.mxu0 0.0
        %995 = vmatprep.subr.mxu0 0.0
        %996 = vmatpush2.msra.mxu0 0.0
        %997 = vmatprep.subr.mxu0 0.0
        %998 = vmatpush2.msra.mxu0 0.0
        %999 = vmatprep.subr.mxu0 0.0
        %1000 = vmatpush2.msra.mxu0 0.0
        %1001 = vmatprep.subr.mxu0 0.0
        %1002 = vmatpush2.msra.mxu0 0.0
        %1003 = vmatprep.subr.mxu0 0.0
        %1004 = vmatpush2.msra.mxu0 0.0
        %1005 = vmatprep.subr.mxu0 0.0
        %1006 = vmatpush2.msra.mxu0 0.0
        %1007 = vmatprep.subr.mxu0 0.0
        %1008 = vmatpush2.msra.mxu0 0.0
        %1009 = vmatprep.subr.mxu0 0.0
        %1010 = vmatpush2.msra.mxu0 0.0
        %1011 = vmatprep.subr.mxu0 0.0
        %1012 = vmatpush2.msra.mxu0 0.0
        %1013 = vmatprep.subr.mxu0 0.0
        %1014 = vmatpush2.msra.mxu0 0.0
        %1015 = vmatprep.subr.mxu0 0.0
        %1016 = vmatpush2.msra.mxu0 0.0
        %1017 = vmatprep.subr.mxu0 0.0
        %1018 = vmatpush2.msra.mxu0 0.0
        %1019 = vmatprep.subr.mxu0 0.0
        %1020 = vmatpush2.msra.mxu0 0.0
        %1021 = vmatprep.subr.mxu0 0.0
        %1022 = vmatpush2.msra.mxu0 0.0
        %1023 = vmatprep.mubr.f32.mxu0 0.0
        %1024 = vmatmul.mubr.f32.gmra.mxu0 %v957
        %v1025 = vpop.f32.mrf.mxu0
        %v1026 = vadd.f32 0.0, %v1025
        %v1027 = vpop.f32.mrf.mxu0
        %1028 = vdwg.mxu0
        %1029 = vst.msk [vmem:[#allocation3] sm:$0xff] %vm858, %v1026
        %1030 = vrot.lane.b32.xlu0 %v852, 120
        %v1031 = vpop.permute.xlu0 %1030
        %1032 = vrot.lane.b32.xlu0 %v855, 120
        %v1033 = vpop.permute.xlu0 %1032
        %v1034 = vsel %vm858, %v1031, 0
        %v1036 = vsel %vm858, %v1033, 0
        %1038 = vmatprep.subr.mxu0 0.0
        %1039 = vmatpush1.xpose.msra.mxu0 0.0
        %1040 = vmatprep.subr.mxu0 0.0
        %1041 = vmatpush1.xpose.msra.mxu0 0.0
        %1042 = vmatprep.subr.mxu0 0.0
        %1043 = vmatpush1.xpose.msra.mxu0 0.0
        %1044 = vmatprep.subr.mxu0 0.0
        %1045 = vmatpush1.xpose.msra.mxu0 0.0
        %1046 = vmatprep.subr.mxu0 0.0
        %1047 = vmatpush1.xpose.msra.mxu0 0.0
        %1048 = vmatprep.subr.mxu0 0.0
        %1049 = vmatpush1.xpose.msra.mxu0 0.0
        %1050 = vmatprep.subr.mxu0 0.0
        %1051 = vmatpush1.xpose.msra.mxu0 0.0
        %1052 = vmatprep.subr.mxu0 0.0
        %1053 = vmatpush1.xpose.msra.mxu0 0.0
        %1054 = vmatprep.subr.mxu0 0.0
        %1055 = vmatpush1.xpose.msra.mxu0 0.0
        %1056 = vmatprep.subr.mxu0 0.0
        %1057 = vmatpush1.xpose.msra.mxu0 0.0
        %1058 = vmatprep.subr.mxu0 0.0
        %1059 = vmatpush1.xpose.msra.mxu0 0.0
        %1060 = vmatprep.subr.mxu0 0.0
        %1061 = vmatpush1.xpose.msra.mxu0 0.0
        %1062 = vmatprep.subr.mxu0 0.0
        %1063 = vmatpush1.xpose.msra.mxu0 0.0
        %1064 = vmatprep.subr.mxu0 0.0
        %1065 = vmatpush1.xpose.msra.mxu0 0.0
        %1066 = vmatprep.subr.mxu0 0.0
        %1067 = vmatpush1.xpose.msra.mxu0 0.0
        %1068 = vmatprep.subr.mxu0 0.0
        %1069 = vmatpush1.xpose.msra.mxu0 %v1036
        %1070 = vmatprep.subr.mxu0 0.0
        %1071 = vmatpush2.xpose.msra.mxu0 0.0
        %1072 = vmatprep.subr.mxu0 0.0
        %1073 = vmatpush2.xpose.msra.mxu0 0.0
        %1074 = vmatprep.subr.mxu0 0.0
        %1075 = vmatpush2.xpose.msra.mxu0 0.0
        %1076 = vmatprep.subr.mxu0 0.0
        %1077 = vmatpush2.xpose.msra.mxu0 0.0
        %1078 = vmatprep.subr.mxu0 0.0
        %1079 = vmatpush2.xpose.msra.mxu0 0.0
        %1080 = vmatprep.subr.mxu0 0.0
        %1081 = vmatpush2.xpose.msra.mxu0 0.0
        %1082 = vmatprep.subr.mxu0 0.0
        %1083 = vmatpush2.xpose.msra.mxu0 0.0
        %1084 = vmatprep.subr.mxu0 0.0
        %1085 = vmatpush2.xpose.msra.mxu0 0.0
        %1086 = vmatprep.subr.mxu0 0.0
        %1087 = vmatpush2.xpose.msra.mxu0 0.0
        %1088 = vmatprep.subr.mxu0 0.0
        %1089 = vmatpush2.xpose.msra.mxu0 0.0
        %1090 = vmatprep.subr.mxu0 0.0
        %1091 = vmatpush2.xpose.msra.mxu0 0.0
        %1092 = vmatprep.subr.mxu0 0.0
        %1093 = vmatpush2.xpose.msra.mxu0 0.0
        %1094 = vmatprep.subr.mxu0 0.0
        %1095 = vmatpush2.xpose.msra.mxu0 0.0
        %1096 = vmatprep.subr.mxu0 0.0
        %1097 = vmatpush2.xpose.msra.mxu0 0.0
        %1098 = vmatprep.subr.mxu0 0.0
        %1099 = vmatpush2.xpose.msra.mxu0 0.0
        %1100 = vmatprep.subr.mxu0 0.0
        %1101 = vmatpush2.xpose.msra.mxu0 0.0
        %1102 = vmatprep.mubr.f32.mxu0 0.0
        %1103 = vmatmul.mubr.f32.gmra.mxu0 %v1034
        %v1104 = vpop.f32.mrf.mxu0
        %v1105 = vadd.f32 0.0, %v1104
        %v1106 = vpop.f32.mrf.mxu0
        %1107 = vdwg.mxu0
        %v1108 = vsel %vm940, -1e+09, %v1105
        %v1109 = vsel %vm858, %v1108, -inf
        %1110 = vmax.xlane.f32.xlu0 %v1109
        %v1111 = vpop.xlane.xlu0 %1110
        %v1112 = vsub.f32 %v1108, %v1111
        %v1113 = vmul.f32 %v1112, 1.442695
        %v1114 = vpow.pop %v1113
        %v1115 = vsel %vm858, %v1114, 0.0
        %1116 = vadd.xlane.f32.xlu0 %v1115
        %v1117 = vpop.xlane.xlu0 %1116
        %v1118 = vrcp.pop %v1117
        %v1119 = vmul.f32 %v1114, %v1118
        %1120 = vrot.lane.b32.xlu0 %v855, 88
        %v1121 = vpop.permute.xlu0 %1120
        %v1124 = vsel %vm858, %v1119, 0
        %1126 = vmatprep.subr.mxu0 0.0
        %1127 = vmatpush1.msra.mxu0 0.0
        %1128 = vmatprep.subr.mxu0 0.0
        %1129 = vmatpush1.msra.mxu0 0.0
        %1130 = vmatprep.subr.mxu0 0.0
        %1131 = vmatpush1.msra.mxu0 0.0
        %1132 = vmatprep.subr.mxu0 0.0
        %1133 = vmatpush1.msra.mxu0 0.0
        %1134 = vmatprep.subr.mxu0 0.0
        %1135 = vmatpush1.msra.mxu0 0.0
        %1136 = vmatprep.subr.mxu0 0.0
        %1137 = vmatpush1.msra.mxu0 0.0
        %1138 = vmatprep.subr.mxu0 0.0
        %1139 = vmatpush1.msra.mxu0 0.0
        %1140 = vmatprep.subr.mxu0 0.0
        %1141 = vmatpush1.msra.mxu0 0.0
        %1142 = vmatprep.subr.mxu0 0.0
        %1143 = vmatpush1.msra.mxu0 0.0
        %1144 = vmatprep.subr.mxu0 0.0
        %1145 = vmatpush1.msra.mxu0 0.0
        %1146 = vmatprep.subr.mxu0 0.0
        %1147 = vmatpush1.msra.mxu0 0.0
        %1148 = vmatprep.subr.mxu0 0.0
        %1149 = vmatpush1.msra.mxu0 0.0
        %1150 = vmatprep.subr.mxu0 0.0
        %1151 = vmatpush1.msra.mxu0 0.0
        %1152 = vmatprep.subr.mxu0 0.0
        %1153 = vmatpush1.msra.mxu0 0.0
        %1154 = vmatprep.subr.mxu0 0.0
        %1155 = vmatpush1.msra.mxu0 0.0
        %1156 = vmatprep.subr.mxu0 0.0
        %1157 = vmatpush1.msra.mxu0 %v1121
        %1158 = vmatprep.subr.mxu0 0.0
        %1159 = vmatpush2.msra.mxu0 0.0
        %1160 = vmatprep.subr.mxu0 0.0
        %1161 = vmatpush2.msra.mxu0 0.0
        %1162 = vmatprep.subr.mxu0 0.0
        %1163 = vmatpush2.msra.mxu0 0.0
        %1164 = vmatprep.subr.mxu0 0.0
        %1165 = vmatpush2.msra.mxu0 0.0
        %1166 = vmatprep.subr.mxu0 0.0
        %1167 = vmatpush2.msra.mxu0 0.0
        %1168 = vmatprep.subr.mxu0 0.0
        %1169 = vmatpush2.msra.mxu0 0.0
        %1170 = vmatprep.subr.mxu0 0.0
        %1171 = vmatpush2.msra.mxu0 0.0
        %1172 = vmatprep.subr.mxu0 0.0
        %1173 = vmatpush2.msra.mxu0 0.0
        %1174 = vmatprep.subr.mxu0 0.0
        %1175 = vmatpush2.msra.mxu0 0.0
        %1176 = vmatprep.subr.mxu0 0.0
        %1177 = vmatpush2.msra.mxu0 0.0
        %1178 = vmatprep.subr.mxu0 0.0
        %1179 = vmatpush2.msra.mxu0 0.0
        %1180 = vmatprep.subr.mxu0 0.0
        %1181 = vmatpush2.msra.mxu0 0.0
        %1182 = vmatprep.subr.mxu0 0.0
        %1183 = vmatpush2.msra.mxu0 0.0
        %1184 = vmatprep.subr.mxu0 0.0
        %1185 = vmatpush2.msra.mxu0 0.0
        %1186 = vmatprep.subr.mxu0 0.0
        %1187 = vmatpush2.msra.mxu0 0.0
        %1188 = vmatprep.subr.mxu0 0.0
        %1189 = vmatpush2.msra.mxu0 0.0
        %1190 = vmatprep.mubr.f32.mxu0 0.0
        %1191 = vmatmul.mubr.f32.gmra.mxu0 %v1124
        %v1192 = vpop.f32.mrf.mxu0
        %v1193 = vadd.f32 0.0, %v1192
        %v1194 = vpop.f32.mrf.mxu0
        %1195 = vdwg.mxu0
        %1197 = vrot.lane.b32.xlu0 %v1193, 8
        %v1198 = vpop.permute.xlu0 %1197
        %vm1200 = vcmask 130112
        %1201 = vst.msk [vmem:[#allocation3] sm:$0xff] %vm1200, %v1198
        %1202 = vrot.lane.b32.xlu0 %v852, 112
        %v1203 = vpop.permute.xlu0 %1202
        %1204 = vrot.lane.b32.xlu0 %v855, 112
        %v1205 = vpop.permute.xlu0 %1204
        %v1206 = vsel %vm858, %v1203, 0
        %v1208 = vsel %vm858, %v1205, 0
        %1210 = vmatprep.subr.mxu0 0.0
        %1211 = vmatpush1.xpose.msra.mxu0 0.0
        %1212 = vmatprep.subr.mxu0 0.0
        %1213 = vmatpush1.xpose.msra.mxu0 0.0
        %1214 = vmatprep.subr.mxu0 0.0
        %1215 = vmatpush1.xpose.msra.mxu0 0.0
        %1216 = vmatprep.subr.mxu0 0.0
        %1217 = vmatpush1.xpose.msra.mxu0 0.0
        %1218 = vmatprep.subr.mxu0 0.0
        %1219 = vmatpush1.xpose.msra.mxu0 0.0
        %1220 = vmatprep.subr.mxu0 0.0
        %1221 = vmatpush1.xpose.msra.mxu0 0.0
        %1222 = vmatprep.subr.mxu0 0.0
        %1223 = vmatpush1.xpose.msra.mxu0 0.0
        %1224 = vmatprep.subr.mxu0 0.0
        %1225 = vmatpush1.xpose.msra.mxu0 0.0
        %1226 = vmatprep.subr.mxu0 0.0
        %1227 = vmatpush1.xpose.msra.mxu0 0.0
        %1228 = vmatprep.subr.mxu0 0.0
        %1229 = vmatpush1.xpose.msra.mxu0 0.0
        %1230 = vmatprep.subr.mxu0 0.0
        %1231 = vmatpush1.xpose.msra.mxu0 0.0
        %1232 = vmatprep.subr.mxu0 0.0
        %1233 = vmatpush1.xpose.msra.mxu0 0.0
        %1234 = vmatprep.subr.mxu0 0.0
        %1235 = vmatpush1.xpose.msra.mxu0 0.0
        %1236 = vmatprep.subr.mxu0 0.0
        %1237 = vmatpush1.xpose.msra.mxu0 0.0
        %1238 = vmatprep.subr.mxu0 0.0
        %1239 = vmatpush1.xpose.msra.mxu0 0.0
        %1240 = vmatprep.subr.mxu0 0.0
        %1241 = vmatpush1.xpose.msra.mxu0 %v1208
        %1242 = vmatprep.subr.mxu0 0.0
        %1243 = vmatpush2.xpose.msra.mxu0 0.0
        %1244 = vmatprep.subr.mxu0 0.0
        %1245 = vmatpush2.xpose.msra.mxu0 0.0
        %1246 = vmatprep.subr.mxu0 0.0
        %1247 = vmatpush2.xpose.msra.mxu0 0.0
        %1248 = vmatprep.subr.mxu0 0.0
        %1249 = vmatpush2.xpose.msra.mxu0 0.0
        %1250 = vmatprep.subr.mxu0 0.0
        %1251 = vmatpush2.xpose.msra.mxu0 0.0
        %1252 = vmatprep.subr.mxu0 0.0
        %1253 = vmatpush2.xpose.msra.mxu0 0.0
        %1254 = vmatprep.subr.mxu0 0.0
        %1255 = vmatpush2.xpose.msra.mxu0 0.0
        %1256 = vmatprep.subr.mxu0 0.0
        %1257 = vmatpush2.xpose.msra.mxu0 0.0
        %1258 = vmatprep.subr.mxu0 0.0
        %1259 = vmatpush2.xpose.msra.mxu0 0.0
        %1260 = vmatprep.subr.mxu0 0.0
        %1261 = vmatpush2.xpose.msra.mxu0 0.0
        %1262 = vmatprep.subr.mxu0 0.0
        %1263 = vmatpush2.xpose.msra.mxu0 0.0
        %1264 = vmatprep.subr.mxu0 0.0
        %1265 = vmatpush2.xpose.msra.mxu0 0.0
        %1266 = vmatprep.subr.mxu0 0.0
        %1267 = vmatpush2.xpose.msra.mxu0 0.0
        %1268 = vmatprep.subr.mxu0 0.0
        %1269 = vmatpush2.xpose.msra.mxu0 0.0
        %1270 = vmatprep.subr.mxu0 0.0
        %1271 = vmatpush2.xpose.msra.mxu0 0.0
        %1272 = vmatprep.subr.mxu0 0.0
        %1273 = vmatpush2.xpose.msra.mxu0 0.0
        %1274 = vmatprep.mubr.f32.mxu0 0.0
        %1275 = vmatmul.mubr.f32.gmra.mxu0 %v1206
        %v1276 = vpop.f32.mrf.mxu0
        %v1277 = vadd.f32 0.0, %v1276
        %v1278 = vpop.f32.mrf.mxu0
        %1279 = vdwg.mxu0
        %v1280 = vsel %vm940, -1e+09, %v1277
        %v1281 = vsel %vm858, %v1280, -inf
        %1282 = vmax.xlane.f32.xlu0 %v1281
        %v1283 = vpop.xlane.xlu0 %1282
        %v1284 = vsub.f32 %v1280, %v1283
        %v1285 = vmul.f32 %v1284, 1.442695
        %v1286 = vpow.pop %v1285
        %v1287 = vsel %vm858, %v1286, 0.0
        %1288 = vadd.xlane.f32.xlu0 %v1287
        %v1289 = vpop.xlane.xlu0 %1288
        %v1290 = vrcp.pop %v1289
        %v1291 = vmul.f32 %v1286, %v1290
        %1292 = vrot.lane.b32.xlu0 %v855, 80
        %v1293 = vpop.permute.xlu0 %1292
        %v1296 = vsel %vm858, %v1291, 0
        %1298 = vmatprep.subr.mxu0 0.0
        %1299 = vmatpush1.msra.mxu0 0.0
        %1300 = vmatprep.subr.mxu0 0.0
        %1301 = vmatpush1.msra.mxu0 0.0
        %1302 = vmatprep.subr.mxu0 0.0
        %1303 = vmatpush1.msra.mxu0 0.0
        %1304 = vmatprep.subr.mxu0 0.0
        %1305 = vmatpush1.msra.mxu0 0.0
        %1306 = vmatprep.subr.mxu0 0.0
        %1307 = vmatpush1.msra.mxu0 0.0
        %1308 = vmatprep.subr.mxu0 0.0
        %1309 = vmatpush1.msra.mxu0 0.0
        %1310 = vmatprep.subr.mxu0 0.0
        %1311 = vmatpush1.msra.mxu0 0.0
        %1312 = vmatprep.subr.mxu0 0.0
        %1313 = vmatpush1.msra.mxu0 0.0
        %1314 = vmatprep.subr.mxu0 0.0
        %1315 = vmatpush1.msra.mxu0 0.0
        %1316 = vmatprep.subr.mxu0 0.0
        %1317 = vmatpush1.msra.mxu0 0.0
        %1318 = vmatprep.subr.mxu0 0.0
        %1319 = vmatpush1.msra.mxu0 0.0
        %1320 = vmatprep.subr.mxu0 0.0
        %1321 = vmatpush1.msra.mxu0 0.0
        %1322 = vmatprep.subr.mxu0 0.0
        %1323 = vmatpush1.msra.mxu0 0.0
        %1324 = vmatprep.subr.mxu0 0.0
        %1325 = vmatpush1.msra.mxu0 0.0
        %1326 = vmatprep.subr.mxu0 0.0
        %1327 = vmatpush1.msra.mxu0 0.0
        %1328 = vmatprep.subr.mxu0 0.0
        %1329 = vmatpush1.msra.mxu0 %v1293
        %1330 = vmatprep.subr.mxu0 0.0
        %1331 = vmatpush2.msra.mxu0 0.0
        %1332 = vmatprep.subr.mxu0 0.0
        %1333 = vmatpush2.msra.mxu0 0.0
        %1334 = vmatprep.subr.mxu0 0.0
        %1335 = vmatpush2.msra.mxu0 0.0
        %1336 = vmatprep.subr.mxu0 0.0
        %1337 = vmatpush2.msra.mxu0 0.0
        %1338 = vmatprep.subr.mxu0 0.0
        %1339 = vmatpush2.msra.mxu0 0.0
        %1340 = vmatprep.subr.mxu0 0.0
        %1341 = vmatpush2.msra.mxu0 0.0
        %1342 = vmatprep.subr.mxu0 0.0
        %1343 = vmatpush2.msra.mxu0 0.0
        %1344 = vmatprep.subr.mxu0 0.0
        %1345 = vmatpush2.msra.mxu0 0.0
        %1346 = vmatprep.subr.mxu0 0.0
        %1347 = vmatpush2.msra.mxu0 0.0
        %1348 = vmatprep.subr.mxu0 0.0
        %1349 = vmatpush2.msra.mxu0 0.0
        %1350 = vmatprep.subr.mxu0 0.0
        %1351 = vmatpush2.msra.mxu0 0.0
        %1352 = vmatprep.subr.mxu0 0.0
        %1353 = vmatpush2.msra.mxu0 0.0
        %1354 = vmatprep.subr.mxu0 0.0
        %1355 = vmatpush2.msra.mxu0 0.0
        %1356 = vmatprep.subr.mxu0 0.0
        %1357 = vmatpush2.msra.mxu0 0.0
        %1358 = vmatprep.subr.mxu0 0.0
        %1359 = vmatpush2.msra.mxu0 0.0
        %1360 = vmatprep.subr.mxu0 0.0
        %1361 = vmatpush2.msra.mxu0 0.0
        %1362 = vmatprep.mubr.f32.mxu0 0.0
        %1363 = vmatmul.mubr.f32.gmra.mxu0 %v1296
        %v1364 = vpop.f32.mrf.mxu0
        %v1365 = vadd.f32 0.0, %v1364
        %v1366 = vpop.f32.mrf.mxu0
        %1367 = vdwg.mxu0
        %1369 = vrot.lane.b32.xlu0 %v1365, 16
        %v1370 = vpop.permute.xlu0 %1369
        %vm1372 = vcmask 195712
        %1373 = vst.msk [vmem:[#allocation3] sm:$0xff] %vm1372, %v1370
        %1374 = vrot.lane.b32.xlu0 %v852, 104
        %v1375 = vpop.permute.xlu0 %1374
        %1376 = vrot.lane.b32.xlu0 %v855, 104
        %v1377 = vpop.permute.xlu0 %1376
        %v1378 = vsel %vm858, %v1375, 0
        %v1380 = vsel %vm858, %v1377, 0
        %1382 = vmatprep.subr.mxu0 0.0
        %1383 = vmatpush1.xpose.msra.mxu0 0.0
        %1384 = vmatprep.subr.mxu0 0.0
        %1385 = vmatpush1.xpose.msra.mxu0 0.0
        %1386 = vmatprep.subr.mxu0 0.0
        %1387 = vmatpush1.xpose.msra.mxu0 0.0
        %1388 = vmatprep.subr.mxu0 0.0
        %1389 = vmatpush1.xpose.msra.mxu0 0.0
        %1390 = vmatprep.subr.mxu0 0.0
        %1391 = vmatpush1.xpose.msra.mxu0 0.0
        %1392 = vmatprep.subr.mxu0 0.0
        %1393 = vmatpush1.xpose.msra.mxu0 0.0
        %1394 = vmatprep.subr.mxu0 0.0
        %1395 = vmatpush1.xpose.msra.mxu0 0.0
        %1396 = vmatprep.subr.mxu0 0.0
        %1397 = vmatpush1.xpose.msra.mxu0 0.0
        %1398 = vmatprep.subr.mxu0 0.0
        %1399 = vmatpush1.xpose.msra.mxu0 0.0
        %1400 = vmatprep.subr.mxu0 0.0
        %1401 = vmatpush1.xpose.msra.mxu0 0.0
        %1402 = vmatprep.subr.mxu0 0.0
        %1403 = vmatpush1.xpose.msra.mxu0 0.0
        %1404 = vmatprep.subr.mxu0 0.0
        %1405 = vmatpush1.xpose.msra.mxu0 0.0
        %1406 = vmatprep.subr.mxu0 0.0
        %1407 = vmatpush1.xpose.msra.mxu0 0.0
        %1408 = vmatprep.subr.mxu0 0.0
        %1409 = vmatpush1.xpose.msra.mxu0 0.0
        %1410 = vmatprep.subr.mxu0 0.0
        %1411 = vmatpush1.xpose.msra.mxu0 0.0
        %1412 = vmatprep.subr.mxu0 0.0
        %1413 = vmatpush1.xpose.msra.mxu0 %v1380
        %1414 = vmatprep.subr.mxu0 0.0
        %1415 = vmatpush2.xpose.msra.mxu0 0.0
        %1416 = vmatprep.subr.mxu0 0.0
        %1417 = vmatpush2.xpose.msra.mxu0 0.0
        %1418 = vmatprep.subr.mxu0 0.0
        %1419 = vmatpush2.xpose.msra.mxu0 0.0
        %1420 = vmatprep.subr.mxu0 0.0
        %1421 = vmatpush2.xpose.msra.mxu0 0.0
        %1422 = vmatprep.subr.mxu0 0.0
        %1423 = vmatpush2.xpose.msra.mxu0 0.0
        %1424 = vmatprep.subr.mxu0 0.0
        %1425 = vmatpush2.xpose.msra.mxu0 0.0
        %1426 = vmatprep.subr.mxu0 0.0
        %1427 = vmatpush2.xpose.msra.mxu0 0.0
        %1428 = vmatprep.subr.mxu0 0.0
        %1429 = vmatpush2.xpose.msra.mxu0 0.0
        %1430 = vmatprep.subr.mxu0 0.0
        %1431 = vmatpush2.xpose.msra.mxu0 0.0
        %1432 = vmatprep.subr.mxu0 0.0
        %1433 = vmatpush2.xpose.msra.mxu0 0.0
        %1434 = vmatprep.subr.mxu0 0.0
        %1435 = vmatpush2.xpose.msra.mxu0 0.0
        %1436 = vmatprep.subr.mxu0 0.0
        %1437 = vmatpush2.xpose.msra.mxu0 0.0
        %1438 = vmatprep.subr.mxu0 0.0
        %1439 = vmatpush2.xpose.msra.mxu0 0.0
        %1440 = vmatprep.subr.mxu0 0.0
        %1441 = vmatpush2.xpose.msra.mxu0 0.0
        %1442 = vmatprep.subr.mxu0 0.0
        %1443 = vmatpush2.xpose.msra.mxu0 0.0
        %1444 = vmatprep.subr.mxu0 0.0
        %1445 = vmatpush2.xpose.msra.mxu0 0.0
        %1446 = vmatprep.mubr.f32.mxu0 0.0
        %1447 = vmatmul.mubr.f32.gmra.mxu0 %v1378
        %v1448 = vpop.f32.mrf.mxu0
        %v1449 = vadd.f32 0.0, %v1448
        %v1450 = vpop.f32.mrf.mxu0
        %1451 = vdwg.mxu0
        %v1452 = vsel %vm940, -1e+09, %v1449
        %v1453 = vsel %vm858, %v1452, -inf
        %1454 = vmax.xlane.f32.xlu0 %v1453
        %v1455 = vpop.xlane.xlu0 %1454
        %v1456 = vsub.f32 %v1452, %v1455
        %v1457 = vmul.f32 %v1456, 1.442695
        %v1458 = vpow.pop %v1457
        %v1459 = vsel %vm858, %v1458, 0.0
        %1460 = vadd.xlane.f32.xlu0 %v1459
        %v1461 = vpop.xlane.xlu0 %1460
        %v1462 = vrcp.pop %v1461
        %v1463 = vmul.f32 %v1458, %v1462
        %1464 = vrot.lane.b32.xlu0 %v855, 72
        %v1465 = vpop.permute.xlu0 %1464
        %v1468 = vsel %vm858, %v1463, 0
        %1470 = vmatprep.subr.mxu0 0.0
        %1471 = vmatpush1.msra.mxu0 0.0
        %1472 = vmatprep.subr.mxu0 0.0
        %1473 = vmatpush1.msra.mxu0 0.0
        %1474 = vmatprep.subr.mxu0 0.0
        %1475 = vmatpush1.msra.mxu0 0.0
        %1476 = vmatprep.subr.mxu0 0.0
        %1477 = vmatpush1.msra.mxu0 0.0
        %1478 = vmatprep.subr.mxu0 0.0
        %1479 = vmatpush1.msra.mxu0 0.0
        %1480 = vmatprep.subr.mxu0 0.0
        %1481 = vmatpush1.msra.mxu0 0.0
        %1482 = vmatprep.subr.mxu0 0.0
        %1483 = vmatpush1.msra.mxu0 0.0
        %1484 = vmatprep.subr.mxu0 0.0
        %1485 = vmatpush1.msra.mxu0 0.0
        %1486 = vmatprep.subr.mxu0 0.0
        %1487 = vmatpush1.msra.mxu0 0.0
        %1488 = vmatprep.subr.mxu0 0.0
        %1489 = vmatpush1.msra.mxu0 0.0
        %1490 = vmatprep.subr.mxu0 0.0
        %1491 = vmatpush1.msra.mxu0 0.0
        %1492 = vmatprep.subr.mxu0 0.0
        %1493 = vmatpush1.msra.mxu0 0.0
        %1494 = vmatprep.subr.mxu0 0.0
        %1495 = vmatpush1.msra.mxu0 0.0
        %1496 = vmatprep.subr.mxu0 0.0
        %1497 = vmatpush1.msra.mxu0 0.0
        %1498 = vmatprep.subr.mxu0 0.0
        %1499 = vmatpush1.msra.mxu0 0.0
        %1500 = vmatprep.subr.mxu0 0.0
        %1501 = vmatpush1.msra.mxu0 %v1465
        %1502 = vmatprep.subr.mxu0 0.0
        %1503 = vmatpush2.msra.mxu0 0.0
        %1504 = vmatprep.subr.mxu0 0.0
        %1505 = vmatpush2.msra.mxu0 0.0
        %1506 = vmatprep.subr.mxu0 0.0
        %1507 = vmatpush2.msra.mxu0 0.0
        %1508 = vmatprep.subr.mxu0 0.0
        %1509 = vmatpush2.msra.mxu0 0.0
        %1510 = vmatprep.subr.mxu0 0.0
        %1511 = vmatpush2.msra.mxu0 0.0
        %1512 = vmatprep.subr.mxu0 0.0
        %1513 = vmatpush2.msra.mxu0 0.0
        %1514 = vmatprep.subr.mxu0 0.0
        %1515 = vmatpush2.msra.mxu0 0.0
        %1516 = vmatprep.subr.mxu0 0.0
        %1517 = vmatpush2.msra.mxu0 0.0
        %1518 = vmatprep.subr.mxu0 0.0
        %1519 = vmatpush2.msra.mxu0 0.0
        %1520 = vmatprep.subr.mxu0 0.0
        %1521 = vmatpush2.msra.mxu0 0.0
        %1522 = vmatprep.subr.mxu0 0.0
        %1523 = vmatpush2.msra.mxu0 0.0
        %1524 = vmatprep.subr.mxu0 0.0
        %1525 = vmatpush2.msra.mxu0 0.0
        %1526 = vmatprep.subr.mxu0 0.0
        %1527 = vmatpush2.msra.mxu0 0.0
        %1528 = vmatprep.subr.mxu0 0.0
        %1529 = vmatpush2.msra.mxu0 0.0
        %1530 = vmatprep.subr.mxu0 0.0
        %1531 = vmatpush2.msra.mxu0 0.0
        %1532 = vmatprep.subr.mxu0 0.0
        %1533 = vmatpush2.msra.mxu0 0.0
        %1534 = vmatprep.mubr.f32.mxu0 0.0
        %1535 = vmatmul.mubr.f32.gmra.mxu0 %v1468
        %v1536 = vpop.f32.mrf.mxu0
        %v1537 = vadd.f32 0.0, %v1536
        %v1538 = vpop.f32.mrf.mxu0
        %1539 = vdwg.mxu0
        %1541 = vrot.lane.b32.xlu0 %v1537, 24
        %v1542 = vpop.permute.xlu0 %1541
        %vm1544 = vcmask 261312
        %1545 = vst.msk [vmem:[#allocation3] sm:$0xff] %vm1544, %v1542
        %v1546 = vld [vmem:[#allocation3] sm:$0xff]
        %v1547 = vld [vmem:[%s8] sm:$0xff]
        %v1548 = vld [vmem:[%s8 + $0x8] sm:$0xff]
        %v1549 = vld [vmem:[%s8 + $0x10] sm:$0xff]
        %v1550 = vld [vmem:[%s8 + $0x18] sm:$0xff]
        %v1551 = vld [vmem:[%s9] sm:$0x1]
        %v1553 = vlaneseq
        %v1554 = vshrl.u32 %v1553, 7
        %v1555 = vsub.s32 0, %v1554
        %v1556 = vrot.slane %v1551, %v1555
        %v1559 = vsel %vm734, %v1546, 0
        %1561 = vmatprep.subr.mxu0 0.0
        %1562 = vmatpush1.msra.mxu0 0.0
        %1563 = vmatprep.subr.mxu0 0.0
        %1564 = vmatpush1.msra.mxu0 0.0
        %1565 = vmatprep.subr.mxu0 0.0
        %1566 = vmatpush1.msra.mxu0 0.0
        %1567 = vmatprep.subr.mxu0 0.0
        %1568 = vmatpush1.msra.mxu0 0.0
        %1569 = vmatprep.subr.mxu0 0.0
        %1570 = vmatpush1.msra.mxu0 0.0
        %1571 = vmatprep.subr.mxu0 0.0
        %1572 = vmatpush1.msra.mxu0 0.0
        %1573 = vmatprep.subr.mxu0 0.0
        %1574 = vmatpush1.msra.mxu0 0.0
        %1575 = vmatprep.subr.mxu0 0.0
        %1576 = vmatpush1.msra.mxu0 0.0
        %1577 = vmatprep.subr.mxu0 0.0
        %1578 = vmatpush1.msra.mxu0 0.0
        %1579 = vmatprep.subr.mxu0 0.0
        %1580 = vmatpush1.msra.mxu0 0.0
        %1581 = vmatprep.subr.mxu0 0.0
        %1582 = vmatpush1.msra.mxu0 0.0
        %1583 = vmatprep.subr.mxu0 0.0
        %1584 = vmatpush1.msra.mxu0 0.0
        %1585 = vmatprep.subr.mxu0 0.0
        %1586 = vmatpush1.msra.mxu0 %v1550
        %1587 = vmatprep.subr.mxu0 0.0
        %1588 = vmatpush1.msra.mxu0 %v1549
        %1589 = vmatprep.subr.mxu0 0.0
        %1590 = vmatpush1.msra.mxu0 %v1548
        %1591 = vmatprep.subr.mxu0 0.0
        %1592 = vmatpush1.msra.mxu0 %v1547
        %1593 = vmatprep.subr.mxu0 0.0
        %1594 = vmatpush2.msra.mxu0 0.0
        %1595 = vmatprep.subr.mxu0 0.0
        %1596 = vmatpush2.msra.mxu0 0.0
        %1597 = vmatprep.subr.mxu0 0.0
        %1598 = vmatpush2.msra.mxu0 0.0
        %1599 = vmatprep.subr.mxu0 0.0
        %1600 = vmatpush2.msra.mxu0 0.0
        %1601 = vmatprep.subr.mxu0 0.0
        %1602 = vmatpush2.msra.mxu0 0.0
        %1603 = vmatprep.subr.mxu0 0.0
        %1604 = vmatpush2.msra.mxu0 0.0
        %1605 = vmatprep.subr.mxu0 0.0
        %1606 = vmatpush2.msra.mxu0 0.0
        %1607 = vmatprep.subr.mxu0 0.0
        %1608 = vmatpush2.msra.mxu0 0.0
        %1609 = vmatprep.subr.mxu0 0.0
        %1610 = vmatpush2.msra.mxu0 0.0
        %1611 = vmatprep.subr.mxu0 0.0
        %1612 = vmatpush2.msra.mxu0 0.0
        %1613 = vmatprep.subr.mxu0 0.0
        %1614 = vmatpush2.msra.mxu0 0.0
        %1615 = vmatprep.subr.mxu0 0.0
        %1616 = vmatpush2.msra.mxu0 0.0
        %1617 = vmatprep.subr.mxu0 0.0
        %1618 = vmatpush2.msra.mxu0 0.0
        %1619 = vmatprep.subr.mxu0 0.0
        %1620 = vmatpush2.msra.mxu0 0.0
        %1621 = vmatprep.subr.mxu0 0.0
        %1622 = vmatpush2.msra.mxu0 0.0
        %1623 = vmatprep.subr.mxu0 0.0
        %1624 = vmatpush2.msra.mxu0 0.0
        %1625 = vmatprep.mubr.f32.mxu0 0.0
        %1626 = vmatmul.mubr.f32.gmra.mxu0 %v1559
        %v1627 = vpop.f32.mrf.mxu0
        %v1628 = vadd.f32 %v1556, %v1627
        %v1629 = vpop.f32.mrf.mxu0
        %1630 = vdwg.mxu0
        %v1631 = vadd.f32 %v731, %v1628
        %v1632 = vld [vmem:[%s10] sm:$0x1]
        %v1633 = vld [vmem:[%s11] sm:$0x1]
        %v1634 = vsel %vm734, %v1631, 0.0
        %1635 = vadd.xlane.f32.xlu0 %v1634
        %v1636 = vpop.xlane.xlu0 %1635
        %v1637 = vmul.f32 %v1636, %v738
        %v1638 = vsub.f32 %v1631, %v1637
        %v1639 = vmul.f32 %v1638, %v1638
        %v1640 = vsel %vm734, %v1639, 0.0
        %1641 = vadd.xlane.f32.xlu0 %v1640
        %v1642 = vpop.xlane.xlu0 %1641
        %v1643 = vmul.f32 %v1642, %v745
        %v1645 = vlaneseq
        %v1646 = vshrl.u32 %v1645, 7
        %v1647 = vsub.s32 0, %v1646
        %v1648 = vrot.slane %v1632, %v1647
        %v1650 = vmul.f32 %v1648, %v1638
        %v1651 = vrsqrt.pop %v1643
        %v1652 = vmul.f32 %v1643, %v1651
        %vm1653 = vcmp.eq.f32.partialorder %v1643, inf
        %v1654 = vsel %vm1653, %v1643, %v1652
        %vm1655 = vcmp.eq.f32.partialorder %v1643, 0.0
        %v1656 = vand.u32 %v1643, 2147483648
        %v1657 = vsel %vm1655, %v1656, %v1654
        %v1658 = vadd.f32 %v1657, 1e-06
        %v1659 = vrcp.pop %v1658
        %v1660 = vmul.f32 %v1650, %v1659
        %v1662 = vlaneseq
        %v1663 = vshrl.u32 %v1662, 7
        %v1664 = vsub.s32 0, %v1663
        %v1665 = vrot.slane %v1633, %v1664
        %v1667 = vadd.f32 %v1660, %v1665
        %v1668 = vld [vmem:[%s12] sm:$0xff]
        %v1669 = vld [vmem:[%s12 + $0x8] sm:$0xff]
        %v1670 = vld [vmem:[%s12 + $0x10] sm:$0xff]
        %v1671 = vld [vmem:[%s12 + $0x18] sm:$0xff]
        %v1672 = vld [vmem:[%s13] sm:$0x1]
        %v1674 = vlaneseq
        %v1675 = vshrl.u32 %v1674, 7
        %v1676 = vsub.s32 0, %v1675
        %v1677 = vrot.slane %v1672, %v1676
        %v1680 = vsel %vm734, %v1667, 0
        %1682 = vmatprep.subr.mxu0 0.0
        %1683 = vmatpush1.msra.mxu0 0.0
        %1684 = vmatprep.subr.mxu0 0.0
        %1685 = vmatpush1.msra.mxu0 0.0
        %1686 = vmatprep.subr.mxu0 0.0
        %1687 = vmatpush1.msra.mxu0 0.0
        %1688 = vmatprep.subr.mxu0 0.0
        %1689 = vmatpush1.msra.mxu0 0.0
        %1690 = vmatprep.subr.mxu0 0.0
        %1691 = vmatpush1.msra.mxu0 0.0
        %1692 = vmatprep.subr.mxu0 0.0
        %1693 = vmatpush1.msra.mxu0 0.0
        %1694 = vmatprep.subr.mxu0 0.0
        %1695 = vmatpush1.msra.mxu0 0.0
        %1696 = vmatprep.subr.mxu0 0.0
        %1697 = vmatpush1.msra.mxu0 0.0
        %1698 = vmatprep.subr.mxu0 0.0
        %1699 = vmatpush1.msra.mxu0 0.0
        %1700 = vmatprep.subr.mxu0 0.0
        %1701 = vmatpush1.msra.mxu0 0.0
        %1702 = vmatprep.subr.mxu0 0.0
        %1703 = vmatpush1.msra.mxu0 0.0
        %1704 = vmatprep.subr.mxu0 0.0
        %1705 = vmatpush1.msra.mxu0 0.0
        %1706 = vmatprep.subr.mxu0 0.0
        %1707 = vmatpush1.msra.mxu0 %v1671
        %1708 = vmatprep.subr.mxu0 0.0
        %1709 = vmatpush1.msra.mxu0 %v1670
        %1710 = vmatprep.subr.mxu0 0.0
        %1711 = vmatpush1.msra.mxu0 %v1669
        %1712 = vmatprep.subr.mxu0 0.0
        %1713 = vmatpush1.msra.mxu0 %v1668
        %1714 = vmatprep.subr.mxu0 0.0
        %1715 = vmatpush2.msra.mxu0 0.0
        %1716 = vmatprep.subr.mxu0 0.0
        %1717 = vmatpush2.msra.mxu0 0.0
        %1718 = vmatprep.subr.mxu0 0.0
        %1719 = vmatpush2.msra.mxu0 0.0
        %1720 = vmatprep.subr.mxu0 0.0
        %1721 = vmatpush2.msra.mxu0 0.0
        %1722 = vmatprep.subr.mxu0 0.0
        %1723 = vmatpush2.msra.mxu0 0.0
        %1724 = vmatprep.subr.mxu0 0.0
        %1725 = vmatpush2.msra.mxu0 0.0
        %1726 = vmatprep.subr.mxu0 0.0
        %1727 = vmatpush2.msra.mxu0 0.0
        %1728 = vmatprep.subr.mxu0 0.0
        %1729 = vmatpush2.msra.mxu0 0.0
        %1730 = vmatprep.subr.mxu0 0.0
        %1731 = vmatpush2.msra.mxu0 0.0
        %1732 = vmatprep.subr.mxu0 0.0
        %1733 = vmatpush2.msra.mxu0 0.0
        %1734 = vmatprep.subr.mxu0 0.0
        %1735 = vmatpush2.msra.mxu0 0.0
        %1736 = vmatprep.subr.mxu0 0.0
        %1737 = vmatpush2.msra.mxu0 0.0
        %1738 = vmatprep.subr.mxu0 0.0
        %1739 = vmatpush2.msra.mxu0 0.0
        %1740 = vmatprep.subr.mxu0 0.0
        %1741 = vmatpush2.msra.mxu0 0.0
        %1742 = vmatprep.subr.mxu0 0.0
        %1743 = vmatpush2.msra.mxu0 0.0
        %1744 = vmatprep.subr.mxu0 0.0
        %1745 = vmatpush2.msra.mxu0 0.0
        %1746 = vmatprep.mubr.f32.mxu0 0.0
        %1747 = vmatmul.mubr.f32.gmra.mxu0 %v1680
        %v1748 = vpop.f32.mrf.mxu0
        %v1749 = vadd.f32 %v1677, %v1748
        %v1750 = vpop.f32.mrf.mxu0
        %1751 = vdwg.mxu0
        %v1752 = vmax.f32 %v1749, 0.0
        %v1753 = vld [vmem:[%s14] sm:$0xff]
        %v1754 = vld [vmem:[%s14 + $0x8] sm:$0xff]
        %v1755 = vld [vmem:[%s14 + $0x10] sm:$0xff]
        %v1756 = vld [vmem:[%s14 + $0x18] sm:$0xff]
        %v1757 = vld [vmem:[%s14 + $0x20] sm:$0xff]
        %v1758 = vld [vmem:[%s14 + $0x28] sm:$0xff]
        %v1759 = vld [vmem:[%s14 + $0x30] sm:$0xff]
        %v1760 = vld [vmem:[%s14 + $0x38] sm:$0xff]
        %v1761 = vld [vmem:[%s15] sm:$0x1]
        %v1763 = vlaneseq
        %v1764 = vshrl.u32 %v1763, 7
        %v1765 = vsub.s32 0, %v1764
        %v1766 = vrot.slane %v1761, %v1765
        %vm1768 = vcmask 523264
        %v1770 = vsel %vm1768, %v1752, 0
        %1772 = vmatprep.subr.mxu0 0.0
        %1773 = vmatpush1.msra.mxu0 0.0
        %1774 = vmatprep.subr.mxu0 0.0
        %1775 = vmatpush1.msra.mxu0 0.0
        %1776 = vmatprep.subr.mxu0 0.0
        %1777 = vmatpush1.msra.mxu0 0.0
        %1778 = vmatprep.subr.mxu0 0.0
        %1779 = vmatpush1.msra.mxu0 0.0
        %1780 = vmatprep.subr.mxu0 0.0
        %1781 = vmatpush1.msra.mxu0 0.0
        %1782 = vmatprep.subr.mxu0 0.0
        %1783 = vmatpush1.msra.mxu0 0.0
        %1784 = vmatprep.subr.mxu0 0.0
        %1785 = vmatpush1.msra.mxu0 0.0
        %1786 = vmatprep.subr.mxu0 0.0
        %1787 = vmatpush1.msra.mxu0 0.0
        %1788 = vmatprep.subr.mxu0 0.0
        %1789 = vmatpush1.msra.mxu0 %v1760
        %1790 = vmatprep.subr.mxu0 0.0
        %1791 = vmatpush1.msra.mxu0 %v1759
        %1792 = vmatprep.subr.mxu0 0.0
        %1793 = vmatpush1.msra.mxu0 %v1758
        %1794 = vmatprep.subr.mxu0 0.0
        %1795 = vmatpush1.msra.mxu0 %v1757
        %1796 = vmatprep.subr.mxu0 0.0
        %1797 = vmatpush1.msra.mxu0 %v1756
        %1798 = vmatprep.subr.mxu0 0.0
        %1799 = vmatpush1.msra.mxu0 %v1755
        %1800 = vmatprep.subr.mxu0 0.0
        %1801 = vmatpush1.msra.mxu0 %v1754
        %1802 = vmatprep.subr.mxu0 0.0
        %1803 = vmatpush1.msra.mxu0 %v1753
        %1804 = vmatprep.subr.mxu0 0.0
        %1805 = vmatpush2.msra.mxu0 0.0
        %1806 = vmatprep.subr.mxu0 0.0
        %1807 = vmatpush2.msra.mxu0 0.0
        %1808 = vmatprep.subr.mxu0 0.0
        %1809 = vmatpush2.msra.mxu0 0.0
        %1810 = vmatprep.subr.mxu0 0.0
        %1811 = vmatpush2.msra.mxu0 0.0
        %1812 = vmatprep.subr.mxu0 0.0
        %1813 = vmatpush2.msra.mxu0 0.0
        %1814 = vmatprep.subr.mxu0 0.0
        %1815 = vmatpush2.msra.mxu0 0.0
        %1816 = vmatprep.subr.mxu0 0.0
        %1817 = vmatpush2.msra.mxu0 0.0
        %1818 = vmatprep.subr.mxu0 0.0
        %1819 = vmatpush2.msra.mxu0 0.0
        %1820 = vmatprep.subr.mxu0 0.0
        %1821 = vmatpush2.msra.mxu0 0.0
        %1822 = vmatprep.subr.mxu0 0.0
        %1823 = vmatpush2.msra.mxu0 0.0
        %1824 = vmatprep.subr.mxu0 0.0
        %1825 = vmatpush2.msra.mxu0 0.0
        %1826 = vmatprep.subr.mxu0 0.0
        %1827 = vmatpush2.msra.mxu0 0.0
        %1828 = vmatprep.subr.mxu0 0.0
        %1829 = vmatpush2.msra.mxu0 0.0
        %1830 = vmatprep.subr.mxu0 0.0
        %1831 = vmatpush2.msra.mxu0 0.0
        %1832 = vmatprep.subr.mxu0 0.0
        %1833 = vmatpush2.msra.mxu0 0.0
        %1834 = vmatprep.subr.mxu0 0.0
        %1835 = vmatpush2.msra.mxu0 0.0
        %1836 = vmatprep.mubr.f32.mxu0 0.0
        %1837 = vmatmul.mubr.f32.gmra.mxu0 %v1770
        %v1838 = vpop.f32.mrf.mxu0
        %v1839 = vadd.f32 %v1766, %v1838
        %v1840 = vpop.f32.mrf.mxu0
        %1841 = vdwg.mxu0
        %v1842 = vadd.f32 %v1631, %v1839
        %v1843 = vld [vmem:[%s16] sm:$0x1]
        %v1844 = vld [vmem:[%s17] sm:$0x1]
        %v1845 = vsel %vm734, %v1842, 0.0
        %1846 = vadd.xlane.f32.xlu0 %v1845
        %v1847 = vpop.xlane.xlu0 %1846
        %v1848 = vmul.f32 %v1847, %v738
        %v1849 = vsub.f32 %v1842, %v1848
        %v1850 = vmul.f32 %v1849, %v1849
        %v1851 = vsel %vm734, %v1850, 0.0
        %1852 = vadd.xlane.f32.xlu0 %v1851
        %v1853 = vpop.xlane.xlu0 %1852
        %v1854 = vmul.f32 %v1853, %v745
        %v1856 = vlaneseq
        %v1857 = vshrl.u32 %v1856, 7
        %v1858 = vsub.s32 0, %v1857
        %v1859 = vrot.slane %v1843, %v1858
        %v1861 = vmul.f32 %v1859, %v1849
        %v1862 = vrsqrt.pop %v1854
        %v1863 = vmul.f32 %v1854, %v1862
        %vm1864 = vcmp.eq.f32.partialorder %v1854, inf
        %v1865 = vsel %vm1864, %v1854, %v1863
        %vm1866 = vcmp.eq.f32.partialorder %v1854, 0.0
        %v1867 = vand.u32 %v1854, 2147483648
        %v1868 = vsel %vm1866, %v1867, %v1865
        %v1869 = vadd.f32 %v1868, 1e-06
        %v1870 = vrcp.pop %v1869
        %v1871 = vmul.f32 %v1861, %v1870
        %v1873 = vlaneseq
        %v1874 = vshrl.u32 %v1873, 7
        %v1875 = vsub.s32 0, %v1874
        %v1876 = vrot.slane %v1844, %v1875
        %v1878 = vadd.f32 %v1871, %v1876
        %1879 = vst.msk [vmem:[%s591] sm:$0xff] %vm734, %v1878
        %s1880 = sand.u32 %s442, 1
        %s1881 = scalar_lea.sflag [#allocation5], %s1880
        %s1882 = sand.u32 %s442, 1
        %s1883 = smul.addr %s1882, 8
        %s1884 = scalar_lea.vmem [#allocation4], %s1883
        // Predicated region
        $region97: #{encoder_forward.3} parent=91 // pred_check
          %p1885 = pneg %p452
        $region98: #{encoder_forward.3} parent=91 // pred_check_branch
          %1887 = sbr.rel (%p1885) target = $region100
        $region99: #{encoder_forward.3} parent=91 // pred_region
          %s1889 = ssub.s32 128, 128
          %1890 = vsyncadd %s1881, %s1889
          %s1891 = sadd.s32 %s37, %s36
          %s1892 = smul.addr %s1891, 128
          %s1893 = scalar_lea.hbm %s18, %s1892
          %s1895 = sshll.u32 %s1884, 4
          %s1896 = int_to_ptr.vmem [resolvable:$true] %s1895
          %1898 = dma.vmem_to_hbm [thread:$0]  %s1896, 128, %s1893, %s1881
        $region100: #{encoder_forward.3} parent=91 // pred_fallthru
          _
      $region92: #{encoder_forward.3} parent=5 // pred_fallthru
        _
      %p1899 = scmp.le.s32.totalorder 2, %s27
      // Predicated region
      $region101: #{encoder_forward.3} parent=5 // pred_check
        %p1900 = pneg %p1899
      $region102: #{encoder_forward.3} parent=5 // pred_check_branch
        %1902 = sbr.rel (%p1900) target = $region104
      $region103: #{encoder_forward.3} parent=5 // pred_region
        %s1903 = ssub.s32 %s27, 2
        // Predicated region
        $region105: #{encoder_forward.3} parent=103 // pred_check
          %p1904 = pneg %p458
        $region106: #{encoder_forward.3} parent=103 // pred_check_branch
          %1906 = sbr.rel (%p1904) target = $region108
        $region107: #{encoder_forward.3} parent=103 // pred_region
          %s1907 = sand.u32 %s443, 1
          %s1908 = scalar_lea.sflag [#allocation5], %s1907
          %s1909 = sand.u32 %s443, 1
          %s1910 = smul.addr %s1909, 8
          %s1911 = scalar_lea.vmem [#allocation4], %s1910
          %1912 = dma.done %s1908, 128
        $region108: #{encoder_forward.3} parent=103 // pred_fallthru
          _
      $region104: #{encoder_forward.3} parent=5 // pred_fallthru
        _
    $region6: #{encoder_forward.3} parent=1 // loop_footer
      %s31 = sadd.s32 1, %s27
    $region7: #{encoder_forward.3} parent=1 // loop_footer_branch
      %26 = sbr.rel target = $region3
    $region8: #{encoder_forward.3} parent=1 // loop_exit
      _
    %1913 = vsyncpa [#allocation5], 1
    %s1914 = scalar_lea.sflag [#allocation5], 1
    %1915 = vsyncpa %s1914, 1

</llo_original>
